<compile_context>
chip_gen: v7x
topology: tpu7x:2x2x1
jax: 0.10.0
libtpu: 0.0.40
codegen_flags: <defaults>
</compile_context>

<pallas_src>
import functools
import math

import numpy as np
import jax
import jax.numpy as jnp
from jax import lax
from jax.experimental import pallas as pl
from jax.experimental.pallas import tpu as pltpu

OUT_DIM = {2: 39, 4: 35, 6: 31}
OUT_DIM_64 = {2: 29, 4: 25, 6: 21}

FC_K_BLOCKS = 8                    # K tiles for the fc + LayerNorm + tanh kernel
FC_TILE_M = 256                    # fc rows per tile
_VMEM_LIMIT = 32 * 1024 * 1024     # explicit scoped-VMEM budget (fits all gens)


def _round_up(x, m):
    return ((x + m - 1) // m) * m


# ----------------------------- Pallas kernels ------------------------------

def _fused_conv_kernel(p_ref, w1_ref, b1_ref, w2_ref, b2_ref, o_ref, act1_ref,
                       *, pitch, r2):
    """Fused conv1 (3x3 stride 2, via im2col patches) + conv2 (3x3 stride 1).

    Channel-major layout, spatial index on the lane dimension:
      p_ref  : (G, K1, R1) bf16  im2col patches, column r = oy*pitch + ox
      w1_ref : (D, K1)     bf16  conv1 weight (transposed, /255 folded in)
      b1_ref : (D, 1)      f32
      w2_ref : (9, D, D)   bf16  conv2 taps, (dy*3+dx, c_out, c_in)
      b2_ref : (D, 1)      f32
      o_ref  : (G, D, r2)  bf16  conv2 activation, column r = oy*pitch + ox
      act1_ref: (D, R1)    bf16  VMEM scratch for the conv1 activation.
    Columns with ox >= ow or r >= valid range hold finite garbage; the packed
    fc weight zero-fills the corresponding K rows.
    """
    g_per_step = o_ref.shape[0]
    for g in range(g_per_step):
        a1 = jnp.dot(w1_ref[...], p_ref[g],
                     preferred_element_type=jnp.float32)          # (D, R1)
        act1_ref[...] = jnp.maximum(a1 + b1_ref[...], 0.0).astype(jnp.bfloat16)
        acc = None
        for dy in range(3):
            for dx in range(3):
                start = dy * pitch + dx                           # static
                seg = act1_ref[:, start:start + r2]               # (D, r2)
                part = jnp.dot(w2_ref[dy * 3 + dx], seg,
                               preferred_element_type=jnp.float32)
                acc = part if acc is None else acc + part
        y = jnp.maximum(acc + b2_ref[...], 0.0)
        o_ref[g] = y.astype(o_ref.dtype)


def _fc_ln_tanh_kernel(x_ref, w_ref, p_ref, o_ref, acc_ref):
    # K-tiled matmul accumulation; bias + LayerNorm + tanh on the last K step.
    # p_ref rows: [0]=fc bias, [1]=LN gamma, [2]=LN beta.
    # NOTE: for a partial last M tile the extra rows carry finite garbage that
    # flows through rsqrt/tanh; stores are masked so results stay correct.
    k = pl.program_id(1)

    @pl.when(k == 0)
    def _():
        acc_ref[...] = jnp.zeros_like(acc_ref)

    acc_ref[...] += jnp.dot(x_ref[...], w_ref[...],
                            preferred_element_type=jnp.float32)

    @pl.when(k == pl.num_programs(1) - 1)
    def _():
        p = p_ref[...]
        y = acc_ref[...] + p[0:1, :]
        mean = jnp.mean(y, axis=-1, keepdims=True)
        var = jnp.mean(jnp.square(y - mean), axis=-1, keepdims=True)
        yn = (y - mean) * lax.rsqrt(var + 1e-5)        # LayerNorm eps = 1e-5
        o_ref[...] = jnp.tanh(yn * p[1:2, :] + p[2:3, :])


# ----------------------------- Pallas wrappers ------------------------------

def fused_conv(patches, w1_t, b1, w2_t, b2, *, group, pitch, r2):
    # patches: (B, K1, R1) bf16 -> (B, D, r2) bf16
    B, K1, R1 = patches.shape
    D = w1_t.shape[0]
    assert B % group == 0
    kernel = functools.partial(_fused_conv_kernel, pitch=pitch, r2=r2)
    return pl.pallas_call(
        kernel,
        out_shape=jax.ShapeDtypeStruct((B, D, r2), jnp.bfloat16),
        grid=(B // group,),
        in_specs=[
            pl.BlockSpec((group, K1, R1), lambda i: (i, 0, 0)),
            pl.BlockSpec((D, K1), lambda i: (0, 0)),
            pl.BlockSpec((D, 1), lambda i: (0, 0)),
            pl.BlockSpec((9, D, D), lambda i: (0, 0, 0)),
            pl.BlockSpec((D, 1), lambda i: (0, 0)),
        ],
        out_specs=pl.BlockSpec((group, D, r2), lambda i: (i, 0, 0)),
        scratch_shapes=[pltpu.VMEM((D, R1), jnp.bfloat16)],
        compiler_params=pltpu.CompilerParams(
            dimension_semantics=("parallel",),
            vmem_limit_bytes=_VMEM_LIMIT),
    )(patches, w1_t, b1, w2_t, b2)


def fc_ln_tanh(x, w, p, block_k):
    # x: (M, K) bf16, w: (K, N) bf16, p: (3, N) f32 -> (M, N) f32
    M, K = x.shape
    N = w.shape[1]
    assert K % block_k == 0
    kt = K // block_k
    tm = M if M <= FC_TILE_M else FC_TILE_M
    mt = pl.cdiv(M, tm)
    return pl.pallas_call(
        _fc_ln_tanh_kernel,
        out_shape=jax.ShapeDtypeStruct((M, N), jnp.float32),
        grid=(mt, kt),
        in_specs=[
            pl.BlockSpec((tm, block_k), lambda i, k: (i, k)),
            pl.BlockSpec((block_k, N), lambda i, k: (k, 0)),
            pl.BlockSpec((3, N), lambda i, k: (0, 0)),
        ],
        out_specs=pl.BlockSpec((tm, N), lambda i, k: (i, 0)),
        scratch_shapes=[pltpu.VMEM((tm, N), jnp.float32)],
        compiler_params=pltpu.CompilerParams(
            dimension_semantics=("parallel", "arbitrary"),
            vmem_limit_bytes=_VMEM_LIMIT),
    )(x, w, p)


# ------------------------------ JAX glue ------------------------------------

def _im2col_chw(x_chw, pitch, r1_pad):
    """3x3 stride-2 im2col on NCHW input -> (B, 9*C, r1_pad) bf16.

    Column r = oy*pitch + ox holds the patch for output (oy, ox); columns with
    ox >= ow (pitch padding) and r >= oh*pitch are zero.
    """
    # TODO(synk): this first-layer gather still runs as plain XLA ops; the
    # remaining conv work is all inside the fused Pallas kernel.
    B, C, H, W = x_chw.shape
    oh = (H - 3) // 2 + 1
    ow = (W - 3) // 2 + 1
    taps = []
    for dy in range(3):
        for dx in range(3):
            taps.append(x_chw[:, :, dy:dy + 2 * (oh - 1) + 1:2,
                              dx:dx + 2 * (ow - 1) + 1:2])
    p = jnp.stack(taps, axis=1).reshape(B, 9 * C, oh, ow)
    p = jnp.pad(p, ((0, 0), (0, 0), (0, 0), (0, pitch - ow)))
    p = p.reshape(B, 9 * C, oh * pitch)
    p = jnp.pad(p, ((0, 0), (0, 0), (0, r1_pad - oh * pitch)))
    return p.astype(jnp.bfloat16)


def _plan(shape, num_layers, stride, depth):
    """Static layout plan for the fused encoder."""
    assert num_layers == 2 and stride == 1, (
        "this script implements the default 2-layer / stride-1 encoder")
    # TODO(synk): generalize the fused conv path to num_layers > 2 / stride-2
    # tails (the previous, unfused plan-based path handled those).
    assert shape[-1] == shape[-2]
    h = shape[-1]
    oh1 = (h - 3) // 2 + 1                   # conv1: 3x3 stride 2
    pitch = _round_up(oh1, 8)                # padded spatial row pitch
    oh2 = oh1 - 2                            # conv2: 3x3 stride 1, VALID
    # conv2 must only ever read valid conv1 columns (ox2 + dx <= oh2 + 1).
    assert oh2 + 2 <= oh1 and oh2 + 1 < pitch
    r2_valid = (oh2 - 1) * pitch + oh2       # last valid stored output row + 1
    step = (128 * FC_K_BLOCKS) // math.gcd(depth, 128 * FC_K_BLOCKS)
    step = step * 8 // math.gcd(step, 8)     # lcm(step, 8)
    r2 = _round_up(r2_valid, step)
    k_pad = depth * r2
    assert k_pad % (128 * FC_K_BLOCKS) == 0
    block_k = k_pad // FC_K_BLOCKS
    r1_pad = _round_up(max(oh1 * pitch, r2 + 2 * pitch + 2), 128)
    assert r2 + 2 * pitch + 2 <= r1_pad
    return dict(oh1=oh1, oh2=oh2, pitch=pitch, r2=r2, r1_pad=r1_pad,
                k_pad=k_pad, block_k=block_k)


def _pack_fc_weight(fc_w, *, out_hw, pitch, r2, depth):
    """Reorder the fc weight from PyTorch CHW-flatten row order to the kernel's
    (channel, stored spatial column = oy*pitch + ox) order, zero-filling rows
    that correspond to pitch-padding / garbage positions."""
    w = np.asarray(fc_w, np.float32)                 # (depth*out_hw*out_hw, N)
    n = w.shape[1]
    out = np.zeros((depth * r2, n), np.float32)
    oy, ox = np.meshgrid(np.arange(out_hw), np.arange(out_hw), indexing="ij")
    r = (oy * pitch + ox).reshape(-1)                # stored spatial column
    s = (oy * out_hw + ox).reshape(-1)               # torch spatial index
    ch = np.arange(depth)
    dst = (ch[:, None] * r2 + r[None, :]).reshape(-1)
    src = (ch[:, None] * (out_hw * out_hw) + s[None, :]).reshape(-1)
    out[dst] = w[src]
    return jnp.asarray(out).astype(jnp.bfloat16)


def _pick_group(b):
    for g in (8, 4, 2):
        if b % g == 0:
            return g
    return 1


def init_params(key, depth=32, stride=1, shape=(3, 64, 64), num_layers=2,
                feature_dim=50):
    cin = shape[0]
    keys = jax.random.split(key, 2 * num_layers + 2)
    convs = []
    in_c = cin
    for i in range(num_layers):
        w = jax.random.normal(keys[2 * i], (3, 3, in_c, depth),
                              jnp.float32) * 0.05
        b = jax.random.normal(keys[2 * i + 1], (depth,), jnp.float32) * 0.05
        if i == 0:
            w = w / 255.0        # fold the /255 input normalization into conv1
        convs.append((w, b))
        in_c = depth

    out_dim = OUT_DIM_64[num_layers] if shape[-1] == 64 else OUT_DIM[num_layers]
    embed_size = depth * out_dim * out_dim
    fc_w = jax.random.normal(keys[-2], (embed_size, feature_dim),
                             jnp.float32) * (1.0 / np.sqrt(embed_size))
    fc_b = jax.random.normal(keys[-1], (feature_dim,), jnp.float32) * 0.05
    ln_g = jnp.ones((feature_dim,), jnp.float32)
    ln_b = jnp.zeros((feature_dim,), jnp.float32)

    plan = _plan(shape, num_layers, stride, depth)
    assert plan["oh2"] == out_dim

    (w1, b1), (w2, b2) = convs
    w1_t = jnp.transpose(w1.reshape(-1, depth)).astype(jnp.bfloat16)   # (D,27)
    w2_t = jnp.transpose(w2.reshape(9, depth, depth),
                         (0, 2, 1)).astype(jnp.bfloat16)               # (9,D,D)
    b1_col = b1.reshape(depth, 1)
    b2_col = b2.reshape(depth, 1)

    fc_w_packed = _pack_fc_weight(fc_w, out_hw=out_dim, pitch=plan["pitch"],
                                  r2=plan["r2"], depth=depth)
    fc_params = jnp.stack([fc_b, ln_g, ln_b], axis=0)                  # (3, N)

    return dict(convs=convs, fc_w=fc_w,
                w1_t=w1_t, b1_col=b1_col, w2_t=w2_t, b2_col=b2_col,
                fc_w_packed=fc_w_packed, fc_params=fc_params,
                plan=plan, depth=depth, stride=stride, num_layers=num_layers,
                feature_dim=feature_dim, shape=shape)


def observation_encoder_forward(params, obs):
    """obs: (*batch, C, H, W) float in [0, 255] (NCHW, like PyTorch)."""
    batch_shape = obs.shape[:-3]
    c, h, w = obs.shape[-3:]
    x = obs.reshape((-1, c, h, w)).astype(jnp.float32)   # /255 folded into w1
    bsz = x.shape[0]
    plan = params["plan"]

    patches = _im2col_chw(x, plan["pitch"], plan["r1_pad"])   # (B, 27, R1) bf16
    conv_out = fused_conv(patches, params["w1_t"], params["b1_col"],
                          params["w2_t"], params["b2_col"],
                          group=_pick_group(bsz),
                          pitch=plan["pitch"], r2=plan["r2"])  # (B, D, r2) bf16

    flat = conv_out.reshape(bsz, -1)        # free row-major collapse, width k_pad
    assert flat.shape[1] == plan["k_pad"]
    out = fc_ln_tanh(flat, params["fc_w_packed"], params["fc_params"],
                     plan["block_k"])
    return out.reshape(batch_shape + (params["feature_dim"],))


# ------------------------------ reference -----------------------------------

def reference_forward(params, obs):
    # Pure-JAX reference with the same bf16-operand / f32-accumulate numerics.
    batch_shape = obs.shape[:-3]
    c, h, w = obs.shape[-3:]
    x = obs.reshape((-1, c, h, w)).astype(jnp.float32)
    x = jnp.transpose(x, (0, 2, 3, 1))
    strides = [2] + [params["stride"]] * (params["num_layers"] - 1)
    for i, (wc, bc) in enumerate(params["convs"]):
        y = lax.conv_general_dilated(
            x.astype(jnp.bfloat16), wc.astype(jnp.bfloat16),
            (strides[i], strides[i]), "VALID",
            dimension_numbers=("NHWC", "HWIO", "NHWC"),
            preferred_element_type=jnp.float32)
        x = jnp.maximum(y + bc, 0.0)
    bsz = x.shape[0]
    flat = jnp.transpose(x, (0, 3, 1, 2)).reshape(bsz, -1)   # torch CHW flatten
    fc_b = params["fc_params"][0]
    ln_g = params["fc_params"][1]
    ln_b = params["fc_params"][2]
    y = jnp.dot(flat.astype(jnp.bfloat16),
                params["fc_w"].astype(jnp.bfloat16),
                preferred_element_type=jnp.float32) + fc_b
    mean = jnp.mean(y, axis=-1, keepdims=True)
    var = jnp.mean(jnp.square(y - mean), axis=-1, keepdims=True)
    yn = (y - mean) / jnp.sqrt(var + 1e-5)
    out = jnp.tanh(yn * ln_g + ln_b)
    return out.reshape(batch_shape + (params["feature_dim"],))


# -------------------------------- main ---------------------------------------

if __name__ == "__main__":
    key = jax.random.PRNGKey(0)
    pkey, okey = jax.random.split(key)
    params = init_params(pkey, depth=32, stride=1, shape=(3, 64, 64),
                         num_layers=2, feature_dim=50)
    # batch=2, 3x64x64 uint8-style images (float values in [0, 255))
    obs = jax.random.uniform(okey, (2, 3, 64, 64), jnp.float32, 0.0, 255.0)

    out = observation_encoder_forward(params, obs)
    out = jax.block_until_ready(out)
    assert out.shape == (2, 50), out.shape

    ref = reference_forward(params, obs)
    ref = jax.block_until_ready(ref)
    np.testing.assert_allclose(np.asarray(out), np.asarray(ref),
                               atol=5e-3, rtol=5e-3)
    print("KERNEL_OK")
</pallas_src>

<mosaic_0001>
module attributes {stable_mosaic.version = 11 : i64} {
  func.func @_fused_conv_kernel(%arg0: i32, %arg1: memref<2x27x1024xbf16, #tpu.memory_space<vmem>>, %arg2: memref<32x27xbf16, #tpu.memory_space<vmem>>, %arg3: memref<32x1xf32, #tpu.memory_space<vmem>>, %arg4: memref<9x32x32xbf16, #tpu.memory_space<vmem>>, %arg5: memref<32x1xf32, #tpu.memory_space<vmem>>, %arg6: memref<2x32x928xbf16, #tpu.memory_space<vmem>>, %arg7: memref<32x1024xbf16, #tpu.memory_space<vmem>>) attributes {dimension_semantics = [#tpu.dimension_semantics<parallel>], iteration_bounds = array<i64: 1>, scalar_prefetch = 0 : i64, scratch_operands = 1 : i64, tpu.core_type = #tpu.core_type<tc>, window_params = [{transform_indices = @transform_0, window_bounds = array<i64: 2, 27, 1024>}, {pipeline_mode = #tpu.pipeline_mode<synchronous>, transform_indices = @transform_1, window_bounds = array<i64: 32, 27>}, {pipeline_mode = #tpu.pipeline_mode<synchronous>, transform_indices = @transform_2, window_bounds = array<i64: 32, 1>}, {pipeline_mode = #tpu.pipeline_mode<synchronous>, transform_indices = @transform_3, window_bounds = array<i64: 9, 32, 32>}, {pipeline_mode = #tpu.pipeline_mode<synchronous>, transform_indices = @transform_4, window_bounds = array<i64: 32, 1>}, {transform_indices = @transform_5, window_bounds = array<i64: 2, 32, 928>}]} {
    %c0 = arith.constant 0 : index
    %c0_0 = arith.constant 0 : index
    %0 = vector.load %arg2[%c0, %c0_0] : memref<32x27xbf16, #tpu.memory_space<vmem>>, vector<32x27xbf16>
    %c0_1 = arith.constant 0 : index
    %c0_2 = arith.constant 0 : index
    %c0_3 = arith.constant 0 : index
    %1 = vector.load %arg1[%c0_1, %c0_2, %c0_3] : memref<2x27x1024xbf16, #tpu.memory_space<vmem>>, vector<1x27x1024xbf16>
    %2 = vector.shape_cast %1 : vector<1x27x1024xbf16> to vector<27x1024xbf16>
    %cst = arith.constant dense<0.000000e+00> : vector<32x1024xf32>
    %3 = tpu.matmul %0, %2, %cst {dimension_numbers = #tpu.dot_dimension_numbers<[1], [0], [0], [1], [0, 0, 1, 1], [], []>} : vector<32x27xbf16>, vector<27x1024xbf16>, vector<32x1024xf32> -> vector<32x1024xf32>
    %c0_4 = arith.constant 0 : index
    %c0_5 = arith.constant 0 : index
    %4 = vector.load %arg3[%c0_4, %c0_5] : memref<32x1xf32, #tpu.memory_space<vmem>>, vector<32x1xf32>
    %5 = vector.broadcast %4 : vector<32x1xf32> to vector<32x1024xf32>
    %6 = arith.addf %3, %5 : vector<32x1024xf32>
    %cst_6 = arith.constant 0.000000e+00 : f32
    %7 = vector.broadcast %cst_6 : f32 to vector<32x1024xf32>
    %8 = arith.maximumf %6, %7 : vector<32x1024xf32>
    %9 = arith.truncf %8 : vector<32x1024xf32> to vector<32x1024xbf16>
    %c0_7 = arith.constant 0 : index
    %c0_8 = arith.constant 0 : index
    %10 = vector.load %arg7[%c0_7, %c0_8] : memref<32x1024xbf16, #tpu.memory_space<vmem>>, vector<32x1024xbf16>
    tpu.vector_store %arg7[%c0_7, %c0_8], %9 {strides = array<i32>} : memref<32x1024xbf16, #tpu.memory_space<vmem>>, vector<32x1024xbf16>,
    %c0_9 = arith.constant 0 : index
    %c0_10 = arith.constant 0 : index
    %11 = vector.load %arg7[%c0_9, %c0_10] : memref<32x1024xbf16, #tpu.memory_space<vmem>>, vector<32x928xbf16>
    %c0_11 = arith.constant 0 : index
    %c0_12 = arith.constant 0 : index
    %c0_13 = arith.constant 0 : index
    %12 = vector.load %arg4[%c0_11, %c0_12, %c0_13] : memref<9x32x32xbf16, #tpu.memory_space<vmem>>, vector<1x32x32xbf16>
    %13 = vector.shape_cast %12 : vector<1x32x32xbf16> to vector<32x32xbf16>
    %cst_14 = arith.constant dense<0.000000e+00> : vector<32x928xf32>
    %14 = tpu.matmul %13, %11, %cst_14 {dimension_numbers = #tpu.dot_dimension_numbers<[1], [0], [0], [1], [0, 0, 1, 1], [], []>} : vector<32x32xbf16>, vector<32x928xbf16>, vector<32x928xf32> -> vector<32x928xf32>
    %c0_15 = arith.constant 0 : index
    %c1 = arith.constant 1 : index
    %15 = vector.load %arg7[%c0_15, %c1] : memref<32x1024xbf16, #tpu.memory_space<vmem>>, vector<32x928xbf16>
    %c1_16 = arith.constant 1 : index
    %c0_17 = arith.constant 0 : index
    %c0_18 = arith.constant 0 : index
    %16 = vector.load %arg4[%c1_16, %c0_17, %c0_18] : memref<9x32x32xbf16, #tpu.memory_space<vmem>>, vector<1x32x32xbf16>
    %17 = vector.shape_cast %16 : vector<1x32x32xbf16> to vector<32x32xbf16>
    %cst_19 = arith.constant dense<0.000000e+00> : vector<32x928xf32>
    %18 = tpu.matmul %17, %15, %cst_19 {dimension_numbers = #tpu.dot_dimension_numbers<[1], [0], [0], [1], [0, 0, 1, 1], [], []>} : vector<32x32xbf16>, vector<32x928xbf16>, vector<32x928xf32> -> vector<32x928xf32>
    %19 = arith.addf %14, %18 : vector<32x928xf32>
    %c0_20 = arith.constant 0 : index
    %c2 = arith.constant 2 : index
    %20 = vector.load %arg7[%c0_20, %c2] : memref<32x1024xbf16, #tpu.memory_space<vmem>>, vector<32x928xbf16>
    %c2_21 = arith.constant 2 : index
    %c0_22 = arith.constant 0 : index
    %c0_23 = arith.constant 0 : index
    %21 = vector.load %arg4[%c2_21, %c0_22, %c0_23] : memref<9x32x32xbf16, #tpu.memory_space<vmem>>, vector<1x32x32xbf16>
    %22 = vector.shape_cast %21 : vector<1x32x32xbf16> to vector<32x32xbf16>
    %cst_24 = arith.constant dense<0.000000e+00> : vector<32x928xf32>
    %23 = tpu.matmul %22, %20, %cst_24 {dimension_numbers = #tpu.dot_dimension_numbers<[1], [0], [0], [1], [0, 0, 1, 1], [], []>} : vector<32x32xbf16>, vector<32x928xbf16>, vector<32x928xf32> -> vector<32x928xf32>
    %24 = arith.addf %19, %23 : vector<32x928xf32>
    %c0_25 = arith.constant 0 : index
    %c32 = arith.constant 32 : index
    %25 = vector.load %arg7[%c0_25, %c32] : memref<32x1024xbf16, #tpu.memory_space<vmem>>, vector<32x928xbf16>
    %c3 = arith.constant 3 : index
    %c0_26 = arith.constant 0 : index
    %c0_27 = arith.constant 0 : index
    %26 = vector.load %arg4[%c3, %c0_26, %c0_27] : memref<9x32x32xbf16, #tpu.memory_space<vmem>>, vector<1x32x32xbf16>
    %27 = vector.shape_cast %26 : vector<1x32x32xbf16> to vector<32x32xbf16>
    %cst_28 = arith.constant dense<0.000000e+00> : vector<32x928xf32>
    %28 = tpu.matmul %27, %25, %cst_28 {dimension_numbers = #tpu.dot_dimension_numbers<[1], [0], [0], [1], [0, 0, 1, 1], [], []>} : vector<32x32xbf16>, vector<32x928xbf16>, vector<32x928xf32> -> vector<32x928xf32>
    %29 = arith.addf %24, %28 : vector<32x928xf32>
    %c0_29 = arith.constant 0 : index
    %c33 = arith.constant 33 : index
    %30 = vector.load %arg7[%c0_29, %c33] : memref<32x1024xbf16, #tpu.memory_space<vmem>>, vector<32x928xbf16>
    %c4 = arith.constant 4 : index
    %c0_30 = arith.constant 0 : index
    %c0_31 = arith.constant 0 : index
    %31 = vector.load %arg4[%c4, %c0_30, %c0_31] : memref<9x32x32xbf16, #tpu.memory_space<vmem>>, vector<1x32x32xbf16>
    %32 = vector.shape_cast %31 : vector<1x32x32xbf16> to vector<32x32xbf16>
    %cst_32 = arith.constant dense<0.000000e+00> : vector<32x928xf32>
    %33 = tpu.matmul %32, %30, %cst_32 {dimension_numbers = #tpu.dot_dimension_numbers<[1], [0], [0], [1], [0, 0, 1, 1], [], []>} : vector<32x32xbf16>, vector<32x928xbf16>, vector<32x928xf32> -> vector<32x928xf32>
    %34 = arith.addf %29, %33 : vector<32x928xf32>
    %c0_33 = arith.constant 0 : index
    %c34 = arith.constant 34 : index
    %35 = vector.load %arg7[%c0_33, %c34] : memref<32x1024xbf16, #tpu.memory_space<vmem>>, vector<32x928xbf16>
    %c5 = arith.constant 5 : index
    %c0_34 = arith.constant 0 : index
    %c0_35 = arith.constant 0 : index
    %36 = vector.load %arg4[%c5, %c0_34, %c0_35] : memref<9x32x32xbf16, #tpu.memory_space<vmem>>, vector<1x32x32xbf16>
    %37 = vector.shape_cast %36 : vector<1x32x32xbf16> to vector<32x32xbf16>
    %cst_36 = arith.constant dense<0.000000e+00> : vector<32x928xf32>
    %38 = tpu.matmul %37, %35, %cst_36 {dimension_numbers = #tpu.dot_dimension_numbers<[1], [0], [0], [1], [0, 0, 1, 1], [], []>} : vector<32x32xbf16>, vector<32x928xbf16>, vector<32x928xf32> -> vector<32x928xf32>
    %39 = arith.addf %34, %38 : vector<32x928xf32>
    %c0_37 = arith.constant 0 : index
    %c64 = arith.constant 64 : index
    %40 = vector.load %arg7[%c0_37, %c64] : memref<32x1024xbf16, #tpu.memory_space<vmem>>, vector<32x928xbf16>
    %c6 = arith.constant 6 : index
    %c0_38 = arith.constant 0 : index
    %c0_39 = arith.constant 0 : index
    %41 = vector.load %arg4[%c6, %c0_38, %c0_39] : memref<9x32x32xbf16, #tpu.memory_space<vmem>>, vector<1x32x32xbf16>
    %42 = vector.shape_cast %41 : vector<1x32x32xbf16> to vector<32x32xbf16>
    %cst_40 = arith.constant dense<0.000000e+00> : vector<32x928xf32>
    %43 = tpu.matmul %42, %40, %cst_40 {dimension_numbers = #tpu.dot_dimension_numbers<[1], [0], [0], [1], [0, 0, 1, 1], [], []>} : vector<32x32xbf16>, vector<32x928xbf16>, vector<32x928xf32> -> vector<32x928xf32>
    %44 = arith.addf %39, %43 : vector<32x928xf32>
    %c0_41 = arith.constant 0 : index
    %c65 = arith.constant 65 : index
    %45 = vector.load %arg7[%c0_41, %c65] : memref<32x1024xbf16, #tpu.memory_space<vmem>>, vector<32x928xbf16>
    %c7 = arith.constant 7 : index
    %c0_42 = arith.constant 0 : index
    %c0_43 = arith.constant 0 : index
    %46 = vector.load %arg4[%c7, %c0_42, %c0_43] : memref<9x32x32xbf16, #tpu.memory_space<vmem>>, vector<1x32x32xbf16>
    %47 = vector.shape_cast %46 : vector<1x32x32xbf16> to vector<32x32xbf16>
    %cst_44 = arith.constant dense<0.000000e+00> : vector<32x928xf32>
    %48 = tpu.matmul %47, %45, %cst_44 {dimension_numbers = #tpu.dot_dimension_numbers<[1], [0], [0], [1], [0, 0, 1, 1], [], []>} : vector<32x32xbf16>, vector<32x928xbf16>, vector<32x928xf32> -> vector<32x928xf32>
    %49 = arith.addf %44, %48 : vector<32x928xf32>
    %c0_45 = arith.constant 0 : index
    %c66 = arith.constant 66 : index
    %50 = vector.load %arg7[%c0_45, %c66] : memref<32x1024xbf16, #tpu.memory_space<vmem>>, vector<32x928xbf16>
    %c8 = arith.constant 8 : index
    %c0_46 = arith.constant 0 : index
    %c0_47 = arith.constant 0 : index
    %51 = vector.load %arg4[%c8, %c0_46, %c0_47] : memref<9x32x32xbf16, #tpu.memory_space<vmem>>, vector<1x32x32xbf16>
    %52 = vector.shape_cast %51 : vector<1x32x32xbf16> to vector<32x32xbf16>
    %cst_48 = arith.constant dense<0.000000e+00> : vector<32x928xf32>
    %53 = tpu.matmul %52, %50, %cst_48 {dimension_numbers = #tpu.dot_dimension_numbers<[1], [0], [0], [1], [0, 0, 1, 1], [], []>} : vector<32x32xbf16>, vector<32x928xbf16>, vector<32x928xf32> -> vector<32x928xf32>
    %54 = arith.addf %49, %53 : vector<32x928xf32>
    %c0_49 = arith.constant 0 : index
    %c0_50 = arith.constant 0 : index
    %55 = vector.load %arg5[%c0_49, %c0_50] : memref<32x1xf32, #tpu.memory_space<vmem>>, vector<32x1xf32>
    %56 = vector.broadcast %55 : vector<32x1xf32> to vector<32x928xf32>
    %57 = arith.addf %54, %56 : vector<32x928xf32>
    %cst_51 = arith.constant 0.000000e+00 : f32
    %58 = vector.broadcast %cst_51 : f32 to vector<32x928xf32>
    %59 = arith.maximumf %57, %58 : vector<32x928xf32>
    %60 = arith.truncf %59 : vector<32x928xf32> to vector<32x928xbf16>
    %c0_52 = arith.constant 0 : index
    %c0_53 = arith.constant 0 : index
    %c0_54 = arith.constant 0 : index
    %61 = vector.load %arg6[%c0_52, %c0_53, %c0_54] : memref<2x32x928xbf16, #tpu.memory_space<vmem>>, vector<1x32x928xbf16>
    %62 = vector.shape_cast %61 : vector<1x32x928xbf16> to vector<32x928xbf16>
    %63 = vector.shape_cast %60 : vector<32x928xbf16> to vector<1x32x928xbf16>
    tpu.vector_store %arg6[%c0_52, %c0_53, %c0_54], %63 {strides = array<i32>} : memref<2x32x928xbf16, #tpu.memory_space<vmem>>, vector<1x32x928xbf16>,
    %c0_55 = arith.constant 0 : index
    %c0_56 = arith.constant 0 : index
    %64 = vector.load %arg2[%c0_55, %c0_56] : memref<32x27xbf16, #tpu.memory_space<vmem>>, vector<32x27xbf16>
    %c1_57 = arith.constant 1 : index
    %c0_58 = arith.constant 0 : index
    %c0_59 = arith.constant 0 : index
    %65 = vector.load %arg1[%c1_57, %c0_58, %c0_59] : memref<2x27x1024xbf16, #tpu.memory_space<vmem>>, vector<1x27x1024xbf16>
    %66 = vector.shape_cast %65 : vector<1x27x1024xbf16> to vector<27x1024xbf16>
    %cst_60 = arith.constant dense<0.000000e+00> : vector<32x1024xf32>
    %67 = tpu.matmul %64, %66, %cst_60 {dimension_numbers = #tpu.dot_dimension_numbers<[1], [0], [0], [1], [0, 0, 1, 1], [], []>} : vector<32x27xbf16>, vector<27x1024xbf16>, vector<32x1024xf32> -> vector<32x1024xf32>
    %c0_61 = arith.constant 0 : index
    %c0_62 = arith.constant 0 : index
    %68 = vector.load %arg3[%c0_61, %c0_62] : memref<32x1xf32, #tpu.memory_space<vmem>>, vector<32x1xf32>
    %69 = vector.broadcast %68 : vector<32x1xf32> to vector<32x1024xf32>
    %70 = arith.addf %67, %69 : vector<32x1024xf32>
    %cst_63 = arith.constant 0.000000e+00 : f32
    %71 = vector.broadcast %cst_63 : f32 to vector<32x1024xf32>
    %72 = arith.maximumf %70, %71 : vector<32x1024xf32>
    %73 = arith.truncf %72 : vector<32x1024xf32> to vector<32x1024xbf16>
    %c0_64 = arith.constant 0 : index
    %c0_65 = arith.constant 0 : index
    %74 = vector.load %arg7[%c0_64, %c0_65] : memref<32x1024xbf16, #tpu.memory_space<vmem>>, vector<32x1024xbf16>
    tpu.vector_store %arg7[%c0_64, %c0_65], %73 {strides = array<i32>} : memref<32x1024xbf16, #tpu.memory_space<vmem>>, vector<32x1024xbf16>,
    %c0_66 = arith.constant 0 : index
    %c0_67 = arith.constant 0 : index
    %75 = vector.load %arg7[%c0_66, %c0_67] : memref<32x1024xbf16, #tpu.memory_space<vmem>>, vector<32x928xbf16>
    %c0_68 = arith.constant 0 : index
    %c0_69 = arith.constant 0 : index
    %c0_70 = arith.constant 0 : index
    %76 = vector.load %arg4[%c0_68, %c0_69, %c0_70] : memref<9x32x32xbf16, #tpu.memory_space<vmem>>, vector<1x32x32xbf16>
    %77 = vector.shape_cast %76 : vector<1x32x32xbf16> to vector<32x32xbf16>
    %cst_71 = arith.constant dense<0.000000e+00> : vector<32x928xf32>
    %78 = tpu.matmul %77, %75, %cst_71 {dimension_numbers = #tpu.dot_dimension_numbers<[1], [0], [0], [1], [0, 0, 1, 1], [], []>} : vector<32x32xbf16>, vector<32x928xbf16>, vector<32x928xf32> -> vector<32x928xf32>
    %c0_72 = arith.constant 0 : index
    %c1_73 = arith.constant 1 : index
    %79 = vector.load %arg7[%c0_72, %c1_73] : memref<32x1024xbf16, #tpu.memory_space<vmem>>, vector<32x928xbf16>
    %c1_74 = arith.constant 1 : index
    %c0_75 = arith.constant 0 : index
    %c0_76 = arith.constant 0 : index
    %80 = vector.load %arg4[%c1_74, %c0_75, %c0_76] : memref<9x32x32xbf16, #tpu.memory_space<vmem>>, vector<1x32x32xbf16>
    %81 = vector.shape_cast %80 : vector<1x32x32xbf16> to vector<32x32xbf16>
    %cst_77 = arith.constant dense<0.000000e+00> : vector<32x928xf32>
    %82 = tpu.matmul %81, %79, %cst_77 {dimension_numbers = #tpu.dot_dimension_numbers<[1], [0], [0], [1], [0, 0, 1, 1], [], []>} : vector<32x32xbf16>, vector<32x928xbf16>, vector<32x928xf32> -> vector<32x928xf32>
    %83 = arith.addf %78, %82 : vector<32x928xf32>
    %c0_78 = arith.constant 0 : index
    %c2_79 = arith.constant 2 : index
    %84 = vector.load %arg7[%c0_78, %c2_79] : memref<32x1024xbf16, #tpu.memory_space<vmem>>, vector<32x928xbf16>
    %c2_80 = arith.constant 2 : index
    %c0_81 = arith.constant 0 : index
    %c0_82 = arith.constant 0 : index
    %85 = vector.load %arg4[%c2_80, %c0_81, %c0_82] : memref<9x32x32xbf16, #tpu.memory_space<vmem>>, vector<1x32x32xbf16>
    %86 = vector.shape_cast %85 : vector<1x32x32xbf16> to vector<32x32xbf16>
    %cst_83 = arith.constant dense<0.000000e+00> : vector<32x928xf32>
    %87 = tpu.matmul %86, %84, %cst_83 {dimension_numbers = #tpu.dot_dimension_numbers<[1], [0], [0], [1], [0, 0, 1, 1], [], []>} : vector<32x32xbf16>, vector<32x928xbf16>, vector<32x928xf32> -> vector<32x928xf32>
    %88 = arith.addf %83, %87 : vector<32x928xf32>
    %c0_84 = arith.constant 0 : index
    %c32_85 = arith.constant 32 : index
    %89 = vector.load %arg7[%c0_84, %c32_85] : memref<32x1024xbf16, #tpu.memory_space<vmem>>, vector<32x928xbf16>
    %c3_86 = arith.constant 3 : index
    %c0_87 = arith.constant 0 : index
    %c0_88 = arith.constant 0 : index
    %90 = vector.load %arg4[%c3_86, %c0_87, %c0_88] : memref<9x32x32xbf16, #tpu.memory_space<vmem>>, vector<1x32x32xbf16>
    %91 = vector.shape_cast %90 : vector<1x32x32xbf16> to vector<32x32xbf16>
    %cst_89 = arith.constant dense<0.000000e+00> : vector<32x928xf32>
    %92 = tpu.matmul %91, %89, %cst_89 {dimension_numbers = #tpu.dot_dimension_numbers<[1], [0], [0], [1], [0, 0, 1, 1], [], []>} : vector<32x32xbf16>, vector<32x928xbf16>, vector<32x928xf32> -> vector<32x928xf32>
    %93 = arith.addf %88, %92 : vector<32x928xf32>
    %c0_90 = arith.constant 0 : index
    %c33_91 = arith.constant 33 : index
    %94 = vector.load %arg7[%c0_90, %c33_91] : memref<32x1024xbf16, #tpu.memory_space<vmem>>, vector<32x928xbf16>
    %c4_92 = arith.constant 4 : index
    %c0_93 = arith.constant 0 : index
    %c0_94 = arith.constant 0 : index
    %95 = vector.load %arg4[%c4_92, %c0_93, %c0_94] : memref<9x32x32xbf16, #tpu.memory_space<vmem>>, vector<1x32x32xbf16>
    %96 = vector.shape_cast %95 : vector<1x32x32xbf16> to vector<32x32xbf16>
    %cst_95 = arith.constant dense<0.000000e+00> : vector<32x928xf32>
    %97 = tpu.matmul %96, %94, %cst_95 {dimension_numbers = #tpu.dot_dimension_numbers<[1], [0], [0], [1], [0, 0, 1, 1], [], []>} : vector<32x32xbf16>, vector<32x928xbf16>, vector<32x928xf32> -> vector<32x928xf32>
    %98 = arith.addf %93, %97 : vector<32x928xf32>
    %c0_96 = arith.constant 0 : index
    %c34_97 = arith.constant 34 : index
    %99 = vector.load %arg7[%c0_96, %c34_97] : memref<32x1024xbf16, #tpu.memory_space<vmem>>, vector<32x928xbf16>
    %c5_98 = arith.constant 5 : index
    %c0_99 = arith.constant 0 : index
    %c0_100 = arith.constant 0 : index
    %100 = vector.load %arg4[%c5_98, %c0_99, %c0_100] : memref<9x32x32xbf16, #tpu.memory_space<vmem>>, vector<1x32x32xbf16>
    %101 = vector.shape_cast %100 : vector<1x32x32xbf16> to vector<32x32xbf16>
    %cst_101 = arith.constant dense<0.000000e+00> : vector<32x928xf32>
    %102 = tpu.matmul %101, %99, %cst_101 {dimension_numbers = #tpu.dot_dimension_numbers<[1], [0], [0], [1], [0, 0, 1, 1], [], []>} : vector<32x32xbf16>, vector<32x928xbf16>, vector<32x928xf32> -> vector<32x928xf32>
    %103 = arith.addf %98, %102 : vector<32x928xf32>
    %c0_102 = arith.constant 0 : index
    %c64_103 = arith.constant 64 : index
    %104 = vector.load %arg7[%c0_102, %c64_103] : memref<32x1024xbf16, #tpu.memory_space<vmem>>, vector<32x928xbf16>
    %c6_104 = arith.constant 6 : index
    %c0_105 = arith.constant 0 : index
    %c0_106 = arith.constant 0 : index
    %105 = vector.load %arg4[%c6_104, %c0_105, %c0_106] : memref<9x32x32xbf16, #tpu.memory_space<vmem>>, vector<1x32x32xbf16>
    %106 = vector.shape_cast %105 : vector<1x32x32xbf16> to vector<32x32xbf16>
    %cst_107 = arith.constant dense<0.000000e+00> : vector<32x928xf32>
    %107 = tpu.matmul %106, %104, %cst_107 {dimension_numbers = #tpu.dot_dimension_numbers<[1], [0], [0], [1], [0, 0, 1, 1], [], []>} : vector<32x32xbf16>, vector<32x928xbf16>, vector<32x928xf32> -> vector<32x928xf32>
    %108 = arith.addf %103, %107 : vector<32x928xf32>
    %c0_108 = arith.constant 0 : index
    %c65_109 = arith.constant 65 : index
    %109 = vector.load %arg7[%c0_108, %c65_109] : memref<32x1024xbf16, #tpu.memory_space<vmem>>, vector<32x928xbf16>
    %c7_110 = arith.constant 7 : index
    %c0_111 = arith.constant 0 : index
    %c0_112 = arith.constant 0 : index
    %110 = vector.load %arg4[%c7_110, %c0_111, %c0_112] : memref<9x32x32xbf16, #tpu.memory_space<vmem>>, vector<1x32x32xbf16>
    %111 = vector.shape_cast %110 : vector<1x32x32xbf16> to vector<32x32xbf16>
    %cst_113 = arith.constant dense<0.000000e+00> : vector<32x928xf32>
    %112 = tpu.matmul %111, %109, %cst_113 {dimension_numbers = #tpu.dot_dimension_numbers<[1], [0], [0], [1], [0, 0, 1, 1], [], []>} : vector<32x32xbf16>, vector<32x928xbf16>, vector<32x928xf32> -> vector<32x928xf32>
    %113 = arith.addf %108, %112 : vector<32x928xf32>
    %c0_114 = arith.constant 0 : index
    %c66_115 = arith.constant 66 : index
    %114 = vector.load %arg7[%c0_114, %c66_115] : memref<32x1024xbf16, #tpu.memory_space<vmem>>, vector<32x928xbf16>
    %c8_116 = arith.constant 8 : index
    %c0_117 = arith.constant 0 : index
    %c0_118 = arith.constant 0 : index
    %115 = vector.load %arg4[%c8_116, %c0_117, %c0_118] : memref<9x32x32xbf16, #tpu.memory_space<vmem>>, vector<1x32x32xbf16>
    %116 = vector.shape_cast %115 : vector<1x32x32xbf16> to vector<32x32xbf16>
    %cst_119 = arith.constant dense<0.000000e+00> : vector<32x928xf32>
    %117 = tpu.matmul %116, %114, %cst_119 {dimension_numbers = #tpu.dot_dimension_numbers<[1], [0], [0], [1], [0, 0, 1, 1], [], []>} : vector<32x32xbf16>, vector<32x928xbf16>, vector<32x928xf32> -> vector<32x928xf32>
    %118 = arith.addf %113, %117 : vector<32x928xf32>
    %c0_120 = arith.constant 0 : index
    %c0_121 = arith.constant 0 : index
    %119 = vector.load %arg5[%c0_120, %c0_121] : memref<32x1xf32, #tpu.memory_space<vmem>>, vector<32x1xf32>
    %120 = vector.broadcast %119 : vector<32x1xf32> to vector<32x928xf32>
    %121 = arith.addf %118, %120 : vector<32x928xf32>
    %cst_122 = arith.constant 0.000000e+00 : f32
    %122 = vector.broadcast %cst_122 : f32 to vector<32x928xf32>
    %123 = arith.maximumf %121, %122 : vector<32x928xf32>
    %124 = arith.truncf %123 : vector<32x928xf32> to vector<32x928xbf16>
    %c1_123 = arith.constant 1 : index
    %c0_124 = arith.constant 0 : index
    %c0_125 = arith.constant 0 : index
    %125 = vector.load %arg6[%c1_123, %c0_124, %c0_125] : memref<2x32x928xbf16, #tpu.memory_space<vmem>>, vector<1x32x928xbf16>
    %126 = vector.shape_cast %125 : vector<1x32x928xbf16> to vector<32x928xbf16>
    %127 = vector.shape_cast %124 : vector<32x928xbf16> to vector<1x32x928xbf16>
    tpu.vector_store %arg6[%c1_123, %c0_124, %c0_125], %127 {strides = array<i32>} : memref<2x32x928xbf16, #tpu.memory_space<vmem>>, vector<1x32x928xbf16>,
    return
  }
  func.func @transform_0(%arg0: i32) -> (i32, i32, i32) {
    %c0_i32 = arith.constant 0 : i32
    %c0_i32_0 = arith.constant 0 : i32
    %c0_i32_1 = arith.constant 0 : i32
    return %arg0, %c0_i32, %c0_i32_0 : i32, i32, i32
  }
  func.func @transform_1(%arg0: i32) -> (i32, i32) {
    %c0_i32 = arith.constant 0 : i32
    %c0_i32_0 = arith.constant 0 : i32
    %c0_i32_1 = arith.constant 0 : i32
    return %c0_i32, %c0_i32_0 : i32, i32
  }
  func.func @transform_2(%arg0: i32) -> (i32, i32) {
    %c0_i32 = arith.constant 0 : i32
    %c0_i32_0 = arith.constant 0 : i32
    %c0_i32_1 = arith.constant 0 : i32
    return %c0_i32, %c0_i32_0 : i32, i32
  }
  func.func @transform_3(%arg0: i32) -> (i32, i32, i32) {
    %c0_i32 = arith.constant 0 : i32
    %c0_i32_0 = arith.constant 0 : i32
    %c0_i32_1 = arith.constant 0 : i32
    %c0_i32_2 = arith.constant 0 : i32
    return %c0_i32, %c0_i32_0, %c0_i32_1 : i32, i32, i32
  }
  func.func @transform_4(%arg0: i32) -> (i32, i32) {
    %c0_i32 = arith.constant 0 : i32
    %c0_i32_0 = arith.constant 0 : i32
    %c0_i32_1 = arith.constant 0 : i32
    return %c0_i32, %c0_i32_0 : i32, i32
  }
  func.func @transform_5(%arg0: i32) -> (i32, i32, i32) {
    %c0_i32 = arith.constant 0 : i32
    %c0_i32_0 = arith.constant 0 : i32
    %c0_i32_1 = arith.constant 0 : i32
    return %arg0, %c0_i32, %c0_i32_0 : i32, i32, i32
  }
}

</mosaic_0001>

<llo_original>
// kernel: tpu_custom_call.1
$region0: #{tpu_custom_call.1}
  #allocation0 [shape = 'u32[]', space=smem, size = 0x4, offset = 0x4, fixed_abs, tag = 'smem constant byte address 0x4 - core index']
  #allocation1 [shape = 'u32[144,128]{1,0:T(1,128)}', space=vmem, size = 0x12000, scoped, tag = 'internal scratch']
  #allocation2 [shape = 'bf16[32,1024]{1,0:T(16,128)(2,1)}', space=vmem, size = 0x10000, scoped, tag = 'scratch operand']
  %s0 = inlined_call_operand.vmem [shape: bf16[2,27,1024], index: 0, kind: input, shape index: {}]
  %s1 = inlined_call_operand.vmem [shape: bf16[32,27], index: 1, kind: input, shape index: {}]
  %s2 = inlined_call_operand.vmem [shape: f32[32,1], index: 2, kind: input, shape index: {}]
  %s3 = inlined_call_operand.vmem [shape: bf16[9,32,32], index: 3, kind: input, shape index: {}]
  %s4 = inlined_call_operand.vmem [shape: f32[32,1], index: 4, kind: input, shape index: {}]
  %s5 = inlined_call_operand.hbm [shape: bf16[2,32,928], index: 5, kind: output, shape index: {}]
  %s6 = sld [smem:[#allocation0]]
  $region30: #{tpu_custom_call.1} parent=0
    _
  %s8 = ssub.s32 1, %s6
  %s9 = scalar_select 0, %s8, %s6
  $region1: #{tpu_custom_call.1} parent=0
    #allocation3 [shape = 'u8[131072]{0}', space=vmem, size = 0x20000, scoped, tag = 'output window, operand 0, single buffered']
    #allocation4 [shape = 's32[1]{0}', space=sflag, size = 0x4, scoped, tag = 'scoped memory for tpu_custom_call.1']
    %10 = vsyncpa [#allocation4], 0
    // Predicated region
    $region2: #{tpu_custom_call.1} parent=1 // pred_check
      _
    $region3: #{tpu_custom_call.1} parent=1 // pred_check_branch
      %12 = sbr.rel (0) target = $region5
    $region4: #{tpu_custom_call.1} parent=1 // pred_region
      _
    $region5: #{tpu_custom_call.1} parent=1 // pred_fallthru
      _
    // Predicated region
    $region6: #{tpu_custom_call.1} parent=1 // pred_check
      _
    $region7: #{tpu_custom_call.1} parent=1 // pred_check_branch
      %14 = sbr.rel (0) target = $region9
    $region8: #{tpu_custom_call.1} parent=1 // pred_region
      _
    $region9: #{tpu_custom_call.1} parent=1 // pred_fallthru
      _
    // Predicated region
    $region10: #{tpu_custom_call.1} parent=1 // pred_check
      _
    $region11: #{tpu_custom_call.1} parent=1 // pred_check_branch
      %16 = sbr.rel (0) target = $region13
    $region12: #{tpu_custom_call.1} parent=1 // pred_region
      _
    $region13: #{tpu_custom_call.1} parent=1 // pred_fallthru
      _
    // Predicated region
    $region14: #{tpu_custom_call.1} parent=1 // pred_check
      _
    $region15: #{tpu_custom_call.1} parent=1 // pred_check_branch
      %18 = sbr.rel (0) target = $region17
    $region16: #{tpu_custom_call.1} parent=1 // pred_region
      _
    $region17: #{tpu_custom_call.1} parent=1 // pred_fallthru
      _
    // Predicated region
    $region18: #{tpu_custom_call.1} parent=1 // pred_check
      _
    $region19: #{tpu_custom_call.1} parent=1 // pred_check_branch
      %20 = sbr.rel (0) target = $region21
    $region20: #{tpu_custom_call.1} parent=1 // pred_region
      _
    $region21: #{tpu_custom_call.1} parent=1 // pred_fallthru
      _
    %v22 = vld [vmem:[%s1] sm:$0xf]
    %v23 = vld [vmem:[%s1 + $0x4] sm:$0xf]
    %v24 = vld [vmem:[%s1 + $0x8] sm:$0xf]
    %v25 = vld [vmem:[%s1 + $0xc] sm:$0xf]
    %v26 = vld [vmem:[%s0] sm:$0xff]
    %v27 = vld [vmem:[%s0 + $0x8] sm:$0xff]
    %v28 = vld [vmem:[%s0 + $0x10] sm:$0xff]
    %v29 = vld [vmem:[%s0 + $0x18] sm:$0xff]
    %v30 = vld [vmem:[%s0 + $0x20] sm:$0xff]
    %v31 = vld [vmem:[%s0 + $0x28] sm:$0xff]
    %v32 = vld [vmem:[%s0 + $0x30] sm:$0xff]
    %v33 = vld [vmem:[%s0 + $0x38] sm:$0xff]
    %v34 = vld [vmem:[%s0 + $0x40] sm:$0xff]
    %v35 = vld [vmem:[%s0 + $0x48] sm:$0xff]
    %v36 = vld [vmem:[%s0 + $0x50] sm:$0xff]
    %v37 = vld [vmem:[%s0 + $0x58] sm:$0xff]
    %v38 = vld [vmem:[%s0 + $0x60] sm:$0x33]
    %v39 = vld [vmem:[%s0 + $0x68] sm:$0x33]
    %v40 = vld [vmem:[%s0 + $0x70] sm:$0x33]
    %v41 = vld [vmem:[%s0 + $0x78] sm:$0x33]
    %v42 = vld [vmem:[%s2] sm:$0xff]
    %v43 = vld [vmem:[%s2 + $0x8] sm:$0xff]
    %v44 = vld [vmem:[%s2 + $0x10] sm:$0xff]
    %v45 = vld [vmem:[%s2 + $0x18] sm:$0xff]
    %47 = vset.pattern.permute.xlu0 0
    %48 = vperm.xlu0 %47, %v42
    %v49 = vpop.permute.xlu0 %48
    %52 = vset.pattern.permute.xlu0 0
    %53 = vperm.xlu0 %52, %v43
    %v54 = vpop.permute.xlu0 %53
    %57 = vset.pattern.permute.xlu0 0
    %58 = vperm.xlu0 %57, %v44
    %v59 = vpop.permute.xlu0 %58
    %62 = vset.pattern.permute.xlu0 0
    %63 = vperm.xlu0 %62, %v45
    %v64 = vpop.permute.xlu0 %63
    %v70 = vunpack.c.l.b16 %v22
    %v71 = vunpack.c.l.b16 %v23
    %v72 = vunpack.c.l.b16 %v24
    %v73 = vunpack.c.l.b16 %v25
    %v74 = vpack.c.b16 %v71, %v70
    %v75 = vpack.c.b16 %v73, %v72
    %v92 = vunpack.c.l.b16 %v26
    %v93 = vunpack.c.h.b16 %v26
    %v94 = vunpack.c.l.b16 %v27
    %v95 = vunpack.c.h.b16 %v27
    %v96 = vunpack.c.l.b16 %v28
    %v97 = vunpack.c.h.b16 %v28
    %v98 = vunpack.c.l.b16 %v29
    %v99 = vunpack.c.h.b16 %v29
    %v100 = vunpack.c.l.b16 %v30
    %v101 = vunpack.c.h.b16 %v30
    %v102 = vunpack.c.l.b16 %v31
    %v103 = vunpack.c.h.b16 %v31
    %v104 = vunpack.c.l.b16 %v32
    %v105 = vunpack.c.h.b16 %v32
    %v106 = vunpack.c.l.b16 %v33
    %v107 = vunpack.c.h.b16 %v33
    %v108 = vunpack.c.l.b16 %v34
    %v109 = vunpack.c.h.b16 %v34
    %v110 = vunpack.c.l.b16 %v35
    %v111 = vunpack.c.h.b16 %v35
    %v112 = vunpack.c.l.b16 %v36
    %v113 = vunpack.c.h.b16 %v36
    %v114 = vunpack.c.l.b16 %v37
    %v115 = vunpack.c.h.b16 %v37
    %v116 = vunpack.c.l.b16 %v38
    %v117 = vunpack.c.h.b16 %v38
    %v118 = vunpack.c.l.b16 %v39
    %v119 = vunpack.c.h.b16 %v39
    %v120 = vunpack.c.l.b16 %v40
    %v121 = vunpack.c.h.b16 %v40
    %v122 = vunpack.c.l.b16 %v41
    %v123 = vunpack.c.h.b16 %v41
    %v124 = vpack.c.b16 %v100, %v92
    %v125 = vpack.c.b16 %v101, %v93
    %v126 = vpack.c.b16 %v102, %v94
    %v127 = vpack.c.b16 %v103, %v95
    %v128 = vpack.c.b16 %v104, %v96
    %v129 = vpack.c.b16 %v105, %v97
    %v130 = vpack.c.b16 %v106, %v98
    %v131 = vpack.c.b16 %v107, %v99
    %v132 = vpack.c.b16 %v116, %v108
    %v133 = vpack.c.b16 %v117, %v109
    %v134 = vpack.c.b16 %v118, %v110
    %v135 = vpack.c.b16 %v119, %v111
    %v136 = vpack.c.b16 %v120, %v112
    %v137 = vpack.c.b16 %v121, %v113
    %v138 = vpack.c.b16 %v122, %v114
    %v139 = vpack.c.b16 %v123, %v115
    %vm148 = vcmask 220160
    %v150 = vsel %vm148, %v74, 0
    %v153 = vsel %vm148, %v75, 0
    %vm155 = vcmask 1044480
    %vm156 = vcmask 1045504
    %v157 = vsel %vm155, 4294967295, 65535
    %v158 = vsel %vm156, %v157, 0
    %v160 = vand.u32 %v132, %v158
    %v163 = vand.u32 %v133, %v158
    %v166 = vand.u32 %v134, %v158
    %v169 = vand.u32 %v135, %v158
    %v172 = vand.u32 %v136, %v158
    %v175 = vand.u32 %v137, %v158
    %v178 = vand.u32 %v138, %v158
    %v181 = vand.u32 %v139, %v158
    %183 = vmatprep.subr.bf16.mxu0 %v125
    %184 = vmatpush1.bf16.msra.mxu0 %v124
    %185 = vmatprep.subr.bf16.mxu0 %v163
    %186 = vmatpush1.bf16.msra.mxu0 %v160
    %187 = vmatprep.subr.bf16.mxu0 0
    %188 = vmatpush1.bf16.msra.mxu0 0
    %189 = vmatprep.subr.bf16.mxu0 0
    %190 = vmatpush1.bf16.msra.mxu0 0
    %191 = vmatprep.subr.bf16.mxu0 0
    %192 = vmatpush1.bf16.msra.mxu0 0
    %193 = vmatprep.subr.bf16.mxu0 0
    %194 = vmatpush1.bf16.msra.mxu0 0
    %195 = vmatprep.subr.bf16.mxu0 0
    %196 = vmatpush1.bf16.msra.mxu0 0
    %197 = vmatprep.subr.bf16.mxu0 0
    %198 = vmatpush1.bf16.msra.mxu0 0
    %199 = vmatprep.subr.bf16.mxu0 0
    %200 = vmatpush1.bf16.msra.mxu0 0
    %201 = vmatprep.subr.bf16.mxu0 0
    %202 = vmatpush1.bf16.msra.mxu0 0
    %203 = vmatprep.subr.bf16.mxu0 0
    %204 = vmatpush1.bf16.msra.mxu0 0
    %205 = vmatprep.subr.bf16.mxu0 0
    %206 = vmatpush1.bf16.msra.mxu0 0
    %207 = vmatprep.subr.bf16.mxu0 0
    %208 = vmatpush1.bf16.msra.mxu0 0
    %209 = vmatprep.subr.bf16.mxu0 0
    %210 = vmatpush1.bf16.msra.mxu0 0
    %211 = vmatprep.subr.bf16.mxu0 0
    %212 = vmatpush1.bf16.msra.mxu0 0
    %213 = vmatprep.subr.bf16.mxu0 0
    %214 = vmatpush1.bf16.msra.mxu0 0
    %215 = vmatprep.mubr.bf16.mxu0 0
    %216 = vmatmul.mubr.bf16.gmra.mrb[0].mxu0 %v150
    %v217 = vpop.f32.mrb[0].mxu0
    %v218 = vadd.f32 %v49, %v217
    %v219 = vpop.f32.mrb[0].mxu0
    %v220 = vadd.f32 %v49, %v219
    %v221 = vpop.f32.mrb[0].mxu0
    %v222 = vadd.f32 %v54, %v221
    %v223 = vpop.f32.mrb[0].mxu0
    %v224 = vadd.f32 %v54, %v223
    %225 = vmatprep.mubr.bf16.mxu0 0
    %226 = vmatmul.mubr.bf16.gmra.mrb[0].mxu0 %v153
    %v227 = vpop.f32.mrb[0].mxu0
    %v228 = vadd.f32 %v59, %v227
    %v229 = vpop.f32.mrb[0].mxu0
    %v230 = vadd.f32 %v59, %v229
    %v231 = vpop.f32.mrb[0].mxu0
    %v232 = vadd.f32 %v64, %v231
    %v233 = vpop.f32.mrb[0].mxu0
    %v234 = vadd.f32 %v64, %v233
    %235 = vdwg.mxu0
    %236 = vmatprep.subr.bf16.mxu0 %v127
    %237 = vmatpush1.bf16.msra.mxu0 %v126
    %238 = vmatprep.subr.bf16.mxu0 %v169
    %239 = vmatpush1.bf16.msra.mxu0 %v166
    %240 = vmatprep.subr.bf16.mxu0 0
    %241 = vmatpush1.bf16.msra.mxu0 0
    %242 = vmatprep.subr.bf16.mxu0 0
    %243 = vmatpush1.bf16.msra.mxu0 0
    %244 = vmatprep.subr.bf16.mxu0 0
    %245 = vmatpush1.bf16.msra.mxu0 0
    %246 = vmatprep.subr.bf16.mxu0 0
    %247 = vmatpush1.bf16.msra.mxu0 0
    %248 = vmatprep.subr.bf16.mxu0 0
    %249 = vmatpush1.bf16.msra.mxu0 0
    %250 = vmatprep.subr.bf16.mxu0 0
    %251 = vmatpush1.bf16.msra.mxu0 0
    %252 = vmatprep.subr.bf16.mxu0 0
    %253 = vmatpush1.bf16.msra.mxu0 0
    %254 = vmatprep.subr.bf16.mxu0 0
    %255 = vmatpush1.bf16.msra.mxu0 0
    %256 = vmatprep.subr.bf16.mxu0 0
    %257 = vmatpush1.bf16.msra.mxu0 0
    %258 = vmatprep.subr.bf16.mxu0 0
    %259 = vmatpush1.bf16.msra.mxu0 0
    %260 = vmatprep.subr.bf16.mxu0 0
    %261 = vmatpush1.bf16.msra.mxu0 0
    %262 = vmatprep.subr.bf16.mxu0 0
    %263 = vmatpush1.bf16.msra.mxu0 0
    %264 = vmatprep.subr.bf16.mxu0 0
    %265 = vmatpush1.bf16.msra.mxu0 0
    %266 = vmatprep.subr.bf16.mxu0 0
    %267 = vmatpush1.bf16.msra.mxu0 0
    %268 = vmatprep.mubr.bf16.mxu0 0
    %269 = vmatmul.mubr.bf16.gmra.mrb[0].mxu0 %v150
    %v270 = vpop.f32.mrb[0].mxu0
    %v271 = vadd.f32 %v49, %v270
    %v272 = vpop.f32.mrb[0].mxu0
    %v273 = vadd.f32 %v49, %v272
    %v274 = vpop.f32.mrb[0].mxu0
    %v275 = vadd.f32 %v54, %v274
    %v276 = vpop.f32.mrb[0].mxu0
    %v277 = vadd.f32 %v54, %v276
    %278 = vmatprep.mubr.bf16.mxu0 0
    %279 = vmatmul.mubr.bf16.gmra.mrb[0].mxu0 %v153
    %v280 = vpop.f32.mrb[0].mxu0
    %v281 = vadd.f32 %v59, %v280
    %v282 = vpop.f32.mrb[0].mxu0
    %v283 = vadd.f32 %v59, %v282
    %v284 = vpop.f32.mrb[0].mxu0
    %v285 = vadd.f32 %v64, %v284
    %v286 = vpop.f32.mrb[0].mxu0
    %v287 = vadd.f32 %v64, %v286
    %288 = vdwg.mxu0
    %289 = vmatprep.subr.bf16.mxu0 %v129
    %290 = vmatpush1.bf16.msra.mxu0 %v128
    %291 = vmatprep.subr.bf16.mxu0 %v175
    %292 = vmatpush1.bf16.msra.mxu0 %v172
    %293 = vmatprep.subr.bf16.mxu0 0
    %294 = vmatpush1.bf16.msra.mxu0 0
    %295 = vmatprep.subr.bf16.mxu0 0
    %296 = vmatpush1.bf16.msra.mxu0 0
    %297 = vmatprep.subr.bf16.mxu0 0
    %298 = vmatpush1.bf16.msra.mxu0 0
    %299 = vmatprep.subr.bf16.mxu0 0
    %300 = vmatpush1.bf16.msra.mxu0 0
    %301 = vmatprep.subr.bf16.mxu0 0
    %302 = vmatpush1.bf16.msra.mxu0 0
    %303 = vmatprep.subr.bf16.mxu0 0
    %304 = vmatpush1.bf16.msra.mxu0 0
    %305 = vmatprep.subr.bf16.mxu0 0
    %306 = vmatpush1.bf16.msra.mxu0 0
    %307 = vmatprep.subr.bf16.mxu0 0
    %308 = vmatpush1.bf16.msra.mxu0 0
    %309 = vmatprep.subr.bf16.mxu0 0
    %310 = vmatpush1.bf16.msra.mxu0 0
    %311 = vmatprep.subr.bf16.mxu0 0
    %312 = vmatpush1.bf16.msra.mxu0 0
    %313 = vmatprep.subr.bf16.mxu0 0
    %314 = vmatpush1.bf16.msra.mxu0 0
    %315 = vmatprep.subr.bf16.mxu0 0
    %316 = vmatpush1.bf16.msra.mxu0 0
    %317 = vmatprep.subr.bf16.mxu0 0
    %318 = vmatpush1.bf16.msra.mxu0 0
    %319 = vmatprep.subr.bf16.mxu0 0
    %320 = vmatpush1.bf16.msra.mxu0 0
    %321 = vmatprep.mubr.bf16.mxu0 0
    %322 = vmatmul.mubr.bf16.gmra.mrb[0].mxu0 %v150
    %v323 = vpop.f32.mrb[0].mxu0
    %v324 = vadd.f32 %v49, %v323
    %v325 = vpop.f32.mrb[0].mxu0
    %v326 = vadd.f32 %v49, %v325
    %v327 = vpop.f32.mrb[0].mxu0
    %v328 = vadd.f32 %v54, %v327
    %v329 = vpop.f32.mrb[0].mxu0
    %v330 = vadd.f32 %v54, %v329
    %331 = vmatprep.mubr.bf16.mxu0 0
    %332 = vmatmul.mubr.bf16.gmra.mrb[0].mxu0 %v153
    %v333 = vpop.f32.mrb[0].mxu0
    %v334 = vadd.f32 %v59, %v333
    %v335 = vpop.f32.mrb[0].mxu0
    %v336 = vadd.f32 %v59, %v335
    %v337 = vpop.f32.mrb[0].mxu0
    %v338 = vadd.f32 %v64, %v337
    %v339 = vpop.f32.mrb[0].mxu0
    %v340 = vadd.f32 %v64, %v339
    %341 = vdwg.mxu0
    %342 = vmatprep.subr.bf16.mxu0 %v131
    %343 = vmatpush1.bf16.msra.mxu0 %v130
    %344 = vmatprep.subr.bf16.mxu0 %v181
    %345 = vmatpush1.bf16.msra.mxu0 %v178
    %346 = vmatprep.subr.bf16.mxu0 0
    %347 = vmatpush1.bf16.msra.mxu0 0
    %348 = vmatprep.subr.bf16.mxu0 0
    %349 = vmatpush1.bf16.msra.mxu0 0
    %350 = vmatprep.subr.bf16.mxu0 0
    %351 = vmatpush1.bf16.msra.mxu0 0
    %352 = vmatprep.subr.bf16.mxu0 0
    %353 = vmatpush1.bf16.msra.mxu0 0
    %354 = vmatprep.subr.bf16.mxu0 0
    %355 = vmatpush1.bf16.msra.mxu0 0
    %356 = vmatprep.subr.bf16.mxu0 0
    %357 = vmatpush1.bf16.msra.mxu0 0
    %358 = vmatprep.subr.bf16.mxu0 0
    %359 = vmatpush1.bf16.msra.mxu0 0
    %360 = vmatprep.subr.bf16.mxu0 0
    %361 = vmatpush1.bf16.msra.mxu0 0
    %362 = vmatprep.subr.bf16.mxu0 0
    %363 = vmatpush1.bf16.msra.mxu0 0
    %364 = vmatprep.subr.bf16.mxu0 0
    %365 = vmatpush1.bf16.msra.mxu0 0
    %366 = vmatprep.subr.bf16.mxu0 0
    %367 = vmatpush1.bf16.msra.mxu0 0
    %368 = vmatprep.subr.bf16.mxu0 0
    %369 = vmatpush1.bf16.msra.mxu0 0
    %370 = vmatprep.subr.bf16.mxu0 0
    %371 = vmatpush1.bf16.msra.mxu0 0
    %372 = vmatprep.subr.bf16.mxu0 0
    %373 = vmatpush1.bf16.msra.mxu0 0
    %374 = vmatprep.mubr.bf16.mxu0 0
    %375 = vmatmul.mubr.bf16.gmra.mrb[0].mxu0 %v150
    %v376 = vpop.f32.mrb[0].mxu0
    %v377 = vadd.f32 %v49, %v376
    %v378 = vpop.f32.mrb[0].mxu0
    %v379 = vadd.f32 %v49, %v378
    %v380 = vpop.f32.mrb[0].mxu0
    %v381 = vadd.f32 %v54, %v380
    %v382 = vpop.f32.mrb[0].mxu0
    %v383 = vadd.f32 %v54, %v382
    %384 = vmatprep.mubr.bf16.mxu0 0
    %385 = vmatmul.mubr.bf16.gmra.mrb[0].mxu0 %v153
    %v386 = vpop.f32.mrb[0].mxu0
    %v387 = vadd.f32 %v59, %v386
    %v388 = vpop.f32.mrb[0].mxu0
    %v389 = vadd.f32 %v59, %v388
    %v390 = vpop.f32.mrb[0].mxu0
    %v391 = vadd.f32 %v64, %v390
    %v392 = vpop.f32.mrb[0].mxu0
    %v393 = vadd.f32 %v64, %v392
    %394 = vdwg.mxu0
    %v395 = vmax.f32 %v218, 0.0
    %v396 = vmax.f32 %v220, 0.0
    %v397 = vmax.f32 %v271, 0.0
    %v398 = vmax.f32 %v273, 0.0
    %v399 = vmax.f32 %v324, 0.0
    %v400 = vmax.f32 %v326, 0.0
    %v401 = vmax.f32 %v377, 0.0
    %v402 = vmax.f32 %v379, 0.0
    %v403 = vmax.f32 %v222, 0.0
    %v404 = vmax.f32 %v224, 0.0
    %v405 = vmax.f32 %v275, 0.0
    %v406 = vmax.f32 %v277, 0.0
    %v407 = vmax.f32 %v328, 0.0
    %v408 = vmax.f32 %v330, 0.0
    %v409 = vmax.f32 %v381, 0.0
    %v410 = vmax.f32 %v383, 0.0
    %v411 = vmax.f32 %v228, 0.0
    %v412 = vmax.f32 %v230, 0.0
    %v413 = vmax.f32 %v281, 0.0
    %v414 = vmax.f32 %v283, 0.0
    %v415 = vmax.f32 %v334, 0.0
    %v416 = vmax.f32 %v336, 0.0
    %v417 = vmax.f32 %v387, 0.0
    %v418 = vmax.f32 %v389, 0.0
    %v419 = vmax.f32 %v232, 0.0
    %v420 = vmax.f32 %v234, 0.0
    %v421 = vmax.f32 %v285, 0.0
    %v422 = vmax.f32 %v287, 0.0
    %v423 = vmax.f32 %v338, 0.0
    %v424 = vmax.f32 %v340, 0.0
    %v425 = vmax.f32 %v391, 0.0
    %v426 = vmax.f32 %v393, 0.0
    %v427 = vpack.c.bf16 %v403, %v395
    %v428 = vpack.c.bf16 %v404, %v396
    %v429 = vpack.c.bf16 %v405, %v397
    %v430 = vpack.c.bf16 %v406, %v398
    %v431 = vpack.c.bf16 %v407, %v399
    %v432 = vpack.c.bf16 %v408, %v400
    %v433 = vpack.c.bf16 %v409, %v401
    %v434 = vpack.c.bf16 %v410, %v402
    %v435 = vpack.c.bf16 %v419, %v411
    %v436 = vpack.c.bf16 %v420, %v412
    %v437 = vpack.c.bf16 %v421, %v413
    %v438 = vpack.c.bf16 %v422, %v414
    %v439 = vpack.c.bf16 %v423, %v415
    %v440 = vpack.c.bf16 %v424, %v416
    %v441 = vpack.c.bf16 %v425, %v417
    %v442 = vpack.c.bf16 %v426, %v418
    %443 = vst [vmem:[#allocation2] sm:$0xff] %v427
    %444 = vst [vmem:[#allocation2 + $0x8] sm:$0xff] %v428
    %445 = vst [vmem:[#allocation2 + $0x10] sm:$0xff] %v429
    %446 = vst [vmem:[#allocation2 + $0x18] sm:$0xff] %v430
    %447 = vst [vmem:[#allocation2 + $0x20] sm:$0xff] %v431
    %448 = vst [vmem:[#allocation2 + $0x28] sm:$0xff] %v432
    %449 = vst [vmem:[#allocation2 + $0x30] sm:$0xff] %v433
    %450 = vst [vmem:[#allocation2 + $0x38] sm:$0xff] %v434
    %451 = vst [vmem:[#allocation2 + $0x40] sm:$0xff] %v435
    %452 = vst [vmem:[#allocation2 + $0x48] sm:$0xff] %v436
    %453 = vst [vmem:[#allocation2 + $0x50] sm:$0xff] %v437
    %454 = vst [vmem:[#allocation2 + $0x58] sm:$0xff] %v438
    %455 = vst [vmem:[#allocation2 + $0x60] sm:$0xff] %v439
    %456 = vst [vmem:[#allocation2 + $0x68] sm:$0xff] %v440
    %457 = vst [vmem:[#allocation2 + $0x70] sm:$0xff] %v441
    %458 = vst [vmem:[#allocation2 + $0x78] sm:$0xff] %v442
    %v459 = vld [vmem:[#allocation2] sm:$0xff]
    %v460 = vld [vmem:[#allocation2 + $0x8] sm:$0xff]
    %v461 = vld [vmem:[#allocation2 + $0x10] sm:$0xff]
    %v462 = vld [vmem:[#allocation2 + $0x18] sm:$0xff]
    %v463 = vld [vmem:[#allocation2 + $0x20] sm:$0xff]
    %v464 = vld [vmem:[#allocation2 + $0x28] sm:$0xff]
    %v465 = vld [vmem:[#allocation2 + $0x30] sm:$0xff]
    %v466 = vld [vmem:[#allocation2 + $0x38] sm:$0xff]
    %v467 = vld [vmem:[#allocation2 + $0x40] sm:$0xff]
    %v468 = vld [vmem:[#allocation2 + $0x48] sm:$0xff]
    %v469 = vld [vmem:[#allocation2 + $0x50] sm:$0xff]
    %v470 = vld [vmem:[#allocation2 + $0x58] sm:$0xff]
    %v471 = vld [vmem:[#allocation2 + $0x60] sm:$0xff]
    %v472 = vld [vmem:[#allocation2 + $0x68] sm:$0xff]
    %v473 = vld [vmem:[#allocation2 + $0x70] sm:$0xff]
    %v474 = vld [vmem:[#allocation2 + $0x78] sm:$0xff]
    %v475 = vld [vmem:[%s3] sm:$0xf]
    %v476 = vld [vmem:[%s3 + $0x4] sm:$0xf]
    %v477 = vld [vmem:[%s3 + $0x8] sm:$0xf]
    %v478 = vld [vmem:[%s3 + $0xc] sm:$0xf]
    %s479 = scalar_lea.vmem %s3, 16
    %v480 = vld [vmem:[%s479] sm:$0xf]
    %v481 = vld [vmem:[%s479 + $0x4] sm:$0xf]
    %v482 = vld [vmem:[%s479 + $0x8] sm:$0xf]
    %v483 = vld [vmem:[%s479 + $0xc] sm:$0xf]
    %v488 = vunpack.c.l.b16 %v480
    %v489 = vunpack.c.l.b16 %v481
    %v490 = vunpack.c.l.b16 %v482
    %v491 = vunpack.c.l.b16 %v483
    %v492 = vpack.c.b16 %v489, %v488
    %v493 = vpack.c.b16 %v491, %v490
    %510 = vrot.lane.b32.xlu0 %v459, 127
    %v511 = vpop.permute.xlu0 %510
    %512 = vrot.lane.b32.xlu0 %v460, 127
    %v513 = vpop.permute.xlu0 %512
    %514 = vrot.lane.b32.xlu0 %v461, 127
    %v515 = vpop.permute.xlu0 %514
    %516 = vrot.lane.b32.xlu0 %v462, 127
    %v517 = vpop.permute.xlu0 %516
    %518 = vrot.lane.b32.xlu0 %v463, 127
    %v519 = vpop.permute.xlu0 %518
    %520 = vrot.lane.b32.xlu0 %v464, 127
    %v521 = vpop.permute.xlu0 %520
    %522 = vrot.lane.b32.xlu0 %v465, 127
    %v523 = vpop.permute.xlu0 %522
    %524 = vrot.lane.b32.xlu0 %v466, 127
    %v525 = vpop.permute.xlu0 %524
    %526 = vrot.lane.b32.xlu0 %v467, 127
    %v527 = vpop.permute.xlu0 %526
    %528 = vrot.lane.b32.xlu0 %v468, 127
    %v529 = vpop.permute.xlu0 %528
    %530 = vrot.lane.b32.xlu0 %v469, 127
    %v531 = vpop.permute.xlu0 %530
    %532 = vrot.lane.b32.xlu0 %v470, 127
    %v533 = vpop.permute.xlu0 %532
    %534 = vrot.lane.b32.xlu0 %v471, 127
    %v535 = vpop.permute.xlu0 %534
    %536 = vrot.lane.b32.xlu0 %v472, 127
    %v537 = vpop.permute.xlu0 %536
    %538 = vrot.lane.b32.xlu0 %v473, 127
    %v539 = vpop.permute.xlu0 %538
    %540 = vrot.lane.b32.xlu0 %v474, 127
    %v541 = vpop.permute.xlu0 %540
    %vm542 = vcmask 1039360
    %v543 = vsel %vm542, %v511, %v513
    %v544 = vsel %vm542, %v513, %v515
    %v545 = vsel %vm542, %v515, %v517
    %v546 = vsel %vm542, %v517, %v519
    %v547 = vsel %vm542, %v519, %v521
    %v548 = vsel %vm542, %v521, %v523
    %v549 = vsel %vm542, %v523, %v525
    %v550 = vsel %vm542, %v527, %v529
    %v551 = vsel %vm542, %v529, %v531
    %v552 = vsel %vm542, %v531, %v533
    %v553 = vsel %vm542, %v533, %v535
    %v554 = vsel %vm542, %v535, %v537
    %v555 = vsel %vm542, %v537, %v539
    %v556 = vsel %vm542, %v539, %v541
    %vm573 = vcmask 261120
    %v575 = vsel %vm573, %v492, 0
    %v578 = vsel %vm573, %v493, 0
    %580 = vmatprep.subr.bf16.mxu0 %v544
    %581 = vmatpush1.bf16.msra.mxu0 %v543
    %582 = vmatprep.subr.bf16.mxu0 %v551
    %583 = vmatpush1.bf16.msra.mxu0 %v550
    %584 = vmatprep.subr.bf16.mxu0 0
    %585 = vmatpush1.bf16.msra.mxu0 0
    %586 = vmatprep.subr.bf16.mxu0 0
    %587 = vmatpush1.bf16.msra.mxu0 0
    %588 = vmatprep.subr.bf16.mxu0 0
    %589 = vmatpush1.bf16.msra.mxu0 0
    %590 = vmatprep.subr.bf16.mxu0 0
    %591 = vmatpush1.bf16.msra.mxu0 0
    %592 = vmatprep.subr.bf16.mxu0 0
    %593 = vmatpush1.bf16.msra.mxu0 0
    %594 = vmatprep.subr.bf16.mxu0 0
    %595 = vmatpush1.bf16.msra.mxu0 0
    %596 = vmatprep.subr.bf16.mxu0 0
    %597 = vmatpush1.bf16.msra.mxu0 0
    %598 = vmatprep.subr.bf16.mxu0 0
    %599 = vmatpush1.bf16.msra.mxu0 0
    %600 = vmatprep.subr.bf16.mxu0 0
    %601 = vmatpush1.bf16.msra.mxu0 0
    %602 = vmatprep.subr.bf16.mxu0 0
    %603 = vmatpush1.bf16.msra.mxu0 0
    %604 = vmatprep.subr.bf16.mxu0 0
    %605 = vmatpush1.bf16.msra.mxu0 0
    %606 = vmatprep.subr.bf16.mxu0 0
    %607 = vmatpush1.bf16.msra.mxu0 0
    %608 = vmatprep.subr.bf16.mxu0 0
    %609 = vmatpush1.bf16.msra.mxu0 0
    %610 = vmatprep.subr.bf16.mxu0 0
    %611 = vmatpush1.bf16.msra.mxu0 0
    %612 = vmatprep.mubr.bf16.mxu0 0
    %613 = vmatmul.mubr.bf16.gmra.mrb[0].mxu0 %v575
    %v614 = vpop.f32.mrb[0].mxu0
    %v615 = vadd.f32 0.0, %v614
    %v616 = vpop.f32.mrb[0].mxu0
    %v617 = vadd.f32 0.0, %v616
    %v618 = vpop.f32.mrb[0].mxu0
    %v619 = vadd.f32 0.0, %v618
    %v620 = vpop.f32.mrb[0].mxu0
    %v621 = vadd.f32 0.0, %v620
    %622 = vmatprep.mubr.bf16.mxu0 0
    %623 = vmatmul.mubr.bf16.gmra.mrb[0].mxu0 %v578
    %v624 = vpop.f32.mrb[0].mxu0
    %v625 = vadd.f32 0.0, %v624
    %v626 = vpop.f32.mrb[0].mxu0
    %v627 = vadd.f32 0.0, %v626
    %v628 = vpop.f32.mrb[0].mxu0
    %v629 = vadd.f32 0.0, %v628
    %v630 = vpop.f32.mrb[0].mxu0
    %v631 = vadd.f32 0.0, %v630
    %632 = vdwg.mxu0
    %633 = vmatprep.subr.bf16.mxu0 %v546
    %634 = vmatpush1.bf16.msra.mxu0 %v545
    %635 = vmatprep.subr.bf16.mxu0 %v553
    %636 = vmatpush1.bf16.msra.mxu0 %v552
    %637 = vmatprep.subr.bf16.mxu0 0
    %638 = vmatpush1.bf16.msra.mxu0 0
    %639 = vmatprep.subr.bf16.mxu0 0
    %640 = vmatpush1.bf16.msra.mxu0 0
    %641 = vmatprep.subr.bf16.mxu0 0
    %642 = vmatpush1.bf16.msra.mxu0 0
    %643 = vmatprep.subr.bf16.mxu0 0
    %644 = vmatpush1.bf16.msra.mxu0 0
    %645 = vmatprep.subr.bf16.mxu0 0
    %646 = vmatpush1.bf16.msra.mxu0 0
    %647 = vmatprep.subr.bf16.mxu0 0
    %648 = vmatpush1.bf16.msra.mxu0 0
    %649 = vmatprep.subr.bf16.mxu0 0
    %650 = vmatpush1.bf16.msra.mxu0 0
    %651 = vmatprep.subr.bf16.mxu0 0
    %652 = vmatpush1.bf16.msra.mxu0 0
    %653 = vmatprep.subr.bf16.mxu0 0
    %654 = vmatpush1.bf16.msra.mxu0 0
    %655 = vmatprep.subr.bf16.mxu0 0
    %656 = vmatpush1.bf16.msra.mxu0 0
    %657 = vmatprep.subr.bf16.mxu0 0
    %658 = vmatpush1.bf16.msra.mxu0 0
    %659 = vmatprep.subr.bf16.mxu0 0
    %660 = vmatpush1.bf16.msra.mxu0 0
    %661 = vmatprep.subr.bf16.mxu0 0
    %662 = vmatpush1.bf16.msra.mxu0 0
    %663 = vmatprep.subr.bf16.mxu0 0
    %664 = vmatpush1.bf16.msra.mxu0 0
    %665 = vmatprep.mubr.bf16.mxu0 0
    %666 = vmatmul.mubr.bf16.gmra.mrb[0].mxu0 %v575
    %v667 = vpop.f32.mrb[0].mxu0
    %v668 = vadd.f32 0.0, %v667
    %v669 = vpop.f32.mrb[0].mxu0
    %v670 = vadd.f32 0.0, %v669
    %v671 = vpop.f32.mrb[0].mxu0
    %v672 = vadd.f32 0.0, %v671
    %v673 = vpop.f32.mrb[0].mxu0
    %v674 = vadd.f32 0.0, %v673
    %675 = vmatprep.mubr.bf16.mxu0 0
    %676 = vmatmul.mubr.bf16.gmra.mrb[0].mxu0 %v578
    %v677 = vpop.f32.mrb[0].mxu0
    %v678 = vadd.f32 0.0, %v677
    %v679 = vpop.f32.mrb[0].mxu0
    %v680 = vadd.f32 0.0, %v679
    %v681 = vpop.f32.mrb[0].mxu0
    %v682 = vadd.f32 0.0, %v681
    %v683 = vpop.f32.mrb[0].mxu0
    %v684 = vadd.f32 0.0, %v683
    %685 = vdwg.mxu0
    %686 = vmatprep.subr.bf16.mxu0 %v548
    %687 = vmatpush1.bf16.msra.mxu0 %v547
    %688 = vmatprep.subr.bf16.mxu0 %v555
    %689 = vmatpush1.bf16.msra.mxu0 %v554
    %690 = vmatprep.subr.bf16.mxu0 0
    %691 = vmatpush1.bf16.msra.mxu0 0
    %692 = vmatprep.subr.bf16.mxu0 0
    %693 = vmatpush1.bf16.msra.mxu0 0
    %694 = vmatprep.subr.bf16.mxu0 0
    %695 = vmatpush1.bf16.msra.mxu0 0
    %696 = vmatprep.subr.bf16.mxu0 0
    %697 = vmatpush1.bf16.msra.mxu0 0
    %698 = vmatprep.subr.bf16.mxu0 0
    %699 = vmatpush1.bf16.msra.mxu0 0
    %700 = vmatprep.subr.bf16.mxu0 0
    %701 = vmatpush1.bf16.msra.mxu0 0
    %702 = vmatprep.subr.bf16.mxu0 0
    %703 = vmatpush1.bf16.msra.mxu0 0
    %704 = vmatprep.subr.bf16.mxu0 0
    %705 = vmatpush1.bf16.msra.mxu0 0
    %706 = vmatprep.subr.bf16.mxu0 0
    %707 = vmatpush1.bf16.msra.mxu0 0
    %708 = vmatprep.subr.bf16.mxu0 0
    %709 = vmatpush1.bf16.msra.mxu0 0
    %710 = vmatprep.subr.bf16.mxu0 0
    %711 = vmatpush1.bf16.msra.mxu0 0
    %712 = vmatprep.subr.bf16.mxu0 0
    %713 = vmatpush1.bf16.msra.mxu0 0
    %714 = vmatprep.subr.bf16.mxu0 0
    %715 = vmatpush1.bf16.msra.mxu0 0
    %716 = vmatprep.subr.bf16.mxu0 0
    %717 = vmatpush1.bf16.msra.mxu0 0
    %718 = vmatprep.mubr.bf16.mxu0 0
    %719 = vmatmul.mubr.bf16.gmra.mrb[0].mxu0 %v575
    %v720 = vpop.f32.mrb[0].mxu0
    %v721 = vadd.f32 0.0, %v720
    %v722 = vpop.f32.mrb[0].mxu0
    %v723 = vadd.f32 0.0, %v722
    %v724 = vpop.f32.mrb[0].mxu0
    %v725 = vadd.f32 0.0, %v724
    %v726 = vpop.f32.mrb[0].mxu0
    %v727 = vadd.f32 0.0, %v726
    %728 = vmatprep.mubr.bf16.mxu0 0
    %729 = vmatmul.mubr.bf16.gmra.mrb[0].mxu0 %v578
    %v730 = vpop.f32.mrb[0].mxu0
    %v731 = vadd.f32 0.0, %v730
    %v732 = vpop.f32.mrb[0].mxu0
    %v733 = vadd.f32 0.0, %v732
    %v734 = vpop.f32.mrb[0].mxu0
    %v735 = vadd.f32 0.0, %v734
    %v736 = vpop.f32.mrb[0].mxu0
    %v737 = vadd.f32 0.0, %v736
    %738 = vdwg.mxu0
    %739 = vmatprep.subr.bf16.mxu0 %v525
    %740 = vmatpush1.bf16.msra.mxu0 %v549
    %741 = vmatprep.subr.bf16.mxu0 %v541
    %742 = vmatpush1.bf16.msra.mxu0 %v556
    %743 = vmatprep.subr.bf16.mxu0 0
    %744 = vmatpush1.bf16.msra.mxu0 0
    %745 = vmatprep.subr.bf16.mxu0 0
    %746 = vmatpush1.bf16.msra.mxu0 0
    %747 = vmatprep.subr.bf16.mxu0 0
    %748 = vmatpush1.bf16.msra.mxu0 0
    %749 = vmatprep.subr.bf16.mxu0 0
    %750 = vmatpush1.bf16.msra.mxu0 0
    %751 = vmatprep.subr.bf16.mxu0 0
    %752 = vmatpush1.bf16.msra.mxu0 0
    %753 = vmatprep.subr.bf16.mxu0 0
    %754 = vmatpush1.bf16.msra.mxu0 0
    %755 = vmatprep.subr.bf16.mxu0 0
    %756 = vmatpush1.bf16.msra.mxu0 0
    %757 = vmatprep.subr.bf16.mxu0 0
    %758 = vmatpush1.bf16.msra.mxu0 0
    %759 = vmatprep.subr.bf16.mxu0 0
    %760 = vmatpush1.bf16.msra.mxu0 0
    %761 = vmatprep.subr.bf16.mxu0 0
    %762 = vmatpush1.bf16.msra.mxu0 0
    %763 = vmatprep.subr.bf16.mxu0 0
    %764 = vmatpush1.bf16.msra.mxu0 0
    %765 = vmatprep.subr.bf16.mxu0 0
    %766 = vmatpush1.bf16.msra.mxu0 0
    %767 = vmatprep.subr.bf16.mxu0 0
    %768 = vmatpush1.bf16.msra.mxu0 0
    %769 = vmatprep.subr.bf16.mxu0 0
    %770 = vmatpush1.bf16.msra.mxu0 0
    %771 = vmatprep.mubr.bf16.mxu0 0
    %772 = vmatmul.mubr.bf16.gmra.mrb[0].mxu0 %v575
    %v773 = vpop.f32.mrb[0].mxu0
    %v774 = vadd.f32 0.0, %v773
    %v775 = vpop.f32.mrb[0].mxu0
    %v776 = vadd.f32 0.0, %v775
    %v777 = vpop.f32.mrb[0].mxu0
    %v778 = vadd.f32 0.0, %v777
    %v779 = vpop.f32.mrb[0].mxu0
    %v780 = vadd.f32 0.0, %v779
    %781 = vmatprep.mubr.bf16.mxu0 0
    %782 = vmatmul.mubr.bf16.gmra.mrb[0].mxu0 %v578
    %v783 = vpop.f32.mrb[0].mxu0
    %v784 = vadd.f32 0.0, %v783
    %v785 = vpop.f32.mrb[0].mxu0
    %v786 = vadd.f32 0.0, %v785
    %v787 = vpop.f32.mrb[0].mxu0
    %v788 = vadd.f32 0.0, %v787
    %v789 = vpop.f32.mrb[0].mxu0
    %v790 = vadd.f32 0.0, %v789
    %791 = vdwg.mxu0
    %v796 = vunpack.c.l.b16 %v475
    %v797 = vunpack.c.l.b16 %v476
    %v798 = vunpack.c.l.b16 %v477
    %v799 = vunpack.c.l.b16 %v478
    %v800 = vpack.c.b16 %v797, %v796
    %v801 = vpack.c.b16 %v799, %v798
    %v803 = vsel %vm573, %v800, 0
    %v806 = vsel %vm573, %v801, 0
    %808 = vmatprep.subr.bf16.mxu0 %v460
    %809 = vmatpush1.bf16.msra.mxu0 %v459
    %810 = vmatprep.subr.bf16.mxu0 %v468
    %811 = vmatpush1.bf16.msra.mxu0 %v467
    %812 = vmatprep.subr.bf16.mxu0 0
    %813 = vmatpush1.bf16.msra.mxu0 0
    %814 = vmatprep.subr.bf16.mxu0 0
    %815 = vmatpush1.bf16.msra.mxu0 0
    %816 = vmatprep.subr.bf16.mxu0 0
    %817 = vmatpush1.bf16.msra.mxu0 0
    %818 = vmatprep.subr.bf16.mxu0 0
    %819 = vmatpush1.bf16.msra.mxu0 0
    %820 = vmatprep.subr.bf16.mxu0 0
    %821 = vmatpush1.bf16.msra.mxu0 0
    %822 = vmatprep.subr.bf16.mxu0 0
    %823 = vmatpush1.bf16.msra.mxu0 0
    %824 = vmatprep.subr.bf16.mxu0 0
    %825 = vmatpush1.bf16.msra.mxu0 0
    %826 = vmatprep.subr.bf16.mxu0 0
    %827 = vmatpush1.bf16.msra.mxu0 0
    %828 = vmatprep.subr.bf16.mxu0 0
    %829 = vmatpush1.bf16.msra.mxu0 0
    %830 = vmatprep.subr.bf16.mxu0 0
    %831 = vmatpush1.bf16.msra.mxu0 0
    %832 = vmatprep.subr.bf16.mxu0 0
    %833 = vmatpush1.bf16.msra.mxu0 0
    %834 = vmatprep.subr.bf16.mxu0 0
    %835 = vmatpush1.bf16.msra.mxu0 0
    %836 = vmatprep.subr.bf16.mxu0 0
    %837 = vmatpush1.bf16.msra.mxu0 0
    %838 = vmatprep.subr.bf16.mxu0 0
    %839 = vmatpush1.bf16.msra.mxu0 0
    %840 = vmatprep.mubr.bf16.mxu0 0
    %841 = vmatmul.mubr.bf16.gmra.mrb[0].mxu0 %v803
    %v842 = vpop.f32.mrb[0].mxu0
    %v843 = vadd.f32 %v615, %v842
    %v844 = vpop.f32.mrb[0].mxu0
    %v845 = vadd.f32 %v617, %v844
    %v846 = vpop.f32.mrb[0].mxu0
    %v847 = vadd.f32 %v619, %v846
    %v848 = vpop.f32.mrb[0].mxu0
    %v849 = vadd.f32 %v621, %v848
    %850 = vmatprep.mubr.bf16.mxu0 0
    %851 = vmatmul.mubr.bf16.gmra.mrb[0].mxu0 %v806
    %v852 = vpop.f32.mrb[0].mxu0
    %v853 = vadd.f32 %v625, %v852
    %v854 = vpop.f32.mrb[0].mxu0
    %v855 = vadd.f32 %v627, %v854
    %v856 = vpop.f32.mrb[0].mxu0
    %v857 = vadd.f32 %v629, %v856
    %v858 = vpop.f32.mrb[0].mxu0
    %v859 = vadd.f32 %v631, %v858
    %860 = vdwg.mxu0
    %861 = vmatprep.subr.bf16.mxu0 %v462
    %862 = vmatpush1.bf16.msra.mxu0 %v461
    %863 = vmatprep.subr.bf16.mxu0 %v470
    %864 = vmatpush1.bf16.msra.mxu0 %v469
    %865 = vmatprep.subr.bf16.mxu0 0
    %866 = vmatpush1.bf16.msra.mxu0 0
    %867 = vmatprep.subr.bf16.mxu0 0
    %868 = vmatpush1.bf16.msra.mxu0 0
    %869 = vmatprep.subr.bf16.mxu0 0
    %870 = vmatpush1.bf16.msra.mxu0 0
    %871 = vmatprep.subr.bf16.mxu0 0
    %872 = vmatpush1.bf16.msra.mxu0 0
    %873 = vmatprep.subr.bf16.mxu0 0
    %874 = vmatpush1.bf16.msra.mxu0 0
    %875 = vmatprep.subr.bf16.mxu0 0
    %876 = vmatpush1.bf16.msra.mxu0 0
    %877 = vmatprep.subr.bf16.mxu0 0
    %878 = vmatpush1.bf16.msra.mxu0 0
    %879 = vmatprep.subr.bf16.mxu0 0
    %880 = vmatpush1.bf16.msra.mxu0 0
    %881 = vmatprep.subr.bf16.mxu0 0
    %882 = vmatpush1.bf16.msra.mxu0 0
    %883 = vmatprep.subr.bf16.mxu0 0
    %884 = vmatpush1.bf16.msra.mxu0 0
    %885 = vmatprep.subr.bf16.mxu0 0
    %886 = vmatpush1.bf16.msra.mxu0 0
    %887 = vmatprep.subr.bf16.mxu0 0
    %888 = vmatpush1.bf16.msra.mxu0 0
    %889 = vmatprep.subr.bf16.mxu0 0
    %890 = vmatpush1.bf16.msra.mxu0 0
    %891 = vmatprep.subr.bf16.mxu0 0
    %892 = vmatpush1.bf16.msra.mxu0 0
    %893 = vmatprep.mubr.bf16.mxu0 0
    %894 = vmatmul.mubr.bf16.gmra.mrb[0].mxu0 %v803
    %v895 = vpop.f32.mrb[0].mxu0
    %v896 = vadd.f32 %v668, %v895
    %v897 = vpop.f32.mrb[0].mxu0
    %v898 = vadd.f32 %v670, %v897
    %v899 = vpop.f32.mrb[0].mxu0
    %v900 = vadd.f32 %v672, %v899
    %v901 = vpop.f32.mrb[0].mxu0
    %v902 = vadd.f32 %v674, %v901
    %903 = vmatprep.mubr.bf16.mxu0 0
    %904 = vmatmul.mubr.bf16.gmra.mrb[0].mxu0 %v806
    %v905 = vpop.f32.mrb[0].mxu0
    %v906 = vadd.f32 %v678, %v905
    %v907 = vpop.f32.mrb[0].mxu0
    %v908 = vadd.f32 %v680, %v907
    %v909 = vpop.f32.mrb[0].mxu0
    %v910 = vadd.f32 %v682, %v909
    %v911 = vpop.f32.mrb[0].mxu0
    %v912 = vadd.f32 %v684, %v911
    %913 = vdwg.mxu0
    %914 = vmatprep.subr.bf16.mxu0 %v464
    %915 = vmatpush1.bf16.msra.mxu0 %v463
    %916 = vmatprep.subr.bf16.mxu0 %v472
    %917 = vmatpush1.bf16.msra.mxu0 %v471
    %918 = vmatprep.subr.bf16.mxu0 0
    %919 = vmatpush1.bf16.msra.mxu0 0
    %920 = vmatprep.subr.bf16.mxu0 0
    %921 = vmatpush1.bf16.msra.mxu0 0
    %922 = vmatprep.subr.bf16.mxu0 0
    %923 = vmatpush1.bf16.msra.mxu0 0
    %924 = vmatprep.subr.bf16.mxu0 0
    %925 = vmatpush1.bf16.msra.mxu0 0
    %926 = vmatprep.subr.bf16.mxu0 0
    %927 = vmatpush1.bf16.msra.mxu0 0
    %928 = vmatprep.subr.bf16.mxu0 0
    %929 = vmatpush1.bf16.msra.mxu0 0
    %930 = vmatprep.subr.bf16.mxu0 0
    %931 = vmatpush1.bf16.msra.mxu0 0
    %932 = vmatprep.subr.bf16.mxu0 0
    %933 = vmatpush1.bf16.msra.mxu0 0
    %934 = vmatprep.subr.bf16.mxu0 0
    %935 = vmatpush1.bf16.msra.mxu0 0
    %936 = vmatprep.subr.bf16.mxu0 0
    %937 = vmatpush1.bf16.msra.mxu0 0
    %938 = vmatprep.subr.bf16.mxu0 0
    %939 = vmatpush1.bf16.msra.mxu0 0
    %940 = vmatprep.subr.bf16.mxu0 0
    %941 = vmatpush1.bf16.msra.mxu0 0
    %942 = vmatprep.subr.bf16.mxu0 0
    %943 = vmatpush1.bf16.msra.mxu0 0
    %944 = vmatprep.subr.bf16.mxu0 0
    %945 = vmatpush1.bf16.msra.mxu0 0
    %946 = vmatprep.mubr.bf16.mxu0 0
    %947 = vmatmul.mubr.bf16.gmra.mrb[0].mxu0 %v803
    %v948 = vpop.f32.mrb[0].mxu0
    %v949 = vadd.f32 %v721, %v948
    %v950 = vpop.f32.mrb[0].mxu0
    %v951 = vadd.f32 %v723, %v950
    %v952 = vpop.f32.mrb[0].mxu0
    %v953 = vadd.f32 %v725, %v952
    %v954 = vpop.f32.mrb[0].mxu0
    %v955 = vadd.f32 %v727, %v954
    %956 = vmatprep.mubr.bf16.mxu0 0
    %957 = vmatmul.mubr.bf16.gmra.mrb[0].mxu0 %v806
    %v958 = vpop.f32.mrb[0].mxu0
    %v959 = vadd.f32 %v731, %v958
    %v960 = vpop.f32.mrb[0].mxu0
    %v961 = vadd.f32 %v733, %v960
    %v962 = vpop.f32.mrb[0].mxu0
    %v963 = vadd.f32 %v735, %v962
    %v964 = vpop.f32.mrb[0].mxu0
    %v965 = vadd.f32 %v737, %v964
    %966 = vdwg.mxu0
    %967 = vmatprep.subr.bf16.mxu0 %v466
    %968 = vmatpush1.bf16.msra.mxu0 %v465
    %969 = vmatprep.subr.bf16.mxu0 %v474
    %970 = vmatpush1.bf16.msra.mxu0 %v473
    %971 = vmatprep.subr.bf16.mxu0 0
    %972 = vmatpush1.bf16.msra.mxu0 0
    %973 = vmatprep.subr.bf16.mxu0 0
    %974 = vmatpush1.bf16.msra.mxu0 0
    %975 = vmatprep.subr.bf16.mxu0 0
    %976 = vmatpush1.bf16.msra.mxu0 0
    %977 = vmatprep.subr.bf16.mxu0 0
    %978 = vmatpush1.bf16.msra.mxu0 0
    %979 = vmatprep.subr.bf16.mxu0 0
    %980 = vmatpush1.bf16.msra.mxu0 0
    %981 = vmatprep.subr.bf16.mxu0 0
    %982 = vmatpush1.bf16.msra.mxu0 0
    %983 = vmatprep.subr.bf16.mxu0 0
    %984 = vmatpush1.bf16.msra.mxu0 0
    %985 = vmatprep.subr.bf16.mxu0 0
    %986 = vmatpush1.bf16.msra.mxu0 0
    %987 = vmatprep.subr.bf16.mxu0 0
    %988 = vmatpush1.bf16.msra.mxu0 0
    %989 = vmatprep.subr.bf16.mxu0 0
    %990 = vmatpush1.bf16.msra.mxu0 0
    %991 = vmatprep.subr.bf16.mxu0 0
    %992 = vmatpush1.bf16.msra.mxu0 0
    %993 = vmatprep.subr.bf16.mxu0 0
    %994 = vmatpush1.bf16.msra.mxu0 0
    %995 = vmatprep.subr.bf16.mxu0 0
    %996 = vmatpush1.bf16.msra.mxu0 0
    %997 = vmatprep.subr.bf16.mxu0 0
    %998 = vmatpush1.bf16.msra.mxu0 0
    %999 = vmatprep.mubr.bf16.mxu0 0
    %1000 = vmatmul.mubr.bf16.gmra.mrb[0].mxu0 %v803
    %v1001 = vpop.f32.mrb[0].mxu0
    %v1002 = vadd.f32 %v774, %v1001
    %v1003 = vpop.f32.mrb[0].mxu0
    %v1004 = vadd.f32 %v776, %v1003
    %v1005 = vpop.f32.mrb[0].mxu0
    %v1006 = vadd.f32 %v778, %v1005
    %v1007 = vpop.f32.mrb[0].mxu0
    %v1008 = vadd.f32 %v780, %v1007
    %1009 = vmatprep.mubr.bf16.mxu0 0
    %1010 = vmatmul.mubr.bf16.gmra.mrb[0].mxu0 %v806
    %v1011 = vpop.f32.mrb[0].mxu0
    %v1012 = vadd.f32 %v784, %v1011
    %v1013 = vpop.f32.mrb[0].mxu0
    %v1014 = vadd.f32 %v786, %v1013
    %v1015 = vpop.f32.mrb[0].mxu0
    %v1016 = vadd.f32 %v788, %v1015
    %v1017 = vpop.f32.mrb[0].mxu0
    %v1018 = vadd.f32 %v790, %v1017
    %1019 = vdwg.mxu0
    %s1020 = scalar_lea.vmem %s3, 32
    %v1021 = vld [vmem:[%s1020] sm:$0xf]
    %v1022 = vld [vmem:[%s1020 + $0x4] sm:$0xf]
    %v1023 = vld [vmem:[%s1020 + $0x8] sm:$0xf]
    %v1024 = vld [vmem:[%s1020 + $0xc] sm:$0xf]
    %v1029 = vunpack.c.l.b16 %v1021
    %v1030 = vunpack.c.l.b16 %v1022
    %v1031 = vunpack.c.l.b16 %v1023
    %v1032 = vunpack.c.l.b16 %v1024
    %v1033 = vpack.c.b16 %v1030, %v1029
    %v1034 = vpack.c.b16 %v1032, %v1031
    %1035 = vrot.lane.b32.xlu0 %v459, 126
    %v1036 = vpop.permute.xlu0 %1035
    %1037 = vrot.lane.b32.xlu0 %v460, 126
    %v1038 = vpop.permute.xlu0 %1037
    %1039 = vrot.lane.b32.xlu0 %v461, 126
    %v1040 = vpop.permute.xlu0 %1039
    %1041 = vrot.lane.b32.xlu0 %v462, 126
    %v1042 = vpop.permute.xlu0 %1041
    %1043 = vrot.lane.b32.xlu0 %v463, 126
    %v1044 = vpop.permute.xlu0 %1043
    %1045 = vrot.lane.b32.xlu0 %v464, 126
    %v1046 = vpop.permute.xlu0 %1045
    %1047 = vrot.lane.b32.xlu0 %v465, 126
    %v1048 = vpop.permute.xlu0 %1047
    %1049 = vrot.lane.b32.xlu0 %v466, 126
    %v1050 = vpop.permute.xlu0 %1049
    %1051 = vrot.lane.b32.xlu0 %v467, 126
    %v1052 = vpop.permute.xlu0 %1051
    %1053 = vrot.lane.b32.xlu0 %v468, 126
    %v1054 = vpop.permute.xlu0 %1053
    %1055 = vrot.lane.b32.xlu0 %v469, 126
    %v1056 = vpop.permute.xlu0 %1055
    %1057 = vrot.lane.b32.xlu0 %v470, 126
    %v1058 = vpop.permute.xlu0 %1057
    %1059 = vrot.lane.b32.xlu0 %v471, 126
    %v1060 = vpop.permute.xlu0 %1059
    %1061 = vrot.lane.b32.xlu0 %v472, 126
    %v1062 = vpop.permute.xlu0 %1061
    %1063 = vrot.lane.b32.xlu0 %v473, 126
    %v1064 = vpop.permute.xlu0 %1063
    %1065 = vrot.lane.b32.xlu0 %v474, 126
    %v1066 = vpop.permute.xlu0 %1065
    %vm1067 = vcmask 1031168
    %v1068 = vsel %vm1067, %v1036, %v1038
    %v1069 = vsel %vm1067, %v1038, %v1040
    %v1070 = vsel %vm1067, %v1040, %v1042
    %v1071 = vsel %vm1067, %v1042, %v1044
    %v1072 = vsel %vm1067, %v1044, %v1046
    %v1073 = vsel %vm1067, %v1046, %v1048
    %v1074 = vsel %vm1067, %v1048, %v1050
    %v1075 = vsel %vm1067, %v1052, %v1054
    %v1076 = vsel %vm1067, %v1054, %v1056
    %v1077 = vsel %vm1067, %v1056, %v1058
    %v1078 = vsel %vm1067, %v1058, %v1060
    %v1079 = vsel %vm1067, %v1060, %v1062
    %v1080 = vsel %vm1067, %v1062, %v1064
    %v1081 = vsel %vm1067, %v1064, %v1066
    %v1099 = vsel %vm573, %v1033, 0
    %v1102 = vsel %vm573, %v1034, 0
    %1104 = vmatprep.subr.bf16.mxu0 %v1069
    %1105 = vmatpush1.bf16.msra.mxu0 %v1068
    %1106 = vmatprep.subr.bf16.mxu0 %v1076
    %1107 = vmatpush1.bf16.msra.mxu0 %v1075
    %1108 = vmatprep.subr.bf16.mxu0 0
    %1109 = vmatpush1.bf16.msra.mxu0 0
    %1110 = vmatprep.subr.bf16.mxu0 0
    %1111 = vmatpush1.bf16.msra.mxu0 0
    %1112 = vmatprep.subr.bf16.mxu0 0
    %1113 = vmatpush1.bf16.msra.mxu0 0
    %1114 = vmatprep.subr.bf16.mxu0 0
    %1115 = vmatpush1.bf16.msra.mxu0 0
    %1116 = vmatprep.subr.bf16.mxu0 0
    %1117 = vmatpush1.bf16.msra.mxu0 0
    %1118 = vmatprep.subr.bf16.mxu0 0
    %1119 = vmatpush1.bf16.msra.mxu0 0
    %1120 = vmatprep.subr.bf16.mxu0 0
    %1121 = vmatpush1.bf16.msra.mxu0 0
    %1122 = vmatprep.subr.bf16.mxu0 0
    %1123 = vmatpush1.bf16.msra.mxu0 0
    %1124 = vmatprep.subr.bf16.mxu0 0
    %1125 = vmatpush1.bf16.msra.mxu0 0
    %1126 = vmatprep.subr.bf16.mxu0 0
    %1127 = vmatpush1.bf16.msra.mxu0 0
    %1128 = vmatprep.subr.bf16.mxu0 0
    %1129 = vmatpush1.bf16.msra.mxu0 0
    %1130 = vmatprep.subr.bf16.mxu0 0
    %1131 = vmatpush1.bf16.msra.mxu0 0
    %1132 = vmatprep.subr.bf16.mxu0 0
    %1133 = vmatpush1.bf16.msra.mxu0 0
    %1134 = vmatprep.subr.bf16.mxu0 0
    %1135 = vmatpush1.bf16.msra.mxu0 0
    %1136 = vmatprep.mubr.bf16.mxu0 0
    %1137 = vmatmul.mubr.bf16.gmra.mrb[0].mxu0 %v1099
    %v1138 = vpop.f32.mrb[0].mxu0
    %v1139 = vadd.f32 0.0, %v1138
    %v1140 = vpop.f32.mrb[0].mxu0
    %v1141 = vadd.f32 0.0, %v1140
    %v1142 = vpop.f32.mrb[0].mxu0
    %v1143 = vadd.f32 0.0, %v1142
    %v1144 = vpop.f32.mrb[0].mxu0
    %v1145 = vadd.f32 0.0, %v1144
    %1146 = vmatprep.mubr.bf16.mxu0 0
    %1147 = vmatmul.mubr.bf16.gmra.mrb[0].mxu0 %v1102
    %v1148 = vpop.f32.mrb[0].mxu0
    %v1149 = vadd.f32 0.0, %v1148
    %v1150 = vpop.f32.mrb[0].mxu0
    %v1151 = vadd.f32 0.0, %v1150
    %v1152 = vpop.f32.mrb[0].mxu0
    %v1153 = vadd.f32 0.0, %v1152
    %v1154 = vpop.f32.mrb[0].mxu0
    %v1155 = vadd.f32 0.0, %v1154
    %1156 = vdwg.mxu0
    %1157 = vmatprep.subr.bf16.mxu0 %v1071
    %1158 = vmatpush1.bf16.msra.mxu0 %v1070
    %1159 = vmatprep.subr.bf16.mxu0 %v1078
    %1160 = vmatpush1.bf16.msra.mxu0 %v1077
    %1161 = vmatprep.subr.bf16.mxu0 0
    %1162 = vmatpush1.bf16.msra.mxu0 0
    %1163 = vmatprep.subr.bf16.mxu0 0
    %1164 = vmatpush1.bf16.msra.mxu0 0
    %1165 = vmatprep.subr.bf16.mxu0 0
    %1166 = vmatpush1.bf16.msra.mxu0 0
    %1167 = vmatprep.subr.bf16.mxu0 0
    %1168 = vmatpush1.bf16.msra.mxu0 0
    %1169 = vmatprep.subr.bf16.mxu0 0
    %1170 = vmatpush1.bf16.msra.mxu0 0
    %1171 = vmatprep.subr.bf16.mxu0 0
    %1172 = vmatpush1.bf16.msra.mxu0 0
    %1173 = vmatprep.subr.bf16.mxu0 0
    %1174 = vmatpush1.bf16.msra.mxu0 0
    %1175 = vmatprep.subr.bf16.mxu0 0
    %1176 = vmatpush1.bf16.msra.mxu0 0
    %1177 = vmatprep.subr.bf16.mxu0 0
    %1178 = vmatpush1.bf16.msra.mxu0 0
    %1179 = vmatprep.subr.bf16.mxu0 0
    %1180 = vmatpush1.bf16.msra.mxu0 0
    %1181 = vmatprep.subr.bf16.mxu0 0
    %1182 = vmatpush1.bf16.msra.mxu0 0
    %1183 = vmatprep.subr.bf16.mxu0 0
    %1184 = vmatpush1.bf16.msra.mxu0 0
    %1185 = vmatprep.subr.bf16.mxu0 0
    %1186 = vmatpush1.bf16.msra.mxu0 0
    %1187 = vmatprep.subr.bf16.mxu0 0
    %1188 = vmatpush1.bf16.msra.mxu0 0
    %1189 = vmatprep.mubr.bf16.mxu0 0
    %1190 = vmatmul.mubr.bf16.gmra.mrb[0].mxu0 %v1099
    %v1191 = vpop.f32.mrb[0].mxu0
    %v1192 = vadd.f32 0.0, %v1191
    %v1193 = vpop.f32.mrb[0].mxu0
    %v1194 = vadd.f32 0.0, %v1193
    %v1195 = vpop.f32.mrb[0].mxu0
    %v1196 = vadd.f32 0.0, %v1195
    %v1197 = vpop.f32.mrb[0].mxu0
    %v1198 = vadd.f32 0.0, %v1197
    %1199 = vmatprep.mubr.bf16.mxu0 0
    %1200 = vmatmul.mubr.bf16.gmra.mrb[0].mxu0 %v1102
    %v1201 = vpop.f32.mrb[0].mxu0
    %v1202 = vadd.f32 0.0, %v1201
    %v1203 = vpop.f32.mrb[0].mxu0
    %v1204 = vadd.f32 0.0, %v1203
    %v1205 = vpop.f32.mrb[0].mxu0
    %v1206 = vadd.f32 0.0, %v1205
    %v1207 = vpop.f32.mrb[0].mxu0
    %v1208 = vadd.f32 0.0, %v1207
    %1209 = vdwg.mxu0
    %1210 = vmatprep.subr.bf16.mxu0 %v1073
    %1211 = vmatpush1.bf16.msra.mxu0 %v1072
    %1212 = vmatprep.subr.bf16.mxu0 %v1080
    %1213 = vmatpush1.bf16.msra.mxu0 %v1079
    %1214 = vmatprep.subr.bf16.mxu0 0
    %1215 = vmatpush1.bf16.msra.mxu0 0
    %1216 = vmatprep.subr.bf16.mxu0 0
    %1217 = vmatpush1.bf16.msra.mxu0 0
    %1218 = vmatprep.subr.bf16.mxu0 0
    %1219 = vmatpush1.bf16.msra.mxu0 0
    %1220 = vmatprep.subr.bf16.mxu0 0
    %1221 = vmatpush1.bf16.msra.mxu0 0
    %1222 = vmatprep.subr.bf16.mxu0 0
    %1223 = vmatpush1.bf16.msra.mxu0 0
    %1224 = vmatprep.subr.bf16.mxu0 0
    %1225 = vmatpush1.bf16.msra.mxu0 0
    %1226 = vmatprep.subr.bf16.mxu0 0
    %1227 = vmatpush1.bf16.msra.mxu0 0
    %1228 = vmatprep.subr.bf16.mxu0 0
    %1229 = vmatpush1.bf16.msra.mxu0 0
    %1230 = vmatprep.subr.bf16.mxu0 0
    %1231 = vmatpush1.bf16.msra.mxu0 0
    %1232 = vmatprep.subr.bf16.mxu0 0
    %1233 = vmatpush1.bf16.msra.mxu0 0
    %1234 = vmatprep.subr.bf16.mxu0 0
    %1235 = vmatpush1.bf16.msra.mxu0 0
    %1236 = vmatprep.subr.bf16.mxu0 0
    %1237 = vmatpush1.bf16.msra.mxu0 0
    %1238 = vmatprep.subr.bf16.mxu0 0
    %1239 = vmatpush1.bf16.msra.mxu0 0
    %1240 = vmatprep.subr.bf16.mxu0 0
    %1241 = vmatpush1.bf16.msra.mxu0 0
    %1242 = vmatprep.mubr.bf16.mxu0 0
    %1243 = vmatmul.mubr.bf16.gmra.mrb[0].mxu0 %v1099
    %v1244 = vpop.f32.mrb[0].mxu0
    %v1245 = vadd.f32 0.0, %v1244
    %v1246 = vpop.f32.mrb[0].mxu0
    %v1247 = vadd.f32 0.0, %v1246
    %v1248 = vpop.f32.mrb[0].mxu0
    %v1249 = vadd.f32 0.0, %v1248
    %v1250 = vpop.f32.mrb[0].mxu0
    %v1251 = vadd.f32 0.0, %v1250
    %1252 = vmatprep.mubr.bf16.mxu0 0
    %1253 = vmatmul.mubr.bf16.gmra.mrb[0].mxu0 %v1102
    %v1254 = vpop.f32.mrb[0].mxu0
    %v1255 = vadd.f32 0.0, %v1254
    %v1256 = vpop.f32.mrb[0].mxu0
    %v1257 = vadd.f32 0.0, %v1256
    %v1258 = vpop.f32.mrb[0].mxu0
    %v1259 = vadd.f32 0.0, %v1258
    %v1260 = vpop.f32.mrb[0].mxu0
    %v1261 = vadd.f32 0.0, %v1260
    %1262 = vdwg.mxu0
    %1263 = vmatprep.subr.bf16.mxu0 %v1050
    %1264 = vmatpush1.bf16.msra.mxu0 %v1074
    %1265 = vmatprep.subr.bf16.mxu0 %v1066
    %1266 = vmatpush1.bf16.msra.mxu0 %v1081
    %1267 = vmatprep.subr.bf16.mxu0 0
    %1268 = vmatpush1.bf16.msra.mxu0 0
    %1269 = vmatprep.subr.bf16.mxu0 0
    %1270 = vmatpush1.bf16.msra.mxu0 0
    %1271 = vmatprep.subr.bf16.mxu0 0
    %1272 = vmatpush1.bf16.msra.mxu0 0
    %1273 = vmatprep.subr.bf16.mxu0 0
    %1274 = vmatpush1.bf16.msra.mxu0 0
    %1275 = vmatprep.subr.bf16.mxu0 0
    %1276 = vmatpush1.bf16.msra.mxu0 0
    %1277 = vmatprep.subr.bf16.mxu0 0
    %1278 = vmatpush1.bf16.msra.mxu0 0
    %1279 = vmatprep.subr.bf16.mxu0 0
    %1280 = vmatpush1.bf16.msra.mxu0 0
    %1281 = vmatprep.subr.bf16.mxu0 0
    %1282 = vmatpush1.bf16.msra.mxu0 0
    %1283 = vmatprep.subr.bf16.mxu0 0
    %1284 = vmatpush1.bf16.msra.mxu0 0
    %1285 = vmatprep.subr.bf16.mxu0 0
    %1286 = vmatpush1.bf16.msra.mxu0 0
    %1287 = vmatprep.subr.bf16.mxu0 0
    %1288 = vmatpush1.bf16.msra.mxu0 0
    %1289 = vmatprep.subr.bf16.mxu0 0
    %1290 = vmatpush1.bf16.msra.mxu0 0
    %1291 = vmatprep.subr.bf16.mxu0 0
    %1292 = vmatpush1.bf16.msra.mxu0 0
    %1293 = vmatprep.subr.bf16.mxu0 0
    %1294 = vmatpush1.bf16.msra.mxu0 0
    %1295 = vmatprep.mubr.bf16.mxu0 0
    %1296 = vmatmul.mubr.bf16.gmra.mrb[0].mxu0 %v1099
    %v1297 = vpop.f32.mrb[0].mxu0
    %v1298 = vadd.f32 0.0, %v1297
    %v1299 = vpop.f32.mrb[0].mxu0
    %v1300 = vadd.f32 0.0, %v1299
    %v1301 = vpop.f32.mrb[0].mxu0
    %v1302 = vadd.f32 0.0, %v1301
    %v1303 = vpop.f32.mrb[0].mxu0
    %v1304 = vadd.f32 0.0, %v1303
    %1305 = vmatprep.mubr.bf16.mxu0 0
    %1306 = vmatmul.mubr.bf16.gmra.mrb[0].mxu0 %v1102
    %v1307 = vpop.f32.mrb[0].mxu0
    %v1308 = vadd.f32 0.0, %v1307
    %v1309 = vpop.f32.mrb[0].mxu0
    %v1310 = vadd.f32 0.0, %v1309
    %v1311 = vpop.f32.mrb[0].mxu0
    %v1312 = vadd.f32 0.0, %v1311
    %v1313 = vpop.f32.mrb[0].mxu0
    %v1314 = vadd.f32 0.0, %v1313
    %1315 = vdwg.mxu0
    %v1316 = vadd.f32 %v843, %v1139
    %v1317 = vadd.f32 %v845, %v1141
    %v1318 = vadd.f32 %v896, %v1192
    %v1319 = vadd.f32 %v898, %v1194
    %v1320 = vadd.f32 %v949, %v1245
    %v1321 = vadd.f32 %v951, %v1247
    %v1322 = vadd.f32 %v1002, %v1298
    %v1323 = vadd.f32 %v1004, %v1300
    %v1324 = vadd.f32 %v847, %v1143
    %v1325 = vadd.f32 %v849, %v1145
    %v1326 = vadd.f32 %v900, %v1196
    %v1327 = vadd.f32 %v902, %v1198
    %v1328 = vadd.f32 %v953, %v1249
    %v1329 = vadd.f32 %v955, %v1251
    %v1330 = vadd.f32 %v1006, %v1302
    %v1331 = vadd.f32 %v1008, %v1304
    %v1332 = vadd.f32 %v853, %v1149
    %v1333 = vadd.f32 %v855, %v1151
    %v1334 = vadd.f32 %v906, %v1202
    %v1335 = vadd.f32 %v908, %v1204
    %v1336 = vadd.f32 %v959, %v1255
    %v1337 = vadd.f32 %v961, %v1257
    %v1338 = vadd.f32 %v1012, %v1308
    %v1339 = vadd.f32 %v1014, %v1310
    %v1340 = vadd.f32 %v857, %v1153
    %v1341 = vadd.f32 %v859, %v1155
    %v1342 = vadd.f32 %v910, %v1206
    %v1343 = vadd.f32 %v912, %v1208
    %v1344 = vadd.f32 %v963, %v1259
    %v1345 = vadd.f32 %v965, %v1261
    %v1346 = vadd.f32 %v1016, %v1312
    %v1347 = vadd.f32 %v1018, %v1314
    %s1348 = scalar_lea.vmem %s3, 48
    %v1349 = vld [vmem:[%s1348] sm:$0xf]
    %v1350 = vld [vmem:[%s1348 + $0x4] sm:$0xf]
    %v1351 = vld [vmem:[%s1348 + $0x8] sm:$0xf]
    %v1352 = vld [vmem:[%s1348 + $0xc] sm:$0xf]
    %v1357 = vunpack.c.l.b16 %v1349
    %v1358 = vunpack.c.l.b16 %v1350
    %v1359 = vunpack.c.l.b16 %v1351
    %v1360 = vunpack.c.l.b16 %v1352
    %v1361 = vpack.c.b16 %v1358, %v1357
    %v1362 = vpack.c.b16 %v1360, %v1359
    %1363 = vrot.lane.b32.xlu0 %v459, 96
    %v1364 = vpop.permute.xlu0 %1363
    %1365 = vrot.lane.b32.xlu0 %v460, 96
    %v1366 = vpop.permute.xlu0 %1365
    %1367 = vrot.lane.b32.xlu0 %v461, 96
    %v1368 = vpop.permute.xlu0 %1367
    %1369 = vrot.lane.b32.xlu0 %v462, 96
    %v1370 = vpop.permute.xlu0 %1369
    %1371 = vrot.lane.b32.xlu0 %v463, 96
    %v1372 = vpop.permute.xlu0 %1371
    %1373 = vrot.lane.b32.xlu0 %v464, 96
    %v1374 = vpop.permute.xlu0 %1373
    %1375 = vrot.lane.b32.xlu0 %v465, 96
    %v1376 = vpop.permute.xlu0 %1375
    %1377 = vrot.lane.b32.xlu0 %v466, 96
    %v1378 = vpop.permute.xlu0 %1377
    %1379 = vrot.lane.b32.xlu0 %v467, 96
    %v1380 = vpop.permute.xlu0 %1379
    %1381 = vrot.lane.b32.xlu0 %v468, 96
    %v1382 = vpop.permute.xlu0 %1381
    %1383 = vrot.lane.b32.xlu0 %v469, 96
    %v1384 = vpop.permute.xlu0 %1383
    %1385 = vrot.lane.b32.xlu0 %v470, 96
    %v1386 = vpop.permute.xlu0 %1385
    %1387 = vrot.lane.b32.xlu0 %v471, 96
    %v1388 = vpop.permute.xlu0 %1387
    %1389 = vrot.lane.b32.xlu0 %v472, 96
    %v1390 = vpop.permute.xlu0 %1389
    %1391 = vrot.lane.b32.xlu0 %v473, 96
    %v1392 = vpop.permute.xlu0 %1391
    %1393 = vrot.lane.b32.xlu0 %v474, 96
    %v1394 = vpop.permute.xlu0 %1393
    %vm1395 = vcmask 785408
    %v1396 = vsel %vm1395, %v1364, %v1366
    %v1397 = vsel %vm1395, %v1366, %v1368
    %v1398 = vsel %vm1395, %v1368, %v1370
    %v1399 = vsel %vm1395, %v1370, %v1372
    %v1400 = vsel %vm1395, %v1372, %v1374
    %v1401 = vsel %vm1395, %v1374, %v1376
    %v1402 = vsel %vm1395, %v1376, %v1378
    %v1403 = vsel %vm1395, %v1380, %v1382
    %v1404 = vsel %vm1395, %v1382, %v1384
    %v1405 = vsel %vm1395, %v1384, %v1386
    %v1406 = vsel %vm1395, %v1386, %v1388
    %v1407 = vsel %vm1395, %v1388, %v1390
    %v1408 = vsel %vm1395, %v1390, %v1392
    %v1409 = vsel %vm1395, %v1392, %v1394
    %v1427 = vsel %vm573, %v1361, 0
    %v1430 = vsel %vm573, %v1362, 0
    %1432 = vmatprep.subr.bf16.mxu0 %v1397
    %1433 = vmatpush1.bf16.msra.mxu0 %v1396
    %1434 = vmatprep.subr.bf16.mxu0 %v1404
    %1435 = vmatpush1.bf16.msra.mxu0 %v1403
    %1436 = vmatprep.subr.bf16.mxu0 0
    %1437 = vmatpush1.bf16.msra.mxu0 0
    %1438 = vmatprep.subr.bf16.mxu0 0
    %1439 = vmatpush1.bf16.msra.mxu0 0
    %1440 = vmatprep.subr.bf16.mxu0 0
    %1441 = vmatpush1.bf16.msra.mxu0 0
    %1442 = vmatprep.subr.bf16.mxu0 0
    %1443 = vmatpush1.bf16.msra.mxu0 0
    %1444 = vmatprep.subr.bf16.mxu0 0
    %1445 = vmatpush1.bf16.msra.mxu0 0
    %1446 = vmatprep.subr.bf16.mxu0 0
    %1447 = vmatpush1.bf16.msra.mxu0 0
    %1448 = vmatprep.subr.bf16.mxu0 0
    %1449 = vmatpush1.bf16.msra.mxu0 0
    %1450 = vmatprep.subr.bf16.mxu0 0
    %1451 = vmatpush1.bf16.msra.mxu0 0
    %1452 = vmatprep.subr.bf16.mxu0 0
    %1453 = vmatpush1.bf16.msra.mxu0 0
    %1454 = vmatprep.subr.bf16.mxu0 0
    %1455 = vmatpush1.bf16.msra.mxu0 0
    %1456 = vmatprep.subr.bf16.mxu0 0
    %1457 = vmatpush1.bf16.msra.mxu0 0
    %1458 = vmatprep.subr.bf16.mxu0 0
    %1459 = vmatpush1.bf16.msra.mxu0 0
    %1460 = vmatprep.subr.bf16.mxu0 0
    %1461 = vmatpush1.bf16.msra.mxu0 0
    %1462 = vmatprep.subr.bf16.mxu0 0
    %1463 = vmatpush1.bf16.msra.mxu0 0
    %1464 = vmatprep.mubr.bf16.mxu0 0
    %1465 = vmatmul.mubr.bf16.gmra.mrb[0].mxu0 %v1427
    %v1466 = vpop.f32.mrb[0].mxu0
    %v1467 = vadd.f32 0.0, %v1466
    %v1468 = vpop.f32.mrb[0].mxu0
    %v1469 = vadd.f32 0.0, %v1468
    %v1470 = vpop.f32.mrb[0].mxu0
    %v1471 = vadd.f32 0.0, %v1470
    %v1472 = vpop.f32.mrb[0].mxu0
    %v1473 = vadd.f32 0.0, %v1472
    %1474 = vmatprep.mubr.bf16.mxu0 0
    %1475 = vmatmul.mubr.bf16.gmra.mrb[0].mxu0 %v1430
    %v1476 = vpop.f32.mrb[0].mxu0
    %v1477 = vadd.f32 0.0, %v1476
    %v1478 = vpop.f32.mrb[0].mxu0
    %v1479 = vadd.f32 0.0, %v1478
    %v1480 = vpop.f32.mrb[0].mxu0
    %v1481 = vadd.f32 0.0, %v1480
    %v1482 = vpop.f32.mrb[0].mxu0
    %v1483 = vadd.f32 0.0, %v1482
    %1484 = vdwg.mxu0
    %1485 = vmatprep.subr.bf16.mxu0 %v1399
    %1486 = vmatpush1.bf16.msra.mxu0 %v1398
    %1487 = vmatprep.subr.bf16.mxu0 %v1406
    %1488 = vmatpush1.bf16.msra.mxu0 %v1405
    %1489 = vmatprep.subr.bf16.mxu0 0
    %1490 = vmatpush1.bf16.msra.mxu0 0
    %1491 = vmatprep.subr.bf16.mxu0 0
    %1492 = vmatpush1.bf16.msra.mxu0 0
    %1493 = vmatprep.subr.bf16.mxu0 0
    %1494 = vmatpush1.bf16.msra.mxu0 0
    %1495 = vmatprep.subr.bf16.mxu0 0
    %1496 = vmatpush1.bf16.msra.mxu0 0
    %1497 = vmatprep.subr.bf16.mxu0 0
    %1498 = vmatpush1.bf16.msra.mxu0 0
    %1499 = vmatprep.subr.bf16.mxu0 0
    %1500 = vmatpush1.bf16.msra.mxu0 0
    %1501 = vmatprep.subr.bf16.mxu0 0
    %1502 = vmatpush1.bf16.msra.mxu0 0
    %1503 = vmatprep.subr.bf16.mxu0 0
    %1504 = vmatpush1.bf16.msra.mxu0 0
    %1505 = vmatprep.subr.bf16.mxu0 0
    %1506 = vmatpush1.bf16.msra.mxu0 0
    %1507 = vmatprep.subr.bf16.mxu0 0
    %1508 = vmatpush1.bf16.msra.mxu0 0
    %1509 = vmatprep.subr.bf16.mxu0 0
    %1510 = vmatpush1.bf16.msra.mxu0 0
    %1511 = vmatprep.subr.bf16.mxu0 0
    %1512 = vmatpush1.bf16.msra.mxu0 0
    %1513 = vmatprep.subr.bf16.mxu0 0
    %1514 = vmatpush1.bf16.msra.mxu0 0
    %1515 = vmatprep.subr.bf16.mxu0 0
    %1516 = vmatpush1.bf16.msra.mxu0 0
    %1517 = vmatprep.mubr.bf16.mxu0 0
    %1518 = vmatmul.mubr.bf16.gmra.mrb[0].mxu0 %v1427
    %v1519 = vpop.f32.mrb[0].mxu0
    %v1520 = vadd.f32 0.0, %v1519
    %v1521 = vpop.f32.mrb[0].mxu0
    %v1522 = vadd.f32 0.0, %v1521
    %v1523 = vpop.f32.mrb[0].mxu0
    %v1524 = vadd.f32 0.0, %v1523
    %v1525 = vpop.f32.mrb[0].mxu0
    %v1526 = vadd.f32 0.0, %v1525
    %1527 = vmatprep.mubr.bf16.mxu0 0
    %1528 = vmatmul.mubr.bf16.gmra.mrb[0].mxu0 %v1430
    %v1529 = vpop.f32.mrb[0].mxu0
    %v1530 = vadd.f32 0.0, %v1529
    %v1531 = vpop.f32.mrb[0].mxu0
    %v1532 = vadd.f32 0.0, %v1531
    %v1533 = vpop.f32.mrb[0].mxu0
    %v1534 = vadd.f32 0.0, %v1533
    %v1535 = vpop.f32.mrb[0].mxu0
    %v1536 = vadd.f32 0.0, %v1535
    %1537 = vdwg.mxu0
    %1538 = vmatprep.subr.bf16.mxu0 %v1401
    %1539 = vmatpush1.bf16.msra.mxu0 %v1400
    %1540 = vmatprep.subr.bf16.mxu0 %v1408
    %1541 = vmatpush1.bf16.msra.mxu0 %v1407
    %1542 = vmatprep.subr.bf16.mxu0 0
    %1543 = vmatpush1.bf16.msra.mxu0 0
    %1544 = vmatprep.subr.bf16.mxu0 0
    %1545 = vmatpush1.bf16.msra.mxu0 0
    %1546 = vmatprep.subr.bf16.mxu0 0
    %1547 = vmatpush1.bf16.msra.mxu0 0
    %1548 = vmatprep.subr.bf16.mxu0 0
    %1549 = vmatpush1.bf16.msra.mxu0 0
    %1550 = vmatprep.subr.bf16.mxu0 0
    %1551 = vmatpush1.bf16.msra.mxu0 0
    %1552 = vmatprep.subr.bf16.mxu0 0
    %1553 = vmatpush1.bf16.msra.mxu0 0
    %1554 = vmatprep.subr.bf16.mxu0 0
    %1555 = vmatpush1.bf16.msra.mxu0 0
    %1556 = vmatprep.subr.bf16.mxu0 0
    %1557 = vmatpush1.bf16.msra.mxu0 0
    %1558 = vmatprep.subr.bf16.mxu0 0
    %1559 = vmatpush1.bf16.msra.mxu0 0
    %1560 = vmatprep.subr.bf16.mxu0 0
    %1561 = vmatpush1.bf16.msra.mxu0 0
    %1562 = vmatprep.subr.bf16.mxu0 0
    %1563 = vmatpush1.bf16.msra.mxu0 0
    %1564 = vmatprep.subr.bf16.mxu0 0
    %1565 = vmatpush1.bf16.msra.mxu0 0
    %1566 = vmatprep.subr.bf16.mxu0 0
    %1567 = vmatpush1.bf16.msra.mxu0 0
    %1568 = vmatprep.subr.bf16.mxu0 0
    %1569 = vmatpush1.bf16.msra.mxu0 0
    %1570 = vmatprep.mubr.bf16.mxu0 0
    %1571 = vmatmul.mubr.bf16.gmra.mrb[0].mxu0 %v1427
    %v1572 = vpop.f32.mrb[0].mxu0
    %v1573 = vadd.f32 0.0, %v1572
    %v1574 = vpop.f32.mrb[0].mxu0
    %v1575 = vadd.f32 0.0, %v1574
    %v1576 = vpop.f32.mrb[0].mxu0
    %v1577 = vadd.f32 0.0, %v1576
    %v1578 = vpop.f32.mrb[0].mxu0
    %v1579 = vadd.f32 0.0, %v1578
    %1580 = vmatprep.mubr.bf16.mxu0 0
    %1581 = vmatmul.mubr.bf16.gmra.mrb[0].mxu0 %v1430
    %v1582 = vpop.f32.mrb[0].mxu0
    %v1583 = vadd.f32 0.0, %v1582
    %v1584 = vpop.f32.mrb[0].mxu0
    %v1585 = vadd.f32 0.0, %v1584
    %v1586 = vpop.f32.mrb[0].mxu0
    %v1587 = vadd.f32 0.0, %v1586
    %v1588 = vpop.f32.mrb[0].mxu0
    %v1589 = vadd.f32 0.0, %v1588
    %1590 = vdwg.mxu0
    %1591 = vmatprep.subr.bf16.mxu0 %v1378
    %1592 = vmatpush1.bf16.msra.mxu0 %v1402
    %1593 = vmatprep.subr.bf16.mxu0 %v1394
    %1594 = vmatpush1.bf16.msra.mxu0 %v1409
    %1595 = vmatprep.subr.bf16.mxu0 0
    %1596 = vmatpush1.bf16.msra.mxu0 0
    %1597 = vmatprep.subr.bf16.mxu0 0
    %1598 = vmatpush1.bf16.msra.mxu0 0
    %1599 = vmatprep.subr.bf16.mxu0 0
    %1600 = vmatpush1.bf16.msra.mxu0 0
    %1601 = vmatprep.subr.bf16.mxu0 0
    %1602 = vmatpush1.bf16.msra.mxu0 0
    %1603 = vmatprep.subr.bf16.mxu0 0
    %1604 = vmatpush1.bf16.msra.mxu0 0
    %1605 = vmatprep.subr.bf16.mxu0 0
    %1606 = vmatpush1.bf16.msra.mxu0 0
    %1607 = vmatprep.subr.bf16.mxu0 0
    %1608 = vmatpush1.bf16.msra.mxu0 0
    %1609 = vmatprep.subr.bf16.mxu0 0
    %1610 = vmatpush1.bf16.msra.mxu0 0
    %1611 = vmatprep.subr.bf16.mxu0 0
    %1612 = vmatpush1.bf16.msra.mxu0 0
    %1613 = vmatprep.subr.bf16.mxu0 0
    %1614 = vmatpush1.bf16.msra.mxu0 0
    %1615 = vmatprep.subr.bf16.mxu0 0
    %1616 = vmatpush1.bf16.msra.mxu0 0
    %1617 = vmatprep.subr.bf16.mxu0 0
    %1618 = vmatpush1.bf16.msra.mxu0 0
    %1619 = vmatprep.subr.bf16.mxu0 0
    %1620 = vmatpush1.bf16.msra.mxu0 0
    %1621 = vmatprep.subr.bf16.mxu0 0
    %1622 = vmatpush1.bf16.msra.mxu0 0
    %1623 = vmatprep.mubr.bf16.mxu0 0
    %1624 = vmatmul.mubr.bf16.gmra.mrb[0].mxu0 %v1427
    %v1625 = vpop.f32.mrb[0].mxu0
    %v1626 = vadd.f32 0.0, %v1625
    %v1627 = vpop.f32.mrb[0].mxu0
    %v1628 = vadd.f32 0.0, %v1627
    %v1629 = vpop.f32.mrb[0].mxu0
    %v1630 = vadd.f32 0.0, %v1629
    %v1631 = vpop.f32.mrb[0].mxu0
    %v1632 = vadd.f32 0.0, %v1631
    %1633 = vmatprep.mubr.bf16.mxu0 0
    %1634 = vmatmul.mubr.bf16.gmra.mrb[0].mxu0 %v1430
    %v1635 = vpop.f32.mrb[0].mxu0
    %v1636 = vadd.f32 0.0, %v1635
    %v1637 = vpop.f32.mrb[0].mxu0
    %v1638 = vadd.f32 0.0, %v1637
    %v1639 = vpop.f32.mrb[0].mxu0
    %v1640 = vadd.f32 0.0, %v1639
    %v1641 = vpop.f32.mrb[0].mxu0
    %v1642 = vadd.f32 0.0, %v1641
    %1643 = vdwg.mxu0
    %v1644 = vadd.f32 %v1316, %v1467
    %v1645 = vadd.f32 %v1317, %v1469
    %v1646 = vadd.f32 %v1318, %v1520
    %v1647 = vadd.f32 %v1319, %v1522
    %v1648 = vadd.f32 %v1320, %v1573
    %v1649 = vadd.f32 %v1321, %v1575
    %v1650 = vadd.f32 %v1322, %v1626
    %v1651 = vadd.f32 %v1323, %v1628
    %v1652 = vadd.f32 %v1324, %v1471
    %v1653 = vadd.f32 %v1325, %v1473
    %v1654 = vadd.f32 %v1326, %v1524
    %v1655 = vadd.f32 %v1327, %v1526
    %v1656 = vadd.f32 %v1328, %v1577
    %v1657 = vadd.f32 %v1329, %v1579
    %v1658 = vadd.f32 %v1330, %v1630
    %v1659 = vadd.f32 %v1331, %v1632
    %v1660 = vadd.f32 %v1332, %v1477
    %v1661 = vadd.f32 %v1333, %v1479
    %v1662 = vadd.f32 %v1334, %v1530
    %v1663 = vadd.f32 %v1335, %v1532
    %v1664 = vadd.f32 %v1336, %v1583
    %v1665 = vadd.f32 %v1337, %v1585
    %v1666 = vadd.f32 %v1338, %v1636
    %v1667 = vadd.f32 %v1339, %v1638
    %v1668 = vadd.f32 %v1340, %v1481
    %v1669 = vadd.f32 %v1341, %v1483
    %v1670 = vadd.f32 %v1342, %v1534
    %v1671 = vadd.f32 %v1343, %v1536
    %v1672 = vadd.f32 %v1344, %v1587
    %v1673 = vadd.f32 %v1345, %v1589
    %v1674 = vadd.f32 %v1346, %v1640
    %v1675 = vadd.f32 %v1347, %v1642
    %s1676 = scalar_lea.vmem %s3, 64
    %v1677 = vld [vmem:[%s1676] sm:$0xf]
    %v1678 = vld [vmem:[%s1676 + $0x4] sm:$0xf]
    %v1679 = vld [vmem:[%s1676 + $0x8] sm:$0xf]
    %v1680 = vld [vmem:[%s1676 + $0xc] sm:$0xf]
    %v1685 = vunpack.c.l.b16 %v1677
    %v1686 = vunpack.c.l.b16 %v1678
    %v1687 = vunpack.c.l.b16 %v1679
    %v1688 = vunpack.c.l.b16 %v1680
    %v1689 = vpack.c.b16 %v1686, %v1685
    %v1690 = vpack.c.b16 %v1688, %v1687
    %1691 = vrot.lane.b32.xlu0 %v459, 95
    %v1692 = vpop.permute.xlu0 %1691
    %1693 = vrot.lane.b32.xlu0 %v460, 95
    %v1694 = vpop.permute.xlu0 %1693
    %1695 = vrot.lane.b32.xlu0 %v461, 95
    %v1696 = vpop.permute.xlu0 %1695
    %1697 = vrot.lane.b32.xlu0 %v462, 95
    %v1698 = vpop.permute.xlu0 %1697
    %1699 = vrot.lane.b32.xlu0 %v463, 95
    %v1700 = vpop.permute.xlu0 %1699
    %1701 = vrot.lane.b32.xlu0 %v464, 95
    %v1702 = vpop.permute.xlu0 %1701
    %1703 = vrot.lane.b32.xlu0 %v465, 95
    %v1704 = vpop.permute.xlu0 %1703
    %1705 = vrot.lane.b32.xlu0 %v466, 95
    %v1706 = vpop.permute.xlu0 %1705
    %1707 = vrot.lane.b32.xlu0 %v467, 95
    %v1708 = vpop.permute.xlu0 %1707
    %1709 = vrot.lane.b32.xlu0 %v468, 95
    %v1710 = vpop.permute.xlu0 %1709
    %1711 = vrot.lane.b32.xlu0 %v469, 95
    %v1712 = vpop.permute.xlu0 %1711
    %1713 = vrot.lane.b32.xlu0 %v470, 95
    %v1714 = vpop.permute.xlu0 %1713
    %1715 = vrot.lane.b32.xlu0 %v471, 95
    %v1716 = vpop.permute.xlu0 %1715
    %1717 = vrot.lane.b32.xlu0 %v472, 95
    %v1718 = vpop.permute.xlu0 %1717
    %1719 = vrot.lane.b32.xlu0 %v473, 95
    %v1720 = vpop.permute.xlu0 %1719
    %1721 = vrot.lane.b32.xlu0 %v474, 95
    %v1722 = vpop.permute.xlu0 %1721
    %vm1723 = vcmask 777216
    %v1724 = vsel %vm1723, %v1692, %v1694
    %v1725 = vsel %vm1723, %v1694, %v1696
    %v1726 = vsel %vm1723, %v1696, %v1698
    %v1727 = vsel %vm1723, %v1698, %v1700
    %v1728 = vsel %vm1723, %v1700, %v1702
    %v1729 = vsel %vm1723, %v1702, %v1704
    %v1730 = vsel %vm1723, %v1704, %v1706
    %v1731 = vsel %vm1723, %v1708, %v1710
    %v1732 = vsel %vm1723, %v1710, %v1712
    %v1733 = vsel %vm1723, %v1712, %v1714
    %v1734 = vsel %vm1723, %v1714, %v1716
    %v1735 = vsel %vm1723, %v1716, %v1718
    %v1736 = vsel %vm1723, %v1718, %v1720
    %v1737 = vsel %vm1723, %v1720, %v1722
    %v1755 = vsel %vm573, %v1689, 0
    %v1758 = vsel %vm573, %v1690, 0
    %1760 = vmatprep.subr.bf16.mxu0 %v1725
    %1761 = vmatpush1.bf16.msra.mxu0 %v1724
    %1762 = vmatprep.subr.bf16.mxu0 %v1732
    %1763 = vmatpush1.bf16.msra.mxu0 %v1731
    %1764 = vmatprep.subr.bf16.mxu0 0
    %1765 = vmatpush1.bf16.msra.mxu0 0
    %1766 = vmatprep.subr.bf16.mxu0 0
    %1767 = vmatpush1.bf16.msra.mxu0 0
    %1768 = vmatprep.subr.bf16.mxu0 0
    %1769 = vmatpush1.bf16.msra.mxu0 0
    %1770 = vmatprep.subr.bf16.mxu0 0
    %1771 = vmatpush1.bf16.msra.mxu0 0
    %1772 = vmatprep.subr.bf16.mxu0 0
    %1773 = vmatpush1.bf16.msra.mxu0 0
    %1774 = vmatprep.subr.bf16.mxu0 0
    %1775 = vmatpush1.bf16.msra.mxu0 0
    %1776 = vmatprep.subr.bf16.mxu0 0
    %1777 = vmatpush1.bf16.msra.mxu0 0
    %1778 = vmatprep.subr.bf16.mxu0 0
    %1779 = vmatpush1.bf16.msra.mxu0 0
    %1780 = vmatprep.subr.bf16.mxu0 0
    %1781 = vmatpush1.bf16.msra.mxu0 0
    %1782 = vmatprep.subr.bf16.mxu0 0
    %1783 = vmatpush1.bf16.msra.mxu0 0
    %1784 = vmatprep.subr.bf16.mxu0 0
    %1785 = vmatpush1.bf16.msra.mxu0 0
    %1786 = vmatprep.subr.bf16.mxu0 0
    %1787 = vmatpush1.bf16.msra.mxu0 0
    %1788 = vmatprep.subr.bf16.mxu0 0
    %1789 = vmatpush1.bf16.msra.mxu0 0
    %1790 = vmatprep.subr.bf16.mxu0 0
    %1791 = vmatpush1.bf16.msra.mxu0 0
    %1792 = vmatprep.mubr.bf16.mxu0 0
    %1793 = vmatmul.mubr.bf16.gmra.mrb[0].mxu0 %v1755
    %v1794 = vpop.f32.mrb[0].mxu0
    %v1795 = vadd.f32 0.0, %v1794
    %v1796 = vpop.f32.mrb[0].mxu0
    %v1797 = vadd.f32 0.0, %v1796
    %v1798 = vpop.f32.mrb[0].mxu0
    %v1799 = vadd.f32 0.0, %v1798
    %v1800 = vpop.f32.mrb[0].mxu0
    %v1801 = vadd.f32 0.0, %v1800
    %1802 = vmatprep.mubr.bf16.mxu0 0
    %1803 = vmatmul.mubr.bf16.gmra.mrb[0].mxu0 %v1758
    %v1804 = vpop.f32.mrb[0].mxu0
    %v1805 = vadd.f32 0.0, %v1804
    %v1806 = vpop.f32.mrb[0].mxu0
    %v1807 = vadd.f32 0.0, %v1806
    %v1808 = vpop.f32.mrb[0].mxu0
    %v1809 = vadd.f32 0.0, %v1808
    %v1810 = vpop.f32.mrb[0].mxu0
    %v1811 = vadd.f32 0.0, %v1810
    %1812 = vdwg.mxu0
    %1813 = vmatprep.subr.bf16.mxu0 %v1727
    %1814 = vmatpush1.bf16.msra.mxu0 %v1726
    %1815 = vmatprep.subr.bf16.mxu0 %v1734
    %1816 = vmatpush1.bf16.msra.mxu0 %v1733
    %1817 = vmatprep.subr.bf16.mxu0 0
    %1818 = vmatpush1.bf16.msra.mxu0 0
    %1819 = vmatprep.subr.bf16.mxu0 0
    %1820 = vmatpush1.bf16.msra.mxu0 0
    %1821 = vmatprep.subr.bf16.mxu0 0
    %1822 = vmatpush1.bf16.msra.mxu0 0
    %1823 = vmatprep.subr.bf16.mxu0 0
    %1824 = vmatpush1.bf16.msra.mxu0 0
    %1825 = vmatprep.subr.bf16.mxu0 0
    %1826 = vmatpush1.bf16.msra.mxu0 0
    %1827 = vmatprep.subr.bf16.mxu0 0
    %1828 = vmatpush1.bf16.msra.mxu0 0
    %1829 = vmatprep.subr.bf16.mxu0 0
    %1830 = vmatpush1.bf16.msra.mxu0 0
    %1831 = vmatprep.subr.bf16.mxu0 0
    %1832 = vmatpush1.bf16.msra.mxu0 0
    %1833 = vmatprep.subr.bf16.mxu0 0
    %1834 = vmatpush1.bf16.msra.mxu0 0
    %1835 = vmatprep.subr.bf16.mxu0 0
    %1836 = vmatpush1.bf16.msra.mxu0 0
    %1837 = vmatprep.subr.bf16.mxu0 0
    %1838 = vmatpush1.bf16.msra.mxu0 0
    %1839 = vmatprep.subr.bf16.mxu0 0
    %1840 = vmatpush1.bf16.msra.mxu0 0
    %1841 = vmatprep.subr.bf16.mxu0 0
    %1842 = vmatpush1.bf16.msra.mxu0 0
    %1843 = vmatprep.subr.bf16.mxu0 0
    %1844 = vmatpush1.bf16.msra.mxu0 0
    %1845 = vmatprep.mubr.bf16.mxu0 0
    %1846 = vmatmul.mubr.bf16.gmra.mrb[0].mxu0 %v1755
    %v1847 = vpop.f32.mrb[0].mxu0
    %v1848 = vadd.f32 0.0, %v1847
    %v1849 = vpop.f32.mrb[0].mxu0
    %v1850 = vadd.f32 0.0, %v1849
    %v1851 = vpop.f32.mrb[0].mxu0
    %v1852 = vadd.f32 0.0, %v1851
    %v1853 = vpop.f32.mrb[0].mxu0
    %v1854 = vadd.f32 0.0, %v1853
    %1855 = vmatprep.mubr.bf16.mxu0 0
    %1856 = vmatmul.mubr.bf16.gmra.mrb[0].mxu0 %v1758
    %v1857 = vpop.f32.mrb[0].mxu0
    %v1858 = vadd.f32 0.0, %v1857
    %v1859 = vpop.f32.mrb[0].mxu0
    %v1860 = vadd.f32 0.0, %v1859
    %v1861 = vpop.f32.mrb[0].mxu0
    %v1862 = vadd.f32 0.0, %v1861
    %v1863 = vpop.f32.mrb[0].mxu0
    %v1864 = vadd.f32 0.0, %v1863
    %1865 = vdwg.mxu0
    %1866 = vmatprep.subr.bf16.mxu0 %v1729
    %1867 = vmatpush1.bf16.msra.mxu0 %v1728
    %1868 = vmatprep.subr.bf16.mxu0 %v1736
    %1869 = vmatpush1.bf16.msra.mxu0 %v1735
    %1870 = vmatprep.subr.bf16.mxu0 0
    %1871 = vmatpush1.bf16.msra.mxu0 0
    %1872 = vmatprep.subr.bf16.mxu0 0
    %1873 = vmatpush1.bf16.msra.mxu0 0
    %1874 = vmatprep.subr.bf16.mxu0 0
    %1875 = vmatpush1.bf16.msra.mxu0 0
    %1876 = vmatprep.subr.bf16.mxu0 0
    %1877 = vmatpush1.bf16.msra.mxu0 0
    %1878 = vmatprep.subr.bf16.mxu0 0
    %1879 = vmatpush1.bf16.msra.mxu0 0
    %1880 = vmatprep.subr.bf16.mxu0 0
    %1881 = vmatpush1.bf16.msra.mxu0 0
    %1882 = vmatprep.subr.bf16.mxu0 0
    %1883 = vmatpush1.bf16.msra.mxu0 0
    %1884 = vmatprep.subr.bf16.mxu0 0
    %1885 = vmatpush1.bf16.msra.mxu0 0
    %1886 = vmatprep.subr.bf16.mxu0 0
    %1887 = vmatpush1.bf16.msra.mxu0 0
    %1888 = vmatprep.subr.bf16.mxu0 0
    %1889 = vmatpush1.bf16.msra.mxu0 0
    %1890 = vmatprep.subr.bf16.mxu0 0
    %1891 = vmatpush1.bf16.msra.mxu0 0
    %1892 = vmatprep.subr.bf16.mxu0 0
    %1893 = vmatpush1.bf16.msra.mxu0 0
    %1894 = vmatprep.subr.bf16.mxu0 0
    %1895 = vmatpush1.bf16.msra.mxu0 0
    %1896 = vmatprep.subr.bf16.mxu0 0
    %1897 = vmatpush1.bf16.msra.mxu0 0
    %1898 = vmatprep.mubr.bf16.mxu0 0
    %1899 = vmatmul.mubr.bf16.gmra.mrb[0].mxu0 %v1755
    %v1900 = vpop.f32.mrb[0].mxu0
    %v1901 = vadd.f32 0.0, %v1900
    %v1902 = vpop.f32.mrb[0].mxu0
    %v1903 = vadd.f32 0.0, %v1902
    %v1904 = vpop.f32.mrb[0].mxu0
    %v1905 = vadd.f32 0.0, %v1904
    %v1906 = vpop.f32.mrb[0].mxu0
    %v1907 = vadd.f32 0.0, %v1906
    %1908 = vmatprep.mubr.bf16.mxu0 0
    %1909 = vmatmul.mubr.bf16.gmra.mrb[0].mxu0 %v1758
    %v1910 = vpop.f32.mrb[0].mxu0
    %v1911 = vadd.f32 0.0, %v1910
    %v1912 = vpop.f32.mrb[0].mxu0
    %v1913 = vadd.f32 0.0, %v1912
    %v1914 = vpop.f32.mrb[0].mxu0
    %v1915 = vadd.f32 0.0, %v1914
    %v1916 = vpop.f32.mrb[0].mxu0
    %v1917 = vadd.f32 0.0, %v1916
    %1918 = vdwg.mxu0
    %1919 = vmatprep.subr.bf16.mxu0 %v1706
    %1920 = vmatpush1.bf16.msra.mxu0 %v1730
    %1921 = vmatprep.subr.bf16.mxu0 %v1722
    %1922 = vmatpush1.bf16.msra.mxu0 %v1737
    %1923 = vmatprep.subr.bf16.mxu0 0
    %1924 = vmatpush1.bf16.msra.mxu0 0
    %1925 = vmatprep.subr.bf16.mxu0 0
    %1926 = vmatpush1.bf16.msra.mxu0 0
    %1927 = vmatprep.subr.bf16.mxu0 0
    %1928 = vmatpush1.bf16.msra.mxu0 0
    %1929 = vmatprep.subr.bf16.mxu0 0
    %1930 = vmatpush1.bf16.msra.mxu0 0
    %1931 = vmatprep.subr.bf16.mxu0 0
    %1932 = vmatpush1.bf16.msra.mxu0 0
    %1933 = vmatprep.subr.bf16.mxu0 0
    %1934 = vmatpush1.bf16.msra.mxu0 0
    %1935 = vmatprep.subr.bf16.mxu0 0
    %1936 = vmatpush1.bf16.msra.mxu0 0
    %1937 = vmatprep.subr.bf16.mxu0 0
    %1938 = vmatpush1.bf16.msra.mxu0 0
    %1939 = vmatprep.subr.bf16.mxu0 0
    %1940 = vmatpush1.bf16.msra.mxu0 0
    %1941 = vmatprep.subr.bf16.mxu0 0
    %1942 = vmatpush1.bf16.msra.mxu0 0
    %1943 = vmatprep.subr.bf16.mxu0 0
    %1944 = vmatpush1.bf16.msra.mxu0 0
    %1945 = vmatprep.subr.bf16.mxu0 0
    %1946 = vmatpush1.bf16.msra.mxu0 0
    %1947 = vmatprep.subr.bf16.mxu0 0
    %1948 = vmatpush1.bf16.msra.mxu0 0
    %1949 = vmatprep.subr.bf16.mxu0 0
    %1950 = vmatpush1.bf16.msra.mxu0 0
    %1951 = vmatprep.mubr.bf16.mxu0 0
    %1952 = vmatmul.mubr.bf16.gmra.mrb[0].mxu0 %v1755
    %v1953 = vpop.f32.mrb[0].mxu0
    %v1954 = vadd.f32 0.0, %v1953
    %v1955 = vpop.f32.mrb[0].mxu0
    %v1956 = vadd.f32 0.0, %v1955
    %v1957 = vpop.f32.mrb[0].mxu0
    %v1958 = vadd.f32 0.0, %v1957
    %v1959 = vpop.f32.mrb[0].mxu0
    %v1960 = vadd.f32 0.0, %v1959
    %1961 = vmatprep.mubr.bf16.mxu0 0
    %1962 = vmatmul.mubr.bf16.gmra.mrb[0].mxu0 %v1758
    %v1963 = vpop.f32.mrb[0].mxu0
    %v1964 = vadd.f32 0.0, %v1963
    %v1965 = vpop.f32.mrb[0].mxu0
    %v1966 = vadd.f32 0.0, %v1965
    %v1967 = vpop.f32.mrb[0].mxu0
    %v1968 = vadd.f32 0.0, %v1967
    %v1969 = vpop.f32.mrb[0].mxu0
    %v1970 = vadd.f32 0.0, %v1969
    %1971 = vdwg.mxu0
    %v1972 = vadd.f32 %v1644, %v1795
    %v1973 = vadd.f32 %v1645, %v1797
    %v1974 = vadd.f32 %v1646, %v1848
    %v1975 = vadd.f32 %v1647, %v1850
    %v1976 = vadd.f32 %v1648, %v1901
    %v1977 = vadd.f32 %v1649, %v1903
    %v1978 = vadd.f32 %v1650, %v1954
    %v1979 = vadd.f32 %v1651, %v1956
    %v1980 = vadd.f32 %v1652, %v1799
    %v1981 = vadd.f32 %v1653, %v1801
    %v1982 = vadd.f32 %v1654, %v1852
    %v1983 = vadd.f32 %v1655, %v1854
    %v1984 = vadd.f32 %v1656, %v1905
    %v1985 = vadd.f32 %v1657, %v1907
    %v1986 = vadd.f32 %v1658, %v1958
    %v1987 = vadd.f32 %v1659, %v1960
    %v1988 = vadd.f32 %v1660, %v1805
    %v1989 = vadd.f32 %v1661, %v1807
    %v1990 = vadd.f32 %v1662, %v1858
    %v1991 = vadd.f32 %v1663, %v1860
    %v1992 = vadd.f32 %v1664, %v1911
    %v1993 = vadd.f32 %v1665, %v1913
    %v1994 = vadd.f32 %v1666, %v1964
    %v1995 = vadd.f32 %v1667, %v1966
    %v1996 = vadd.f32 %v1668, %v1809
    %v1997 = vadd.f32 %v1669, %v1811
    %v1998 = vadd.f32 %v1670, %v1862
    %v1999 = vadd.f32 %v1671, %v1864
    %v2000 = vadd.f32 %v1672, %v1915
    %v2001 = vadd.f32 %v1673, %v1917
    %v2002 = vadd.f32 %v1674, %v1968
    %v2003 = vadd.f32 %v1675, %v1970
    %s2004 = scalar_lea.vmem %s3, 80
    %v2005 = vld [vmem:[%s2004] sm:$0xf]
    %v2006 = vld [vmem:[%s2004 + $0x4] sm:$0xf]
    %v2007 = vld [vmem:[%s2004 + $0x8] sm:$0xf]
    %v2008 = vld [vmem:[%s2004 + $0xc] sm:$0xf]
    %v2013 = vunpack.c.l.b16 %v2005
    %v2014 = vunpack.c.l.b16 %v2006
    %v2015 = vunpack.c.l.b16 %v2007
    %v2016 = vunpack.c.l.b16 %v2008
    %v2017 = vpack.c.b16 %v2014, %v2013
    %v2018 = vpack.c.b16 %v2016, %v2015
    %2019 = vrot.lane.b32.xlu0 %v459, 94
    %v2020 = vpop.permute.xlu0 %2019
    %2021 = vrot.lane.b32.xlu0 %v460, 94
    %v2022 = vpop.permute.xlu0 %2021
    %2023 = vrot.lane.b32.xlu0 %v461, 94
    %v2024 = vpop.permute.xlu0 %2023
    %2025 = vrot.lane.b32.xlu0 %v462, 94
    %v2026 = vpop.permute.xlu0 %2025
    %2027 = vrot.lane.b32.xlu0 %v463, 94
    %v2028 = vpop.permute.xlu0 %2027
    %2029 = vrot.lane.b32.xlu0 %v464, 94
    %v2030 = vpop.permute.xlu0 %2029
    %2031 = vrot.lane.b32.xlu0 %v465, 94
    %v2032 = vpop.permute.xlu0 %2031
    %2033 = vrot.lane.b32.xlu0 %v466, 94
    %v2034 = vpop.permute.xlu0 %2033
    %2035 = vrot.lane.b32.xlu0 %v467, 94
    %v2036 = vpop.permute.xlu0 %2035
    %2037 = vrot.lane.b32.xlu0 %v468, 94
    %v2038 = vpop.permute.xlu0 %2037
    %2039 = vrot.lane.b32.xlu0 %v469, 94
    %v2040 = vpop.permute.xlu0 %2039
    %2041 = vrot.lane.b32.xlu0 %v470, 94
    %v2042 = vpop.permute.xlu0 %2041
    %2043 = vrot.lane.b32.xlu0 %v471, 94
    %v2044 = vpop.permute.xlu0 %2043
    %2045 = vrot.lane.b32.xlu0 %v472, 94
    %v2046 = vpop.permute.xlu0 %2045
    %2047 = vrot.lane.b32.xlu0 %v473, 94
    %v2048 = vpop.permute.xlu0 %2047
    %2049 = vrot.lane.b32.xlu0 %v474, 94
    %v2050 = vpop.permute.xlu0 %2049
    %vm2051 = vcmask 769024
    %v2052 = vsel %vm2051, %v2020, %v2022
    %v2053 = vsel %vm2051, %v2022, %v2024
    %v2054 = vsel %vm2051, %v2024, %v2026
    %v2055 = vsel %vm2051, %v2026, %v2028
    %v2056 = vsel %vm2051, %v2028, %v2030
    %v2057 = vsel %vm2051, %v2030, %v2032
    %v2058 = vsel %vm2051, %v2032, %v2034
    %v2059 = vsel %vm2051, %v2036, %v2038
    %v2060 = vsel %vm2051, %v2038, %v2040
    %v2061 = vsel %vm2051, %v2040, %v2042
    %v2062 = vsel %vm2051, %v2042, %v2044
    %v2063 = vsel %vm2051, %v2044, %v2046
    %v2064 = vsel %vm2051, %v2046, %v2048
    %v2065 = vsel %vm2051, %v2048, %v2050
    %v2083 = vsel %vm573, %v2017, 0
    %v2086 = vsel %vm573, %v2018, 0
    %2088 = vmatprep.subr.bf16.mxu0 %v2053
    %2089 = vmatpush1.bf16.msra.mxu0 %v2052
    %2090 = vmatprep.subr.bf16.mxu0 %v2060
    %2091 = vmatpush1.bf16.msra.mxu0 %v2059
    %2092 = vmatprep.subr.bf16.mxu0 0
    %2093 = vmatpush1.bf16.msra.mxu0 0
    %2094 = vmatprep.subr.bf16.mxu0 0
    %2095 = vmatpush1.bf16.msra.mxu0 0
    %2096 = vmatprep.subr.bf16.mxu0 0
    %2097 = vmatpush1.bf16.msra.mxu0 0
    %2098 = vmatprep.subr.bf16.mxu0 0
    %2099 = vmatpush1.bf16.msra.mxu0 0
    %2100 = vmatprep.subr.bf16.mxu0 0
    %2101 = vmatpush1.bf16.msra.mxu0 0
    %2102 = vmatprep.subr.bf16.mxu0 0
    %2103 = vmatpush1.bf16.msra.mxu0 0
    %2104 = vmatprep.subr.bf16.mxu0 0
    %2105 = vmatpush1.bf16.msra.mxu0 0
    %2106 = vmatprep.subr.bf16.mxu0 0
    %2107 = vmatpush1.bf16.msra.mxu0 0
    %2108 = vmatprep.subr.bf16.mxu0 0
    %2109 = vmatpush1.bf16.msra.mxu0 0
    %2110 = vmatprep.subr.bf16.mxu0 0
    %2111 = vmatpush1.bf16.msra.mxu0 0
    %2112 = vmatprep.subr.bf16.mxu0 0
    %2113 = vmatpush1.bf16.msra.mxu0 0
    %2114 = vmatprep.subr.bf16.mxu0 0
    %2115 = vmatpush1.bf16.msra.mxu0 0
    %2116 = vmatprep.subr.bf16.mxu0 0
    %2117 = vmatpush1.bf16.msra.mxu0 0
    %2118 = vmatprep.subr.bf16.mxu0 0
    %2119 = vmatpush1.bf16.msra.mxu0 0
    %2120 = vmatprep.mubr.bf16.mxu0 0
    %2121 = vmatmul.mubr.bf16.gmra.mrb[0].mxu0 %v2083
    %v2122 = vpop.f32.mrb[0].mxu0
    %v2123 = vadd.f32 0.0, %v2122
    %v2124 = vpop.f32.mrb[0].mxu0
    %v2125 = vadd.f32 0.0, %v2124
    %v2126 = vpop.f32.mrb[0].mxu0
    %v2127 = vadd.f32 0.0, %v2126
    %v2128 = vpop.f32.mrb[0].mxu0
    %v2129 = vadd.f32 0.0, %v2128
    %2130 = vmatprep.mubr.bf16.mxu0 0
    %2131 = vmatmul.mubr.bf16.gmra.mrb[0].mxu0 %v2086
    %v2132 = vpop.f32.mrb[0].mxu0
    %v2133 = vadd.f32 0.0, %v2132
    %v2134 = vpop.f32.mrb[0].mxu0
    %v2135 = vadd.f32 0.0, %v2134
    %v2136 = vpop.f32.mrb[0].mxu0
    %v2137 = vadd.f32 0.0, %v2136
    %v2138 = vpop.f32.mrb[0].mxu0
    %v2139 = vadd.f32 0.0, %v2138
    %2140 = vdwg.mxu0
    %2141 = vmatprep.subr.bf16.mxu0 %v2055
    %2142 = vmatpush1.bf16.msra.mxu0 %v2054
    %2143 = vmatprep.subr.bf16.mxu0 %v2062
    %2144 = vmatpush1.bf16.msra.mxu0 %v2061
    %2145 = vmatprep.subr.bf16.mxu0 0
    %2146 = vmatpush1.bf16.msra.mxu0 0
    %2147 = vmatprep.subr.bf16.mxu0 0
    %2148 = vmatpush1.bf16.msra.mxu0 0
    %2149 = vmatprep.subr.bf16.mxu0 0
    %2150 = vmatpush1.bf16.msra.mxu0 0
    %2151 = vmatprep.subr.bf16.mxu0 0
    %2152 = vmatpush1.bf16.msra.mxu0 0
    %2153 = vmatprep.subr.bf16.mxu0 0
    %2154 = vmatpush1.bf16.msra.mxu0 0
    %2155 = vmatprep.subr.bf16.mxu0 0
    %2156 = vmatpush1.bf16.msra.mxu0 0
    %2157 = vmatprep.subr.bf16.mxu0 0
    %2158 = vmatpush1.bf16.msra.mxu0 0
    %2159 = vmatprep.subr.bf16.mxu0 0
    %2160 = vmatpush1.bf16.msra.mxu0 0
    %2161 = vmatprep.subr.bf16.mxu0 0
    %2162 = vmatpush1.bf16.msra.mxu0 0
    %2163 = vmatprep.subr.bf16.mxu0 0
    %2164 = vmatpush1.bf16.msra.mxu0 0
    %2165 = vmatprep.subr.bf16.mxu0 0
    %2166 = vmatpush1.bf16.msra.mxu0 0
    %2167 = vmatprep.subr.bf16.mxu0 0
    %2168 = vmatpush1.bf16.msra.mxu0 0
    %2169 = vmatprep.subr.bf16.mxu0 0
    %2170 = vmatpush1.bf16.msra.mxu0 0
    %2171 = vmatprep.subr.bf16.mxu0 0
    %2172 = vmatpush1.bf16.msra.mxu0 0
    %2173 = vmatprep.mubr.bf16.mxu0 0
    %2174 = vmatmul.mubr.bf16.gmra.mrb[0].mxu0 %v2083
    %v2175 = vpop.f32.mrb[0].mxu0
    %v2176 = vadd.f32 0.0, %v2175
    %v2177 = vpop.f32.mrb[0].mxu0
    %v2178 = vadd.f32 0.0, %v2177
    %v2179 = vpop.f32.mrb[0].mxu0
    %v2180 = vadd.f32 0.0, %v2179
    %v2181 = vpop.f32.mrb[0].mxu0
    %v2182 = vadd.f32 0.0, %v2181
    %2183 = vmatprep.mubr.bf16.mxu0 0
    %2184 = vmatmul.mubr.bf16.gmra.mrb[0].mxu0 %v2086
    %v2185 = vpop.f32.mrb[0].mxu0
    %v2186 = vadd.f32 0.0, %v2185
    %v2187 = vpop.f32.mrb[0].mxu0
    %v2188 = vadd.f32 0.0, %v2187
    %v2189 = vpop.f32.mrb[0].mxu0
    %v2190 = vadd.f32 0.0, %v2189
    %v2191 = vpop.f32.mrb[0].mxu0
    %v2192 = vadd.f32 0.0, %v2191
    %2193 = vdwg.mxu0
    %2194 = vmatprep.subr.bf16.mxu0 %v2057
    %2195 = vmatpush1.bf16.msra.mxu0 %v2056
    %2196 = vmatprep.subr.bf16.mxu0 %v2064
    %2197 = vmatpush1.bf16.msra.mxu0 %v2063
    %2198 = vmatprep.subr.bf16.mxu0 0
    %2199 = vmatpush1.bf16.msra.mxu0 0
    %2200 = vmatprep.subr.bf16.mxu0 0
    %2201 = vmatpush1.bf16.msra.mxu0 0
    %2202 = vmatprep.subr.bf16.mxu0 0
    %2203 = vmatpush1.bf16.msra.mxu0 0
    %2204 = vmatprep.subr.bf16.mxu0 0
    %2205 = vmatpush1.bf16.msra.mxu0 0
    %2206 = vmatprep.subr.bf16.mxu0 0
    %2207 = vmatpush1.bf16.msra.mxu0 0
    %2208 = vmatprep.subr.bf16.mxu0 0
    %2209 = vmatpush1.bf16.msra.mxu0 0
    %2210 = vmatprep.subr.bf16.mxu0 0
    %2211 = vmatpush1.bf16.msra.mxu0 0
    %2212 = vmatprep.subr.bf16.mxu0 0
    %2213 = vmatpush1.bf16.msra.mxu0 0
    %2214 = vmatprep.subr.bf16.mxu0 0
    %2215 = vmatpush1.bf16.msra.mxu0 0
    %2216 = vmatprep.subr.bf16.mxu0 0
    %2217 = vmatpush1.bf16.msra.mxu0 0
    %2218 = vmatprep.subr.bf16.mxu0 0
    %2219 = vmatpush1.bf16.msra.mxu0 0
    %2220 = vmatprep.subr.bf16.mxu0 0
    %2221 = vmatpush1.bf16.msra.mxu0 0
    %2222 = vmatprep.subr.bf16.mxu0 0
    %2223 = vmatpush1.bf16.msra.mxu0 0
    %2224 = vmatprep.subr.bf16.mxu0 0
    %2225 = vmatpush1.bf16.msra.mxu0 0
    %2226 = vmatprep.mubr.bf16.mxu0 0
    %2227 = vmatmul.mubr.bf16.gmra.mrb[0].mxu0 %v2083
    %v2228 = vpop.f32.mrb[0].mxu0
    %v2229 = vadd.f32 0.0, %v2228
    %v2230 = vpop.f32.mrb[0].mxu0
    %v2231 = vadd.f32 0.0, %v2230
    %v2232 = vpop.f32.mrb[0].mxu0
    %v2233 = vadd.f32 0.0, %v2232
    %v2234 = vpop.f32.mrb[0].mxu0
    %v2235 = vadd.f32 0.0, %v2234
    %2236 = vmatprep.mubr.bf16.mxu0 0
    %2237 = vmatmul.mubr.bf16.gmra.mrb[0].mxu0 %v2086
    %v2238 = vpop.f32.mrb[0].mxu0
    %v2239 = vadd.f32 0.0, %v2238
    %v2240 = vpop.f32.mrb[0].mxu0
    %v2241 = vadd.f32 0.0, %v2240
    %v2242 = vpop.f32.mrb[0].mxu0
    %v2243 = vadd.f32 0.0, %v2242
    %v2244 = vpop.f32.mrb[0].mxu0
    %v2245 = vadd.f32 0.0, %v2244
    %2246 = vdwg.mxu0
    %2247 = vmatprep.subr.bf16.mxu0 %v2034
    %2248 = vmatpush1.bf16.msra.mxu0 %v2058
    %2249 = vmatprep.subr.bf16.mxu0 %v2050
    %2250 = vmatpush1.bf16.msra.mxu0 %v2065
    %2251 = vmatprep.subr.bf16.mxu0 0
    %2252 = vmatpush1.bf16.msra.mxu0 0
    %2253 = vmatprep.subr.bf16.mxu0 0
    %2254 = vmatpush1.bf16.msra.mxu0 0
    %2255 = vmatprep.subr.bf16.mxu0 0
    %2256 = vmatpush1.bf16.msra.mxu0 0
    %2257 = vmatprep.subr.bf16.mxu0 0
    %2258 = vmatpush1.bf16.msra.mxu0 0
    %2259 = vmatprep.subr.bf16.mxu0 0
    %2260 = vmatpush1.bf16.msra.mxu0 0
    %2261 = vmatprep.subr.bf16.mxu0 0
    %2262 = vmatpush1.bf16.msra.mxu0 0
    %2263 = vmatprep.subr.bf16.mxu0 0
    %2264 = vmatpush1.bf16.msra.mxu0 0
    %2265 = vmatprep.subr.bf16.mxu0 0
    %2266 = vmatpush1.bf16.msra.mxu0 0
    %2267 = vmatprep.subr.bf16.mxu0 0
    %2268 = vmatpush1.bf16.msra.mxu0 0
    %2269 = vmatprep.subr.bf16.mxu0 0
    %2270 = vmatpush1.bf16.msra.mxu0 0
    %2271 = vmatprep.subr.bf16.mxu0 0
    %2272 = vmatpush1.bf16.msra.mxu0 0
    %2273 = vmatprep.subr.bf16.mxu0 0
    %2274 = vmatpush1.bf16.msra.mxu0 0
    %2275 = vmatprep.subr.bf16.mxu0 0
    %2276 = vmatpush1.bf16.msra.mxu0 0
    %2277 = vmatprep.subr.bf16.mxu0 0
    %2278 = vmatpush1.bf16.msra.mxu0 0
    %2279 = vmatprep.mubr.bf16.mxu0 0
    %2280 = vmatmul.mubr.bf16.gmra.mrb[0].mxu0 %v2083
    %v2281 = vpop.f32.mrb[0].mxu0
    %v2282 = vadd.f32 0.0, %v2281
    %v2283 = vpop.f32.mrb[0].mxu0
    %v2284 = vadd.f32 0.0, %v2283
    %v2285 = vpop.f32.mrb[0].mxu0
    %v2286 = vadd.f32 0.0, %v2285
    %v2287 = vpop.f32.mrb[0].mxu0
    %v2288 = vadd.f32 0.0, %v2287
    %2289 = vmatprep.mubr.bf16.mxu0 0
    %2290 = vmatmul.mubr.bf16.gmra.mrb[0].mxu0 %v2086
    %v2291 = vpop.f32.mrb[0].mxu0
    %v2292 = vadd.f32 0.0, %v2291
    %v2293 = vpop.f32.mrb[0].mxu0
    %v2294 = vadd.f32 0.0, %v2293
    %v2295 = vpop.f32.mrb[0].mxu0
    %v2296 = vadd.f32 0.0, %v2295
    %v2297 = vpop.f32.mrb[0].mxu0
    %v2298 = vadd.f32 0.0, %v2297
    %2299 = vdwg.mxu0
    %v2300 = vadd.f32 %v1972, %v2123
    %v2301 = vadd.f32 %v1973, %v2125
    %v2302 = vadd.f32 %v1974, %v2176
    %v2303 = vadd.f32 %v1975, %v2178
    %v2304 = vadd.f32 %v1976, %v2229
    %v2305 = vadd.f32 %v1977, %v2231
    %v2306 = vadd.f32 %v1978, %v2282
    %v2307 = vadd.f32 %v1979, %v2284
    %v2308 = vadd.f32 %v1980, %v2127
    %v2309 = vadd.f32 %v1981, %v2129
    %v2310 = vadd.f32 %v1982, %v2180
    %v2311 = vadd.f32 %v1983, %v2182
    %v2312 = vadd.f32 %v1984, %v2233
    %v2313 = vadd.f32 %v1985, %v2235
    %v2314 = vadd.f32 %v1986, %v2286
    %v2315 = vadd.f32 %v1987, %v2288
    %v2316 = vadd.f32 %v1988, %v2133
    %v2317 = vadd.f32 %v1989, %v2135
    %v2318 = vadd.f32 %v1990, %v2186
    %v2319 = vadd.f32 %v1991, %v2188
    %v2320 = vadd.f32 %v1992, %v2239
    %v2321 = vadd.f32 %v1993, %v2241
    %v2322 = vadd.f32 %v1994, %v2292
    %v2323 = vadd.f32 %v1995, %v2294
    %v2324 = vadd.f32 %v1996, %v2137
    %v2325 = vadd.f32 %v1997, %v2139
    %v2326 = vadd.f32 %v1998, %v2190
    %v2327 = vadd.f32 %v1999, %v2192
    %v2328 = vadd.f32 %v2000, %v2243
    %v2329 = vadd.f32 %v2001, %v2245
    %v2330 = vadd.f32 %v2002, %v2296
    %v2331 = vadd.f32 %v2003, %v2298
    %s2332 = scalar_lea.vmem %s3, 96
    %v2333 = vld [vmem:[%s2332] sm:$0xf]
    %v2334 = vld [vmem:[%s2332 + $0x4] sm:$0xf]
    %v2335 = vld [vmem:[%s2332 + $0x8] sm:$0xf]
    %v2336 = vld [vmem:[%s2332 + $0xc] sm:$0xf]
    %v2341 = vunpack.c.l.b16 %v2333
    %v2342 = vunpack.c.l.b16 %v2334
    %v2343 = vunpack.c.l.b16 %v2335
    %v2344 = vunpack.c.l.b16 %v2336
    %v2345 = vpack.c.b16 %v2342, %v2341
    %v2346 = vpack.c.b16 %v2344, %v2343
    %2347 = vrot.lane.b32.xlu0 %v459, 64
    %v2348 = vpop.permute.xlu0 %2347
    %2349 = vrot.lane.b32.xlu0 %v460, 64
    %v2350 = vpop.permute.xlu0 %2349
    %2351 = vrot.lane.b32.xlu0 %v461, 64
    %v2352 = vpop.permute.xlu0 %2351
    %2353 = vrot.lane.b32.xlu0 %v462, 64
    %v2354 = vpop.permute.xlu0 %2353
    %2355 = vrot.lane.b32.xlu0 %v463, 64
    %v2356 = vpop.permute.xlu0 %2355
    %2357 = vrot.lane.b32.xlu0 %v464, 64
    %v2358 = vpop.permute.xlu0 %2357
    %2359 = vrot.lane.b32.xlu0 %v465, 64
    %v2360 = vpop.permute.xlu0 %2359
    %2361 = vrot.lane.b32.xlu0 %v466, 64
    %v2362 = vpop.permute.xlu0 %2361
    %2363 = vrot.lane.b32.xlu0 %v467, 64
    %v2364 = vpop.permute.xlu0 %2363
    %2365 = vrot.lane.b32.xlu0 %v468, 64
    %v2366 = vpop.permute.xlu0 %2365
    %2367 = vrot.lane.b32.xlu0 %v469, 64
    %v2368 = vpop.permute.xlu0 %2367
    %2369 = vrot.lane.b32.xlu0 %v470, 64
    %v2370 = vpop.permute.xlu0 %2369
    %2371 = vrot.lane.b32.xlu0 %v471, 64
    %v2372 = vpop.permute.xlu0 %2371
    %2373 = vrot.lane.b32.xlu0 %v472, 64
    %v2374 = vpop.permute.xlu0 %2373
    %2375 = vrot.lane.b32.xlu0 %v473, 64
    %v2376 = vpop.permute.xlu0 %2375
    %2377 = vrot.lane.b32.xlu0 %v474, 64
    %v2378 = vpop.permute.xlu0 %2377
    %vm2379 = vcmask 523264
    %v2380 = vsel %vm2379, %v2348, %v2350
    %v2381 = vsel %vm2379, %v2350, %v2352
    %v2382 = vsel %vm2379, %v2352, %v2354
    %v2383 = vsel %vm2379, %v2354, %v2356
    %v2384 = vsel %vm2379, %v2356, %v2358
    %v2385 = vsel %vm2379, %v2358, %v2360
    %v2386 = vsel %vm2379, %v2360, %v2362
    %v2387 = vsel %vm2379, %v2364, %v2366
    %v2388 = vsel %vm2379, %v2366, %v2368
    %v2389 = vsel %vm2379, %v2368, %v2370
    %v2390 = vsel %vm2379, %v2370, %v2372
    %v2391 = vsel %vm2379, %v2372, %v2374
    %v2392 = vsel %vm2379, %v2374, %v2376
    %v2393 = vsel %vm2379, %v2376, %v2378
    %v2411 = vsel %vm573, %v2345, 0
    %v2414 = vsel %vm573, %v2346, 0
    %2416 = vmatprep.subr.bf16.mxu0 %v2381
    %2417 = vmatpush1.bf16.msra.mxu0 %v2380
    %2418 = vmatprep.subr.bf16.mxu0 %v2388
    %2419 = vmatpush1.bf16.msra.mxu0 %v2387
    %2420 = vmatprep.subr.bf16.mxu0 0
    %2421 = vmatpush1.bf16.msra.mxu0 0
    %2422 = vmatprep.subr.bf16.mxu0 0
    %2423 = vmatpush1.bf16.msra.mxu0 0
    %2424 = vmatprep.subr.bf16.mxu0 0
    %2425 = vmatpush1.bf16.msra.mxu0 0
    %2426 = vmatprep.subr.bf16.mxu0 0
    %2427 = vmatpush1.bf16.msra.mxu0 0
    %2428 = vmatprep.subr.bf16.mxu0 0
    %2429 = vmatpush1.bf16.msra.mxu0 0
    %2430 = vmatprep.subr.bf16.mxu0 0
    %2431 = vmatpush1.bf16.msra.mxu0 0
    %2432 = vmatprep.subr.bf16.mxu0 0
    %2433 = vmatpush1.bf16.msra.mxu0 0
    %2434 = vmatprep.subr.bf16.mxu0 0
    %2435 = vmatpush1.bf16.msra.mxu0 0
    %2436 = vmatprep.subr.bf16.mxu0 0
    %2437 = vmatpush1.bf16.msra.mxu0 0
    %2438 = vmatprep.subr.bf16.mxu0 0
    %2439 = vmatpush1.bf16.msra.mxu0 0
    %2440 = vmatprep.subr.bf16.mxu0 0
    %2441 = vmatpush1.bf16.msra.mxu0 0
    %2442 = vmatprep.subr.bf16.mxu0 0
    %2443 = vmatpush1.bf16.msra.mxu0 0
    %2444 = vmatprep.subr.bf16.mxu0 0
    %2445 = vmatpush1.bf16.msra.mxu0 0
    %2446 = vmatprep.subr.bf16.mxu0 0
    %2447 = vmatpush1.bf16.msra.mxu0 0
    %2448 = vmatprep.mubr.bf16.mxu0 0
    %2449 = vmatmul.mubr.bf16.gmra.mrb[0].mxu0 %v2411
    %v2450 = vpop.f32.mrb[0].mxu0
    %v2451 = vadd.f32 0.0, %v2450
    %v2452 = vpop.f32.mrb[0].mxu0
    %v2453 = vadd.f32 0.0, %v2452
    %v2454 = vpop.f32.mrb[0].mxu0
    %v2455 = vadd.f32 0.0, %v2454
    %v2456 = vpop.f32.mrb[0].mxu0
    %v2457 = vadd.f32 0.0, %v2456
    %2458 = vmatprep.mubr.bf16.mxu0 0
    %2459 = vmatmul.mubr.bf16.gmra.mrb[0].mxu0 %v2414
    %v2460 = vpop.f32.mrb[0].mxu0
    %v2461 = vadd.f32 0.0, %v2460
    %v2462 = vpop.f32.mrb[0].mxu0
    %v2463 = vadd.f32 0.0, %v2462
    %v2464 = vpop.f32.mrb[0].mxu0
    %v2465 = vadd.f32 0.0, %v2464
    %v2466 = vpop.f32.mrb[0].mxu0
    %v2467 = vadd.f32 0.0, %v2466
    %2468 = vdwg.mxu0
    %2469 = vmatprep.subr.bf16.mxu0 %v2383
    %2470 = vmatpush1.bf16.msra.mxu0 %v2382
    %2471 = vmatprep.subr.bf16.mxu0 %v2390
    %2472 = vmatpush1.bf16.msra.mxu0 %v2389
    %2473 = vmatprep.subr.bf16.mxu0 0
    %2474 = vmatpush1.bf16.msra.mxu0 0
    %2475 = vmatprep.subr.bf16.mxu0 0
    %2476 = vmatpush1.bf16.msra.mxu0 0
    %2477 = vmatprep.subr.bf16.mxu0 0
    %2478 = vmatpush1.bf16.msra.mxu0 0
    %2479 = vmatprep.subr.bf16.mxu0 0
    %2480 = vmatpush1.bf16.msra.mxu0 0
    %2481 = vmatprep.subr.bf16.mxu0 0
    %2482 = vmatpush1.bf16.msra.mxu0 0
    %2483 = vmatprep.subr.bf16.mxu0 0
    %2484 = vmatpush1.bf16.msra.mxu0 0
    %2485 = vmatprep.subr.bf16.mxu0 0
    %2486 = vmatpush1.bf16.msra.mxu0 0
    %2487 = vmatprep.subr.bf16.mxu0 0
    %2488 = vmatpush1.bf16.msra.mxu0 0
    %2489 = vmatprep.subr.bf16.mxu0 0
    %2490 = vmatpush1.bf16.msra.mxu0 0
    %2491 = vmatprep.subr.bf16.mxu0 0
    %2492 = vmatpush1.bf16.msra.mxu0 0
    %2493 = vmatprep.subr.bf16.mxu0 0
    %2494 = vmatpush1.bf16.msra.mxu0 0
    %2495 = vmatprep.subr.bf16.mxu0 0
    %2496 = vmatpush1.bf16.msra.mxu0 0
    %2497 = vmatprep.subr.bf16.mxu0 0
    %2498 = vmatpush1.bf16.msra.mxu0 0
    %2499 = vmatprep.subr.bf16.mxu0 0
    %2500 = vmatpush1.bf16.msra.mxu0 0
    %2501 = vmatprep.mubr.bf16.mxu0 0
    %2502 = vmatmul.mubr.bf16.gmra.mrb[0].mxu0 %v2411
    %v2503 = vpop.f32.mrb[0].mxu0
    %v2504 = vadd.f32 0.0, %v2503
    %v2505 = vpop.f32.mrb[0].mxu0
    %v2506 = vadd.f32 0.0, %v2505
    %v2507 = vpop.f32.mrb[0].mxu0
    %v2508 = vadd.f32 0.0, %v2507
    %v2509 = vpop.f32.mrb[0].mxu0
    %v2510 = vadd.f32 0.0, %v2509
    %2511 = vmatprep.mubr.bf16.mxu0 0
    %2512 = vmatmul.mubr.bf16.gmra.mrb[0].mxu0 %v2414
    %v2513 = vpop.f32.mrb[0].mxu0
    %v2514 = vadd.f32 0.0, %v2513
    %v2515 = vpop.f32.mrb[0].mxu0
    %v2516 = vadd.f32 0.0, %v2515
    %v2517 = vpop.f32.mrb[0].mxu0
    %v2518 = vadd.f32 0.0, %v2517
    %v2519 = vpop.f32.mrb[0].mxu0
    %v2520 = vadd.f32 0.0, %v2519
    %2521 = vdwg.mxu0
    %2522 = vmatprep.subr.bf16.mxu0 %v2385
    %2523 = vmatpush1.bf16.msra.mxu0 %v2384
    %2524 = vmatprep.subr.bf16.mxu0 %v2392
    %2525 = vmatpush1.bf16.msra.mxu0 %v2391
    %2526 = vmatprep.subr.bf16.mxu0 0
    %2527 = vmatpush1.bf16.msra.mxu0 0
    %2528 = vmatprep.subr.bf16.mxu0 0
    %2529 = vmatpush1.bf16.msra.mxu0 0
    %2530 = vmatprep.subr.bf16.mxu0 0
    %2531 = vmatpush1.bf16.msra.mxu0 0
    %2532 = vmatprep.subr.bf16.mxu0 0
    %2533 = vmatpush1.bf16.msra.mxu0 0
    %2534 = vmatprep.subr.bf16.mxu0 0
    %2535 = vmatpush1.bf16.msra.mxu0 0
    %2536 = vmatprep.subr.bf16.mxu0 0
    %2537 = vmatpush1.bf16.msra.mxu0 0
    %2538 = vmatprep.subr.bf16.mxu0 0
    %2539 = vmatpush1.bf16.msra.mxu0 0
    %2540 = vmatprep.subr.bf16.mxu0 0
    %2541 = vmatpush1.bf16.msra.mxu0 0
    %2542 = vmatprep.subr.bf16.mxu0 0
    %2543 = vmatpush1.bf16.msra.mxu0 0
    %2544 = vmatprep.subr.bf16.mxu0 0
    %2545 = vmatpush1.bf16.msra.mxu0 0
    %2546 = vmatprep.subr.bf16.mxu0 0
    %2547 = vmatpush1.bf16.msra.mxu0 0
    %2548 = vmatprep.subr.bf16.mxu0 0
    %2549 = vmatpush1.bf16.msra.mxu0 0
    %2550 = vmatprep.subr.bf16.mxu0 0
    %2551 = vmatpush1.bf16.msra.mxu0 0
    %2552 = vmatprep.subr.bf16.mxu0 0
    %2553 = vmatpush1.bf16.msra.mxu0 0
    %2554 = vmatprep.mubr.bf16.mxu0 0
    %2555 = vmatmul.mubr.bf16.gmra.mrb[0].mxu0 %v2411
    %v2556 = vpop.f32.mrb[0].mxu0
    %v2557 = vadd.f32 0.0, %v2556
    %v2558 = vpop.f32.mrb[0].mxu0
    %v2559 = vadd.f32 0.0, %v2558
    %v2560 = vpop.f32.mrb[0].mxu0
    %v2561 = vadd.f32 0.0, %v2560
    %v2562 = vpop.f32.mrb[0].mxu0
    %v2563 = vadd.f32 0.0, %v2562
    %2564 = vmatprep.mubr.bf16.mxu0 0
    %2565 = vmatmul.mubr.bf16.gmra.mrb[0].mxu0 %v2414
    %v2566 = vpop.f32.mrb[0].mxu0
    %v2567 = vadd.f32 0.0, %v2566
    %v2568 = vpop.f32.mrb[0].mxu0
    %v2569 = vadd.f32 0.0, %v2568
    %v2570 = vpop.f32.mrb[0].mxu0
    %v2571 = vadd.f32 0.0, %v2570
    %v2572 = vpop.f32.mrb[0].mxu0
    %v2573 = vadd.f32 0.0, %v2572
    %2574 = vdwg.mxu0
    %2575 = vmatprep.subr.bf16.mxu0 %v2362
    %2576 = vmatpush1.bf16.msra.mxu0 %v2386
    %2577 = vmatprep.subr.bf16.mxu0 %v2378
    %2578 = vmatpush1.bf16.msra.mxu0 %v2393
    %2579 = vmatprep.subr.bf16.mxu0 0
    %2580 = vmatpush1.bf16.msra.mxu0 0
    %2581 = vmatprep.subr.bf16.mxu0 0
    %2582 = vmatpush1.bf16.msra.mxu0 0
    %2583 = vmatprep.subr.bf16.mxu0 0
    %2584 = vmatpush1.bf16.msra.mxu0 0
    %2585 = vmatprep.subr.bf16.mxu0 0
    %2586 = vmatpush1.bf16.msra.mxu0 0
    %2587 = vmatprep.subr.bf16.mxu0 0
    %2588 = vmatpush1.bf16.msra.mxu0 0
    %2589 = vmatprep.subr.bf16.mxu0 0
    %2590 = vmatpush1.bf16.msra.mxu0 0
    %2591 = vmatprep.subr.bf16.mxu0 0
    %2592 = vmatpush1.bf16.msra.mxu0 0
    %2593 = vmatprep.subr.bf16.mxu0 0
    %2594 = vmatpush1.bf16.msra.mxu0 0
    %2595 = vmatprep.subr.bf16.mxu0 0
    %2596 = vmatpush1.bf16.msra.mxu0 0
    %2597 = vmatprep.subr.bf16.mxu0 0
    %2598 = vmatpush1.bf16.msra.mxu0 0
    %2599 = vmatprep.subr.bf16.mxu0 0
    %2600 = vmatpush1.bf16.msra.mxu0 0
    %2601 = vmatprep.subr.bf16.mxu0 0
    %2602 = vmatpush1.bf16.msra.mxu0 0
    %2603 = vmatprep.subr.bf16.mxu0 0
    %2604 = vmatpush1.bf16.msra.mxu0 0
    %2605 = vmatprep.subr.bf16.mxu0 0
    %2606 = vmatpush1.bf16.msra.mxu0 0
    %2607 = vmatprep.mubr.bf16.mxu0 0
    %2608 = vmatmul.mubr.bf16.gmra.mrb[0].mxu0 %v2411
    %v2609 = vpop.f32.mrb[0].mxu0
    %v2610 = vadd.f32 0.0, %v2609
    %v2611 = vpop.f32.mrb[0].mxu0
    %v2612 = vadd.f32 0.0, %v2611
    %v2613 = vpop.f32.mrb[0].mxu0
    %v2614 = vadd.f32 0.0, %v2613
    %v2615 = vpop.f32.mrb[0].mxu0
    %v2616 = vadd.f32 0.0, %v2615
    %2617 = vmatprep.mubr.bf16.mxu0 0
    %2618 = vmatmul.mubr.bf16.gmra.mrb[0].mxu0 %v2414
    %v2619 = vpop.f32.mrb[0].mxu0
    %v2620 = vadd.f32 0.0, %v2619
    %v2621 = vpop.f32.mrb[0].mxu0
    %v2622 = vadd.f32 0.0, %v2621
    %v2623 = vpop.f32.mrb[0].mxu0
    %v2624 = vadd.f32 0.0, %v2623
    %v2625 = vpop.f32.mrb[0].mxu0
    %v2626 = vadd.f32 0.0, %v2625
    %2627 = vdwg.mxu0
    %v2628 = vadd.f32 %v2300, %v2451
    %v2629 = vadd.f32 %v2301, %v2453
    %v2630 = vadd.f32 %v2302, %v2504
    %v2631 = vadd.f32 %v2303, %v2506
    %v2632 = vadd.f32 %v2304, %v2557
    %v2633 = vadd.f32 %v2305, %v2559
    %v2634 = vadd.f32 %v2306, %v2610
    %v2635 = vadd.f32 %v2307, %v2612
    %v2636 = vadd.f32 %v2308, %v2455
    %v2637 = vadd.f32 %v2309, %v2457
    %v2638 = vadd.f32 %v2310, %v2508
    %v2639 = vadd.f32 %v2311, %v2510
    %v2640 = vadd.f32 %v2312, %v2561
    %v2641 = vadd.f32 %v2313, %v2563
    %v2642 = vadd.f32 %v2314, %v2614
    %v2643 = vadd.f32 %v2315, %v2616
    %v2644 = vadd.f32 %v2316, %v2461
    %v2645 = vadd.f32 %v2317, %v2463
    %v2646 = vadd.f32 %v2318, %v2514
    %v2647 = vadd.f32 %v2319, %v2516
    %v2648 = vadd.f32 %v2320, %v2567
    %v2649 = vadd.f32 %v2321, %v2569
    %v2650 = vadd.f32 %v2322, %v2620
    %v2651 = vadd.f32 %v2323, %v2622
    %v2652 = vadd.f32 %v2324, %v2465
    %v2653 = vadd.f32 %v2325, %v2467
    %v2654 = vadd.f32 %v2326, %v2518
    %v2655 = vadd.f32 %v2327, %v2520
    %v2656 = vadd.f32 %v2328, %v2571
    %v2657 = vadd.f32 %v2329, %v2573
    %v2658 = vadd.f32 %v2330, %v2624
    %v2659 = vadd.f32 %v2331, %v2626
    %s2660 = scalar_lea.vmem %s3, 112
    %v2661 = vld [vmem:[%s2660] sm:$0xf]
    %v2662 = vld [vmem:[%s2660 + $0x4] sm:$0xf]
    %v2663 = vld [vmem:[%s2660 + $0x8] sm:$0xf]
    %v2664 = vld [vmem:[%s2660 + $0xc] sm:$0xf]
    %v2669 = vunpack.c.l.b16 %v2661
    %v2670 = vunpack.c.l.b16 %v2662
    %v2671 = vunpack.c.l.b16 %v2663
    %v2672 = vunpack.c.l.b16 %v2664
    %v2673 = vpack.c.b16 %v2670, %v2669
    %v2674 = vpack.c.b16 %v2672, %v2671
    %2675 = vrot.lane.b32.xlu0 %v459, 63
    %v2676 = vpop.permute.xlu0 %2675
    %2677 = vrot.lane.b32.xlu0 %v460, 63
    %v2678 = vpop.permute.xlu0 %2677
    %2679 = vrot.lane.b32.xlu0 %v461, 63
    %v2680 = vpop.permute.xlu0 %2679
    %2681 = vrot.lane.b32.xlu0 %v462, 63
    %v2682 = vpop.permute.xlu0 %2681
    %2683 = vrot.lane.b32.xlu0 %v463, 63
    %v2684 = vpop.permute.xlu0 %2683
    %2685 = vrot.lane.b32.xlu0 %v464, 63
    %v2686 = vpop.permute.xlu0 %2685
    %2687 = vrot.lane.b32.xlu0 %v465, 63
    %v2688 = vpop.permute.xlu0 %2687
    %2689 = vrot.lane.b32.xlu0 %v466, 63
    %v2690 = vpop.permute.xlu0 %2689
    %2691 = vrot.lane.b32.xlu0 %v467, 63
    %v2692 = vpop.permute.xlu0 %2691
    %2693 = vrot.lane.b32.xlu0 %v468, 63
    %v2694 = vpop.permute.xlu0 %2693
    %2695 = vrot.lane.b32.xlu0 %v469, 63
    %v2696 = vpop.permute.xlu0 %2695
    %2697 = vrot.lane.b32.xlu0 %v470, 63
    %v2698 = vpop.permute.xlu0 %2697
    %2699 = vrot.lane.b32.xlu0 %v471, 63
    %v2700 = vpop.permute.xlu0 %2699
    %2701 = vrot.lane.b32.xlu0 %v472, 63
    %v2702 = vpop.permute.xlu0 %2701
    %2703 = vrot.lane.b32.xlu0 %v473, 63
    %v2704 = vpop.permute.xlu0 %2703
    %2705 = vrot.lane.b32.xlu0 %v474, 63
    %v2706 = vpop.permute.xlu0 %2705
    %vm2707 = vcmask 515072
    %v2708 = vsel %vm2707, %v2676, %v2678
    %v2709 = vsel %vm2707, %v2678, %v2680
    %v2710 = vsel %vm2707, %v2680, %v2682
    %v2711 = vsel %vm2707, %v2682, %v2684
    %v2712 = vsel %vm2707, %v2684, %v2686
    %v2713 = vsel %vm2707, %v2686, %v2688
    %v2714 = vsel %vm2707, %v2688, %v2690
    %v2715 = vsel %vm2707, %v2692, %v2694
    %v2716 = vsel %vm2707, %v2694, %v2696
    %v2717 = vsel %vm2707, %v2696, %v2698
    %v2718 = vsel %vm2707, %v2698, %v2700
    %v2719 = vsel %vm2707, %v2700, %v2702
    %v2720 = vsel %vm2707, %v2702, %v2704
    %v2721 = vsel %vm2707, %v2704, %v2706
    %v2739 = vsel %vm573, %v2673, 0
    %v2742 = vsel %vm573, %v2674, 0
    %2744 = vmatprep.subr.bf16.mxu0 %v2709
    %2745 = vmatpush1.bf16.msra.mxu0 %v2708
    %2746 = vmatprep.subr.bf16.mxu0 %v2716
    %2747 = vmatpush1.bf16.msra.mxu0 %v2715
    %2748 = vmatprep.subr.bf16.mxu0 0
    %2749 = vmatpush1.bf16.msra.mxu0 0
    %2750 = vmatprep.subr.bf16.mxu0 0
    %2751 = vmatpush1.bf16.msra.mxu0 0
    %2752 = vmatprep.subr.bf16.mxu0 0
    %2753 = vmatpush1.bf16.msra.mxu0 0
    %2754 = vmatprep.subr.bf16.mxu0 0
    %2755 = vmatpush1.bf16.msra.mxu0 0
    %2756 = vmatprep.subr.bf16.mxu0 0
    %2757 = vmatpush1.bf16.msra.mxu0 0
    %2758 = vmatprep.subr.bf16.mxu0 0
    %2759 = vmatpush1.bf16.msra.mxu0 0
    %2760 = vmatprep.subr.bf16.mxu0 0
    %2761 = vmatpush1.bf16.msra.mxu0 0
    %2762 = vmatprep.subr.bf16.mxu0 0
    %2763 = vmatpush1.bf16.msra.mxu0 0
    %2764 = vmatprep.subr.bf16.mxu0 0
    %2765 = vmatpush1.bf16.msra.mxu0 0
    %2766 = vmatprep.subr.bf16.mxu0 0
    %2767 = vmatpush1.bf16.msra.mxu0 0
    %2768 = vmatprep.subr.bf16.mxu0 0
    %2769 = vmatpush1.bf16.msra.mxu0 0
    %2770 = vmatprep.subr.bf16.mxu0 0
    %2771 = vmatpush1.bf16.msra.mxu0 0
    %2772 = vmatprep.subr.bf16.mxu0 0
    %2773 = vmatpush1.bf16.msra.mxu0 0
    %2774 = vmatprep.subr.bf16.mxu0 0
    %2775 = vmatpush1.bf16.msra.mxu0 0
    %2776 = vmatprep.mubr.bf16.mxu0 0
    %2777 = vmatmul.mubr.bf16.gmra.mrb[0].mxu0 %v2739
    %v2778 = vpop.f32.mrb[0].mxu0
    %v2779 = vadd.f32 0.0, %v2778
    %v2780 = vpop.f32.mrb[0].mxu0
    %v2781 = vadd.f32 0.0, %v2780
    %v2782 = vpop.f32.mrb[0].mxu0
    %v2783 = vadd.f32 0.0, %v2782
    %v2784 = vpop.f32.mrb[0].mxu0
    %v2785 = vadd.f32 0.0, %v2784
    %2786 = vmatprep.mubr.bf16.mxu0 0
    %2787 = vmatmul.mubr.bf16.gmra.mrb[0].mxu0 %v2742
    %v2788 = vpop.f32.mrb[0].mxu0
    %v2789 = vadd.f32 0.0, %v2788
    %v2790 = vpop.f32.mrb[0].mxu0
    %v2791 = vadd.f32 0.0, %v2790
    %v2792 = vpop.f32.mrb[0].mxu0
    %v2793 = vadd.f32 0.0, %v2792
    %v2794 = vpop.f32.mrb[0].mxu0
    %v2795 = vadd.f32 0.0, %v2794
    %2796 = vdwg.mxu0
    %2797 = vmatprep.subr.bf16.mxu0 %v2711
    %2798 = vmatpush1.bf16.msra.mxu0 %v2710
    %2799 = vmatprep.subr.bf16.mxu0 %v2718
    %2800 = vmatpush1.bf16.msra.mxu0 %v2717
    %2801 = vmatprep.subr.bf16.mxu0 0
    %2802 = vmatpush1.bf16.msra.mxu0 0
    %2803 = vmatprep.subr.bf16.mxu0 0
    %2804 = vmatpush1.bf16.msra.mxu0 0
    %2805 = vmatprep.subr.bf16.mxu0 0
    %2806 = vmatpush1.bf16.msra.mxu0 0
    %2807 = vmatprep.subr.bf16.mxu0 0
    %2808 = vmatpush1.bf16.msra.mxu0 0
    %2809 = vmatprep.subr.bf16.mxu0 0
    %2810 = vmatpush1.bf16.msra.mxu0 0
    %2811 = vmatprep.subr.bf16.mxu0 0
    %2812 = vmatpush1.bf16.msra.mxu0 0
    %2813 = vmatprep.subr.bf16.mxu0 0
    %2814 = vmatpush1.bf16.msra.mxu0 0
    %2815 = vmatprep.subr.bf16.mxu0 0
    %2816 = vmatpush1.bf16.msra.mxu0 0
    %2817 = vmatprep.subr.bf16.mxu0 0
    %2818 = vmatpush1.bf16.msra.mxu0 0
    %2819 = vmatprep.subr.bf16.mxu0 0
    %2820 = vmatpush1.bf16.msra.mxu0 0
    %2821 = vmatprep.subr.bf16.mxu0 0
    %2822 = vmatpush1.bf16.msra.mxu0 0
    %2823 = vmatprep.subr.bf16.mxu0 0
    %2824 = vmatpush1.bf16.msra.mxu0 0
    %2825 = vmatprep.subr.bf16.mxu0 0
    %2826 = vmatpush1.bf16.msra.mxu0 0
    %2827 = vmatprep.subr.bf16.mxu0 0
    %2828 = vmatpush1.bf16.msra.mxu0 0
    %2829 = vmatprep.mubr.bf16.mxu0 0
    %2830 = vmatmul.mubr.bf16.gmra.mrb[0].mxu0 %v2739
    %v2831 = vpop.f32.mrb[0].mxu0
    %v2832 = vadd.f32 0.0, %v2831
    %v2833 = vpop.f32.mrb[0].mxu0
    %v2834 = vadd.f32 0.0, %v2833
    %v2835 = vpop.f32.mrb[0].mxu0
    %v2836 = vadd.f32 0.0, %v2835
    %v2837 = vpop.f32.mrb[0].mxu0
    %v2838 = vadd.f32 0.0, %v2837
    %2839 = vmatprep.mubr.bf16.mxu0 0
    %2840 = vmatmul.mubr.bf16.gmra.mrb[0].mxu0 %v2742
    %v2841 = vpop.f32.mrb[0].mxu0
    %v2842 = vadd.f32 0.0, %v2841
    %v2843 = vpop.f32.mrb[0].mxu0
    %v2844 = vadd.f32 0.0, %v2843
    %v2845 = vpop.f32.mrb[0].mxu0
    %v2846 = vadd.f32 0.0, %v2845
    %v2847 = vpop.f32.mrb[0].mxu0
    %v2848 = vadd.f32 0.0, %v2847
    %2849 = vdwg.mxu0
    %2850 = vmatprep.subr.bf16.mxu0 %v2713
    %2851 = vmatpush1.bf16.msra.mxu0 %v2712
    %2852 = vmatprep.subr.bf16.mxu0 %v2720
    %2853 = vmatpush1.bf16.msra.mxu0 %v2719
    %2854 = vmatprep.subr.bf16.mxu0 0
    %2855 = vmatpush1.bf16.msra.mxu0 0
    %2856 = vmatprep.subr.bf16.mxu0 0
    %2857 = vmatpush1.bf16.msra.mxu0 0
    %2858 = vmatprep.subr.bf16.mxu0 0
    %2859 = vmatpush1.bf16.msra.mxu0 0
    %2860 = vmatprep.subr.bf16.mxu0 0
    %2861 = vmatpush1.bf16.msra.mxu0 0
    %2862 = vmatprep.subr.bf16.mxu0 0
    %2863 = vmatpush1.bf16.msra.mxu0 0
    %2864 = vmatprep.subr.bf16.mxu0 0
    %2865 = vmatpush1.bf16.msra.mxu0 0
    %2866 = vmatprep.subr.bf16.mxu0 0
    %2867 = vmatpush1.bf16.msra.mxu0 0
    %2868 = vmatprep.subr.bf16.mxu0 0
    %2869 = vmatpush1.bf16.msra.mxu0 0
    %2870 = vmatprep.subr.bf16.mxu0 0
    %2871 = vmatpush1.bf16.msra.mxu0 0
    %2872 = vmatprep.subr.bf16.mxu0 0
    %2873 = vmatpush1.bf16.msra.mxu0 0
    %2874 = vmatprep.subr.bf16.mxu0 0
    %2875 = vmatpush1.bf16.msra.mxu0 0
    %2876 = vmatprep.subr.bf16.mxu0 0
    %2877 = vmatpush1.bf16.msra.mxu0 0
    %2878 = vmatprep.subr.bf16.mxu0 0
    %2879 = vmatpush1.bf16.msra.mxu0 0
    %2880 = vmatprep.subr.bf16.mxu0 0
    %2881 = vmatpush1.bf16.msra.mxu0 0
    %2882 = vmatprep.mubr.bf16.mxu0 0
    %2883 = vmatmul.mubr.bf16.gmra.mrb[0].mxu0 %v2739
    %v2884 = vpop.f32.mrb[0].mxu0
    %v2885 = vadd.f32 0.0, %v2884
    %v2886 = vpop.f32.mrb[0].mxu0
    %v2887 = vadd.f32 0.0, %v2886
    %v2888 = vpop.f32.mrb[0].mxu0
    %v2889 = vadd.f32 0.0, %v2888
    %v2890 = vpop.f32.mrb[0].mxu0
    %v2891 = vadd.f32 0.0, %v2890
    %2892 = vmatprep.mubr.bf16.mxu0 0
    %2893 = vmatmul.mubr.bf16.gmra.mrb[0].mxu0 %v2742
    %v2894 = vpop.f32.mrb[0].mxu0
    %v2895 = vadd.f32 0.0, %v2894
    %v2896 = vpop.f32.mrb[0].mxu0
    %v2897 = vadd.f32 0.0, %v2896
    %v2898 = vpop.f32.mrb[0].mxu0
    %v2899 = vadd.f32 0.0, %v2898
    %v2900 = vpop.f32.mrb[0].mxu0
    %v2901 = vadd.f32 0.0, %v2900
    %2902 = vdwg.mxu0
    %2903 = vmatprep.subr.bf16.mxu0 %v2690
    %2904 = vmatpush1.bf16.msra.mxu0 %v2714
    %2905 = vmatprep.subr.bf16.mxu0 %v2706
    %2906 = vmatpush1.bf16.msra.mxu0 %v2721
    %2907 = vmatprep.subr.bf16.mxu0 0
    %2908 = vmatpush1.bf16.msra.mxu0 0
    %2909 = vmatprep.subr.bf16.mxu0 0
    %2910 = vmatpush1.bf16.msra.mxu0 0
    %2911 = vmatprep.subr.bf16.mxu0 0
    %2912 = vmatpush1.bf16.msra.mxu0 0
    %2913 = vmatprep.subr.bf16.mxu0 0
    %2914 = vmatpush1.bf16.msra.mxu0 0
    %2915 = vmatprep.subr.bf16.mxu0 0
    %2916 = vmatpush1.bf16.msra.mxu0 0
    %2917 = vmatprep.subr.bf16.mxu0 0
    %2918 = vmatpush1.bf16.msra.mxu0 0
    %2919 = vmatprep.subr.bf16.mxu0 0
    %2920 = vmatpush1.bf16.msra.mxu0 0
    %2921 = vmatprep.subr.bf16.mxu0 0
    %2922 = vmatpush1.bf16.msra.mxu0 0
    %2923 = vmatprep.subr.bf16.mxu0 0
    %2924 = vmatpush1.bf16.msra.mxu0 0
    %2925 = vmatprep.subr.bf16.mxu0 0
    %2926 = vmatpush1.bf16.msra.mxu0 0
    %2927 = vmatprep.subr.bf16.mxu0 0
    %2928 = vmatpush1.bf16.msra.mxu0 0
    %2929 = vmatprep.subr.bf16.mxu0 0
    %2930 = vmatpush1.bf16.msra.mxu0 0
    %2931 = vmatprep.subr.bf16.mxu0 0
    %2932 = vmatpush1.bf16.msra.mxu0 0
    %2933 = vmatprep.subr.bf16.mxu0 0
    %2934 = vmatpush1.bf16.msra.mxu0 0
    %2935 = vmatprep.mubr.bf16.mxu0 0
    %2936 = vmatmul.mubr.bf16.gmra.mrb[0].mxu0 %v2739
    %v2937 = vpop.f32.mrb[0].mxu0
    %v2938 = vadd.f32 0.0, %v2937
    %v2939 = vpop.f32.mrb[0].mxu0
    %v2940 = vadd.f32 0.0, %v2939
    %v2941 = vpop.f32.mrb[0].mxu0
    %v2942 = vadd.f32 0.0, %v2941
    %v2943 = vpop.f32.mrb[0].mxu0
    %v2944 = vadd.f32 0.0, %v2943
    %2945 = vmatprep.mubr.bf16.mxu0 0
    %2946 = vmatmul.mubr.bf16.gmra.mrb[0].mxu0 %v2742
    %v2947 = vpop.f32.mrb[0].mxu0
    %v2948 = vadd.f32 0.0, %v2947
    %v2949 = vpop.f32.mrb[0].mxu0
    %v2950 = vadd.f32 0.0, %v2949
    %v2951 = vpop.f32.mrb[0].mxu0
    %v2952 = vadd.f32 0.0, %v2951
    %v2953 = vpop.f32.mrb[0].mxu0
    %v2954 = vadd.f32 0.0, %v2953
    %2955 = vdwg.mxu0
    %v2956 = vadd.f32 %v2628, %v2779
    %v2957 = vadd.f32 %v2629, %v2781
    %v2958 = vadd.f32 %v2630, %v2832
    %v2959 = vadd.f32 %v2631, %v2834
    %v2960 = vadd.f32 %v2632, %v2885
    %v2961 = vadd.f32 %v2633, %v2887
    %v2962 = vadd.f32 %v2634, %v2938
    %v2963 = vadd.f32 %v2635, %v2940
    %v2964 = vadd.f32 %v2636, %v2783
    %v2965 = vadd.f32 %v2637, %v2785
    %v2966 = vadd.f32 %v2638, %v2836
    %v2967 = vadd.f32 %v2639, %v2838
    %v2968 = vadd.f32 %v2640, %v2889
    %v2969 = vadd.f32 %v2641, %v2891
    %v2970 = vadd.f32 %v2642, %v2942
    %v2971 = vadd.f32 %v2643, %v2944
    %v2972 = vadd.f32 %v2644, %v2789
    %v2973 = vadd.f32 %v2645, %v2791
    %v2974 = vadd.f32 %v2646, %v2842
    %v2975 = vadd.f32 %v2647, %v2844
    %v2976 = vadd.f32 %v2648, %v2895
    %v2977 = vadd.f32 %v2649, %v2897
    %v2978 = vadd.f32 %v2650, %v2948
    %v2979 = vadd.f32 %v2651, %v2950
    %v2980 = vadd.f32 %v2652, %v2793
    %v2981 = vadd.f32 %v2653, %v2795
    %v2982 = vadd.f32 %v2654, %v2846
    %v2983 = vadd.f32 %v2655, %v2848
    %v2984 = vadd.f32 %v2656, %v2899
    %v2985 = vadd.f32 %v2657, %v2901
    %v2986 = vadd.f32 %v2658, %v2952
    %v2987 = vadd.f32 %v2659, %v2954
    %s2988 = scalar_lea.vmem %s3, 128
    %v2989 = vld [vmem:[%s2988] sm:$0xf]
    %v2990 = vld [vmem:[%s2988 + $0x4] sm:$0xf]
    %v2991 = vld [vmem:[%s2988 + $0x8] sm:$0xf]
    %v2992 = vld [vmem:[%s2988 + $0xc] sm:$0xf]
    %v2997 = vunpack.c.l.b16 %v2989
    %v2998 = vunpack.c.l.b16 %v2990
    %v2999 = vunpack.c.l.b16 %v2991
    %v3000 = vunpack.c.l.b16 %v2992
    %v3001 = vpack.c.b16 %v2998, %v2997
    %v3002 = vpack.c.b16 %v3000, %v2999
    %3003 = vrot.lane.b32.xlu0 %v459, 62
    %v3004 = vpop.permute.xlu0 %3003
    %3005 = vrot.lane.b32.xlu0 %v460, 62
    %v3006 = vpop.permute.xlu0 %3005
    %3007 = vrot.lane.b32.xlu0 %v461, 62
    %v3008 = vpop.permute.xlu0 %3007
    %3009 = vrot.lane.b32.xlu0 %v462, 62
    %v3010 = vpop.permute.xlu0 %3009
    %3011 = vrot.lane.b32.xlu0 %v463, 62
    %v3012 = vpop.permute.xlu0 %3011
    %3013 = vrot.lane.b32.xlu0 %v464, 62
    %v3014 = vpop.permute.xlu0 %3013
    %3015 = vrot.lane.b32.xlu0 %v465, 62
    %v3016 = vpop.permute.xlu0 %3015
    %3017 = vrot.lane.b32.xlu0 %v466, 62
    %v3018 = vpop.permute.xlu0 %3017
    %3019 = vrot.lane.b32.xlu0 %v467, 62
    %v3020 = vpop.permute.xlu0 %3019
    %3021 = vrot.lane.b32.xlu0 %v468, 62
    %v3022 = vpop.permute.xlu0 %3021
    %3023 = vrot.lane.b32.xlu0 %v469, 62
    %v3024 = vpop.permute.xlu0 %3023
    %3025 = vrot.lane.b32.xlu0 %v470, 62
    %v3026 = vpop.permute.xlu0 %3025
    %3027 = vrot.lane.b32.xlu0 %v471, 62
    %v3028 = vpop.permute.xlu0 %3027
    %3029 = vrot.lane.b32.xlu0 %v472, 62
    %v3030 = vpop.permute.xlu0 %3029
    %3031 = vrot.lane.b32.xlu0 %v473, 62
    %v3032 = vpop.permute.xlu0 %3031
    %3033 = vrot.lane.b32.xlu0 %v474, 62
    %v3034 = vpop.permute.xlu0 %3033
    %vm3035 = vcmask 506880
    %v3036 = vsel %vm3035, %v3004, %v3006
    %v3037 = vsel %vm3035, %v3006, %v3008
    %v3038 = vsel %vm3035, %v3008, %v3010
    %v3039 = vsel %vm3035, %v3010, %v3012
    %v3040 = vsel %vm3035, %v3012, %v3014
    %v3041 = vsel %vm3035, %v3014, %v3016
    %v3042 = vsel %vm3035, %v3016, %v3018
    %v3043 = vsel %vm3035, %v3020, %v3022
    %v3044 = vsel %vm3035, %v3022, %v3024
    %v3045 = vsel %vm3035, %v3024, %v3026
    %v3046 = vsel %vm3035, %v3026, %v3028
    %v3047 = vsel %vm3035, %v3028, %v3030
    %v3048 = vsel %vm3035, %v3030, %v3032
    %v3049 = vsel %vm3035, %v3032, %v3034
    %v3067 = vsel %vm573, %v3001, 0
    %v3070 = vsel %vm573, %v3002, 0
    %3072 = vmatprep.subr.bf16.mxu0 %v3037
    %3073 = vmatpush1.bf16.msra.mxu0 %v3036
    %3074 = vmatprep.subr.bf16.mxu0 %v3044
    %3075 = vmatpush1.bf16.msra.mxu0 %v3043
    %3076 = vmatprep.subr.bf16.mxu0 0
    %3077 = vmatpush1.bf16.msra.mxu0 0
    %3078 = vmatprep.subr.bf16.mxu0 0
    %3079 = vmatpush1.bf16.msra.mxu0 0
    %3080 = vmatprep.subr.bf16.mxu0 0
    %3081 = vmatpush1.bf16.msra.mxu0 0
    %3082 = vmatprep.subr.bf16.mxu0 0
    %3083 = vmatpush1.bf16.msra.mxu0 0
    %3084 = vmatprep.subr.bf16.mxu0 0
    %3085 = vmatpush1.bf16.msra.mxu0 0
    %3086 = vmatprep.subr.bf16.mxu0 0
    %3087 = vmatpush1.bf16.msra.mxu0 0
    %3088 = vmatprep.subr.bf16.mxu0 0
    %3089 = vmatpush1.bf16.msra.mxu0 0
    %3090 = vmatprep.subr.bf16.mxu0 0
    %3091 = vmatpush1.bf16.msra.mxu0 0
    %3092 = vmatprep.subr.bf16.mxu0 0
    %3093 = vmatpush1.bf16.msra.mxu0 0
    %3094 = vmatprep.subr.bf16.mxu0 0
    %3095 = vmatpush1.bf16.msra.mxu0 0
    %3096 = vmatprep.subr.bf16.mxu0 0
    %3097 = vmatpush1.bf16.msra.mxu0 0
    %3098 = vmatprep.subr.bf16.mxu0 0
    %3099 = vmatpush1.bf16.msra.mxu0 0
    %3100 = vmatprep.subr.bf16.mxu0 0
    %3101 = vmatpush1.bf16.msra.mxu0 0
    %3102 = vmatprep.subr.bf16.mxu0 0
    %3103 = vmatpush1.bf16.msra.mxu0 0
    %3104 = vmatprep.mubr.bf16.mxu0 0
    %3105 = vmatmul.mubr.bf16.gmra.mrb[0].mxu0 %v3067
    %v3106 = vpop.f32.mrb[0].mxu0
    %v3107 = vadd.f32 0.0, %v3106
    %v3108 = vpop.f32.mrb[0].mxu0
    %v3109 = vadd.f32 0.0, %v3108
    %v3110 = vpop.f32.mrb[0].mxu0
    %v3111 = vadd.f32 0.0, %v3110
    %v3112 = vpop.f32.mrb[0].mxu0
    %v3113 = vadd.f32 0.0, %v3112
    %3114 = vmatprep.mubr.bf16.mxu0 0
    %3115 = vmatmul.mubr.bf16.gmra.mrb[0].mxu0 %v3070
    %v3116 = vpop.f32.mrb[0].mxu0
    %v3117 = vadd.f32 0.0, %v3116
    %v3118 = vpop.f32.mrb[0].mxu0
    %v3119 = vadd.f32 0.0, %v3118
    %v3120 = vpop.f32.mrb[0].mxu0
    %v3121 = vadd.f32 0.0, %v3120
    %v3122 = vpop.f32.mrb[0].mxu0
    %v3123 = vadd.f32 0.0, %v3122
    %3124 = vdwg.mxu0
    %3125 = vmatprep.subr.bf16.mxu0 %v3039
    %3126 = vmatpush1.bf16.msra.mxu0 %v3038
    %3127 = vmatprep.subr.bf16.mxu0 %v3046
    %3128 = vmatpush1.bf16.msra.mxu0 %v3045
    %3129 = vmatprep.subr.bf16.mxu0 0
    %3130 = vmatpush1.bf16.msra.mxu0 0
    %3131 = vmatprep.subr.bf16.mxu0 0
    %3132 = vmatpush1.bf16.msra.mxu0 0
    %3133 = vmatprep.subr.bf16.mxu0 0
    %3134 = vmatpush1.bf16.msra.mxu0 0
    %3135 = vmatprep.subr.bf16.mxu0 0
    %3136 = vmatpush1.bf16.msra.mxu0 0
    %3137 = vmatprep.subr.bf16.mxu0 0
    %3138 = vmatpush1.bf16.msra.mxu0 0
    %3139 = vmatprep.subr.bf16.mxu0 0
    %3140 = vmatpush1.bf16.msra.mxu0 0
    %3141 = vmatprep.subr.bf16.mxu0 0
    %3142 = vmatpush1.bf16.msra.mxu0 0
    %3143 = vmatprep.subr.bf16.mxu0 0
    %3144 = vmatpush1.bf16.msra.mxu0 0
    %3145 = vmatprep.subr.bf16.mxu0 0
    %3146 = vmatpush1.bf16.msra.mxu0 0
    %3147 = vmatprep.subr.bf16.mxu0 0
    %3148 = vmatpush1.bf16.msra.mxu0 0
    %3149 = vmatprep.subr.bf16.mxu0 0
    %3150 = vmatpush1.bf16.msra.mxu0 0
    %3151 = vmatprep.subr.bf16.mxu0 0
    %3152 = vmatpush1.bf16.msra.mxu0 0
    %3153 = vmatprep.subr.bf16.mxu0 0
    %3154 = vmatpush1.bf16.msra.mxu0 0
    %3155 = vmatprep.subr.bf16.mxu0 0
    %3156 = vmatpush1.bf16.msra.mxu0 0
    %3157 = vmatprep.mubr.bf16.mxu0 0
    %3158 = vmatmul.mubr.bf16.gmra.mrb[0].mxu0 %v3067
    %v3159 = vpop.f32.mrb[0].mxu0
    %v3160 = vadd.f32 0.0, %v3159
    %v3161 = vpop.f32.mrb[0].mxu0
    %v3162 = vadd.f32 0.0, %v3161
    %v3163 = vpop.f32.mrb[0].mxu0
    %v3164 = vadd.f32 0.0, %v3163
    %v3165 = vpop.f32.mrb[0].mxu0
    %v3166 = vadd.f32 0.0, %v3165
    %3167 = vmatprep.mubr.bf16.mxu0 0
    %3168 = vmatmul.mubr.bf16.gmra.mrb[0].mxu0 %v3070
    %v3169 = vpop.f32.mrb[0].mxu0
    %v3170 = vadd.f32 0.0, %v3169
    %v3171 = vpop.f32.mrb[0].mxu0
    %v3172 = vadd.f32 0.0, %v3171
    %v3173 = vpop.f32.mrb[0].mxu0
    %v3174 = vadd.f32 0.0, %v3173
    %v3175 = vpop.f32.mrb[0].mxu0
    %v3176 = vadd.f32 0.0, %v3175
    %3177 = vdwg.mxu0
    %3178 = vmatprep.subr.bf16.mxu0 %v3041
    %3179 = vmatpush1.bf16.msra.mxu0 %v3040
    %3180 = vmatprep.subr.bf16.mxu0 %v3048
    %3181 = vmatpush1.bf16.msra.mxu0 %v3047
    %3182 = vmatprep.subr.bf16.mxu0 0
    %3183 = vmatpush1.bf16.msra.mxu0 0
    %3184 = vmatprep.subr.bf16.mxu0 0
    %3185 = vmatpush1.bf16.msra.mxu0 0
    %3186 = vmatprep.subr.bf16.mxu0 0
    %3187 = vmatpush1.bf16.msra.mxu0 0
    %3188 = vmatprep.subr.bf16.mxu0 0
    %3189 = vmatpush1.bf16.msra.mxu0 0
    %3190 = vmatprep.subr.bf16.mxu0 0
    %3191 = vmatpush1.bf16.msra.mxu0 0
    %3192 = vmatprep.subr.bf16.mxu0 0
    %3193 = vmatpush1.bf16.msra.mxu0 0
    %3194 = vmatprep.subr.bf16.mxu0 0
    %3195 = vmatpush1.bf16.msra.mxu0 0
    %3196 = vmatprep.subr.bf16.mxu0 0
    %3197 = vmatpush1.bf16.msra.mxu0 0
    %3198 = vmatprep.subr.bf16.mxu0 0
    %3199 = vmatpush1.bf16.msra.mxu0 0
    %3200 = vmatprep.subr.bf16.mxu0 0
    %3201 = vmatpush1.bf16.msra.mxu0 0
    %3202 = vmatprep.subr.bf16.mxu0 0
    %3203 = vmatpush1.bf16.msra.mxu0 0
    %3204 = vmatprep.subr.bf16.mxu0 0
    %3205 = vmatpush1.bf16.msra.mxu0 0
    %3206 = vmatprep.subr.bf16.mxu0 0
    %3207 = vmatpush1.bf16.msra.mxu0 0
    %3208 = vmatprep.subr.bf16.mxu0 0
    %3209 = vmatpush1.bf16.msra.mxu0 0
    %3210 = vmatprep.mubr.bf16.mxu0 0
    %3211 = vmatmul.mubr.bf16.gmra.mrb[0].mxu0 %v3067
    %v3212 = vpop.f32.mrb[0].mxu0
    %v3213 = vadd.f32 0.0, %v3212
    %v3214 = vpop.f32.mrb[0].mxu0
    %v3215 = vadd.f32 0.0, %v3214
    %v3216 = vpop.f32.mrb[0].mxu0
    %v3217 = vadd.f32 0.0, %v3216
    %v3218 = vpop.f32.mrb[0].mxu0
    %v3219 = vadd.f32 0.0, %v3218
    %3220 = vmatprep.mubr.bf16.mxu0 0
    %3221 = vmatmul.mubr.bf16.gmra.mrb[0].mxu0 %v3070
    %v3222 = vpop.f32.mrb[0].mxu0
    %v3223 = vadd.f32 0.0, %v3222
    %v3224 = vpop.f32.mrb[0].mxu0
    %v3225 = vadd.f32 0.0, %v3224
    %v3226 = vpop.f32.mrb[0].mxu0
    %v3227 = vadd.f32 0.0, %v3226
    %v3228 = vpop.f32.mrb[0].mxu0
    %v3229 = vadd.f32 0.0, %v3228
    %3230 = vdwg.mxu0
    %3231 = vmatprep.subr.bf16.mxu0 %v3018
    %3232 = vmatpush1.bf16.msra.mxu0 %v3042
    %3233 = vmatprep.subr.bf16.mxu0 %v3034
    %3234 = vmatpush1.bf16.msra.mxu0 %v3049
    %3235 = vmatprep.subr.bf16.mxu0 0
    %3236 = vmatpush1.bf16.msra.mxu0 0
    %3237 = vmatprep.subr.bf16.mxu0 0
    %3238 = vmatpush1.bf16.msra.mxu0 0
    %3239 = vmatprep.subr.bf16.mxu0 0
    %3240 = vmatpush1.bf16.msra.mxu0 0
    %3241 = vmatprep.subr.bf16.mxu0 0
    %3242 = vmatpush1.bf16.msra.mxu0 0
    %3243 = vmatprep.subr.bf16.mxu0 0
    %3244 = vmatpush1.bf16.msra.mxu0 0
    %3245 = vmatprep.subr.bf16.mxu0 0
    %3246 = vmatpush1.bf16.msra.mxu0 0
    %3247 = vmatprep.subr.bf16.mxu0 0
    %3248 = vmatpush1.bf16.msra.mxu0 0
    %3249 = vmatprep.subr.bf16.mxu0 0
    %3250 = vmatpush1.bf16.msra.mxu0 0
    %3251 = vmatprep.subr.bf16.mxu0 0
    %3252 = vmatpush1.bf16.msra.mxu0 0
    %3253 = vmatprep.subr.bf16.mxu0 0
    %3254 = vmatpush1.bf16.msra.mxu0 0
    %3255 = vmatprep.subr.bf16.mxu0 0
    %3256 = vmatpush1.bf16.msra.mxu0 0
    %3257 = vmatprep.subr.bf16.mxu0 0
    %3258 = vmatpush1.bf16.msra.mxu0 0
    %3259 = vmatprep.subr.bf16.mxu0 0
    %3260 = vmatpush1.bf16.msra.mxu0 0
    %3261 = vmatprep.subr.bf16.mxu0 0
    %3262 = vmatpush1.bf16.msra.mxu0 0
    %3263 = vmatprep.mubr.bf16.mxu0 0
    %3264 = vmatmul.mubr.bf16.gmra.mrb[0].mxu0 %v3067
    %v3265 = vpop.f32.mrb[0].mxu0
    %v3266 = vadd.f32 0.0, %v3265
    %v3267 = vpop.f32.mrb[0].mxu0
    %v3268 = vadd.f32 0.0, %v3267
    %v3269 = vpop.f32.mrb[0].mxu0
    %v3270 = vadd.f32 0.0, %v3269
    %v3271 = vpop.f32.mrb[0].mxu0
    %v3272 = vadd.f32 0.0, %v3271
    %3273 = vmatprep.mubr.bf16.mxu0 0
    %3274 = vmatmul.mubr.bf16.gmra.mrb[0].mxu0 %v3070
    %v3275 = vpop.f32.mrb[0].mxu0
    %v3276 = vadd.f32 0.0, %v3275
    %v3277 = vpop.f32.mrb[0].mxu0
    %v3278 = vadd.f32 0.0, %v3277
    %v3279 = vpop.f32.mrb[0].mxu0
    %v3280 = vadd.f32 0.0, %v3279
    %v3281 = vpop.f32.mrb[0].mxu0
    %v3282 = vadd.f32 0.0, %v3281
    %3283 = vdwg.mxu0
    %v3284 = vadd.f32 %v2956, %v3107
    %v3285 = vadd.f32 %v2957, %v3109
    %v3286 = vadd.f32 %v2958, %v3160
    %v3287 = vadd.f32 %v2959, %v3162
    %v3288 = vadd.f32 %v2960, %v3213
    %v3289 = vadd.f32 %v2961, %v3215
    %v3290 = vadd.f32 %v2962, %v3266
    %v3291 = vadd.f32 %v2963, %v3268
    %v3292 = vadd.f32 %v2964, %v3111
    %v3293 = vadd.f32 %v2965, %v3113
    %v3294 = vadd.f32 %v2966, %v3164
    %v3295 = vadd.f32 %v2967, %v3166
    %v3296 = vadd.f32 %v2968, %v3217
    %v3297 = vadd.f32 %v2969, %v3219
    %v3298 = vadd.f32 %v2970, %v3270
    %v3299 = vadd.f32 %v2971, %v3272
    %v3300 = vadd.f32 %v2972, %v3117
    %v3301 = vadd.f32 %v2973, %v3119
    %v3302 = vadd.f32 %v2974, %v3170
    %v3303 = vadd.f32 %v2975, %v3172
    %v3304 = vadd.f32 %v2976, %v3223
    %v3305 = vadd.f32 %v2977, %v3225
    %v3306 = vadd.f32 %v2978, %v3276
    %v3307 = vadd.f32 %v2979, %v3278
    %v3308 = vadd.f32 %v2980, %v3121
    %v3309 = vadd.f32 %v2981, %v3123
    %v3310 = vadd.f32 %v2982, %v3174
    %v3311 = vadd.f32 %v2983, %v3176
    %v3312 = vadd.f32 %v2984, %v3227
    %v3313 = vadd.f32 %v2985, %v3229
    %v3314 = vadd.f32 %v2986, %v3280
    %v3315 = vadd.f32 %v2987, %v3282
    %v3316 = vld [vmem:[%s4] sm:$0xff]
    %v3317 = vld [vmem:[%s4 + $0x8] sm:$0xff]
    %v3318 = vld [vmem:[%s4 + $0x10] sm:$0xff]
    %v3319 = vld [vmem:[%s4 + $0x18] sm:$0xff]
    %3321 = vset.pattern.permute.xlu0 0
    %3322 = vperm.xlu0 %3321, %v3316
    %v3323 = vpop.permute.xlu0 %3322
    %3326 = vset.pattern.permute.xlu0 0
    %3327 = vperm.xlu0 %3326, %v3317
    %v3328 = vpop.permute.xlu0 %3327
    %3331 = vset.pattern.permute.xlu0 0
    %3332 = vperm.xlu0 %3331, %v3318
    %v3333 = vpop.permute.xlu0 %3332
    %3336 = vset.pattern.permute.xlu0 0
    %3337 = vperm.xlu0 %3336, %v3319
    %v3338 = vpop.permute.xlu0 %3337
    %v3340 = vadd.f32 %v3284, %v3323
    %v3341 = vadd.f32 %v3285, %v3323
    %v3342 = vadd.f32 %v3286, %v3323
    %v3343 = vadd.f32 %v3287, %v3323
    %v3344 = vadd.f32 %v3288, %v3323
    %v3345 = vadd.f32 %v3289, %v3323
    %v3346 = vadd.f32 %v3290, %v3323
    %v3347 = vadd.f32 %v3291, %v3323
    %v3348 = vadd.f32 %v3292, %v3328
    %v3349 = vadd.f32 %v3293, %v3328
    %v3350 = vadd.f32 %v3294, %v3328
    %v3351 = vadd.f32 %v3295, %v3328
    %v3352 = vadd.f32 %v3296, %v3328
    %v3353 = vadd.f32 %v3297, %v3328
    %v3354 = vadd.f32 %v3298, %v3328
    %v3355 = vadd.f32 %v3299, %v3328
    %v3356 = vadd.f32 %v3300, %v3333
    %v3357 = vadd.f32 %v3301, %v3333
    %v3358 = vadd.f32 %v3302, %v3333
    %v3359 = vadd.f32 %v3303, %v3333
    %v3360 = vadd.f32 %v3304, %v3333
    %v3361 = vadd.f32 %v3305, %v3333
    %v3362 = vadd.f32 %v3306, %v3333
    %v3363 = vadd.f32 %v3307, %v3333
    %v3364 = vadd.f32 %v3308, %v3338
    %v3365 = vadd.f32 %v3309, %v3338
    %v3366 = vadd.f32 %v3310, %v3338
    %v3367 = vadd.f32 %v3311, %v3338
    %v3368 = vadd.f32 %v3312, %v3338
    %v3369 = vadd.f32 %v3313, %v3338
    %v3370 = vadd.f32 %v3314, %v3338
    %v3371 = vadd.f32 %v3315, %v3338
    %v3372 = vmax.f32 %v3340, 0.0
    %v3373 = vmax.f32 %v3341, 0.0
    %v3374 = vmax.f32 %v3342, 0.0
    %v3375 = vmax.f32 %v3343, 0.0
    %v3376 = vmax.f32 %v3344, 0.0
    %v3377 = vmax.f32 %v3345, 0.0
    %v3378 = vmax.f32 %v3346, 0.0
    %v3379 = vmax.f32 %v3347, 0.0
    %v3380 = vmax.f32 %v3348, 0.0
    %v3381 = vmax.f32 %v3349, 0.0
    %v3382 = vmax.f32 %v3350, 0.0
    %v3383 = vmax.f32 %v3351, 0.0
    %v3384 = vmax.f32 %v3352, 0.0
    %v3385 = vmax.f32 %v3353, 0.0
    %v3386 = vmax.f32 %v3354, 0.0
    %v3387 = vmax.f32 %v3355, 0.0
    %v3388 = vmax.f32 %v3356, 0.0
    %v3389 = vmax.f32 %v3357, 0.0
    %v3390 = vmax.f32 %v3358, 0.0
    %v3391 = vmax.f32 %v3359, 0.0
    %v3392 = vmax.f32 %v3360, 0.0
    %v3393 = vmax.f32 %v3361, 0.0
    %v3394 = vmax.f32 %v3362, 0.0
    %v3395 = vmax.f32 %v3363, 0.0
    %v3396 = vmax.f32 %v3364, 0.0
    %v3397 = vmax.f32 %v3365, 0.0
    %v3398 = vmax.f32 %v3366, 0.0
    %v3399 = vmax.f32 %v3367, 0.0
    %v3400 = vmax.f32 %v3368, 0.0
    %v3401 = vmax.f32 %v3369, 0.0
    %v3402 = vmax.f32 %v3370, 0.0
    %v3403 = vmax.f32 %v3371, 0.0
    %v3404 = vpack.c.bf16 %v3380, %v3372
    %v3405 = vpack.c.bf16 %v3381, %v3373
    %v3406 = vpack.c.bf16 %v3382, %v3374
    %v3407 = vpack.c.bf16 %v3383, %v3375
    %v3408 = vpack.c.bf16 %v3384, %v3376
    %v3409 = vpack.c.bf16 %v3385, %v3377
    %v3410 = vpack.c.bf16 %v3386, %v3378
    %v3411 = vpack.c.bf16 %v3387, %v3379
    %v3412 = vpack.c.bf16 %v3396, %v3388
    %v3413 = vpack.c.bf16 %v3397, %v3389
    %v3414 = vpack.c.bf16 %v3398, %v3390
    %v3415 = vpack.c.bf16 %v3399, %v3391
    %v3416 = vpack.c.bf16 %v3400, %v3392
    %v3417 = vpack.c.bf16 %v3401, %v3393
    %v3418 = vpack.c.bf16 %v3402, %v3394
    %v3419 = vpack.c.bf16 %v3403, %v3395
    %v3436 = vunpack.c.l.b16 %v3404
    %v3437 = vunpack.c.l.b16 %v3405
    %v3438 = vunpack.c.l.b16 %v3406
    %v3439 = vunpack.c.l.b16 %v3407
    %v3440 = vunpack.c.l.b16 %v3408
    %v3441 = vunpack.c.l.b16 %v3409
    %v3442 = vunpack.c.l.b16 %v3410
    %v3443 = vunpack.c.l.b16 %v3411
    %v3444 = vunpack.c.h.b16 %v3404
    %v3445 = vunpack.c.h.b16 %v3405
    %v3446 = vunpack.c.h.b16 %v3406
    %v3447 = vunpack.c.h.b16 %v3407
    %v3448 = vunpack.c.h.b16 %v3408
    %v3449 = vunpack.c.h.b16 %v3409
    %v3450 = vunpack.c.h.b16 %v3410
    %v3451 = vunpack.c.h.b16 %v3411
    %v3452 = vunpack.c.l.b16 %v3412
    %v3453 = vunpack.c.l.b16 %v3413
    %v3454 = vunpack.c.l.b16 %v3414
    %v3455 = vunpack.c.l.b16 %v3415
    %v3456 = vunpack.c.l.b16 %v3416
    %v3457 = vunpack.c.l.b16 %v3417
    %v3458 = vunpack.c.l.b16 %v3418
    %v3459 = vunpack.c.l.b16 %v3419
    %v3460 = vunpack.c.h.b16 %v3412
    %v3461 = vunpack.c.h.b16 %v3413
    %v3462 = vunpack.c.h.b16 %v3414
    %v3463 = vunpack.c.h.b16 %v3415
    %v3464 = vunpack.c.h.b16 %v3416
    %v3465 = vunpack.c.h.b16 %v3417
    %v3466 = vunpack.c.h.b16 %v3418
    %v3467 = vunpack.c.h.b16 %v3419
    %v3468 = vpack.c.b16 %v3437, %v3436
    %v3469 = vpack.c.b16 %v3439, %v3438
    %v3470 = vpack.c.b16 %v3441, %v3440
    %v3471 = vpack.c.b16 %v3443, %v3442
    %v3472 = vpack.c.b16 %v3445, %v3444
    %v3473 = vpack.c.b16 %v3447, %v3446
    %v3474 = vpack.c.b16 %v3449, %v3448
    %v3475 = vpack.c.b16 %v3451, %v3450
    %v3476 = vpack.c.b16 %v3453, %v3452
    %v3477 = vpack.c.b16 %v3455, %v3454
    %v3478 = vpack.c.b16 %v3457, %v3456
    %v3479 = vpack.c.b16 %v3459, %v3458
    %v3480 = vpack.c.b16 %v3461, %v3460
    %v3481 = vpack.c.b16 %v3463, %v3462
    %v3482 = vpack.c.b16 %v3465, %v3464
    %v3483 = vpack.c.b16 %v3467, %v3466
    %3500 = vst [vmem:[#allocation3] sm:$0xff] %v3468
    %3501 = vst [vmem:[#allocation3 + $0x8] sm:$0xff] %v3469
    %3502 = vst [vmem:[#allocation3 + $0x10] sm:$0xff] %v3470
    %vm3503 = vcmask 1043456
    %vm3504 = vcmask 261124
    %vm3505 = vmor %vm3504, %vm3503
    %3506 = vst.msk [vmem:[#allocation3 + $0x18] sm:$0xff] %vm3505, %v3471
    %3507 = vst [vmem:[#allocation3 + $0x20] sm:$0xff] %v3472
    %3508 = vst [vmem:[#allocation3 + $0x28] sm:$0xff] %v3473
    %3509 = vst [vmem:[#allocation3 + $0x30] sm:$0xff] %v3474
    %3510 = vst.msk [vmem:[#allocation3 + $0x38] sm:$0xff] %vm3505, %v3475
    %3511 = vst [vmem:[#allocation3 + $0x40] sm:$0xff] %v3476
    %3512 = vst [vmem:[#allocation3 + $0x48] sm:$0xff] %v3477
    %3513 = vst [vmem:[#allocation3 + $0x50] sm:$0xff] %v3478
    %3514 = vst.msk [vmem:[#allocation3 + $0x58] sm:$0xff] %vm3505, %v3479
    %3515 = vst [vmem:[#allocation3 + $0x60] sm:$0xff] %v3480
    %3516 = vst [vmem:[#allocation3 + $0x68] sm:$0xff] %v3481
    %3517 = vst [vmem:[#allocation3 + $0x70] sm:$0xff] %v3482
    %3518 = vst.msk [vmem:[#allocation3 + $0x78] sm:$0xff] %vm3505, %v3483
    %v3519 = vld [vmem:[%s1] sm:$0xf]
    %v3520 = vld [vmem:[%s1 + $0x4] sm:$0xf]
    %v3521 = vld [vmem:[%s1 + $0x8] sm:$0xf]
    %v3522 = vld [vmem:[%s1 + $0xc] sm:$0xf]
    %s3523 = scalar_lea.vmem %s0, 128
    %v3524 = vld [vmem:[%s3523] sm:$0xff]
    %v3525 = vld [vmem:[%s3523 + $0x8] sm:$0xff]
    %v3526 = vld [vmem:[%s3523 + $0x10] sm:$0xff]
    %v3527 = vld [vmem:[%s3523 + $0x18] sm:$0xff]
    %v3528 = vld [vmem:[%s3523 + $0x20] sm:$0xff]
    %v3529 = vld [vmem:[%s3523 + $0x28] sm:$0xff]
    %v3530 = vld [vmem:[%s3523 + $0x30] sm:$0xff]
    %v3531 = vld [vmem:[%s3523 + $0x38] sm:$0xff]
    %v3532 = vld [vmem:[%s3523 + $0x40] sm:$0xff]
    %v3533 = vld [vmem:[%s3523 + $0x48] sm:$0xff]
    %v3534 = vld [vmem:[%s3523 + $0x50] sm:$0xff]
    %v3535 = vld [vmem:[%s3523 + $0x58] sm:$0xff]
    %v3536 = vld [vmem:[%s3523 + $0x60] sm:$0x33]
    %v3537 = vld [vmem:[%s3523 + $0x68] sm:$0x33]
    %v3538 = vld [vmem:[%s3523 + $0x70] sm:$0x33]
    %v3539 = vld [vmem:[%s3523 + $0x78] sm:$0x33]
    %v3540 = vld [vmem:[%s2] sm:$0xff]
    %v3541 = vld [vmem:[%s2 + $0x8] sm:$0xff]
    %v3542 = vld [vmem:[%s2 + $0x10] sm:$0xff]
    %v3543 = vld [vmem:[%s2 + $0x18] sm:$0xff]
    %3545 = vset.pattern.permute.xlu0 0
    %3546 = vperm.xlu0 %3545, %v3540
    %v3547 = vpop.permute.xlu0 %3546
    %3550 = vset.pattern.permute.xlu0 0
    %3551 = vperm.xlu0 %3550, %v3541
    %v3552 = vpop.permute.xlu0 %3551
    %3555 = vset.pattern.permute.xlu0 0
    %3556 = vperm.xlu0 %3555, %v3542
    %v3557 = vpop.permute.xlu0 %3556
    %3560 = vset.pattern.permute.xlu0 0
    %3561 = vperm.xlu0 %3560, %v3543
    %v3562 = vpop.permute.xlu0 %3561
    %v3568 = vunpack.c.l.b16 %v3519
    %v3569 = vunpack.c.l.b16 %v3520
    %v3570 = vunpack.c.l.b16 %v3521
    %v3571 = vunpack.c.l.b16 %v3522
    %v3572 = vpack.c.b16 %v3569, %v3568
    %v3573 = vpack.c.b16 %v3571, %v3570
    %v3590 = vunpack.c.l.b16 %v3524
    %v3591 = vunpack.c.h.b16 %v3524
    %v3592 = vunpack.c.l.b16 %v3525
    %v3593 = vunpack.c.h.b16 %v3525
    %v3594 = vunpack.c.l.b16 %v3526
    %v3595 = vunpack.c.h.b16 %v3526
    %v3596 = vunpack.c.l.b16 %v3527
    %v3597 = vunpack.c.h.b16 %v3527
    %v3598 = vunpack.c.l.b16 %v3528
    %v3599 = vunpack.c.h.b16 %v3528
    %v3600 = vunpack.c.l.b16 %v3529
    %v3601 = vunpack.c.h.b16 %v3529
    %v3602 = vunpack.c.l.b16 %v3530
    %v3603 = vunpack.c.h.b16 %v3530
    %v3604 = vunpack.c.l.b16 %v3531
    %v3605 = vunpack.c.h.b16 %v3531
    %v3606 = vunpack.c.l.b16 %v3532
    %v3607 = vunpack.c.h.b16 %v3532
    %v3608 = vunpack.c.l.b16 %v3533
    %v3609 = vunpack.c.h.b16 %v3533
    %v3610 = vunpack.c.l.b16 %v3534
    %v3611 = vunpack.c.h.b16 %v3534
    %v3612 = vunpack.c.l.b16 %v3535
    %v3613 = vunpack.c.h.b16 %v3535
    %v3614 = vunpack.c.l.b16 %v3536
    %v3615 = vunpack.c.h.b16 %v3536
    %v3616 = vunpack.c.l.b16 %v3537
    %v3617 = vunpack.c.h.b16 %v3537
    %v3618 = vunpack.c.l.b16 %v3538
    %v3619 = vunpack.c.h.b16 %v3538
    %v3620 = vunpack.c.l.b16 %v3539
    %v3621 = vunpack.c.h.b16 %v3539
    %v3622 = vpack.c.b16 %v3598, %v3590
    %v3623 = vpack.c.b16 %v3599, %v3591
    %v3624 = vpack.c.b16 %v3600, %v3592
    %v3625 = vpack.c.b16 %v3601, %v3593
    %v3626 = vpack.c.b16 %v3602, %v3594
    %v3627 = vpack.c.b16 %v3603, %v3595
    %v3628 = vpack.c.b16 %v3604, %v3596
    %v3629 = vpack.c.b16 %v3605, %v3597
    %v3630 = vpack.c.b16 %v3614, %v3606
    %v3631 = vpack.c.b16 %v3615, %v3607
    %v3632 = vpack.c.b16 %v3616, %v3608
    %v3633 = vpack.c.b16 %v3617, %v3609
    %v3634 = vpack.c.b16 %v3618, %v3610
    %v3635 = vpack.c.b16 %v3619, %v3611
    %v3636 = vpack.c.b16 %v3620, %v3612
    %v3637 = vpack.c.b16 %v3621, %v3613
    %v3647 = vsel %vm148, %v3572, 0
    %v3650 = vsel %vm148, %v3573, 0
    %v3653 = vand.u32 %v3630, %v158
    %v3656 = vand.u32 %v3631, %v158
    %v3659 = vand.u32 %v3632, %v158
    %v3662 = vand.u32 %v3633, %v158
    %v3665 = vand.u32 %v3634, %v158
    %v3668 = vand.u32 %v3635, %v158
    %v3671 = vand.u32 %v3636, %v158
    %v3674 = vand.u32 %v3637, %v158
    %3676 = vmatprep.subr.bf16.mxu0 %v3623
    %3677 = vmatpush1.bf16.msra.mxu0 %v3622
    %3678 = vmatprep.subr.bf16.mxu0 %v3656
    %3679 = vmatpush1.bf16.msra.mxu0 %v3653
    %3680 = vmatprep.subr.bf16.mxu0 0
    %3681 = vmatpush1.bf16.msra.mxu0 0
    %3682 = vmatprep.subr.bf16.mxu0 0
    %3683 = vmatpush1.bf16.msra.mxu0 0
    %3684 = vmatprep.subr.bf16.mxu0 0
    %3685 = vmatpush1.bf16.msra.mxu0 0
    %3686 = vmatprep.subr.bf16.mxu0 0
    %3687 = vmatpush1.bf16.msra.mxu0 0
    %3688 = vmatprep.subr.bf16.mxu0 0
    %3689 = vmatpush1.bf16.msra.mxu0 0
    %3690 = vmatprep.subr.bf16.mxu0 0
    %3691 = vmatpush1.bf16.msra.mxu0 0
    %3692 = vmatprep.subr.bf16.mxu0 0
    %3693 = vmatpush1.bf16.msra.mxu0 0
    %3694 = vmatprep.subr.bf16.mxu0 0
    %3695 = vmatpush1.bf16.msra.mxu0 0
    %3696 = vmatprep.subr.bf16.mxu0 0
    %3697 = vmatpush1.bf16.msra.mxu0 0
    %3698 = vmatprep.subr.bf16.mxu0 0
    %3699 = vmatpush1.bf16.msra.mxu0 0
    %3700 = vmatprep.subr.bf16.mxu0 0
    %3701 = vmatpush1.bf16.msra.mxu0 0
    %3702 = vmatprep.subr.bf16.mxu0 0
    %3703 = vmatpush1.bf16.msra.mxu0 0
    %3704 = vmatprep.subr.bf16.mxu0 0
    %3705 = vmatpush1.bf16.msra.mxu0 0
    %3706 = vmatprep.subr.bf16.mxu0 0
    %3707 = vmatpush1.bf16.msra.mxu0 0
    %3708 = vmatprep.mubr.bf16.mxu0 0
    %3709 = vmatmul.mubr.bf16.gmra.mrb[0].mxu0 %v3647
    %v3710 = vpop.f32.mrb[0].mxu0
    %v3711 = vadd.f32 %v3547, %v3710
    %v3712 = vpop.f32.mrb[0].mxu0
    %v3713 = vadd.f32 %v3547, %v3712
    %v3714 = vpop.f32.mrb[0].mxu0
    %v3715 = vadd.f32 %v3552, %v3714
    %v3716 = vpop.f32.mrb[0].mxu0
    %v3717 = vadd.f32 %v3552, %v3716
    %3718 = vmatprep.mubr.bf16.mxu0 0
    %3719 = vmatmul.mubr.bf16.gmra.mrb[0].mxu0 %v3650
    %v3720 = vpop.f32.mrb[0].mxu0
    %v3721 = vadd.f32 %v3557, %v3720
    %v3722 = vpop.f32.mrb[0].mxu0
    %v3723 = vadd.f32 %v3557, %v3722
    %v3724 = vpop.f32.mrb[0].mxu0
    %v3725 = vadd.f32 %v3562, %v3724
    %v3726 = vpop.f32.mrb[0].mxu0
    %v3727 = vadd.f32 %v3562, %v3726
    %3728 = vdwg.mxu0
    %3729 = vmatprep.subr.bf16.mxu0 %v3625
    %3730 = vmatpush1.bf16.msra.mxu0 %v3624
    %3731 = vmatprep.subr.bf16.mxu0 %v3662
    %3732 = vmatpush1.bf16.msra.mxu0 %v3659
    %3733 = vmatprep.subr.bf16.mxu0 0
    %3734 = vmatpush1.bf16.msra.mxu0 0
    %3735 = vmatprep.subr.bf16.mxu0 0
    %3736 = vmatpush1.bf16.msra.mxu0 0
    %3737 = vmatprep.subr.bf16.mxu0 0
    %3738 = vmatpush1.bf16.msra.mxu0 0
    %3739 = vmatprep.subr.bf16.mxu0 0
    %3740 = vmatpush1.bf16.msra.mxu0 0
    %3741 = vmatprep.subr.bf16.mxu0 0
    %3742 = vmatpush1.bf16.msra.mxu0 0
    %3743 = vmatprep.subr.bf16.mxu0 0
    %3744 = vmatpush1.bf16.msra.mxu0 0
    %3745 = vmatprep.subr.bf16.mxu0 0
    %3746 = vmatpush1.bf16.msra.mxu0 0
    %3747 = vmatprep.subr.bf16.mxu0 0
    %3748 = vmatpush1.bf16.msra.mxu0 0
    %3749 = vmatprep.subr.bf16.mxu0 0
    %3750 = vmatpush1.bf16.msra.mxu0 0
    %3751 = vmatprep.subr.bf16.mxu0 0
    %3752 = vmatpush1.bf16.msra.mxu0 0
    %3753 = vmatprep.subr.bf16.mxu0 0
    %3754 = vmatpush1.bf16.msra.mxu0 0
    %3755 = vmatprep.subr.bf16.mxu0 0
    %3756 = vmatpush1.bf16.msra.mxu0 0
    %3757 = vmatprep.subr.bf16.mxu0 0
    %3758 = vmatpush1.bf16.msra.mxu0 0
    %3759 = vmatprep.subr.bf16.mxu0 0
    %3760 = vmatpush1.bf16.msra.mxu0 0
    %3761 = vmatprep.mubr.bf16.mxu0 0
    %3762 = vmatmul.mubr.bf16.gmra.mrb[0].mxu0 %v3647
    %v3763 = vpop.f32.mrb[0].mxu0
    %v3764 = vadd.f32 %v3547, %v3763
    %v3765 = vpop.f32.mrb[0].mxu0
    %v3766 = vadd.f32 %v3547, %v3765
    %v3767 = vpop.f32.mrb[0].mxu0
    %v3768 = vadd.f32 %v3552, %v3767
    %v3769 = vpop.f32.mrb[0].mxu0
    %v3770 = vadd.f32 %v3552, %v3769
    %3771 = vmatprep.mubr.bf16.mxu0 0
    %3772 = vmatmul.mubr.bf16.gmra.mrb[0].mxu0 %v3650
    %v3773 = vpop.f32.mrb[0].mxu0
    %v3774 = vadd.f32 %v3557, %v3773
    %v3775 = vpop.f32.mrb[0].mxu0
    %v3776 = vadd.f32 %v3557, %v3775
    %v3777 = vpop.f32.mrb[0].mxu0
    %v3778 = vadd.f32 %v3562, %v3777
    %v3779 = vpop.f32.mrb[0].mxu0
    %v3780 = vadd.f32 %v3562, %v3779
    %3781 = vdwg.mxu0
    %3782 = vmatprep.subr.bf16.mxu0 %v3627
    %3783 = vmatpush1.bf16.msra.mxu0 %v3626
    %3784 = vmatprep.subr.bf16.mxu0 %v3668
    %3785 = vmatpush1.bf16.msra.mxu0 %v3665
    %3786 = vmatprep.subr.bf16.mxu0 0
    %3787 = vmatpush1.bf16.msra.mxu0 0
    %3788 = vmatprep.subr.bf16.mxu0 0
    %3789 = vmatpush1.bf16.msra.mxu0 0
    %3790 = vmatprep.subr.bf16.mxu0 0
    %3791 = vmatpush1.bf16.msra.mxu0 0
    %3792 = vmatprep.subr.bf16.mxu0 0
    %3793 = vmatpush1.bf16.msra.mxu0 0
    %3794 = vmatprep.subr.bf16.mxu0 0
    %3795 = vmatpush1.bf16.msra.mxu0 0
    %3796 = vmatprep.subr.bf16.mxu0 0
    %3797 = vmatpush1.bf16.msra.mxu0 0
    %3798 = vmatprep.subr.bf16.mxu0 0
    %3799 = vmatpush1.bf16.msra.mxu0 0
    %3800 = vmatprep.subr.bf16.mxu0 0
    %3801 = vmatpush1.bf16.msra.mxu0 0
    %3802 = vmatprep.subr.bf16.mxu0 0
    %3803 = vmatpush1.bf16.msra.mxu0 0
    %3804 = vmatprep.subr.bf16.mxu0 0
    %3805 = vmatpush1.bf16.msra.mxu0 0
    %3806 = vmatprep.subr.bf16.mxu0 0
    %3807 = vmatpush1.bf16.msra.mxu0 0
    %3808 = vmatprep.subr.bf16.mxu0 0
    %3809 = vmatpush1.bf16.msra.mxu0 0
    %3810 = vmatprep.subr.bf16.mxu0 0
    %3811 = vmatpush1.bf16.msra.mxu0 0
    %3812 = vmatprep.subr.bf16.mxu0 0
    %3813 = vmatpush1.bf16.msra.mxu0 0
    %3814 = vmatprep.mubr.bf16.mxu0 0
    %3815 = vmatmul.mubr.bf16.gmra.mrb[0].mxu0 %v3647
    %v3816 = vpop.f32.mrb[0].mxu0
    %v3817 = vadd.f32 %v3547, %v3816
    %v3818 = vpop.f32.mrb[0].mxu0
    %v3819 = vadd.f32 %v3547, %v3818
    %v3820 = vpop.f32.mrb[0].mxu0
    %v3821 = vadd.f32 %v3552, %v3820
    %v3822 = vpop.f32.mrb[0].mxu0
    %v3823 = vadd.f32 %v3552, %v3822
    %3824 = vmatprep.mubr.bf16.mxu0 0
    %3825 = vmatmul.mubr.bf16.gmra.mrb[0].mxu0 %v3650
    %v3826 = vpop.f32.mrb[0].mxu0
    %v3827 = vadd.f32 %v3557, %v3826
    %v3828 = vpop.f32.mrb[0].mxu0
    %v3829 = vadd.f32 %v3557, %v3828
    %v3830 = vpop.f32.mrb[0].mxu0
    %v3831 = vadd.f32 %v3562, %v3830
    %v3832 = vpop.f32.mrb[0].mxu0
    %v3833 = vadd.f32 %v3562, %v3832
    %3834 = vdwg.mxu0
    %3835 = vmatprep.subr.bf16.mxu0 %v3629
    %3836 = vmatpush1.bf16.msra.mxu0 %v3628
    %3837 = vmatprep.subr.bf16.mxu0 %v3674
    %3838 = vmatpush1.bf16.msra.mxu0 %v3671
    %3839 = vmatprep.subr.bf16.mxu0 0
    %3840 = vmatpush1.bf16.msra.mxu0 0
    %3841 = vmatprep.subr.bf16.mxu0 0
    %3842 = vmatpush1.bf16.msra.mxu0 0
    %3843 = vmatprep.subr.bf16.mxu0 0
    %3844 = vmatpush1.bf16.msra.mxu0 0
    %3845 = vmatprep.subr.bf16.mxu0 0
    %3846 = vmatpush1.bf16.msra.mxu0 0
    %3847 = vmatprep.subr.bf16.mxu0 0
    %3848 = vmatpush1.bf16.msra.mxu0 0
    %3849 = vmatprep.subr.bf16.mxu0 0
    %3850 = vmatpush1.bf16.msra.mxu0 0
    %3851 = vmatprep.subr.bf16.mxu0 0
    %3852 = vmatpush1.bf16.msra.mxu0 0
    %3853 = vmatprep.subr.bf16.mxu0 0
    %3854 = vmatpush1.bf16.msra.mxu0 0
    %3855 = vmatprep.subr.bf16.mxu0 0
    %3856 = vmatpush1.bf16.msra.mxu0 0
    %3857 = vmatprep.subr.bf16.mxu0 0
    %3858 = vmatpush1.bf16.msra.mxu0 0
    %3859 = vmatprep.subr.bf16.mxu0 0
    %3860 = vmatpush1.bf16.msra.mxu0 0
    %3861 = vmatprep.subr.bf16.mxu0 0
    %3862 = vmatpush1.bf16.msra.mxu0 0
    %3863 = vmatprep.subr.bf16.mxu0 0
    %3864 = vmatpush1.bf16.msra.mxu0 0
    %3865 = vmatprep.subr.bf16.mxu0 0
    %3866 = vmatpush1.bf16.msra.mxu0 0
    %3867 = vmatprep.mubr.bf16.mxu0 0
    %3868 = vmatmul.mubr.bf16.gmra.mrb[0].mxu0 %v3647
    %v3869 = vpop.f32.mrb[0].mxu0
    %v3870 = vadd.f32 %v3547, %v3869
    %v3871 = vpop.f32.mrb[0].mxu0
    %v3872 = vadd.f32 %v3547, %v3871
    %v3873 = vpop.f32.mrb[0].mxu0
    %v3874 = vadd.f32 %v3552, %v3873
    %v3875 = vpop.f32.mrb[0].mxu0
    %v3876 = vadd.f32 %v3552, %v3875
    %3877 = vmatprep.mubr.bf16.mxu0 0
    %3878 = vmatmul.mubr.bf16.gmra.mrb[0].mxu0 %v3650
    %v3879 = vpop.f32.mrb[0].mxu0
    %v3880 = vadd.f32 %v3557, %v3879
    %v3881 = vpop.f32.mrb[0].mxu0
    %v3882 = vadd.f32 %v3557, %v3881
    %v3883 = vpop.f32.mrb[0].mxu0
    %v3884 = vadd.f32 %v3562, %v3883
    %v3885 = vpop.f32.mrb[0].mxu0
    %v3886 = vadd.f32 %v3562, %v3885
    %3887 = vdwg.mxu0
    %v3888 = vmax.f32 %v3711, 0.0
    %v3889 = vmax.f32 %v3713, 0.0
    %v3890 = vmax.f32 %v3764, 0.0
    %v3891 = vmax.f32 %v3766, 0.0
    %v3892 = vmax.f32 %v3817, 0.0
    %v3893 = vmax.f32 %v3819, 0.0
    %v3894 = vmax.f32 %v3870, 0.0
    %v3895 = vmax.f32 %v3872, 0.0
    %v3896 = vmax.f32 %v3715, 0.0
    %v3897 = vmax.f32 %v3717, 0.0
    %v3898 = vmax.f32 %v3768, 0.0
    %v3899 = vmax.f32 %v3770, 0.0
    %v3900 = vmax.f32 %v3821, 0.0
    %v3901 = vmax.f32 %v3823, 0.0
    %v3902 = vmax.f32 %v3874, 0.0
    %v3903 = vmax.f32 %v3876, 0.0
    %v3904 = vmax.f32 %v3721, 0.0
    %v3905 = vmax.f32 %v3723, 0.0
    %v3906 = vmax.f32 %v3774, 0.0
    %v3907 = vmax.f32 %v3776, 0.0
    %v3908 = vmax.f32 %v3827, 0.0
    %v3909 = vmax.f32 %v3829, 0.0
    %v3910 = vmax.f32 %v3880, 0.0
    %v3911 = vmax.f32 %v3882, 0.0
    %v3912 = vmax.f32 %v3725, 0.0
    %v3913 = vmax.f32 %v3727, 0.0
    %v3914 = vmax.f32 %v3778, 0.0
    %v3915 = vmax.f32 %v3780, 0.0
    %v3916 = vmax.f32 %v3831, 0.0
    %v3917 = vmax.f32 %v3833, 0.0
    %v3918 = vmax.f32 %v3884, 0.0
    %v3919 = vmax.f32 %v3886, 0.0
    %v3920 = vpack.c.bf16 %v3896, %v3888
    %v3921 = vpack.c.bf16 %v3897, %v3889
    %v3922 = vpack.c.bf16 %v3898, %v3890
    %v3923 = vpack.c.bf16 %v3899, %v3891
    %v3924 = vpack.c.bf16 %v3900, %v3892
    %v3925 = vpack.c.bf16 %v3901, %v3893
    %v3926 = vpack.c.bf16 %v3902, %v3894
    %v3927 = vpack.c.bf16 %v3903, %v3895
    %v3928 = vpack.c.bf16 %v3912, %v3904
    %v3929 = vpack.c.bf16 %v3913, %v3905
    %v3930 = vpack.c.bf16 %v3914, %v3906
    %v3931 = vpack.c.bf16 %v3915, %v3907
    %v3932 = vpack.c.bf16 %v3916, %v3908
    %v3933 = vpack.c.bf16 %v3917, %v3909
    %v3934 = vpack.c.bf16 %v3918, %v3910
    %v3935 = vpack.c.bf16 %v3919, %v3911
    %3936 = vst [vmem:[#allocation2] sm:$0xff] %v3920
    %3937 = vst [vmem:[#allocation2 + $0x8] sm:$0xff] %v3921
    %3938 = vst [vmem:[#allocation2 + $0x10] sm:$0xff] %v3922
    %3939 = vst [vmem:[#allocation2 + $0x18] sm:$0xff] %v3923
    %3940 = vst [vmem:[#allocation2 + $0x20] sm:$0xff] %v3924
    %3941 = vst [vmem:[#allocation2 + $0x28] sm:$0xff] %v3925
    %3942 = vst [vmem:[#allocation2 + $0x30] sm:$0xff] %v3926
    %3943 = vst [vmem:[#allocation2 + $0x38] sm:$0xff] %v3927
    %3944 = vst [vmem:[#allocation2 + $0x40] sm:$0xff] %v3928
    %3945 = vst [vmem:[#allocation2 + $0x48] sm:$0xff] %v3929
    %3946 = vst [vmem:[#allocation2 + $0x50] sm:$0xff] %v3930
    %3947 = vst [vmem:[#allocation2 + $0x58] sm:$0xff] %v3931
    %3948 = vst [vmem:[#allocation2 + $0x60] sm:$0xff] %v3932
    %3949 = vst [vmem:[#allocation2 + $0x68] sm:$0xff] %v3933
    %3950 = vst [vmem:[#allocation2 + $0x70] sm:$0xff] %v3934
    %3951 = vst [vmem:[#allocation2 + $0x78] sm:$0xff] %v3935
    %v3952 = vld [vmem:[#allocation2] sm:$0xff]
    %v3953 = vld [vmem:[#allocation2 + $0x8] sm:$0xff]
    %v3954 = vld [vmem:[#allocation2 + $0x10] sm:$0xff]
    %v3955 = vld [vmem:[#allocation2 + $0x18] sm:$0xff]
    %v3956 = vld [vmem:[#allocation2 + $0x20] sm:$0xff]
    %v3957 = vld [vmem:[#allocation2 + $0x28] sm:$0xff]
    %v3958 = vld [vmem:[#allocation2 + $0x30] sm:$0xff]
    %v3959 = vld [vmem:[#allocation2 + $0x38] sm:$0xff]
    %v3960 = vld [vmem:[#allocation2 + $0x40] sm:$0xff]
    %v3961 = vld [vmem:[#allocation2 + $0x48] sm:$0xff]
    %v3962 = vld [vmem:[#allocation2 + $0x50] sm:$0xff]
    %v3963 = vld [vmem:[#allocation2 + $0x58] sm:$0xff]
    %v3964 = vld [vmem:[#allocation2 + $0x60] sm:$0xff]
    %v3965 = vld [vmem:[#allocation2 + $0x68] sm:$0xff]
    %v3966 = vld [vmem:[#allocation2 + $0x70] sm:$0xff]
    %v3967 = vld [vmem:[#allocation2 + $0x78] sm:$0xff]
    %v3968 = vld [vmem:[%s3] sm:$0xf]
    %v3969 = vld [vmem:[%s3 + $0x4] sm:$0xf]
    %v3970 = vld [vmem:[%s3 + $0x8] sm:$0xf]
    %v3971 = vld [vmem:[%s3 + $0xc] sm:$0xf]
    %v3972 = vld [vmem:[%s479] sm:$0xf]
    %v3973 = vld [vmem:[%s479 + $0x4] sm:$0xf]
    %v3974 = vld [vmem:[%s479 + $0x8] sm:$0xf]
    %v3975 = vld [vmem:[%s479 + $0xc] sm:$0xf]
    %v3980 = vunpack.c.l.b16 %v3972
    %v3981 = vunpack.c.l.b16 %v3973
    %v3982 = vunpack.c.l.b16 %v3974
    %v3983 = vunpack.c.l.b16 %v3975
    %v3984 = vpack.c.b16 %v3981, %v3980
    %v3985 = vpack.c.b16 %v3983, %v3982
    %4002 = vrot.lane.b32.xlu0 %v3952, 127
    %v4003 = vpop.permute.xlu0 %4002
    %4004 = vrot.lane.b32.xlu0 %v3953, 127
    %v4005 = vpop.permute.xlu0 %4004
    %4006 = vrot.lane.b32.xlu0 %v3954, 127
    %v4007 = vpop.permute.xlu0 %4006
    %4008 = vrot.lane.b32.xlu0 %v3955, 127
    %v4009 = vpop.permute.xlu0 %4008
    %4010 = vrot.lane.b32.xlu0 %v3956, 127
    %v4011 = vpop.permute.xlu0 %4010
    %4012 = vrot.lane.b32.xlu0 %v3957, 127
    %v4013 = vpop.permute.xlu0 %4012
    %4014 = vrot.lane.b32.xlu0 %v3958, 127
    %v4015 = vpop.permute.xlu0 %4014
    %4016 = vrot.lane.b32.xlu0 %v3959, 127
    %v4017 = vpop.permute.xlu0 %4016
    %4018 = vrot.lane.b32.xlu0 %v3960, 127
    %v4019 = vpop.permute.xlu0 %4018
    %4020 = vrot.lane.b32.xlu0 %v3961, 127
    %v4021 = vpop.permute.xlu0 %4020
    %4022 = vrot.lane.b32.xlu0 %v3962, 127
    %v4023 = vpop.permute.xlu0 %4022
    %4024 = vrot.lane.b32.xlu0 %v3963, 127
    %v4025 = vpop.permute.xlu0 %4024
    %4026 = vrot.lane.b32.xlu0 %v3964, 127
    %v4027 = vpop.permute.xlu0 %4026
    %4028 = vrot.lane.b32.xlu0 %v3965, 127
    %v4029 = vpop.permute.xlu0 %4028
    %4030 = vrot.lane.b32.xlu0 %v3966, 127
    %v4031 = vpop.permute.xlu0 %4030
    %4032 = vrot.lane.b32.xlu0 %v3967, 127
    %v4033 = vpop.permute.xlu0 %4032
    %v4034 = vsel %vm542, %v4003, %v4005
    %v4035 = vsel %vm542, %v4005, %v4007
    %v4036 = vsel %vm542, %v4007, %v4009
    %v4037 = vsel %vm542, %v4009, %v4011
    %v4038 = vsel %vm542, %v4011, %v4013
    %v4039 = vsel %vm542, %v4013, %v4015
    %v4040 = vsel %vm542, %v4015, %v4017
    %v4041 = vsel %vm542, %v4019, %v4021
    %v4042 = vsel %vm542, %v4021, %v4023
    %v4043 = vsel %vm542, %v4023, %v4025
    %v4044 = vsel %vm542, %v4025, %v4027
    %v4045 = vsel %vm542, %v4027, %v4029
    %v4046 = vsel %vm542, %v4029, %v4031
    %v4047 = vsel %vm542, %v4031, %v4033
    %v4065 = vsel %vm573, %v3984, 0
    %v4068 = vsel %vm573, %v3985, 0
    %4070 = vmatprep.subr.bf16.mxu0 %v4035
    %4071 = vmatpush1.bf16.msra.mxu0 %v4034
    %4072 = vmatprep.subr.bf16.mxu0 %v4042
    %4073 = vmatpush1.bf16.msra.mxu0 %v4041
    %4074 = vmatprep.subr.bf16.mxu0 0
    %4075 = vmatpush1.bf16.msra.mxu0 0
    %4076 = vmatprep.subr.bf16.mxu0 0
    %4077 = vmatpush1.bf16.msra.mxu0 0
    %4078 = vmatprep.subr.bf16.mxu0 0
    %4079 = vmatpush1.bf16.msra.mxu0 0
    %4080 = vmatprep.subr.bf16.mxu0 0
    %4081 = vmatpush1.bf16.msra.mxu0 0
    %4082 = vmatprep.subr.bf16.mxu0 0
    %4083 = vmatpush1.bf16.msra.mxu0 0
    %4084 = vmatprep.subr.bf16.mxu0 0
    %4085 = vmatpush1.bf16.msra.mxu0 0
    %4086 = vmatprep.subr.bf16.mxu0 0
    %4087 = vmatpush1.bf16.msra.mxu0 0
    %4088 = vmatprep.subr.bf16.mxu0 0
    %4089 = vmatpush1.bf16.msra.mxu0 0
    %4090 = vmatprep.subr.bf16.mxu0 0
    %4091 = vmatpush1.bf16.msra.mxu0 0
    %4092 = vmatprep.subr.bf16.mxu0 0
    %4093 = vmatpush1.bf16.msra.mxu0 0
    %4094 = vmatprep.subr.bf16.mxu0 0
    %4095 = vmatpush1.bf16.msra.mxu0 0
    %4096 = vmatprep.subr.bf16.mxu0 0
    %4097 = vmatpush1.bf16.msra.mxu0 0
    %4098 = vmatprep.subr.bf16.mxu0 0
    %4099 = vmatpush1.bf16.msra.mxu0 0
    %4100 = vmatprep.subr.bf16.mxu0 0
    %4101 = vmatpush1.bf16.msra.mxu0 0
    %4102 = vmatprep.mubr.bf16.mxu0 0
    %4103 = vmatmul.mubr.bf16.gmra.mrb[0].mxu0 %v4065
    %v4104 = vpop.f32.mrb[0].mxu0
    %v4105 = vadd.f32 0.0, %v4104
    %v4106 = vpop.f32.mrb[0].mxu0
    %v4107 = vadd.f32 0.0, %v4106
    %v4108 = vpop.f32.mrb[0].mxu0
    %v4109 = vadd.f32 0.0, %v4108
    %v4110 = vpop.f32.mrb[0].mxu0
    %v4111 = vadd.f32 0.0, %v4110
    %4112 = vmatprep.mubr.bf16.mxu0 0
    %4113 = vmatmul.mubr.bf16.gmra.mrb[0].mxu0 %v4068
    %v4114 = vpop.f32.mrb[0].mxu0
    %v4115 = vadd.f32 0.0, %v4114
    %v4116 = vpop.f32.mrb[0].mxu0
    %v4117 = vadd.f32 0.0, %v4116
    %v4118 = vpop.f32.mrb[0].mxu0
    %v4119 = vadd.f32 0.0, %v4118
    %v4120 = vpop.f32.mrb[0].mxu0
    %v4121 = vadd.f32 0.0, %v4120
    %4122 = vdwg.mxu0
    %4123 = vmatprep.subr.bf16.mxu0 %v4037
    %4124 = vmatpush1.bf16.msra.mxu0 %v4036
    %4125 = vmatprep.subr.bf16.mxu0 %v4044
    %4126 = vmatpush1.bf16.msra.mxu0 %v4043
    %4127 = vmatprep.subr.bf16.mxu0 0
    %4128 = vmatpush1.bf16.msra.mxu0 0
    %4129 = vmatprep.subr.bf16.mxu0 0
    %4130 = vmatpush1.bf16.msra.mxu0 0
    %4131 = vmatprep.subr.bf16.mxu0 0
    %4132 = vmatpush1.bf16.msra.mxu0 0
    %4133 = vmatprep.subr.bf16.mxu0 0
    %4134 = vmatpush1.bf16.msra.mxu0 0
    %4135 = vmatprep.subr.bf16.mxu0 0
    %4136 = vmatpush1.bf16.msra.mxu0 0
    %4137 = vmatprep.subr.bf16.mxu0 0
    %4138 = vmatpush1.bf16.msra.mxu0 0
    %4139 = vmatprep.subr.bf16.mxu0 0
    %4140 = vmatpush1.bf16.msra.mxu0 0
    %4141 = vmatprep.subr.bf16.mxu0 0
    %4142 = vmatpush1.bf16.msra.mxu0 0
    %4143 = vmatprep.subr.bf16.mxu0 0
    %4144 = vmatpush1.bf16.msra.mxu0 0
    %4145 = vmatprep.subr.bf16.mxu0 0
    %4146 = vmatpush1.bf16.msra.mxu0 0
    %4147 = vmatprep.subr.bf16.mxu0 0
    %4148 = vmatpush1.bf16.msra.mxu0 0
    %4149 = vmatprep.subr.bf16.mxu0 0
    %4150 = vmatpush1.bf16.msra.mxu0 0
    %4151 = vmatprep.subr.bf16.mxu0 0
    %4152 = vmatpush1.bf16.msra.mxu0 0
    %4153 = vmatprep.subr.bf16.mxu0 0
    %4154 = vmatpush1.bf16.msra.mxu0 0
    %4155 = vmatprep.mubr.bf16.mxu0 0
    %4156 = vmatmul.mubr.bf16.gmra.mrb[0].mxu0 %v4065
    %v4157 = vpop.f32.mrb[0].mxu0
    %v4158 = vadd.f32 0.0, %v4157
    %v4159 = vpop.f32.mrb[0].mxu0
    %v4160 = vadd.f32 0.0, %v4159
    %v4161 = vpop.f32.mrb[0].mxu0
    %v4162 = vadd.f32 0.0, %v4161
    %v4163 = vpop.f32.mrb[0].mxu0
    %v4164 = vadd.f32 0.0, %v4163
    %4165 = vmatprep.mubr.bf16.mxu0 0
    %4166 = vmatmul.mubr.bf16.gmra.mrb[0].mxu0 %v4068
    %v4167 = vpop.f32.mrb[0].mxu0
    %v4168 = vadd.f32 0.0, %v4167
    %v4169 = vpop.f32.mrb[0].mxu0
    %v4170 = vadd.f32 0.0, %v4169
    %v4171 = vpop.f32.mrb[0].mxu0
    %v4172 = vadd.f32 0.0, %v4171
    %v4173 = vpop.f32.mrb[0].mxu0
    %v4174 = vadd.f32 0.0, %v4173
    %4175 = vdwg.mxu0
    %4176 = vmatprep.subr.bf16.mxu0 %v4039
    %4177 = vmatpush1.bf16.msra.mxu0 %v4038
    %4178 = vmatprep.subr.bf16.mxu0 %v4046
    %4179 = vmatpush1.bf16.msra.mxu0 %v4045
    %4180 = vmatprep.subr.bf16.mxu0 0
    %4181 = vmatpush1.bf16.msra.mxu0 0
    %4182 = vmatprep.subr.bf16.mxu0 0
    %4183 = vmatpush1.bf16.msra.mxu0 0
    %4184 = vmatprep.subr.bf16.mxu0 0
    %4185 = vmatpush1.bf16.msra.mxu0 0
    %4186 = vmatprep.subr.bf16.mxu0 0
    %4187 = vmatpush1.bf16.msra.mxu0 0
    %4188 = vmatprep.subr.bf16.mxu0 0
    %4189 = vmatpush1.bf16.msra.mxu0 0
    %4190 = vmatprep.subr.bf16.mxu0 0
    %4191 = vmatpush1.bf16.msra.mxu0 0
    %4192 = vmatprep.subr.bf16.mxu0 0
    %4193 = vmatpush1.bf16.msra.mxu0 0
    %4194 = vmatprep.subr.bf16.mxu0 0
    %4195 = vmatpush1.bf16.msra.mxu0 0
    %4196 = vmatprep.subr.bf16.mxu0 0
    %4197 = vmatpush1.bf16.msra.mxu0 0
    %4198 = vmatprep.subr.bf16.mxu0 0
    %4199 = vmatpush1.bf16.msra.mxu0 0
    %4200 = vmatprep.subr.bf16.mxu0 0
    %4201 = vmatpush1.bf16.msra.mxu0 0
    %4202 = vmatprep.subr.bf16.mxu0 0
    %4203 = vmatpush1.bf16.msra.mxu0 0
    %4204 = vmatprep.subr.bf16.mxu0 0
    %4205 = vmatpush1.bf16.msra.mxu0 0
    %4206 = vmatprep.subr.bf16.mxu0 0
    %4207 = vmatpush1.bf16.msra.mxu0 0
    %4208 = vmatprep.mubr.bf16.mxu0 0
    %4209 = vmatmul.mubr.bf16.gmra.mrb[0].mxu0 %v4065
    %v4210 = vpop.f32.mrb[0].mxu0
    %v4211 = vadd.f32 0.0, %v4210
    %v4212 = vpop.f32.mrb[0].mxu0
    %v4213 = vadd.f32 0.0, %v4212
    %v4214 = vpop.f32.mrb[0].mxu0
    %v4215 = vadd.f32 0.0, %v4214
    %v4216 = vpop.f32.mrb[0].mxu0
    %v4217 = vadd.f32 0.0, %v4216
    %4218 = vmatprep.mubr.bf16.mxu0 0
    %4219 = vmatmul.mubr.bf16.gmra.mrb[0].mxu0 %v4068
    %v4220 = vpop.f32.mrb[0].mxu0
    %v4221 = vadd.f32 0.0, %v4220
    %v4222 = vpop.f32.mrb[0].mxu0
    %v4223 = vadd.f32 0.0, %v4222
    %v4224 = vpop.f32.mrb[0].mxu0
    %v4225 = vadd.f32 0.0, %v4224
    %v4226 = vpop.f32.mrb[0].mxu0
    %v4227 = vadd.f32 0.0, %v4226
    %4228 = vdwg.mxu0
    %4229 = vmatprep.subr.bf16.mxu0 %v4017
    %4230 = vmatpush1.bf16.msra.mxu0 %v4040
    %4231 = vmatprep.subr.bf16.mxu0 %v4033
    %4232 = vmatpush1.bf16.msra.mxu0 %v4047
    %4233 = vmatprep.subr.bf16.mxu0 0
    %4234 = vmatpush1.bf16.msra.mxu0 0
    %4235 = vmatprep.subr.bf16.mxu0 0
    %4236 = vmatpush1.bf16.msra.mxu0 0
    %4237 = vmatprep.subr.bf16.mxu0 0
    %4238 = vmatpush1.bf16.msra.mxu0 0
    %4239 = vmatprep.subr.bf16.mxu0 0
    %4240 = vmatpush1.bf16.msra.mxu0 0
    %4241 = vmatprep.subr.bf16.mxu0 0
    %4242 = vmatpush1.bf16.msra.mxu0 0
    %4243 = vmatprep.subr.bf16.mxu0 0
    %4244 = vmatpush1.bf16.msra.mxu0 0
    %4245 = vmatprep.subr.bf16.mxu0 0
    %4246 = vmatpush1.bf16.msra.mxu0 0
    %4247 = vmatprep.subr.bf16.mxu0 0
    %4248 = vmatpush1.bf16.msra.mxu0 0
    %4249 = vmatprep.subr.bf16.mxu0 0
    %4250 = vmatpush1.bf16.msra.mxu0 0
    %4251 = vmatprep.subr.bf16.mxu0 0
    %4252 = vmatpush1.bf16.msra.mxu0 0
    %4253 = vmatprep.subr.bf16.mxu0 0
    %4254 = vmatpush1.bf16.msra.mxu0 0
    %4255 = vmatprep.subr.bf16.mxu0 0
    %4256 = vmatpush1.bf16.msra.mxu0 0
    %4257 = vmatprep.subr.bf16.mxu0 0
    %4258 = vmatpush1.bf16.msra.mxu0 0
    %4259 = vmatprep.subr.bf16.mxu0 0
    %4260 = vmatpush1.bf16.msra.mxu0 0
    %4261 = vmatprep.mubr.bf16.mxu0 0
    %4262 = vmatmul.mubr.bf16.gmra.mrb[0].mxu0 %v4065
    %v4263 = vpop.f32.mrb[0].mxu0
    %v4264 = vadd.f32 0.0, %v4263
    %v4265 = vpop.f32.mrb[0].mxu0
    %v4266 = vadd.f32 0.0, %v4265
    %v4267 = vpop.f32.mrb[0].mxu0
    %v4268 = vadd.f32 0.0, %v4267
    %v4269 = vpop.f32.mrb[0].mxu0
    %v4270 = vadd.f32 0.0, %v4269
    %4271 = vmatprep.mubr.bf16.mxu0 0
    %4272 = vmatmul.mubr.bf16.gmra.mrb[0].mxu0 %v4068
    %v4273 = vpop.f32.mrb[0].mxu0
    %v4274 = vadd.f32 0.0, %v4273
    %v4275 = vpop.f32.mrb[0].mxu0
    %v4276 = vadd.f32 0.0, %v4275
    %v4277 = vpop.f32.mrb[0].mxu0
    %v4278 = vadd.f32 0.0, %v4277
    %v4279 = vpop.f32.mrb[0].mxu0
    %v4280 = vadd.f32 0.0, %v4279
    %4281 = vdwg.mxu0
    %v4286 = vunpack.c.l.b16 %v3968
    %v4287 = vunpack.c.l.b16 %v3969
    %v4288 = vunpack.c.l.b16 %v3970
    %v4289 = vunpack.c.l.b16 %v3971
    %v4290 = vpack.c.b16 %v4287, %v4286
    %v4291 = vpack.c.b16 %v4289, %v4288
    %v4293 = vsel %vm573, %v4290, 0
    %v4296 = vsel %vm573, %v4291, 0
    %4298 = vmatprep.subr.bf16.mxu0 %v3953
    %4299 = vmatpush1.bf16.msra.mxu0 %v3952
    %4300 = vmatprep.subr.bf16.mxu0 %v3961
    %4301 = vmatpush1.bf16.msra.mxu0 %v3960
    %4302 = vmatprep.subr.bf16.mxu0 0
    %4303 = vmatpush1.bf16.msra.mxu0 0
    %4304 = vmatprep.subr.bf16.mxu0 0
    %4305 = vmatpush1.bf16.msra.mxu0 0
    %4306 = vmatprep.subr.bf16.mxu0 0
    %4307 = vmatpush1.bf16.msra.mxu0 0
    %4308 = vmatprep.subr.bf16.mxu0 0
    %4309 = vmatpush1.bf16.msra.mxu0 0
    %4310 = vmatprep.subr.bf16.mxu0 0
    %4311 = vmatpush1.bf16.msra.mxu0 0
    %4312 = vmatprep.subr.bf16.mxu0 0
    %4313 = vmatpush1.bf16.msra.mxu0 0
    %4314 = vmatprep.subr.bf16.mxu0 0
    %4315 = vmatpush1.bf16.msra.mxu0 0
    %4316 = vmatprep.subr.bf16.mxu0 0
    %4317 = vmatpush1.bf16.msra.mxu0 0
    %4318 = vmatprep.subr.bf16.mxu0 0
    %4319 = vmatpush1.bf16.msra.mxu0 0
    %4320 = vmatprep.subr.bf16.mxu0 0
    %4321 = vmatpush1.bf16.msra.mxu0 0
    %4322 = vmatprep.subr.bf16.mxu0 0
    %4323 = vmatpush1.bf16.msra.mxu0 0
    %4324 = vmatprep.subr.bf16.mxu0 0
    %4325 = vmatpush1.bf16.msra.mxu0 0
    %4326 = vmatprep.subr.bf16.mxu0 0
    %4327 = vmatpush1.bf16.msra.mxu0 0
    %4328 = vmatprep.subr.bf16.mxu0 0
    %4329 = vmatpush1.bf16.msra.mxu0 0
    %4330 = vmatprep.mubr.bf16.mxu0 0
    %4331 = vmatmul.mubr.bf16.gmra.mrb[0].mxu0 %v4293
    %v4332 = vpop.f32.mrb[0].mxu0
    %v4333 = vadd.f32 %v4105, %v4332
    %v4334 = vpop.f32.mrb[0].mxu0
    %v4335 = vadd.f32 %v4107, %v4334
    %v4336 = vpop.f32.mrb[0].mxu0
    %v4337 = vadd.f32 %v4109, %v4336
    %v4338 = vpop.f32.mrb[0].mxu0
    %v4339 = vadd.f32 %v4111, %v4338
    %4340 = vmatprep.mubr.bf16.mxu0 0
    %4341 = vmatmul.mubr.bf16.gmra.mrb[0].mxu0 %v4296
    %v4342 = vpop.f32.mrb[0].mxu0
    %v4343 = vadd.f32 %v4115, %v4342
    %v4344 = vpop.f32.mrb[0].mxu0
    %v4345 = vadd.f32 %v4117, %v4344
    %v4346 = vpop.f32.mrb[0].mxu0
    %v4347 = vadd.f32 %v4119, %v4346
    %v4348 = vpop.f32.mrb[0].mxu0
    %v4349 = vadd.f32 %v4121, %v4348
    %4350 = vdwg.mxu0
    %4351 = vmatprep.subr.bf16.mxu0 %v3955
    %4352 = vmatpush1.bf16.msra.mxu0 %v3954
    %4353 = vmatprep.subr.bf16.mxu0 %v3963
    %4354 = vmatpush1.bf16.msra.mxu0 %v3962
    %4355 = vmatprep.subr.bf16.mxu0 0
    %4356 = vmatpush1.bf16.msra.mxu0 0
    %4357 = vmatprep.subr.bf16.mxu0 0
    %4358 = vmatpush1.bf16.msra.mxu0 0
    %4359 = vmatprep.subr.bf16.mxu0 0
    %4360 = vmatpush1.bf16.msra.mxu0 0
    %4361 = vmatprep.subr.bf16.mxu0 0
    %4362 = vmatpush1.bf16.msra.mxu0 0
    %4363 = vmatprep.subr.bf16.mxu0 0
    %4364 = vmatpush1.bf16.msra.mxu0 0
    %4365 = vmatprep.subr.bf16.mxu0 0
    %4366 = vmatpush1.bf16.msra.mxu0 0
    %4367 = vmatprep.subr.bf16.mxu0 0
    %4368 = vmatpush1.bf16.msra.mxu0 0
    %4369 = vmatprep.subr.bf16.mxu0 0
    %4370 = vmatpush1.bf16.msra.mxu0 0
    %4371 = vmatprep.subr.bf16.mxu0 0
    %4372 = vmatpush1.bf16.msra.mxu0 0
    %4373 = vmatprep.subr.bf16.mxu0 0
    %4374 = vmatpush1.bf16.msra.mxu0 0
    %4375 = vmatprep.subr.bf16.mxu0 0
    %4376 = vmatpush1.bf16.msra.mxu0 0
    %4377 = vmatprep.subr.bf16.mxu0 0
    %4378 = vmatpush1.bf16.msra.mxu0 0
    %4379 = vmatprep.subr.bf16.mxu0 0
    %4380 = vmatpush1.bf16.msra.mxu0 0
    %4381 = vmatprep.subr.bf16.mxu0 0
    %4382 = vmatpush1.bf16.msra.mxu0 0
    %4383 = vmatprep.mubr.bf16.mxu0 0
    %4384 = vmatmul.mubr.bf16.gmra.mrb[0].mxu0 %v4293
    %v4385 = vpop.f32.mrb[0].mxu0
    %v4386 = vadd.f32 %v4158, %v4385
    %v4387 = vpop.f32.mrb[0].mxu0
    %v4388 = vadd.f32 %v4160, %v4387
    %v4389 = vpop.f32.mrb[0].mxu0
    %v4390 = vadd.f32 %v4162, %v4389
    %v4391 = vpop.f32.mrb[0].mxu0
    %v4392 = vadd.f32 %v4164, %v4391
    %4393 = vmatprep.mubr.bf16.mxu0 0
    %4394 = vmatmul.mubr.bf16.gmra.mrb[0].mxu0 %v4296
    %v4395 = vpop.f32.mrb[0].mxu0
    %v4396 = vadd.f32 %v4168, %v4395
    %v4397 = vpop.f32.mrb[0].mxu0
    %v4398 = vadd.f32 %v4170, %v4397
    %v4399 = vpop.f32.mrb[0].mxu0
    %v4400 = vadd.f32 %v4172, %v4399
    %v4401 = vpop.f32.mrb[0].mxu0
    %v4402 = vadd.f32 %v4174, %v4401
    %4403 = vdwg.mxu0
    %4404 = vmatprep.subr.bf16.mxu0 %v3957
    %4405 = vmatpush1.bf16.msra.mxu0 %v3956
    %4406 = vmatprep.subr.bf16.mxu0 %v3965
    %4407 = vmatpush1.bf16.msra.mxu0 %v3964
    %4408 = vmatprep.subr.bf16.mxu0 0
    %4409 = vmatpush1.bf16.msra.mxu0 0
    %4410 = vmatprep.subr.bf16.mxu0 0
    %4411 = vmatpush1.bf16.msra.mxu0 0
    %4412 = vmatprep.subr.bf16.mxu0 0
    %4413 = vmatpush1.bf16.msra.mxu0 0
    %4414 = vmatprep.subr.bf16.mxu0 0
    %4415 = vmatpush1.bf16.msra.mxu0 0
    %4416 = vmatprep.subr.bf16.mxu0 0
    %4417 = vmatpush1.bf16.msra.mxu0 0
    %4418 = vmatprep.subr.bf16.mxu0 0
    %4419 = vmatpush1.bf16.msra.mxu0 0
    %4420 = vmatprep.subr.bf16.mxu0 0
    %4421 = vmatpush1.bf16.msra.mxu0 0
    %4422 = vmatprep.subr.bf16.mxu0 0
    %4423 = vmatpush1.bf16.msra.mxu0 0
    %4424 = vmatprep.subr.bf16.mxu0 0
    %4425 = vmatpush1.bf16.msra.mxu0 0
    %4426 = vmatprep.subr.bf16.mxu0 0
    %4427 = vmatpush1.bf16.msra.mxu0 0
    %4428 = vmatprep.subr.bf16.mxu0 0
    %4429 = vmatpush1.bf16.msra.mxu0 0
    %4430 = vmatprep.subr.bf16.mxu0 0
    %4431 = vmatpush1.bf16.msra.mxu0 0
    %4432 = vmatprep.subr.bf16.mxu0 0
    %4433 = vmatpush1.bf16.msra.mxu0 0
    %4434 = vmatprep.subr.bf16.mxu0 0
    %4435 = vmatpush1.bf16.msra.mxu0 0
    %4436 = vmatprep.mubr.bf16.mxu0 0
    %4437 = vmatmul.mubr.bf16.gmra.mrb[0].mxu0 %v4293
    %v4438 = vpop.f32.mrb[0].mxu0
    %v4439 = vadd.f32 %v4211, %v4438
    %v4440 = vpop.f32.mrb[0].mxu0
    %v4441 = vadd.f32 %v4213, %v4440
    %v4442 = vpop.f32.mrb[0].mxu0
    %v4443 = vadd.f32 %v4215, %v4442
    %v4444 = vpop.f32.mrb[0].mxu0
    %v4445 = vadd.f32 %v4217, %v4444
    %4446 = vmatprep.mubr.bf16.mxu0 0
    %4447 = vmatmul.mubr.bf16.gmra.mrb[0].mxu0 %v4296
    %v4448 = vpop.f32.mrb[0].mxu0
    %v4449 = vadd.f32 %v4221, %v4448
    %v4450 = vpop.f32.mrb[0].mxu0
    %v4451 = vadd.f32 %v4223, %v4450
    %v4452 = vpop.f32.mrb[0].mxu0
    %v4453 = vadd.f32 %v4225, %v4452
    %v4454 = vpop.f32.mrb[0].mxu0
    %v4455 = vadd.f32 %v4227, %v4454
    %4456 = vdwg.mxu0
    %4457 = vmatprep.subr.bf16.mxu0 %v3959
    %4458 = vmatpush1.bf16.msra.mxu0 %v3958
    %4459 = vmatprep.subr.bf16.mxu0 %v3967
    %4460 = vmatpush1.bf16.msra.mxu0 %v3966
    %4461 = vmatprep.subr.bf16.mxu0 0
    %4462 = vmatpush1.bf16.msra.mxu0 0
    %4463 = vmatprep.subr.bf16.mxu0 0
    %4464 = vmatpush1.bf16.msra.mxu0 0
    %4465 = vmatprep.subr.bf16.mxu0 0
    %4466 = vmatpush1.bf16.msra.mxu0 0
    %4467 = vmatprep.subr.bf16.mxu0 0
    %4468 = vmatpush1.bf16.msra.mxu0 0
    %4469 = vmatprep.subr.bf16.mxu0 0
    %4470 = vmatpush1.bf16.msra.mxu0 0
    %4471 = vmatprep.subr.bf16.mxu0 0
    %4472 = vmatpush1.bf16.msra.mxu0 0
    %4473 = vmatprep.subr.bf16.mxu0 0
    %4474 = vmatpush1.bf16.msra.mxu0 0
    %4475 = vmatprep.subr.bf16.mxu0 0
    %4476 = vmatpush1.bf16.msra.mxu0 0
    %4477 = vmatprep.subr.bf16.mxu0 0
    %4478 = vmatpush1.bf16.msra.mxu0 0
    %4479 = vmatprep.subr.bf16.mxu0 0
    %4480 = vmatpush1.bf16.msra.mxu0 0
    %4481 = vmatprep.subr.bf16.mxu0 0
    %4482 = vmatpush1.bf16.msra.mxu0 0
    %4483 = vmatprep.subr.bf16.mxu0 0
    %4484 = vmatpush1.bf16.msra.mxu0 0
    %4485 = vmatprep.subr.bf16.mxu0 0
    %4486 = vmatpush1.bf16.msra.mxu0 0
    %4487 = vmatprep.subr.bf16.mxu0 0
    %4488 = vmatpush1.bf16.msra.mxu0 0
    %4489 = vmatprep.mubr.bf16.mxu0 0
    %4490 = vmatmul.mubr.bf16.gmra.mrb[0].mxu0 %v4293
    %v4491 = vpop.f32.mrb[0].mxu0
    %v4492 = vadd.f32 %v4264, %v4491
    %v4493 = vpop.f32.mrb[0].mxu0
    %v4494 = vadd.f32 %v4266, %v4493
    %v4495 = vpop.f32.mrb[0].mxu0
    %v4496 = vadd.f32 %v4268, %v4495
    %v4497 = vpop.f32.mrb[0].mxu0
    %v4498 = vadd.f32 %v4270, %v4497
    %4499 = vmatprep.mubr.bf16.mxu0 0
    %4500 = vmatmul.mubr.bf16.gmra.mrb[0].mxu0 %v4296
    %v4501 = vpop.f32.mrb[0].mxu0
    %v4502 = vadd.f32 %v4274, %v4501
    %v4503 = vpop.f32.mrb[0].mxu0
    %v4504 = vadd.f32 %v4276, %v4503
    %v4505 = vpop.f32.mrb[0].mxu0
    %v4506 = vadd.f32 %v4278, %v4505
    %v4507 = vpop.f32.mrb[0].mxu0
    %v4508 = vadd.f32 %v4280, %v4507
    %4509 = vdwg.mxu0
    %v4510 = vld [vmem:[%s1020] sm:$0xf]
    %v4511 = vld [vmem:[%s1020 + $0x4] sm:$0xf]
    %v4512 = vld [vmem:[%s1020 + $0x8] sm:$0xf]
    %v4513 = vld [vmem:[%s1020 + $0xc] sm:$0xf]
    %v4518 = vunpack.c.l.b16 %v4510
    %v4519 = vunpack.c.l.b16 %v4511
    %v4520 = vunpack.c.l.b16 %v4512
    %v4521 = vunpack.c.l.b16 %v4513
    %v4522 = vpack.c.b16 %v4519, %v4518
    %v4523 = vpack.c.b16 %v4521, %v4520
    %4524 = vrot.lane.b32.xlu0 %v3952, 126
    %v4525 = vpop.permute.xlu0 %4524
    %4526 = vrot.lane.b32.xlu0 %v3953, 126
    %v4527 = vpop.permute.xlu0 %4526
    %4528 = vrot.lane.b32.xlu0 %v3954, 126
    %v4529 = vpop.permute.xlu0 %4528
    %4530 = vrot.lane.b32.xlu0 %v3955, 126
    %v4531 = vpop.permute.xlu0 %4530
    %4532 = vrot.lane.b32.xlu0 %v3956, 126
    %v4533 = vpop.permute.xlu0 %4532
    %4534 = vrot.lane.b32.xlu0 %v3957, 126
    %v4535 = vpop.permute.xlu0 %4534
    %4536 = vrot.lane.b32.xlu0 %v3958, 126
    %v4537 = vpop.permute.xlu0 %4536
    %4538 = vrot.lane.b32.xlu0 %v3959, 126
    %v4539 = vpop.permute.xlu0 %4538
    %4540 = vrot.lane.b32.xlu0 %v3960, 126
    %v4541 = vpop.permute.xlu0 %4540
    %4542 = vrot.lane.b32.xlu0 %v3961, 126
    %v4543 = vpop.permute.xlu0 %4542
    %4544 = vrot.lane.b32.xlu0 %v3962, 126
    %v4545 = vpop.permute.xlu0 %4544
    %4546 = vrot.lane.b32.xlu0 %v3963, 126
    %v4547 = vpop.permute.xlu0 %4546
    %4548 = vrot.lane.b32.xlu0 %v3964, 126
    %v4549 = vpop.permute.xlu0 %4548
    %4550 = vrot.lane.b32.xlu0 %v3965, 126
    %v4551 = vpop.permute.xlu0 %4550
    %4552 = vrot.lane.b32.xlu0 %v3966, 126
    %v4553 = vpop.permute.xlu0 %4552
    %4554 = vrot.lane.b32.xlu0 %v3967, 126
    %v4555 = vpop.permute.xlu0 %4554
    %v4556 = vsel %vm1067, %v4525, %v4527
    %v4557 = vsel %vm1067, %v4527, %v4529
    %v4558 = vsel %vm1067, %v4529, %v4531
    %v4559 = vsel %vm1067, %v4531, %v4533
    %v4560 = vsel %vm1067, %v4533, %v4535
    %v4561 = vsel %vm1067, %v4535, %v4537
    %v4562 = vsel %vm1067, %v4537, %v4539
    %v4563 = vsel %vm1067, %v4541, %v4543
    %v4564 = vsel %vm1067, %v4543, %v4545
    %v4565 = vsel %vm1067, %v4545, %v4547
    %v4566 = vsel %vm1067, %v4547, %v4549
    %v4567 = vsel %vm1067, %v4549, %v4551
    %v4568 = vsel %vm1067, %v4551, %v4553
    %v4569 = vsel %vm1067, %v4553, %v4555
    %v4587 = vsel %vm573, %v4522, 0
    %v4590 = vsel %vm573, %v4523, 0
    %4592 = vmatprep.subr.bf16.mxu0 %v4557
    %4593 = vmatpush1.bf16.msra.mxu0 %v4556
    %4594 = vmatprep.subr.bf16.mxu0 %v4564
    %4595 = vmatpush1.bf16.msra.mxu0 %v4563
    %4596 = vmatprep.subr.bf16.mxu0 0
    %4597 = vmatpush1.bf16.msra.mxu0 0
    %4598 = vmatprep.subr.bf16.mxu0 0
    %4599 = vmatpush1.bf16.msra.mxu0 0
    %4600 = vmatprep.subr.bf16.mxu0 0
    %4601 = vmatpush1.bf16.msra.mxu0 0
    %4602 = vmatprep.subr.bf16.mxu0 0
    %4603 = vmatpush1.bf16.msra.mxu0 0
    %4604 = vmatprep.subr.bf16.mxu0 0
    %4605 = vmatpush1.bf16.msra.mxu0 0
    %4606 = vmatprep.subr.bf16.mxu0 0
    %4607 = vmatpush1.bf16.msra.mxu0 0
    %4608 = vmatprep.subr.bf16.mxu0 0
    %4609 = vmatpush1.bf16.msra.mxu0 0
    %4610 = vmatprep.subr.bf16.mxu0 0
    %4611 = vmatpush1.bf16.msra.mxu0 0
    %4612 = vmatprep.subr.bf16.mxu0 0
    %4613 = vmatpush1.bf16.msra.mxu0 0
    %4614 = vmatprep.subr.bf16.mxu0 0
    %4615 = vmatpush1.bf16.msra.mxu0 0
    %4616 = vmatprep.subr.bf16.mxu0 0
    %4617 = vmatpush1.bf16.msra.mxu0 0
    %4618 = vmatprep.subr.bf16.mxu0 0
    %4619 = vmatpush1.bf16.msra.mxu0 0
    %4620 = vmatprep.subr.bf16.mxu0 0
    %4621 = vmatpush1.bf16.msra.mxu0 0
    %4622 = vmatprep.subr.bf16.mxu0 0
    %4623 = vmatpush1.bf16.msra.mxu0 0
    %4624 = vmatprep.mubr.bf16.mxu0 0
    %4625 = vmatmul.mubr.bf16.gmra.mrb[0].mxu0 %v4587
    %v4626 = vpop.f32.mrb[0].mxu0
    %v4627 = vadd.f32 0.0, %v4626
    %v4628 = vpop.f32.mrb[0].mxu0
    %v4629 = vadd.f32 0.0, %v4628
    %v4630 = vpop.f32.mrb[0].mxu0
    %v4631 = vadd.f32 0.0, %v4630
    %v4632 = vpop.f32.mrb[0].mxu0
    %v4633 = vadd.f32 0.0, %v4632
    %4634 = vmatprep.mubr.bf16.mxu0 0
    %4635 = vmatmul.mubr.bf16.gmra.mrb[0].mxu0 %v4590
    %v4636 = vpop.f32.mrb[0].mxu0
    %v4637 = vadd.f32 0.0, %v4636
    %v4638 = vpop.f32.mrb[0].mxu0
    %v4639 = vadd.f32 0.0, %v4638
    %v4640 = vpop.f32.mrb[0].mxu0
    %v4641 = vadd.f32 0.0, %v4640
    %v4642 = vpop.f32.mrb[0].mxu0
    %v4643 = vadd.f32 0.0, %v4642
    %4644 = vdwg.mxu0
    %4645 = vmatprep.subr.bf16.mxu0 %v4559
    %4646 = vmatpush1.bf16.msra.mxu0 %v4558
    %4647 = vmatprep.subr.bf16.mxu0 %v4566
    %4648 = vmatpush1.bf16.msra.mxu0 %v4565
    %4649 = vmatprep.subr.bf16.mxu0 0
    %4650 = vmatpush1.bf16.msra.mxu0 0
    %4651 = vmatprep.subr.bf16.mxu0 0
    %4652 = vmatpush1.bf16.msra.mxu0 0
    %4653 = vmatprep.subr.bf16.mxu0 0
    %4654 = vmatpush1.bf16.msra.mxu0 0
    %4655 = vmatprep.subr.bf16.mxu0 0
    %4656 = vmatpush1.bf16.msra.mxu0 0
    %4657 = vmatprep.subr.bf16.mxu0 0
    %4658 = vmatpush1.bf16.msra.mxu0 0
    %4659 = vmatprep.subr.bf16.mxu0 0
    %4660 = vmatpush1.bf16.msra.mxu0 0
    %4661 = vmatprep.subr.bf16.mxu0 0
    %4662 = vmatpush1.bf16.msra.mxu0 0
    %4663 = vmatprep.subr.bf16.mxu0 0
    %4664 = vmatpush1.bf16.msra.mxu0 0
    %4665 = vmatprep.subr.bf16.mxu0 0
    %4666 = vmatpush1.bf16.msra.mxu0 0
    %4667 = vmatprep.subr.bf16.mxu0 0
    %4668 = vmatpush1.bf16.msra.mxu0 0
    %4669 = vmatprep.subr.bf16.mxu0 0
    %4670 = vmatpush1.bf16.msra.mxu0 0
    %4671 = vmatprep.subr.bf16.mxu0 0
    %4672 = vmatpush1.bf16.msra.mxu0 0
    %4673 = vmatprep.subr.bf16.mxu0 0
    %4674 = vmatpush1.bf16.msra.mxu0 0
    %4675 = vmatprep.subr.bf16.mxu0 0
    %4676 = vmatpush1.bf16.msra.mxu0 0
    %4677 = vmatprep.mubr.bf16.mxu0 0
    %4678 = vmatmul.mubr.bf16.gmra.mrb[0].mxu0 %v4587
    %v4679 = vpop.f32.mrb[0].mxu0
    %v4680 = vadd.f32 0.0, %v4679
    %v4681 = vpop.f32.mrb[0].mxu0
    %v4682 = vadd.f32 0.0, %v4681
    %v4683 = vpop.f32.mrb[0].mxu0
    %v4684 = vadd.f32 0.0, %v4683
    %v4685 = vpop.f32.mrb[0].mxu0
    %v4686 = vadd.f32 0.0, %v4685
    %4687 = vmatprep.mubr.bf16.mxu0 0
    %4688 = vmatmul.mubr.bf16.gmra.mrb[0].mxu0 %v4590
    %v4689 = vpop.f32.mrb[0].mxu0
    %v4690 = vadd.f32 0.0, %v4689
    %v4691 = vpop.f32.mrb[0].mxu0
    %v4692 = vadd.f32 0.0, %v4691
    %v4693 = vpop.f32.mrb[0].mxu0
    %v4694 = vadd.f32 0.0, %v4693
    %v4695 = vpop.f32.mrb[0].mxu0
    %v4696 = vadd.f32 0.0, %v4695
    %4697 = vdwg.mxu0
    %4698 = vmatprep.subr.bf16.mxu0 %v4561
    %4699 = vmatpush1.bf16.msra.mxu0 %v4560
    %4700 = vmatprep.subr.bf16.mxu0 %v4568
    %4701 = vmatpush1.bf16.msra.mxu0 %v4567
    %4702 = vmatprep.subr.bf16.mxu0 0
    %4703 = vmatpush1.bf16.msra.mxu0 0
    %4704 = vmatprep.subr.bf16.mxu0 0
    %4705 = vmatpush1.bf16.msra.mxu0 0
    %4706 = vmatprep.subr.bf16.mxu0 0
    %4707 = vmatpush1.bf16.msra.mxu0 0
    %4708 = vmatprep.subr.bf16.mxu0 0
    %4709 = vmatpush1.bf16.msra.mxu0 0
    %4710 = vmatprep.subr.bf16.mxu0 0
    %4711 = vmatpush1.bf16.msra.mxu0 0
    %4712 = vmatprep.subr.bf16.mxu0 0
    %4713 = vmatpush1.bf16.msra.mxu0 0
    %4714 = vmatprep.subr.bf16.mxu0 0
    %4715 = vmatpush1.bf16.msra.mxu0 0
    %4716 = vmatprep.subr.bf16.mxu0 0
    %4717 = vmatpush1.bf16.msra.mxu0 0
    %4718 = vmatprep.subr.bf16.mxu0 0
    %4719 = vmatpush1.bf16.msra.mxu0 0
    %4720 = vmatprep.subr.bf16.mxu0 0
    %4721 = vmatpush1.bf16.msra.mxu0 0
    %4722 = vmatprep.subr.bf16.mxu0 0
    %4723 = vmatpush1.bf16.msra.mxu0 0
    %4724 = vmatprep.subr.bf16.mxu0 0
    %4725 = vmatpush1.bf16.msra.mxu0 0
    %4726 = vmatprep.subr.bf16.mxu0 0
    %4727 = vmatpush1.bf16.msra.mxu0 0
    %4728 = vmatprep.subr.bf16.mxu0 0
    %4729 = vmatpush1.bf16.msra.mxu0 0
    %4730 = vmatprep.mubr.bf16.mxu0 0
    %4731 = vmatmul.mubr.bf16.gmra.mrb[0].mxu0 %v4587
    %v4732 = vpop.f32.mrb[0].mxu0
    %v4733 = vadd.f32 0.0, %v4732
    %v4734 = vpop.f32.mrb[0].mxu0
    %v4735 = vadd.f32 0.0, %v4734
    %v4736 = vpop.f32.mrb[0].mxu0
    %v4737 = vadd.f32 0.0, %v4736
    %v4738 = vpop.f32.mrb[0].mxu0
    %v4739 = vadd.f32 0.0, %v4738
    %4740 = vmatprep.mubr.bf16.mxu0 0
    %4741 = vmatmul.mubr.bf16.gmra.mrb[0].mxu0 %v4590
    %v4742 = vpop.f32.mrb[0].mxu0
    %v4743 = vadd.f32 0.0, %v4742
    %v4744 = vpop.f32.mrb[0].mxu0
    %v4745 = vadd.f32 0.0, %v4744
    %v4746 = vpop.f32.mrb[0].mxu0
    %v4747 = vadd.f32 0.0, %v4746
    %v4748 = vpop.f32.mrb[0].mxu0
    %v4749 = vadd.f32 0.0, %v4748
    %4750 = vdwg.mxu0
    %4751 = vmatprep.subr.bf16.mxu0 %v4539
    %4752 = vmatpush1.bf16.msra.mxu0 %v4562
    %4753 = vmatprep.subr.bf16.mxu0 %v4555
    %4754 = vmatpush1.bf16.msra.mxu0 %v4569
    %4755 = vmatprep.subr.bf16.mxu0 0
    %4756 = vmatpush1.bf16.msra.mxu0 0
    %4757 = vmatprep.subr.bf16.mxu0 0
    %4758 = vmatpush1.bf16.msra.mxu0 0
    %4759 = vmatprep.subr.bf16.mxu0 0
    %4760 = vmatpush1.bf16.msra.mxu0 0
    %4761 = vmatprep.subr.bf16.mxu0 0
    %4762 = vmatpush1.bf16.msra.mxu0 0
    %4763 = vmatprep.subr.bf16.mxu0 0
    %4764 = vmatpush1.bf16.msra.mxu0 0
    %4765 = vmatprep.subr.bf16.mxu0 0
    %4766 = vmatpush1.bf16.msra.mxu0 0
    %4767 = vmatprep.subr.bf16.mxu0 0
    %4768 = vmatpush1.bf16.msra.mxu0 0
    %4769 = vmatprep.subr.bf16.mxu0 0
    %4770 = vmatpush1.bf16.msra.mxu0 0
    %4771 = vmatprep.subr.bf16.mxu0 0
    %4772 = vmatpush1.bf16.msra.mxu0 0
    %4773 = vmatprep.subr.bf16.mxu0 0
    %4774 = vmatpush1.bf16.msra.mxu0 0
    %4775 = vmatprep.subr.bf16.mxu0 0
    %4776 = vmatpush1.bf16.msra.mxu0 0
    %4777 = vmatprep.subr.bf16.mxu0 0
    %4778 = vmatpush1.bf16.msra.mxu0 0
    %4779 = vmatprep.subr.bf16.mxu0 0
    %4780 = vmatpush1.bf16.msra.mxu0 0
    %4781 = vmatprep.subr.bf16.mxu0 0
    %4782 = vmatpush1.bf16.msra.mxu0 0
    %4783 = vmatprep.mubr.bf16.mxu0 0
    %4784 = vmatmul.mubr.bf16.gmra.mrb[0].mxu0 %v4587
    %v4785 = vpop.f32.mrb[0].mxu0
    %v4786 = vadd.f32 0.0, %v4785
    %v4787 = vpop.f32.mrb[0].mxu0
    %v4788 = vadd.f32 0.0, %v4787
    %v4789 = vpop.f32.mrb[0].mxu0
    %v4790 = vadd.f32 0.0, %v4789
    %v4791 = vpop.f32.mrb[0].mxu0
    %v4792 = vadd.f32 0.0, %v4791
    %4793 = vmatprep.mubr.bf16.mxu0 0
    %4794 = vmatmul.mubr.bf16.gmra.mrb[0].mxu0 %v4590
    %v4795 = vpop.f32.mrb[0].mxu0
    %v4796 = vadd.f32 0.0, %v4795
    %v4797 = vpop.f32.mrb[0].mxu0
    %v4798 = vadd.f32 0.0, %v4797
    %v4799 = vpop.f32.mrb[0].mxu0
    %v4800 = vadd.f32 0.0, %v4799
    %v4801 = vpop.f32.mrb[0].mxu0
    %v4802 = vadd.f32 0.0, %v4801
    %4803 = vdwg.mxu0
    %v4804 = vadd.f32 %v4333, %v4627
    %v4805 = vadd.f32 %v4335, %v4629
    %v4806 = vadd.f32 %v4386, %v4680
    %v4807 = vadd.f32 %v4388, %v4682
    %v4808 = vadd.f32 %v4439, %v4733
    %v4809 = vadd.f32 %v4441, %v4735
    %v4810 = vadd.f32 %v4492, %v4786
    %v4811 = vadd.f32 %v4494, %v4788
    %v4812 = vadd.f32 %v4337, %v4631
    %v4813 = vadd.f32 %v4339, %v4633
    %v4814 = vadd.f32 %v4390, %v4684
    %v4815 = vadd.f32 %v4392, %v4686
    %v4816 = vadd.f32 %v4443, %v4737
    %v4817 = vadd.f32 %v4445, %v4739
    %v4818 = vadd.f32 %v4496, %v4790
    %v4819 = vadd.f32 %v4498, %v4792
    %v4820 = vadd.f32 %v4343, %v4637
    %v4821 = vadd.f32 %v4345, %v4639
    %v4822 = vadd.f32 %v4396, %v4690
    %v4823 = vadd.f32 %v4398, %v4692
    %v4824 = vadd.f32 %v4449, %v4743
    %v4825 = vadd.f32 %v4451, %v4745
    %v4826 = vadd.f32 %v4502, %v4796
    %v4827 = vadd.f32 %v4504, %v4798
    %v4828 = vadd.f32 %v4347, %v4641
    %v4829 = vadd.f32 %v4349, %v4643
    %v4830 = vadd.f32 %v4400, %v4694
    %v4831 = vadd.f32 %v4402, %v4696
    %v4832 = vadd.f32 %v4453, %v4747
    %v4833 = vadd.f32 %v4455, %v4749
    %v4834 = vadd.f32 %v4506, %v4800
    %v4835 = vadd.f32 %v4508, %v4802
    %v4836 = vld [vmem:[%s1348] sm:$0xf]
    %v4837 = vld [vmem:[%s1348 + $0x4] sm:$0xf]
    %v4838 = vld [vmem:[%s1348 + $0x8] sm:$0xf]
    %v4839 = vld [vmem:[%s1348 + $0xc] sm:$0xf]
    %v4844 = vunpack.c.l.b16 %v4836
    %v4845 = vunpack.c.l.b16 %v4837
    %v4846 = vunpack.c.l.b16 %v4838
    %v4847 = vunpack.c.l.b16 %v4839
    %v4848 = vpack.c.b16 %v4845, %v4844
    %v4849 = vpack.c.b16 %v4847, %v4846
    %4850 = vrot.lane.b32.xlu0 %v3952, 96
    %v4851 = vpop.permute.xlu0 %4850
    %4852 = vrot.lane.b32.xlu0 %v3953, 96
    %v4853 = vpop.permute.xlu0 %4852
    %4854 = vrot.lane.b32.xlu0 %v3954, 96
    %v4855 = vpop.permute.xlu0 %4854
    %4856 = vrot.lane.b32.xlu0 %v3955, 96
    %v4857 = vpop.permute.xlu0 %4856
    %4858 = vrot.lane.b32.xlu0 %v3956, 96
    %v4859 = vpop.permute.xlu0 %4858
    %4860 = vrot.lane.b32.xlu0 %v3957, 96
    %v4861 = vpop.permute.xlu0 %4860
    %4862 = vrot.lane.b32.xlu0 %v3958, 96
    %v4863 = vpop.permute.xlu0 %4862
    %4864 = vrot.lane.b32.xlu0 %v3959, 96
    %v4865 = vpop.permute.xlu0 %4864
    %4866 = vrot.lane.b32.xlu0 %v3960, 96
    %v4867 = vpop.permute.xlu0 %4866
    %4868 = vrot.lane.b32.xlu0 %v3961, 96
    %v4869 = vpop.permute.xlu0 %4868
    %4870 = vrot.lane.b32.xlu0 %v3962, 96
    %v4871 = vpop.permute.xlu0 %4870
    %4872 = vrot.lane.b32.xlu0 %v3963, 96
    %v4873 = vpop.permute.xlu0 %4872
    %4874 = vrot.lane.b32.xlu0 %v3964, 96
    %v4875 = vpop.permute.xlu0 %4874
    %4876 = vrot.lane.b32.xlu0 %v3965, 96
    %v4877 = vpop.permute.xlu0 %4876
    %4878 = vrot.lane.b32.xlu0 %v3966, 96
    %v4879 = vpop.permute.xlu0 %4878
    %4880 = vrot.lane.b32.xlu0 %v3967, 96
    %v4881 = vpop.permute.xlu0 %4880
    %v4882 = vsel %vm1395, %v4851, %v4853
    %v4883 = vsel %vm1395, %v4853, %v4855
    %v4884 = vsel %vm1395, %v4855, %v4857
    %v4885 = vsel %vm1395, %v4857, %v4859
    %v4886 = vsel %vm1395, %v4859, %v4861
    %v4887 = vsel %vm1395, %v4861, %v4863
    %v4888 = vsel %vm1395, %v4863, %v4865
    %v4889 = vsel %vm1395, %v4867, %v4869
    %v4890 = vsel %vm1395, %v4869, %v4871
    %v4891 = vsel %vm1395, %v4871, %v4873
    %v4892 = vsel %vm1395, %v4873, %v4875
    %v4893 = vsel %vm1395, %v4875, %v4877
    %v4894 = vsel %vm1395, %v4877, %v4879
    %v4895 = vsel %vm1395, %v4879, %v4881
    %v4913 = vsel %vm573, %v4848, 0
    %v4916 = vsel %vm573, %v4849, 0
    %4918 = vmatprep.subr.bf16.mxu0 %v4883
    %4919 = vmatpush1.bf16.msra.mxu0 %v4882
    %4920 = vmatprep.subr.bf16.mxu0 %v4890
    %4921 = vmatpush1.bf16.msra.mxu0 %v4889
    %4922 = vmatprep.subr.bf16.mxu0 0
    %4923 = vmatpush1.bf16.msra.mxu0 0
    %4924 = vmatprep.subr.bf16.mxu0 0
    %4925 = vmatpush1.bf16.msra.mxu0 0
    %4926 = vmatprep.subr.bf16.mxu0 0
    %4927 = vmatpush1.bf16.msra.mxu0 0
    %4928 = vmatprep.subr.bf16.mxu0 0
    %4929 = vmatpush1.bf16.msra.mxu0 0
    %4930 = vmatprep.subr.bf16.mxu0 0
    %4931 = vmatpush1.bf16.msra.mxu0 0
    %4932 = vmatprep.subr.bf16.mxu0 0
    %4933 = vmatpush1.bf16.msra.mxu0 0
    %4934 = vmatprep.subr.bf16.mxu0 0
    %4935 = vmatpush1.bf16.msra.mxu0 0
    %4936 = vmatprep.subr.bf16.mxu0 0
    %4937 = vmatpush1.bf16.msra.mxu0 0
    %4938 = vmatprep.subr.bf16.mxu0 0
    %4939 = vmatpush1.bf16.msra.mxu0 0
    %4940 = vmatprep.subr.bf16.mxu0 0
    %4941 = vmatpush1.bf16.msra.mxu0 0
    %4942 = vmatprep.subr.bf16.mxu0 0
    %4943 = vmatpush1.bf16.msra.mxu0 0
    %4944 = vmatprep.subr.bf16.mxu0 0
    %4945 = vmatpush1.bf16.msra.mxu0 0
    %4946 = vmatprep.subr.bf16.mxu0 0
    %4947 = vmatpush1.bf16.msra.mxu0 0
    %4948 = vmatprep.subr.bf16.mxu0 0
    %4949 = vmatpush1.bf16.msra.mxu0 0
    %4950 = vmatprep.mubr.bf16.mxu0 0
    %4951 = vmatmul.mubr.bf16.gmra.mrb[0].mxu0 %v4913
    %v4952 = vpop.f32.mrb[0].mxu0
    %v4953 = vadd.f32 0.0, %v4952
    %v4954 = vpop.f32.mrb[0].mxu0
    %v4955 = vadd.f32 0.0, %v4954
    %v4956 = vpop.f32.mrb[0].mxu0
    %v4957 = vadd.f32 0.0, %v4956
    %v4958 = vpop.f32.mrb[0].mxu0
    %v4959 = vadd.f32 0.0, %v4958
    %4960 = vmatprep.mubr.bf16.mxu0 0
    %4961 = vmatmul.mubr.bf16.gmra.mrb[0].mxu0 %v4916
    %v4962 = vpop.f32.mrb[0].mxu0
    %v4963 = vadd.f32 0.0, %v4962
    %v4964 = vpop.f32.mrb[0].mxu0
    %v4965 = vadd.f32 0.0, %v4964
    %v4966 = vpop.f32.mrb[0].mxu0
    %v4967 = vadd.f32 0.0, %v4966
    %v4968 = vpop.f32.mrb[0].mxu0
    %v4969 = vadd.f32 0.0, %v4968
    %4970 = vdwg.mxu0
    %4971 = vmatprep.subr.bf16.mxu0 %v4885
    %4972 = vmatpush1.bf16.msra.mxu0 %v4884
    %4973 = vmatprep.subr.bf16.mxu0 %v4892
    %4974 = vmatpush1.bf16.msra.mxu0 %v4891
    %4975 = vmatprep.subr.bf16.mxu0 0
    %4976 = vmatpush1.bf16.msra.mxu0 0
    %4977 = vmatprep.subr.bf16.mxu0 0
    %4978 = vmatpush1.bf16.msra.mxu0 0
    %4979 = vmatprep.subr.bf16.mxu0 0
    %4980 = vmatpush1.bf16.msra.mxu0 0
    %4981 = vmatprep.subr.bf16.mxu0 0
    %4982 = vmatpush1.bf16.msra.mxu0 0
    %4983 = vmatprep.subr.bf16.mxu0 0
    %4984 = vmatpush1.bf16.msra.mxu0 0
    %4985 = vmatprep.subr.bf16.mxu0 0
    %4986 = vmatpush1.bf16.msra.mxu0 0
    %4987 = vmatprep.subr.bf16.mxu0 0
    %4988 = vmatpush1.bf16.msra.mxu0 0
    %4989 = vmatprep.subr.bf16.mxu0 0
    %4990 = vmatpush1.bf16.msra.mxu0 0
    %4991 = vmatprep.subr.bf16.mxu0 0
    %4992 = vmatpush1.bf16.msra.mxu0 0
    %4993 = vmatprep.subr.bf16.mxu0 0
    %4994 = vmatpush1.bf16.msra.mxu0 0
    %4995 = vmatprep.subr.bf16.mxu0 0
    %4996 = vmatpush1.bf16.msra.mxu0 0
    %4997 = vmatprep.subr.bf16.mxu0 0
    %4998 = vmatpush1.bf16.msra.mxu0 0
    %4999 = vmatprep.subr.bf16.mxu0 0
    %5000 = vmatpush1.bf16.msra.mxu0 0
    %5001 = vmatprep.subr.bf16.mxu0 0
    %5002 = vmatpush1.bf16.msra.mxu0 0
    %5003 = vmatprep.mubr.bf16.mxu0 0
    %5004 = vmatmul.mubr.bf16.gmra.mrb[0].mxu0 %v4913
    %v5005 = vpop.f32.mrb[0].mxu0
    %v5006 = vadd.f32 0.0, %v5005
    %v5007 = vpop.f32.mrb[0].mxu0
    %v5008 = vadd.f32 0.0, %v5007
    %v5009 = vpop.f32.mrb[0].mxu0
    %v5010 = vadd.f32 0.0, %v5009
    %v5011 = vpop.f32.mrb[0].mxu0
    %v5012 = vadd.f32 0.0, %v5011
    %5013 = vmatprep.mubr.bf16.mxu0 0
    %5014 = vmatmul.mubr.bf16.gmra.mrb[0].mxu0 %v4916
    %v5015 = vpop.f32.mrb[0].mxu0
    %v5016 = vadd.f32 0.0, %v5015
    %v5017 = vpop.f32.mrb[0].mxu0
    %v5018 = vadd.f32 0.0, %v5017
    %v5019 = vpop.f32.mrb[0].mxu0
    %v5020 = vadd.f32 0.0, %v5019
    %v5021 = vpop.f32.mrb[0].mxu0
    %v5022 = vadd.f32 0.0, %v5021
    %5023 = vdwg.mxu0
    %5024 = vmatprep.subr.bf16.mxu0 %v4887
    %5025 = vmatpush1.bf16.msra.mxu0 %v4886
    %5026 = vmatprep.subr.bf16.mxu0 %v4894
    %5027 = vmatpush1.bf16.msra.mxu0 %v4893
    %5028 = vmatprep.subr.bf16.mxu0 0
    %5029 = vmatpush1.bf16.msra.mxu0 0
    %5030 = vmatprep.subr.bf16.mxu0 0
    %5031 = vmatpush1.bf16.msra.mxu0 0
    %5032 = vmatprep.subr.bf16.mxu0 0
    %5033 = vmatpush1.bf16.msra.mxu0 0
    %5034 = vmatprep.subr.bf16.mxu0 0
    %5035 = vmatpush1.bf16.msra.mxu0 0
    %5036 = vmatprep.subr.bf16.mxu0 0
    %5037 = vmatpush1.bf16.msra.mxu0 0
    %5038 = vmatprep.subr.bf16.mxu0 0
    %5039 = vmatpush1.bf16.msra.mxu0 0
    %5040 = vmatprep.subr.bf16.mxu0 0
    %5041 = vmatpush1.bf16.msra.mxu0 0
    %5042 = vmatprep.subr.bf16.mxu0 0
    %5043 = vmatpush1.bf16.msra.mxu0 0
    %5044 = vmatprep.subr.bf16.mxu0 0
    %5045 = vmatpush1.bf16.msra.mxu0 0
    %5046 = vmatprep.subr.bf16.mxu0 0
    %5047 = vmatpush1.bf16.msra.mxu0 0
    %5048 = vmatprep.subr.bf16.mxu0 0
    %5049 = vmatpush1.bf16.msra.mxu0 0
    %5050 = vmatprep.subr.bf16.mxu0 0
    %5051 = vmatpush1.bf16.msra.mxu0 0
    %5052 = vmatprep.subr.bf16.mxu0 0
    %5053 = vmatpush1.bf16.msra.mxu0 0
    %5054 = vmatprep.subr.bf16.mxu0 0
    %5055 = vmatpush1.bf16.msra.mxu0 0
    %5056 = vmatprep.mubr.bf16.mxu0 0
    %5057 = vmatmul.mubr.bf16.gmra.mrb[0].mxu0 %v4913
    %v5058 = vpop.f32.mrb[0].mxu0
    %v5059 = vadd.f32 0.0, %v5058
    %v5060 = vpop.f32.mrb[0].mxu0
    %v5061 = vadd.f32 0.0, %v5060
    %v5062 = vpop.f32.mrb[0].mxu0
    %v5063 = vadd.f32 0.0, %v5062
    %v5064 = vpop.f32.mrb[0].mxu0
    %v5065 = vadd.f32 0.0, %v5064
    %5066 = vmatprep.mubr.bf16.mxu0 0
    %5067 = vmatmul.mubr.bf16.gmra.mrb[0].mxu0 %v4916
    %v5068 = vpop.f32.mrb[0].mxu0
    %v5069 = vadd.f32 0.0, %v5068
    %v5070 = vpop.f32.mrb[0].mxu0
    %v5071 = vadd.f32 0.0, %v5070
    %v5072 = vpop.f32.mrb[0].mxu0
    %v5073 = vadd.f32 0.0, %v5072
    %v5074 = vpop.f32.mrb[0].mxu0
    %v5075 = vadd.f32 0.0, %v5074
    %5076 = vdwg.mxu0
    %5077 = vmatprep.subr.bf16.mxu0 %v4865
    %5078 = vmatpush1.bf16.msra.mxu0 %v4888
    %5079 = vmatprep.subr.bf16.mxu0 %v4881
    %5080 = vmatpush1.bf16.msra.mxu0 %v4895
    %5081 = vmatprep.subr.bf16.mxu0 0
    %5082 = vmatpush1.bf16.msra.mxu0 0
    %5083 = vmatprep.subr.bf16.mxu0 0
    %5084 = vmatpush1.bf16.msra.mxu0 0
    %5085 = vmatprep.subr.bf16.mxu0 0
    %5086 = vmatpush1.bf16.msra.mxu0 0
    %5087 = vmatprep.subr.bf16.mxu0 0
    %5088 = vmatpush1.bf16.msra.mxu0 0
    %5089 = vmatprep.subr.bf16.mxu0 0
    %5090 = vmatpush1.bf16.msra.mxu0 0
    %5091 = vmatprep.subr.bf16.mxu0 0
    %5092 = vmatpush1.bf16.msra.mxu0 0
    %5093 = vmatprep.subr.bf16.mxu0 0
    %5094 = vmatpush1.bf16.msra.mxu0 0
    %5095 = vmatprep.subr.bf16.mxu0 0
    %5096 = vmatpush1.bf16.msra.mxu0 0
    %5097 = vmatprep.subr.bf16.mxu0 0
    %5098 = vmatpush1.bf16.msra.mxu0 0
    %5099 = vmatprep.subr.bf16.mxu0 0
    %5100 = vmatpush1.bf16.msra.mxu0 0
    %5101 = vmatprep.subr.bf16.mxu0 0
    %5102 = vmatpush1.bf16.msra.mxu0 0
    %5103 = vmatprep.subr.bf16.mxu0 0
    %5104 = vmatpush1.bf16.msra.mxu0 0
    %5105 = vmatprep.subr.bf16.mxu0 0
    %5106 = vmatpush1.bf16.msra.mxu0 0
    %5107 = vmatprep.subr.bf16.mxu0 0
    %5108 = vmatpush1.bf16.msra.mxu0 0
    %5109 = vmatprep.mubr.bf16.mxu0 0
    %5110 = vmatmul.mubr.bf16.gmra.mrb[0].mxu0 %v4913
    %v5111 = vpop.f32.mrb[0].mxu0
    %v5112 = vadd.f32 0.0, %v5111
    %v5113 = vpop.f32.mrb[0].mxu0
    %v5114 = vadd.f32 0.0, %v5113
    %v5115 = vpop.f32.mrb[0].mxu0
    %v5116 = vadd.f32 0.0, %v5115
    %v5117 = vpop.f32.mrb[0].mxu0
    %v5118 = vadd.f32 0.0, %v5117
    %5119 = vmatprep.mubr.bf16.mxu0 0
    %5120 = vmatmul.mubr.bf16.gmra.mrb[0].mxu0 %v4916
    %v5121 = vpop.f32.mrb[0].mxu0
    %v5122 = vadd.f32 0.0, %v5121
    %v5123 = vpop.f32.mrb[0].mxu0
    %v5124 = vadd.f32 0.0, %v5123
    %v5125 = vpop.f32.mrb[0].mxu0
    %v5126 = vadd.f32 0.0, %v5125
    %v5127 = vpop.f32.mrb[0].mxu0
    %v5128 = vadd.f32 0.0, %v5127
    %5129 = vdwg.mxu0
    %v5130 = vadd.f32 %v4804, %v4953
    %v5131 = vadd.f32 %v4805, %v4955
    %v5132 = vadd.f32 %v4806, %v5006
    %v5133 = vadd.f32 %v4807, %v5008
    %v5134 = vadd.f32 %v4808, %v5059
    %v5135 = vadd.f32 %v4809, %v5061
    %v5136 = vadd.f32 %v4810, %v5112
    %v5137 = vadd.f32 %v4811, %v5114
    %v5138 = vadd.f32 %v4812, %v4957
    %v5139 = vadd.f32 %v4813, %v4959
    %v5140 = vadd.f32 %v4814, %v5010
    %v5141 = vadd.f32 %v4815, %v5012
    %v5142 = vadd.f32 %v4816, %v5063
    %v5143 = vadd.f32 %v4817, %v5065
    %v5144 = vadd.f32 %v4818, %v5116
    %v5145 = vadd.f32 %v4819, %v5118
    %v5146 = vadd.f32 %v4820, %v4963
    %v5147 = vadd.f32 %v4821, %v4965
    %v5148 = vadd.f32 %v4822, %v5016
    %v5149 = vadd.f32 %v4823, %v5018
    %v5150 = vadd.f32 %v4824, %v5069
    %v5151 = vadd.f32 %v4825, %v5071
    %v5152 = vadd.f32 %v4826, %v5122
    %v5153 = vadd.f32 %v4827, %v5124
    %v5154 = vadd.f32 %v4828, %v4967
    %v5155 = vadd.f32 %v4829, %v4969
    %v5156 = vadd.f32 %v4830, %v5020
    %v5157 = vadd.f32 %v4831, %v5022
    %v5158 = vadd.f32 %v4832, %v5073
    %v5159 = vadd.f32 %v4833, %v5075
    %v5160 = vadd.f32 %v4834, %v5126
    %v5161 = vadd.f32 %v4835, %v5128
    %v5162 = vld [vmem:[%s1676] sm:$0xf]
    %v5163 = vld [vmem:[%s1676 + $0x4] sm:$0xf]
    %v5164 = vld [vmem:[%s1676 + $0x8] sm:$0xf]
    %v5165 = vld [vmem:[%s1676 + $0xc] sm:$0xf]
    %v5170 = vunpack.c.l.b16 %v5162
    %v5171 = vunpack.c.l.b16 %v5163
    %v5172 = vunpack.c.l.b16 %v5164
    %v5173 = vunpack.c.l.b16 %v5165
    %v5174 = vpack.c.b16 %v5171, %v5170
    %v5175 = vpack.c.b16 %v5173, %v5172
    %5176 = vrot.lane.b32.xlu0 %v3952, 95
    %v5177 = vpop.permute.xlu0 %5176
    %5178 = vrot.lane.b32.xlu0 %v3953, 95
    %v5179 = vpop.permute.xlu0 %5178
    %5180 = vrot.lane.b32.xlu0 %v3954, 95
    %v5181 = vpop.permute.xlu0 %5180
    %5182 = vrot.lane.b32.xlu0 %v3955, 95
    %v5183 = vpop.permute.xlu0 %5182
    %5184 = vrot.lane.b32.xlu0 %v3956, 95
    %v5185 = vpop.permute.xlu0 %5184
    %5186 = vrot.lane.b32.xlu0 %v3957, 95
    %v5187 = vpop.permute.xlu0 %5186
    %5188 = vrot.lane.b32.xlu0 %v3958, 95
    %v5189 = vpop.permute.xlu0 %5188
    %5190 = vrot.lane.b32.xlu0 %v3959, 95
    %v5191 = vpop.permute.xlu0 %5190
    %5192 = vrot.lane.b32.xlu0 %v3960, 95
    %v5193 = vpop.permute.xlu0 %5192
    %5194 = vrot.lane.b32.xlu0 %v3961, 95
    %v5195 = vpop.permute.xlu0 %5194
    %5196 = vrot.lane.b32.xlu0 %v3962, 95
    %v5197 = vpop.permute.xlu0 %5196
    %5198 = vrot.lane.b32.xlu0 %v3963, 95
    %v5199 = vpop.permute.xlu0 %5198
    %5200 = vrot.lane.b32.xlu0 %v3964, 95
    %v5201 = vpop.permute.xlu0 %5200
    %5202 = vrot.lane.b32.xlu0 %v3965, 95
    %v5203 = vpop.permute.xlu0 %5202
    %5204 = vrot.lane.b32.xlu0 %v3966, 95
    %v5205 = vpop.permute.xlu0 %5204
    %5206 = vrot.lane.b32.xlu0 %v3967, 95
    %v5207 = vpop.permute.xlu0 %5206
    %v5208 = vsel %vm1723, %v5177, %v5179
    %v5209 = vsel %vm1723, %v5179, %v5181
    %v5210 = vsel %vm1723, %v5181, %v5183
    %v5211 = vsel %vm1723, %v5183, %v5185
    %v5212 = vsel %vm1723, %v5185, %v5187
    %v5213 = vsel %vm1723, %v5187, %v5189
    %v5214 = vsel %vm1723, %v5189, %v5191
    %v5215 = vsel %vm1723, %v5193, %v5195
    %v5216 = vsel %vm1723, %v5195, %v5197
    %v5217 = vsel %vm1723, %v5197, %v5199
    %v5218 = vsel %vm1723, %v5199, %v5201
    %v5219 = vsel %vm1723, %v5201, %v5203
    %v5220 = vsel %vm1723, %v5203, %v5205
    %v5221 = vsel %vm1723, %v5205, %v5207
    %v5239 = vsel %vm573, %v5174, 0
    %v5242 = vsel %vm573, %v5175, 0
    %5244 = vmatprep.subr.bf16.mxu0 %v5209
    %5245 = vmatpush1.bf16.msra.mxu0 %v5208
    %5246 = vmatprep.subr.bf16.mxu0 %v5216
    %5247 = vmatpush1.bf16.msra.mxu0 %v5215
    %5248 = vmatprep.subr.bf16.mxu0 0
    %5249 = vmatpush1.bf16.msra.mxu0 0
    %5250 = vmatprep.subr.bf16.mxu0 0
    %5251 = vmatpush1.bf16.msra.mxu0 0
    %5252 = vmatprep.subr.bf16.mxu0 0
    %5253 = vmatpush1.bf16.msra.mxu0 0
    %5254 = vmatprep.subr.bf16.mxu0 0
    %5255 = vmatpush1.bf16.msra.mxu0 0
    %5256 = vmatprep.subr.bf16.mxu0 0
    %5257 = vmatpush1.bf16.msra.mxu0 0
    %5258 = vmatprep.subr.bf16.mxu0 0
    %5259 = vmatpush1.bf16.msra.mxu0 0
    %5260 = vmatprep.subr.bf16.mxu0 0
    %5261 = vmatpush1.bf16.msra.mxu0 0
    %5262 = vmatprep.subr.bf16.mxu0 0
    %5263 = vmatpush1.bf16.msra.mxu0 0
    %5264 = vmatprep.subr.bf16.mxu0 0
    %5265 = vmatpush1.bf16.msra.mxu0 0
    %5266 = vmatprep.subr.bf16.mxu0 0
    %5267 = vmatpush1.bf16.msra.mxu0 0
    %5268 = vmatprep.subr.bf16.mxu0 0
    %5269 = vmatpush1.bf16.msra.mxu0 0
    %5270 = vmatprep.subr.bf16.mxu0 0
    %5271 = vmatpush1.bf16.msra.mxu0 0
    %5272 = vmatprep.subr.bf16.mxu0 0
    %5273 = vmatpush1.bf16.msra.mxu0 0
    %5274 = vmatprep.subr.bf16.mxu0 0
    %5275 = vmatpush1.bf16.msra.mxu0 0
    %5276 = vmatprep.mubr.bf16.mxu0 0
    %5277 = vmatmul.mubr.bf16.gmra.mrb[0].mxu0 %v5239
    %v5278 = vpop.f32.mrb[0].mxu0
    %v5279 = vadd.f32 0.0, %v5278
    %v5280 = vpop.f32.mrb[0].mxu0
    %v5281 = vadd.f32 0.0, %v5280
    %v5282 = vpop.f32.mrb[0].mxu0
    %v5283 = vadd.f32 0.0, %v5282
    %v5284 = vpop.f32.mrb[0].mxu0
    %v5285 = vadd.f32 0.0, %v5284
    %5286 = vmatprep.mubr.bf16.mxu0 0
    %5287 = vmatmul.mubr.bf16.gmra.mrb[0].mxu0 %v5242
    %v5288 = vpop.f32.mrb[0].mxu0
    %v5289 = vadd.f32 0.0, %v5288
    %v5290 = vpop.f32.mrb[0].mxu0
    %v5291 = vadd.f32 0.0, %v5290
    %v5292 = vpop.f32.mrb[0].mxu0
    %v5293 = vadd.f32 0.0, %v5292
    %v5294 = vpop.f32.mrb[0].mxu0
    %v5295 = vadd.f32 0.0, %v5294
    %5296 = vdwg.mxu0
    %5297 = vmatprep.subr.bf16.mxu0 %v5211
    %5298 = vmatpush1.bf16.msra.mxu0 %v5210
    %5299 = vmatprep.subr.bf16.mxu0 %v5218
    %5300 = vmatpush1.bf16.msra.mxu0 %v5217
    %5301 = vmatprep.subr.bf16.mxu0 0
    %5302 = vmatpush1.bf16.msra.mxu0 0
    %5303 = vmatprep.subr.bf16.mxu0 0
    %5304 = vmatpush1.bf16.msra.mxu0 0
    %5305 = vmatprep.subr.bf16.mxu0 0
    %5306 = vmatpush1.bf16.msra.mxu0 0
    %5307 = vmatprep.subr.bf16.mxu0 0
    %5308 = vmatpush1.bf16.msra.mxu0 0
    %5309 = vmatprep.subr.bf16.mxu0 0
    %5310 = vmatpush1.bf16.msra.mxu0 0
    %5311 = vmatprep.subr.bf16.mxu0 0
    %5312 = vmatpush1.bf16.msra.mxu0 0
    %5313 = vmatprep.subr.bf16.mxu0 0
    %5314 = vmatpush1.bf16.msra.mxu0 0
    %5315 = vmatprep.subr.bf16.mxu0 0
    %5316 = vmatpush1.bf16.msra.mxu0 0
    %5317 = vmatprep.subr.bf16.mxu0 0
    %5318 = vmatpush1.bf16.msra.mxu0 0
    %5319 = vmatprep.subr.bf16.mxu0 0
    %5320 = vmatpush1.bf16.msra.mxu0 0
    %5321 = vmatprep.subr.bf16.mxu0 0
    %5322 = vmatpush1.bf16.msra.mxu0 0
    %5323 = vmatprep.subr.bf16.mxu0 0
    %5324 = vmatpush1.bf16.msra.mxu0 0
    %5325 = vmatprep.subr.bf16.mxu0 0
    %5326 = vmatpush1.bf16.msra.mxu0 0
    %5327 = vmatprep.subr.bf16.mxu0 0
    %5328 = vmatpush1.bf16.msra.mxu0 0
    %5329 = vmatprep.mubr.bf16.mxu0 0
    %5330 = vmatmul.mubr.bf16.gmra.mrb[0].mxu0 %v5239
    %v5331 = vpop.f32.mrb[0].mxu0
    %v5332 = vadd.f32 0.0, %v5331
    %v5333 = vpop.f32.mrb[0].mxu0
    %v5334 = vadd.f32 0.0, %v5333
    %v5335 = vpop.f32.mrb[0].mxu0
    %v5336 = vadd.f32 0.0, %v5335
    %v5337 = vpop.f32.mrb[0].mxu0
    %v5338 = vadd.f32 0.0, %v5337
    %5339 = vmatprep.mubr.bf16.mxu0 0
    %5340 = vmatmul.mubr.bf16.gmra.mrb[0].mxu0 %v5242
    %v5341 = vpop.f32.mrb[0].mxu0
    %v5342 = vadd.f32 0.0, %v5341
    %v5343 = vpop.f32.mrb[0].mxu0
    %v5344 = vadd.f32 0.0, %v5343
    %v5345 = vpop.f32.mrb[0].mxu0
    %v5346 = vadd.f32 0.0, %v5345
    %v5347 = vpop.f32.mrb[0].mxu0
    %v5348 = vadd.f32 0.0, %v5347
    %5349 = vdwg.mxu0
    %5350 = vmatprep.subr.bf16.mxu0 %v5213
    %5351 = vmatpush1.bf16.msra.mxu0 %v5212
    %5352 = vmatprep.subr.bf16.mxu0 %v5220
    %5353 = vmatpush1.bf16.msra.mxu0 %v5219
    %5354 = vmatprep.subr.bf16.mxu0 0
    %5355 = vmatpush1.bf16.msra.mxu0 0
    %5356 = vmatprep.subr.bf16.mxu0 0
    %5357 = vmatpush1.bf16.msra.mxu0 0
    %5358 = vmatprep.subr.bf16.mxu0 0
    %5359 = vmatpush1.bf16.msra.mxu0 0
    %5360 = vmatprep.subr.bf16.mxu0 0
    %5361 = vmatpush1.bf16.msra.mxu0 0
    %5362 = vmatprep.subr.bf16.mxu0 0
    %5363 = vmatpush1.bf16.msra.mxu0 0
    %5364 = vmatprep.subr.bf16.mxu0 0
    %5365 = vmatpush1.bf16.msra.mxu0 0
    %5366 = vmatprep.subr.bf16.mxu0 0
    %5367 = vmatpush1.bf16.msra.mxu0 0
    %5368 = vmatprep.subr.bf16.mxu0 0
    %5369 = vmatpush1.bf16.msra.mxu0 0
    %5370 = vmatprep.subr.bf16.mxu0 0
    %5371 = vmatpush1.bf16.msra.mxu0 0
    %5372 = vmatprep.subr.bf16.mxu0 0
    %5373 = vmatpush1.bf16.msra.mxu0 0
    %5374 = vmatprep.subr.bf16.mxu0 0
    %5375 = vmatpush1.bf16.msra.mxu0 0
    %5376 = vmatprep.subr.bf16.mxu0 0
    %5377 = vmatpush1.bf16.msra.mxu0 0
    %5378 = vmatprep.subr.bf16.mxu0 0
    %5379 = vmatpush1.bf16.msra.mxu0 0
    %5380 = vmatprep.subr.bf16.mxu0 0
    %5381 = vmatpush1.bf16.msra.mxu0 0
    %5382 = vmatprep.mubr.bf16.mxu0 0
    %5383 = vmatmul.mubr.bf16.gmra.mrb[0].mxu0 %v5239
    %v5384 = vpop.f32.mrb[0].mxu0
    %v5385 = vadd.f32 0.0, %v5384
    %v5386 = vpop.f32.mrb[0].mxu0
    %v5387 = vadd.f32 0.0, %v5386
    %v5388 = vpop.f32.mrb[0].mxu0
    %v5389 = vadd.f32 0.0, %v5388
    %v5390 = vpop.f32.mrb[0].mxu0
    %v5391 = vadd.f32 0.0, %v5390
    %5392 = vmatprep.mubr.bf16.mxu0 0
    %5393 = vmatmul.mubr.bf16.gmra.mrb[0].mxu0 %v5242
    %v5394 = vpop.f32.mrb[0].mxu0
    %v5395 = vadd.f32 0.0, %v5394
    %v5396 = vpop.f32.mrb[0].mxu0
    %v5397 = vadd.f32 0.0, %v5396
    %v5398 = vpop.f32.mrb[0].mxu0
    %v5399 = vadd.f32 0.0, %v5398
    %v5400 = vpop.f32.mrb[0].mxu0
    %v5401 = vadd.f32 0.0, %v5400
    %5402 = vdwg.mxu0
    %5403 = vmatprep.subr.bf16.mxu0 %v5191
    %5404 = vmatpush1.bf16.msra.mxu0 %v5214
    %5405 = vmatprep.subr.bf16.mxu0 %v5207
    %5406 = vmatpush1.bf16.msra.mxu0 %v5221
    %5407 = vmatprep.subr.bf16.mxu0 0
    %5408 = vmatpush1.bf16.msra.mxu0 0
    %5409 = vmatprep.subr.bf16.mxu0 0
    %5410 = vmatpush1.bf16.msra.mxu0 0
    %5411 = vmatprep.subr.bf16.mxu0 0
    %5412 = vmatpush1.bf16.msra.mxu0 0
    %5413 = vmatprep.subr.bf16.mxu0 0
    %5414 = vmatpush1.bf16.msra.mxu0 0
    %5415 = vmatprep.subr.bf16.mxu0 0
    %5416 = vmatpush1.bf16.msra.mxu0 0
    %5417 = vmatprep.subr.bf16.mxu0 0
    %5418 = vmatpush1.bf16.msra.mxu0 0
    %5419 = vmatprep.subr.bf16.mxu0 0
    %5420 = vmatpush1.bf16.msra.mxu0 0
    %5421 = vmatprep.subr.bf16.mxu0 0
    %5422 = vmatpush1.bf16.msra.mxu0 0
    %5423 = vmatprep.subr.bf16.mxu0 0
    %5424 = vmatpush1.bf16.msra.mxu0 0
    %5425 = vmatprep.subr.bf16.mxu0 0
    %5426 = vmatpush1.bf16.msra.mxu0 0
    %5427 = vmatprep.subr.bf16.mxu0 0
    %5428 = vmatpush1.bf16.msra.mxu0 0
    %5429 = vmatprep.subr.bf16.mxu0 0
    %5430 = vmatpush1.bf16.msra.mxu0 0
    %5431 = vmatprep.subr.bf16.mxu0 0
    %5432 = vmatpush1.bf16.msra.mxu0 0
    %5433 = vmatprep.subr.bf16.mxu0 0
    %5434 = vmatpush1.bf16.msra.mxu0 0
    %5435 = vmatprep.mubr.bf16.mxu0 0
    %5436 = vmatmul.mubr.bf16.gmra.mrb[0].mxu0 %v5239
    %v5437 = vpop.f32.mrb[0].mxu0
    %v5438 = vadd.f32 0.0, %v5437
    %v5439 = vpop.f32.mrb[0].mxu0
    %v5440 = vadd.f32 0.0, %v5439
    %v5441 = vpop.f32.mrb[0].mxu0
    %v5442 = vadd.f32 0.0, %v5441
    %v5443 = vpop.f32.mrb[0].mxu0
    %v5444 = vadd.f32 0.0, %v5443
    %5445 = vmatprep.mubr.bf16.mxu0 0
    %5446 = vmatmul.mubr.bf16.gmra.mrb[0].mxu0 %v5242
    %v5447 = vpop.f32.mrb[0].mxu0
    %v5448 = vadd.f32 0.0, %v5447
    %v5449 = vpop.f32.mrb[0].mxu0
    %v5450 = vadd.f32 0.0, %v5449
    %v5451 = vpop.f32.mrb[0].mxu0
    %v5452 = vadd.f32 0.0, %v5451
    %v5453 = vpop.f32.mrb[0].mxu0
    %v5454 = vadd.f32 0.0, %v5453
    %5455 = vdwg.mxu0
    %v5456 = vadd.f32 %v5130, %v5279
    %v5457 = vadd.f32 %v5131, %v5281
    %v5458 = vadd.f32 %v5132, %v5332
    %v5459 = vadd.f32 %v5133, %v5334
    %v5460 = vadd.f32 %v5134, %v5385
    %v5461 = vadd.f32 %v5135, %v5387
    %v5462 = vadd.f32 %v5136, %v5438
    %v5463 = vadd.f32 %v5137, %v5440
    %v5464 = vadd.f32 %v5138, %v5283
    %v5465 = vadd.f32 %v5139, %v5285
    %v5466 = vadd.f32 %v5140, %v5336
    %v5467 = vadd.f32 %v5141, %v5338
    %v5468 = vadd.f32 %v5142, %v5389
    %v5469 = vadd.f32 %v5143, %v5391
    %v5470 = vadd.f32 %v5144, %v5442
    %v5471 = vadd.f32 %v5145, %v5444
    %v5472 = vadd.f32 %v5146, %v5289
    %v5473 = vadd.f32 %v5147, %v5291
    %v5474 = vadd.f32 %v5148, %v5342
    %v5475 = vadd.f32 %v5149, %v5344
    %v5476 = vadd.f32 %v5150, %v5395
    %v5477 = vadd.f32 %v5151, %v5397
    %v5478 = vadd.f32 %v5152, %v5448
    %v5479 = vadd.f32 %v5153, %v5450
    %v5480 = vadd.f32 %v5154, %v5293
    %v5481 = vadd.f32 %v5155, %v5295
    %v5482 = vadd.f32 %v5156, %v5346
    %v5483 = vadd.f32 %v5157, %v5348
    %v5484 = vadd.f32 %v5158, %v5399
    %v5485 = vadd.f32 %v5159, %v5401
    %v5486 = vadd.f32 %v5160, %v5452
    %v5487 = vadd.f32 %v5161, %v5454
    %v5488 = vld [vmem:[%s2004] sm:$0xf]
    %v5489 = vld [vmem:[%s2004 + $0x4] sm:$0xf]
    %v5490 = vld [vmem:[%s2004 + $0x8] sm:$0xf]
    %v5491 = vld [vmem:[%s2004 + $0xc] sm:$0xf]
    %v5496 = vunpack.c.l.b16 %v5488
    %v5497 = vunpack.c.l.b16 %v5489
    %v5498 = vunpack.c.l.b16 %v5490
    %v5499 = vunpack.c.l.b16 %v5491
    %v5500 = vpack.c.b16 %v5497, %v5496
    %v5501 = vpack.c.b16 %v5499, %v5498
    %5502 = vrot.lane.b32.xlu0 %v3952, 94
    %v5503 = vpop.permute.xlu0 %5502
    %5504 = vrot.lane.b32.xlu0 %v3953, 94
    %v5505 = vpop.permute.xlu0 %5504
    %5506 = vrot.lane.b32.xlu0 %v3954, 94
    %v5507 = vpop.permute.xlu0 %5506
    %5508 = vrot.lane.b32.xlu0 %v3955, 94
    %v5509 = vpop.permute.xlu0 %5508
    %5510 = vrot.lane.b32.xlu0 %v3956, 94
    %v5511 = vpop.permute.xlu0 %5510
    %5512 = vrot.lane.b32.xlu0 %v3957, 94
    %v5513 = vpop.permute.xlu0 %5512
    %5514 = vrot.lane.b32.xlu0 %v3958, 94
    %v5515 = vpop.permute.xlu0 %5514
    %5516 = vrot.lane.b32.xlu0 %v3959, 94
    %v5517 = vpop.permute.xlu0 %5516
    %5518 = vrot.lane.b32.xlu0 %v3960, 94
    %v5519 = vpop.permute.xlu0 %5518
    %5520 = vrot.lane.b32.xlu0 %v3961, 94
    %v5521 = vpop.permute.xlu0 %5520
    %5522 = vrot.lane.b32.xlu0 %v3962, 94
    %v5523 = vpop.permute.xlu0 %5522
    %5524 = vrot.lane.b32.xlu0 %v3963, 94
    %v5525 = vpop.permute.xlu0 %5524
    %5526 = vrot.lane.b32.xlu0 %v3964, 94
    %v5527 = vpop.permute.xlu0 %5526
    %5528 = vrot.lane.b32.xlu0 %v3965, 94
    %v5529 = vpop.permute.xlu0 %5528
    %5530 = vrot.lane.b32.xlu0 %v3966, 94
    %v5531 = vpop.permute.xlu0 %5530
    %5532 = vrot.lane.b32.xlu0 %v3967, 94
    %v5533 = vpop.permute.xlu0 %5532
    %v5534 = vsel %vm2051, %v5503, %v5505
    %v5535 = vsel %vm2051, %v5505, %v5507
    %v5536 = vsel %vm2051, %v5507, %v5509
    %v5537 = vsel %vm2051, %v5509, %v5511
    %v5538 = vsel %vm2051, %v5511, %v5513
    %v5539 = vsel %vm2051, %v5513, %v5515
    %v5540 = vsel %vm2051, %v5515, %v5517
    %v5541 = vsel %vm2051, %v5519, %v5521
    %v5542 = vsel %vm2051, %v5521, %v5523
    %v5543 = vsel %vm2051, %v5523, %v5525
    %v5544 = vsel %vm2051, %v5525, %v5527
    %v5545 = vsel %vm2051, %v5527, %v5529
    %v5546 = vsel %vm2051, %v5529, %v5531
    %v5547 = vsel %vm2051, %v5531, %v5533
    %v5565 = vsel %vm573, %v5500, 0
    %v5568 = vsel %vm573, %v5501, 0
    %5570 = vmatprep.subr.bf16.mxu0 %v5535
    %5571 = vmatpush1.bf16.msra.mxu0 %v5534
    %5572 = vmatprep.subr.bf16.mxu0 %v5542
    %5573 = vmatpush1.bf16.msra.mxu0 %v5541
    %5574 = vmatprep.subr.bf16.mxu0 0
    %5575 = vmatpush1.bf16.msra.mxu0 0
    %5576 = vmatprep.subr.bf16.mxu0 0
    %5577 = vmatpush1.bf16.msra.mxu0 0
    %5578 = vmatprep.subr.bf16.mxu0 0
    %5579 = vmatpush1.bf16.msra.mxu0 0
    %5580 = vmatprep.subr.bf16.mxu0 0
    %5581 = vmatpush1.bf16.msra.mxu0 0
    %5582 = vmatprep.subr.bf16.mxu0 0
    %5583 = vmatpush1.bf16.msra.mxu0 0
    %5584 = vmatprep.subr.bf16.mxu0 0
    %5585 = vmatpush1.bf16.msra.mxu0 0
    %5586 = vmatprep.subr.bf16.mxu0 0
    %5587 = vmatpush1.bf16.msra.mxu0 0
    %5588 = vmatprep.subr.bf16.mxu0 0
    %5589 = vmatpush1.bf16.msra.mxu0 0
    %5590 = vmatprep.subr.bf16.mxu0 0
    %5591 = vmatpush1.bf16.msra.mxu0 0
    %5592 = vmatprep.subr.bf16.mxu0 0
    %5593 = vmatpush1.bf16.msra.mxu0 0
    %5594 = vmatprep.subr.bf16.mxu0 0
    %5595 = vmatpush1.bf16.msra.mxu0 0
    %5596 = vmatprep.subr.bf16.mxu0 0
    %5597 = vmatpush1.bf16.msra.mxu0 0
    %5598 = vmatprep.subr.bf16.mxu0 0
    %5599 = vmatpush1.bf16.msra.mxu0 0
    %5600 = vmatprep.subr.bf16.mxu0 0
    %5601 = vmatpush1.bf16.msra.mxu0 0
    %5602 = vmatprep.mubr.bf16.mxu0 0
    %5603 = vmatmul.mubr.bf16.gmra.mrb[0].mxu0 %v5565
    %v5604 = vpop.f32.mrb[0].mxu0
    %v5605 = vadd.f32 0.0, %v5604
    %v5606 = vpop.f32.mrb[0].mxu0
    %v5607 = vadd.f32 0.0, %v5606
    %v5608 = vpop.f32.mrb[0].mxu0
    %v5609 = vadd.f32 0.0, %v5608
    %v5610 = vpop.f32.mrb[0].mxu0
    %v5611 = vadd.f32 0.0, %v5610
    %5612 = vmatprep.mubr.bf16.mxu0 0
    %5613 = vmatmul.mubr.bf16.gmra.mrb[0].mxu0 %v5568
    %v5614 = vpop.f32.mrb[0].mxu0
    %v5615 = vadd.f32 0.0, %v5614
    %v5616 = vpop.f32.mrb[0].mxu0
    %v5617 = vadd.f32 0.0, %v5616
    %v5618 = vpop.f32.mrb[0].mxu0
    %v5619 = vadd.f32 0.0, %v5618
    %v5620 = vpop.f32.mrb[0].mxu0
    %v5621 = vadd.f32 0.0, %v5620
    %5622 = vdwg.mxu0
    %5623 = vmatprep.subr.bf16.mxu0 %v5537
    %5624 = vmatpush1.bf16.msra.mxu0 %v5536
    %5625 = vmatprep.subr.bf16.mxu0 %v5544
    %5626 = vmatpush1.bf16.msra.mxu0 %v5543
    %5627 = vmatprep.subr.bf16.mxu0 0
    %5628 = vmatpush1.bf16.msra.mxu0 0
    %5629 = vmatprep.subr.bf16.mxu0 0
    %5630 = vmatpush1.bf16.msra.mxu0 0
    %5631 = vmatprep.subr.bf16.mxu0 0
    %5632 = vmatpush1.bf16.msra.mxu0 0
    %5633 = vmatprep.subr.bf16.mxu0 0
    %5634 = vmatpush1.bf16.msra.mxu0 0
    %5635 = vmatprep.subr.bf16.mxu0 0
    %5636 = vmatpush1.bf16.msra.mxu0 0
    %5637 = vmatprep.subr.bf16.mxu0 0
    %5638 = vmatpush1.bf16.msra.mxu0 0
    %5639 = vmatprep.subr.bf16.mxu0 0
    %5640 = vmatpush1.bf16.msra.mxu0 0
    %5641 = vmatprep.subr.bf16.mxu0 0
    %5642 = vmatpush1.bf16.msra.mxu0 0
    %5643 = vmatprep.subr.bf16.mxu0 0
    %5644 = vmatpush1.bf16.msra.mxu0 0
    %5645 = vmatprep.subr.bf16.mxu0 0
    %5646 = vmatpush1.bf16.msra.mxu0 0
    %5647 = vmatprep.subr.bf16.mxu0 0
    %5648 = vmatpush1.bf16.msra.mxu0 0
    %5649 = vmatprep.subr.bf16.mxu0 0
    %5650 = vmatpush1.bf16.msra.mxu0 0
    %5651 = vmatprep.subr.bf16.mxu0 0
    %5652 = vmatpush1.bf16.msra.mxu0 0
    %5653 = vmatprep.subr.bf16.mxu0 0
    %5654 = vmatpush1.bf16.msra.mxu0 0
    %5655 = vmatprep.mubr.bf16.mxu0 0
    %5656 = vmatmul.mubr.bf16.gmra.mrb[0].mxu0 %v5565
    %v5657 = vpop.f32.mrb[0].mxu0
    %v5658 = vadd.f32 0.0, %v5657
    %v5659 = vpop.f32.mrb[0].mxu0
    %v5660 = vadd.f32 0.0, %v5659
    %v5661 = vpop.f32.mrb[0].mxu0
    %v5662 = vadd.f32 0.0, %v5661
    %v5663 = vpop.f32.mrb[0].mxu0
    %v5664 = vadd.f32 0.0, %v5663
    %5665 = vmatprep.mubr.bf16.mxu0 0
    %5666 = vmatmul.mubr.bf16.gmra.mrb[0].mxu0 %v5568
    %v5667 = vpop.f32.mrb[0].mxu0
    %v5668 = vadd.f32 0.0, %v5667
    %v5669 = vpop.f32.mrb[0].mxu0
    %v5670 = vadd.f32 0.0, %v5669
    %v5671 = vpop.f32.mrb[0].mxu0
    %v5672 = vadd.f32 0.0, %v5671
    %v5673 = vpop.f32.mrb[0].mxu0
    %v5674 = vadd.f32 0.0, %v5673
    %5675 = vdwg.mxu0
    %5676 = vmatprep.subr.bf16.mxu0 %v5539
    %5677 = vmatpush1.bf16.msra.mxu0 %v5538
    %5678 = vmatprep.subr.bf16.mxu0 %v5546
    %5679 = vmatpush1.bf16.msra.mxu0 %v5545
    %5680 = vmatprep.subr.bf16.mxu0 0
    %5681 = vmatpush1.bf16.msra.mxu0 0
    %5682 = vmatprep.subr.bf16.mxu0 0
    %5683 = vmatpush1.bf16.msra.mxu0 0
    %5684 = vmatprep.subr.bf16.mxu0 0
    %5685 = vmatpush1.bf16.msra.mxu0 0
    %5686 = vmatprep.subr.bf16.mxu0 0
    %5687 = vmatpush1.bf16.msra.mxu0 0
    %5688 = vmatprep.subr.bf16.mxu0 0
    %5689 = vmatpush1.bf16.msra.mxu0 0
    %5690 = vmatprep.subr.bf16.mxu0 0
    %5691 = vmatpush1.bf16.msra.mxu0 0
    %5692 = vmatprep.subr.bf16.mxu0 0
    %5693 = vmatpush1.bf16.msra.mxu0 0
    %5694 = vmatprep.subr.bf16.mxu0 0
    %5695 = vmatpush1.bf16.msra.mxu0 0
    %5696 = vmatprep.subr.bf16.mxu0 0
    %5697 = vmatpush1.bf16.msra.mxu0 0
    %5698 = vmatprep.subr.bf16.mxu0 0
    %5699 = vmatpush1.bf16.msra.mxu0 0
    %5700 = vmatprep.subr.bf16.mxu0 0
    %5701 = vmatpush1.bf16.msra.mxu0 0
    %5702 = vmatprep.subr.bf16.mxu0 0
    %5703 = vmatpush1.bf16.msra.mxu0 0
    %5704 = vmatprep.subr.bf16.mxu0 0
    %5705 = vmatpush1.bf16.msra.mxu0 0
    %5706 = vmatprep.subr.bf16.mxu0 0
    %5707 = vmatpush1.bf16.msra.mxu0 0
    %5708 = vmatprep.mubr.bf16.mxu0 0
    %5709 = vmatmul.mubr.bf16.gmra.mrb[0].mxu0 %v5565
    %v5710 = vpop.f32.mrb[0].mxu0
    %v5711 = vadd.f32 0.0, %v5710
    %v5712 = vpop.f32.mrb[0].mxu0
    %v5713 = vadd.f32 0.0, %v5712
    %v5714 = vpop.f32.mrb[0].mxu0
    %v5715 = vadd.f32 0.0, %v5714
    %v5716 = vpop.f32.mrb[0].mxu0
    %v5717 = vadd.f32 0.0, %v5716
    %5718 = vmatprep.mubr.bf16.mxu0 0
    %5719 = vmatmul.mubr.bf16.gmra.mrb[0].mxu0 %v5568
    %v5720 = vpop.f32.mrb[0].mxu0
    %v5721 = vadd.f32 0.0, %v5720
    %v5722 = vpop.f32.mrb[0].mxu0
    %v5723 = vadd.f32 0.0, %v5722
    %v5724 = vpop.f32.mrb[0].mxu0
    %v5725 = vadd.f32 0.0, %v5724
    %v5726 = vpop.f32.mrb[0].mxu0
    %v5727 = vadd.f32 0.0, %v5726
    %5728 = vdwg.mxu0
    %5729 = vmatprep.subr.bf16.mxu0 %v5517
    %5730 = vmatpush1.bf16.msra.mxu0 %v5540
    %5731 = vmatprep.subr.bf16.mxu0 %v5533
    %5732 = vmatpush1.bf16.msra.mxu0 %v5547
    %5733 = vmatprep.subr.bf16.mxu0 0
    %5734 = vmatpush1.bf16.msra.mxu0 0
    %5735 = vmatprep.subr.bf16.mxu0 0
    %5736 = vmatpush1.bf16.msra.mxu0 0
    %5737 = vmatprep.subr.bf16.mxu0 0
    %5738 = vmatpush1.bf16.msra.mxu0 0
    %5739 = vmatprep.subr.bf16.mxu0 0
    %5740 = vmatpush1.bf16.msra.mxu0 0
    %5741 = vmatprep.subr.bf16.mxu0 0
    %5742 = vmatpush1.bf16.msra.mxu0 0
    %5743 = vmatprep.subr.bf16.mxu0 0
    %5744 = vmatpush1.bf16.msra.mxu0 0
    %5745 = vmatprep.subr.bf16.mxu0 0
    %5746 = vmatpush1.bf16.msra.mxu0 0
    %5747 = vmatprep.subr.bf16.mxu0 0
    %5748 = vmatpush1.bf16.msra.mxu0 0
    %5749 = vmatprep.subr.bf16.mxu0 0
    %5750 = vmatpush1.bf16.msra.mxu0 0
    %5751 = vmatprep.subr.bf16.mxu0 0
    %5752 = vmatpush1.bf16.msra.mxu0 0
    %5753 = vmatprep.subr.bf16.mxu0 0
    %5754 = vmatpush1.bf16.msra.mxu0 0
    %5755 = vmatprep.subr.bf16.mxu0 0
    %5756 = vmatpush1.bf16.msra.mxu0 0
    %5757 = vmatprep.subr.bf16.mxu0 0
    %5758 = vmatpush1.bf16.msra.mxu0 0
    %5759 = vmatprep.subr.bf16.mxu0 0
    %5760 = vmatpush1.bf16.msra.mxu0 0
    %5761 = vmatprep.mubr.bf16.mxu0 0
    %5762 = vmatmul.mubr.bf16.gmra.mrb[0].mxu0 %v5565
    %v5763 = vpop.f32.mrb[0].mxu0
    %v5764 = vadd.f32 0.0, %v5763
    %v5765 = vpop.f32.mrb[0].mxu0
    %v5766 = vadd.f32 0.0, %v5765
    %v5767 = vpop.f32.mrb[0].mxu0
    %v5768 = vadd.f32 0.0, %v5767
    %v5769 = vpop.f32.mrb[0].mxu0
    %v5770 = vadd.f32 0.0, %v5769
    %5771 = vmatprep.mubr.bf16.mxu0 0
    %5772 = vmatmul.mubr.bf16.gmra.mrb[0].mxu0 %v5568
    %v5773 = vpop.f32.mrb[0].mxu0
    %v5774 = vadd.f32 0.0, %v5773
    %v5775 = vpop.f32.mrb[0].mxu0
    %v5776 = vadd.f32 0.0, %v5775
    %v5777 = vpop.f32.mrb[0].mxu0
    %v5778 = vadd.f32 0.0, %v5777
    %v5779 = vpop.f32.mrb[0].mxu0
    %v5780 = vadd.f32 0.0, %v5779
    %5781 = vdwg.mxu0
    %v5782 = vadd.f32 %v5456, %v5605
    %v5783 = vadd.f32 %v5457, %v5607
    %v5784 = vadd.f32 %v5458, %v5658
    %v5785 = vadd.f32 %v5459, %v5660
    %v5786 = vadd.f32 %v5460, %v5711
    %v5787 = vadd.f32 %v5461, %v5713
    %v5788 = vadd.f32 %v5462, %v5764
    %v5789 = vadd.f32 %v5463, %v5766
    %v5790 = vadd.f32 %v5464, %v5609
    %v5791 = vadd.f32 %v5465, %v5611
    %v5792 = vadd.f32 %v5466, %v5662
    %v5793 = vadd.f32 %v5467, %v5664
    %v5794 = vadd.f32 %v5468, %v5715
    %v5795 = vadd.f32 %v5469, %v5717
    %v5796 = vadd.f32 %v5470, %v5768
    %v5797 = vadd.f32 %v5471, %v5770
    %v5798 = vadd.f32 %v5472, %v5615
    %v5799 = vadd.f32 %v5473, %v5617
    %v5800 = vadd.f32 %v5474, %v5668
    %v5801 = vadd.f32 %v5475, %v5670
    %v5802 = vadd.f32 %v5476, %v5721
    %v5803 = vadd.f32 %v5477, %v5723
    %v5804 = vadd.f32 %v5478, %v5774
    %v5805 = vadd.f32 %v5479, %v5776
    %v5806 = vadd.f32 %v5480, %v5619
    %v5807 = vadd.f32 %v5481, %v5621
    %v5808 = vadd.f32 %v5482, %v5672
    %v5809 = vadd.f32 %v5483, %v5674
    %v5810 = vadd.f32 %v5484, %v5725
    %v5811 = vadd.f32 %v5485, %v5727
    %v5812 = vadd.f32 %v5486, %v5778
    %v5813 = vadd.f32 %v5487, %v5780
    %v5814 = vld [vmem:[%s2332] sm:$0xf]
    %v5815 = vld [vmem:[%s2332 + $0x4] sm:$0xf]
    %v5816 = vld [vmem:[%s2332 + $0x8] sm:$0xf]
    %v5817 = vld [vmem:[%s2332 + $0xc] sm:$0xf]
    %v5822 = vunpack.c.l.b16 %v5814
    %v5823 = vunpack.c.l.b16 %v5815
    %v5824 = vunpack.c.l.b16 %v5816
    %v5825 = vunpack.c.l.b16 %v5817
    %v5826 = vpack.c.b16 %v5823, %v5822
    %v5827 = vpack.c.b16 %v5825, %v5824
    %5828 = vrot.lane.b32.xlu0 %v3952, 64
    %v5829 = vpop.permute.xlu0 %5828
    %5830 = vrot.lane.b32.xlu0 %v3953, 64
    %v5831 = vpop.permute.xlu0 %5830
    %5832 = vrot.lane.b32.xlu0 %v3954, 64
    %v5833 = vpop.permute.xlu0 %5832
    %5834 = vrot.lane.b32.xlu0 %v3955, 64
    %v5835 = vpop.permute.xlu0 %5834
    %5836 = vrot.lane.b32.xlu0 %v3956, 64
    %v5837 = vpop.permute.xlu0 %5836
    %5838 = vrot.lane.b32.xlu0 %v3957, 64
    %v5839 = vpop.permute.xlu0 %5838
    %5840 = vrot.lane.b32.xlu0 %v3958, 64
    %v5841 = vpop.permute.xlu0 %5840
    %5842 = vrot.lane.b32.xlu0 %v3959, 64
    %v5843 = vpop.permute.xlu0 %5842
    %5844 = vrot.lane.b32.xlu0 %v3960, 64
    %v5845 = vpop.permute.xlu0 %5844
    %5846 = vrot.lane.b32.xlu0 %v3961, 64
    %v5847 = vpop.permute.xlu0 %5846
    %5848 = vrot.lane.b32.xlu0 %v3962, 64
    %v5849 = vpop.permute.xlu0 %5848
    %5850 = vrot.lane.b32.xlu0 %v3963, 64
    %v5851 = vpop.permute.xlu0 %5850
    %5852 = vrot.lane.b32.xlu0 %v3964, 64
    %v5853 = vpop.permute.xlu0 %5852
    %5854 = vrot.lane.b32.xlu0 %v3965, 64
    %v5855 = vpop.permute.xlu0 %5854
    %5856 = vrot.lane.b32.xlu0 %v3966, 64
    %v5857 = vpop.permute.xlu0 %5856
    %5858 = vrot.lane.b32.xlu0 %v3967, 64
    %v5859 = vpop.permute.xlu0 %5858
    %v5860 = vsel %vm2379, %v5829, %v5831
    %v5861 = vsel %vm2379, %v5831, %v5833
    %v5862 = vsel %vm2379, %v5833, %v5835
    %v5863 = vsel %vm2379, %v5835, %v5837
    %v5864 = vsel %vm2379, %v5837, %v5839
    %v5865 = vsel %vm2379, %v5839, %v5841
    %v5866 = vsel %vm2379, %v5841, %v5843
    %v5867 = vsel %vm2379, %v5845, %v5847
    %v5868 = vsel %vm2379, %v5847, %v5849
    %v5869 = vsel %vm2379, %v5849, %v5851
    %v5870 = vsel %vm2379, %v5851, %v5853
    %v5871 = vsel %vm2379, %v5853, %v5855
    %v5872 = vsel %vm2379, %v5855, %v5857
    %v5873 = vsel %vm2379, %v5857, %v5859
    %v5891 = vsel %vm573, %v5826, 0
    %v5894 = vsel %vm573, %v5827, 0
    %5896 = vmatprep.subr.bf16.mxu0 %v5861
    %5897 = vmatpush1.bf16.msra.mxu0 %v5860
    %5898 = vmatprep.subr.bf16.mxu0 %v5868
    %5899 = vmatpush1.bf16.msra.mxu0 %v5867
    %5900 = vmatprep.subr.bf16.mxu0 0
    %5901 = vmatpush1.bf16.msra.mxu0 0
    %5902 = vmatprep.subr.bf16.mxu0 0
    %5903 = vmatpush1.bf16.msra.mxu0 0
    %5904 = vmatprep.subr.bf16.mxu0 0
    %5905 = vmatpush1.bf16.msra.mxu0 0
    %5906 = vmatprep.subr.bf16.mxu0 0
    %5907 = vmatpush1.bf16.msra.mxu0 0
    %5908 = vmatprep.subr.bf16.mxu0 0
    %5909 = vmatpush1.bf16.msra.mxu0 0
    %5910 = vmatprep.subr.bf16.mxu0 0
    %5911 = vmatpush1.bf16.msra.mxu0 0
    %5912 = vmatprep.subr.bf16.mxu0 0
    %5913 = vmatpush1.bf16.msra.mxu0 0
    %5914 = vmatprep.subr.bf16.mxu0 0
    %5915 = vmatpush1.bf16.msra.mxu0 0
    %5916 = vmatprep.subr.bf16.mxu0 0
    %5917 = vmatpush1.bf16.msra.mxu0 0
    %5918 = vmatprep.subr.bf16.mxu0 0
    %5919 = vmatpush1.bf16.msra.mxu0 0
    %5920 = vmatprep.subr.bf16.mxu0 0
    %5921 = vmatpush1.bf16.msra.mxu0 0
    %5922 = vmatprep.subr.bf16.mxu0 0
    %5923 = vmatpush1.bf16.msra.mxu0 0
    %5924 = vmatprep.subr.bf16.mxu0 0
    %5925 = vmatpush1.bf16.msra.mxu0 0
    %5926 = vmatprep.subr.bf16.mxu0 0
    %5927 = vmatpush1.bf16.msra.mxu0 0
    %5928 = vmatprep.mubr.bf16.mxu0 0
    %5929 = vmatmul.mubr.bf16.gmra.mrb[0].mxu0 %v5891
    %v5930 = vpop.f32.mrb[0].mxu0
    %v5931 = vadd.f32 0.0, %v5930
    %v5932 = vpop.f32.mrb[0].mxu0
    %v5933 = vadd.f32 0.0, %v5932
    %v5934 = vpop.f32.mrb[0].mxu0
    %v5935 = vadd.f32 0.0, %v5934
    %v5936 = vpop.f32.mrb[0].mxu0
    %v5937 = vadd.f32 0.0, %v5936
    %5938 = vmatprep.mubr.bf16.mxu0 0
    %5939 = vmatmul.mubr.bf16.gmra.mrb[0].mxu0 %v5894
    %v5940 = vpop.f32.mrb[0].mxu0
    %v5941 = vadd.f32 0.0, %v5940
    %v5942 = vpop.f32.mrb[0].mxu0
    %v5943 = vadd.f32 0.0, %v5942
    %v5944 = vpop.f32.mrb[0].mxu0
    %v5945 = vadd.f32 0.0, %v5944
    %v5946 = vpop.f32.mrb[0].mxu0
    %v5947 = vadd.f32 0.0, %v5946
    %5948 = vdwg.mxu0
    %5949 = vmatprep.subr.bf16.mxu0 %v5863
    %5950 = vmatpush1.bf16.msra.mxu0 %v5862
    %5951 = vmatprep.subr.bf16.mxu0 %v5870
    %5952 = vmatpush1.bf16.msra.mxu0 %v5869
    %5953 = vmatprep.subr.bf16.mxu0 0
    %5954 = vmatpush1.bf16.msra.mxu0 0
    %5955 = vmatprep.subr.bf16.mxu0 0
    %5956 = vmatpush1.bf16.msra.mxu0 0
    %5957 = vmatprep.subr.bf16.mxu0 0
    %5958 = vmatpush1.bf16.msra.mxu0 0
    %5959 = vmatprep.subr.bf16.mxu0 0
    %5960 = vmatpush1.bf16.msra.mxu0 0
    %5961 = vmatprep.subr.bf16.mxu0 0
    %5962 = vmatpush1.bf16.msra.mxu0 0
    %5963 = vmatprep.subr.bf16.mxu0 0
    %5964 = vmatpush1.bf16.msra.mxu0 0
    %5965 = vmatprep.subr.bf16.mxu0 0
    %5966 = vmatpush1.bf16.msra.mxu0 0
    %5967 = vmatprep.subr.bf16.mxu0 0
    %5968 = vmatpush1.bf16.msra.mxu0 0
    %5969 = vmatprep.subr.bf16.mxu0 0
    %5970 = vmatpush1.bf16.msra.mxu0 0
    %5971 = vmatprep.subr.bf16.mxu0 0
    %5972 = vmatpush1.bf16.msra.mxu0 0
    %5973 = vmatprep.subr.bf16.mxu0 0
    %5974 = vmatpush1.bf16.msra.mxu0 0
    %5975 = vmatprep.subr.bf16.mxu0 0
    %5976 = vmatpush1.bf16.msra.mxu0 0
    %5977 = vmatprep.subr.bf16.mxu0 0
    %5978 = vmatpush1.bf16.msra.mxu0 0
    %5979 = vmatprep.subr.bf16.mxu0 0
    %5980 = vmatpush1.bf16.msra.mxu0 0
    %5981 = vmatprep.mubr.bf16.mxu0 0
    %5982 = vmatmul.mubr.bf16.gmra.mrb[0].mxu0 %v5891
    %v5983 = vpop.f32.mrb[0].mxu0
    %v5984 = vadd.f32 0.0, %v5983
    %v5985 = vpop.f32.mrb[0].mxu0
    %v5986 = vadd.f32 0.0, %v5985
    %v5987 = vpop.f32.mrb[0].mxu0
    %v5988 = vadd.f32 0.0, %v5987
    %v5989 = vpop.f32.mrb[0].mxu0
    %v5990 = vadd.f32 0.0, %v5989
    %5991 = vmatprep.mubr.bf16.mxu0 0
    %5992 = vmatmul.mubr.bf16.gmra.mrb[0].mxu0 %v5894
    %v5993 = vpop.f32.mrb[0].mxu0
    %v5994 = vadd.f32 0.0, %v5993
    %v5995 = vpop.f32.mrb[0].mxu0
    %v5996 = vadd.f32 0.0, %v5995
    %v5997 = vpop.f32.mrb[0].mxu0
    %v5998 = vadd.f32 0.0, %v5997
    %v5999 = vpop.f32.mrb[0].mxu0
    %v6000 = vadd.f32 0.0, %v5999
    %6001 = vdwg.mxu0
    %6002 = vmatprep.subr.bf16.mxu0 %v5865
    %6003 = vmatpush1.bf16.msra.mxu0 %v5864
    %6004 = vmatprep.subr.bf16.mxu0 %v5872
    %6005 = vmatpush1.bf16.msra.mxu0 %v5871
    %6006 = vmatprep.subr.bf16.mxu0 0
    %6007 = vmatpush1.bf16.msra.mxu0 0
    %6008 = vmatprep.subr.bf16.mxu0 0
    %6009 = vmatpush1.bf16.msra.mxu0 0
    %6010 = vmatprep.subr.bf16.mxu0 0
    %6011 = vmatpush1.bf16.msra.mxu0 0
    %6012 = vmatprep.subr.bf16.mxu0 0
    %6013 = vmatpush1.bf16.msra.mxu0 0
    %6014 = vmatprep.subr.bf16.mxu0 0
    %6015 = vmatpush1.bf16.msra.mxu0 0
    %6016 = vmatprep.subr.bf16.mxu0 0
    %6017 = vmatpush1.bf16.msra.mxu0 0
    %6018 = vmatprep.subr.bf16.mxu0 0
    %6019 = vmatpush1.bf16.msra.mxu0 0
    %6020 = vmatprep.subr.bf16.mxu0 0
    %6021 = vmatpush1.bf16.msra.mxu0 0
    %6022 = vmatprep.subr.bf16.mxu0 0
    %6023 = vmatpush1.bf16.msra.mxu0 0
    %6024 = vmatprep.subr.bf16.mxu0 0
    %6025 = vmatpush1.bf16.msra.mxu0 0
    %6026 = vmatprep.subr.bf16.mxu0 0
    %6027 = vmatpush1.bf16.msra.mxu0 0
    %6028 = vmatprep.subr.bf16.mxu0 0
    %6029 = vmatpush1.bf16.msra.mxu0 0
    %6030 = vmatprep.subr.bf16.mxu0 0
    %6031 = vmatpush1.bf16.msra.mxu0 0
    %6032 = vmatprep.subr.bf16.mxu0 0
    %6033 = vmatpush1.bf16.msra.mxu0 0
    %6034 = vmatprep.mubr.bf16.mxu0 0
    %6035 = vmatmul.mubr.bf16.gmra.mrb[0].mxu0 %v5891
    %v6036 = vpop.f32.mrb[0].mxu0
    %v6037 = vadd.f32 0.0, %v6036
    %v6038 = vpop.f32.mrb[0].mxu0
    %v6039 = vadd.f32 0.0, %v6038
    %v6040 = vpop.f32.mrb[0].mxu0
    %v6041 = vadd.f32 0.0, %v6040
    %v6042 = vpop.f32.mrb[0].mxu0
    %v6043 = vadd.f32 0.0, %v6042
    %6044 = vmatprep.mubr.bf16.mxu0 0
    %6045 = vmatmul.mubr.bf16.gmra.mrb[0].mxu0 %v5894
    %v6046 = vpop.f32.mrb[0].mxu0
    %v6047 = vadd.f32 0.0, %v6046
    %v6048 = vpop.f32.mrb[0].mxu0
    %v6049 = vadd.f32 0.0, %v6048
    %v6050 = vpop.f32.mrb[0].mxu0
    %v6051 = vadd.f32 0.0, %v6050
    %v6052 = vpop.f32.mrb[0].mxu0
    %v6053 = vadd.f32 0.0, %v6052
    %6054 = vdwg.mxu0
    %6055 = vmatprep.subr.bf16.mxu0 %v5843
    %6056 = vmatpush1.bf16.msra.mxu0 %v5866
    %6057 = vmatprep.subr.bf16.mxu0 %v5859
    %6058 = vmatpush1.bf16.msra.mxu0 %v5873
    %6059 = vmatprep.subr.bf16.mxu0 0
    %6060 = vmatpush1.bf16.msra.mxu0 0
    %6061 = vmatprep.subr.bf16.mxu0 0
    %6062 = vmatpush1.bf16.msra.mxu0 0
    %6063 = vmatprep.subr.bf16.mxu0 0
    %6064 = vmatpush1.bf16.msra.mxu0 0
    %6065 = vmatprep.subr.bf16.mxu0 0
    %6066 = vmatpush1.bf16.msra.mxu0 0
    %6067 = vmatprep.subr.bf16.mxu0 0
    %6068 = vmatpush1.bf16.msra.mxu0 0
    %6069 = vmatprep.subr.bf16.mxu0 0
    %6070 = vmatpush1.bf16.msra.mxu0 0
    %6071 = vmatprep.subr.bf16.mxu0 0
    %6072 = vmatpush1.bf16.msra.mxu0 0
    %6073 = vmatprep.subr.bf16.mxu0 0
    %6074 = vmatpush1.bf16.msra.mxu0 0
    %6075 = vmatprep.subr.bf16.mxu0 0
    %6076 = vmatpush1.bf16.msra.mxu0 0
    %6077 = vmatprep.subr.bf16.mxu0 0
    %6078 = vmatpush1.bf16.msra.mxu0 0
    %6079 = vmatprep.subr.bf16.mxu0 0
    %6080 = vmatpush1.bf16.msra.mxu0 0
    %6081 = vmatprep.subr.bf16.mxu0 0
    %6082 = vmatpush1.bf16.msra.mxu0 0
    %6083 = vmatprep.subr.bf16.mxu0 0
    %6084 = vmatpush1.bf16.msra.mxu0 0
    %6085 = vmatprep.subr.bf16.mxu0 0
    %6086 = vmatpush1.bf16.msra.mxu0 0
    %6087 = vmatprep.mubr.bf16.mxu0 0
    %6088 = vmatmul.mubr.bf16.gmra.mrb[0].mxu0 %v5891
    %v6089 = vpop.f32.mrb[0].mxu0
    %v6090 = vadd.f32 0.0, %v6089
    %v6091 = vpop.f32.mrb[0].mxu0
    %v6092 = vadd.f32 0.0, %v6091
    %v6093 = vpop.f32.mrb[0].mxu0
    %v6094 = vadd.f32 0.0, %v6093
    %v6095 = vpop.f32.mrb[0].mxu0
    %v6096 = vadd.f32 0.0, %v6095
    %6097 = vmatprep.mubr.bf16.mxu0 0
    %6098 = vmatmul.mubr.bf16.gmra.mrb[0].mxu0 %v5894
    %v6099 = vpop.f32.mrb[0].mxu0
    %v6100 = vadd.f32 0.0, %v6099
    %v6101 = vpop.f32.mrb[0].mxu0
    %v6102 = vadd.f32 0.0, %v6101
    %v6103 = vpop.f32.mrb[0].mxu0
    %v6104 = vadd.f32 0.0, %v6103
    %v6105 = vpop.f32.mrb[0].mxu0
    %v6106 = vadd.f32 0.0, %v6105
    %6107 = vdwg.mxu0
    %v6108 = vadd.f32 %v5782, %v5931
    %v6109 = vadd.f32 %v5783, %v5933
    %v6110 = vadd.f32 %v5784, %v5984
    %v6111 = vadd.f32 %v5785, %v5986
    %v6112 = vadd.f32 %v5786, %v6037
    %v6113 = vadd.f32 %v5787, %v6039
    %v6114 = vadd.f32 %v5788, %v6090
    %v6115 = vadd.f32 %v5789, %v6092
    %v6116 = vadd.f32 %v5790, %v5935
    %v6117 = vadd.f32 %v5791, %v5937
    %v6118 = vadd.f32 %v5792, %v5988
    %v6119 = vadd.f32 %v5793, %v5990
    %v6120 = vadd.f32 %v5794, %v6041
    %v6121 = vadd.f32 %v5795, %v6043
    %v6122 = vadd.f32 %v5796, %v6094
    %v6123 = vadd.f32 %v5797, %v6096
    %v6124 = vadd.f32 %v5798, %v5941
    %v6125 = vadd.f32 %v5799, %v5943
    %v6126 = vadd.f32 %v5800, %v5994
    %v6127 = vadd.f32 %v5801, %v5996
    %v6128 = vadd.f32 %v5802, %v6047
    %v6129 = vadd.f32 %v5803, %v6049
    %v6130 = vadd.f32 %v5804, %v6100
    %v6131 = vadd.f32 %v5805, %v6102
    %v6132 = vadd.f32 %v5806, %v5945
    %v6133 = vadd.f32 %v5807, %v5947
    %v6134 = vadd.f32 %v5808, %v5998
    %v6135 = vadd.f32 %v5809, %v6000
    %v6136 = vadd.f32 %v5810, %v6051
    %v6137 = vadd.f32 %v5811, %v6053
    %v6138 = vadd.f32 %v5812, %v6104
    %v6139 = vadd.f32 %v5813, %v6106
    %v6140 = vld [vmem:[%s2660] sm:$0xf]
    %v6141 = vld [vmem:[%s2660 + $0x4] sm:$0xf]
    %v6142 = vld [vmem:[%s2660 + $0x8] sm:$0xf]
    %v6143 = vld [vmem:[%s2660 + $0xc] sm:$0xf]
    %v6148 = vunpack.c.l.b16 %v6140
    %v6149 = vunpack.c.l.b16 %v6141
    %v6150 = vunpack.c.l.b16 %v6142
    %v6151 = vunpack.c.l.b16 %v6143
    %v6152 = vpack.c.b16 %v6149, %v6148
    %v6153 = vpack.c.b16 %v6151, %v6150
    %6154 = vrot.lane.b32.xlu0 %v3952, 63
    %v6155 = vpop.permute.xlu0 %6154
    %6156 = vrot.lane.b32.xlu0 %v3953, 63
    %v6157 = vpop.permute.xlu0 %6156
    %6158 = vrot.lane.b32.xlu0 %v3954, 63
    %v6159 = vpop.permute.xlu0 %6158
    %6160 = vrot.lane.b32.xlu0 %v3955, 63
    %v6161 = vpop.permute.xlu0 %6160
    %6162 = vrot.lane.b32.xlu0 %v3956, 63
    %v6163 = vpop.permute.xlu0 %6162
    %6164 = vrot.lane.b32.xlu0 %v3957, 63
    %v6165 = vpop.permute.xlu0 %6164
    %6166 = vrot.lane.b32.xlu0 %v3958, 63
    %v6167 = vpop.permute.xlu0 %6166
    %6168 = vrot.lane.b32.xlu0 %v3959, 63
    %v6169 = vpop.permute.xlu0 %6168
    %6170 = vrot.lane.b32.xlu0 %v3960, 63
    %v6171 = vpop.permute.xlu0 %6170
    %6172 = vrot.lane.b32.xlu0 %v3961, 63
    %v6173 = vpop.permute.xlu0 %6172
    %6174 = vrot.lane.b32.xlu0 %v3962, 63
    %v6175 = vpop.permute.xlu0 %6174
    %6176 = vrot.lane.b32.xlu0 %v3963, 63
    %v6177 = vpop.permute.xlu0 %6176
    %6178 = vrot.lane.b32.xlu0 %v3964, 63
    %v6179 = vpop.permute.xlu0 %6178
    %6180 = vrot.lane.b32.xlu0 %v3965, 63
    %v6181 = vpop.permute.xlu0 %6180
    %6182 = vrot.lane.b32.xlu0 %v3966, 63
    %v6183 = vpop.permute.xlu0 %6182
    %6184 = vrot.lane.b32.xlu0 %v3967, 63
    %v6185 = vpop.permute.xlu0 %6184
    %v6186 = vsel %vm2707, %v6155, %v6157
    %v6187 = vsel %vm2707, %v6157, %v6159
    %v6188 = vsel %vm2707, %v6159, %v6161
    %v6189 = vsel %vm2707, %v6161, %v6163
    %v6190 = vsel %vm2707, %v6163, %v6165
    %v6191 = vsel %vm2707, %v6165, %v6167
    %v6192 = vsel %vm2707, %v6167, %v6169
    %v6193 = vsel %vm2707, %v6171, %v6173
    %v6194 = vsel %vm2707, %v6173, %v6175
    %v6195 = vsel %vm2707, %v6175, %v6177
    %v6196 = vsel %vm2707, %v6177, %v6179
    %v6197 = vsel %vm2707, %v6179, %v6181
    %v6198 = vsel %vm2707, %v6181, %v6183
    %v6199 = vsel %vm2707, %v6183, %v6185
    %v6217 = vsel %vm573, %v6152, 0
    %v6220 = vsel %vm573, %v6153, 0
    %6222 = vmatprep.subr.bf16.mxu0 %v6187
    %6223 = vmatpush1.bf16.msra.mxu0 %v6186
    %6224 = vmatprep.subr.bf16.mxu0 %v6194
    %6225 = vmatpush1.bf16.msra.mxu0 %v6193
    %6226 = vmatprep.subr.bf16.mxu0 0
    %6227 = vmatpush1.bf16.msra.mxu0 0
    %6228 = vmatprep.subr.bf16.mxu0 0
    %6229 = vmatpush1.bf16.msra.mxu0 0
    %6230 = vmatprep.subr.bf16.mxu0 0
    %6231 = vmatpush1.bf16.msra.mxu0 0
    %6232 = vmatprep.subr.bf16.mxu0 0
    %6233 = vmatpush1.bf16.msra.mxu0 0
    %6234 = vmatprep.subr.bf16.mxu0 0
    %6235 = vmatpush1.bf16.msra.mxu0 0
    %6236 = vmatprep.subr.bf16.mxu0 0
    %6237 = vmatpush1.bf16.msra.mxu0 0
    %6238 = vmatprep.subr.bf16.mxu0 0
    %6239 = vmatpush1.bf16.msra.mxu0 0
    %6240 = vmatprep.subr.bf16.mxu0 0
    %6241 = vmatpush1.bf16.msra.mxu0 0
    %6242 = vmatprep.subr.bf16.mxu0 0
    %6243 = vmatpush1.bf16.msra.mxu0 0
    %6244 = vmatprep.subr.bf16.mxu0 0
    %6245 = vmatpush1.bf16.msra.mxu0 0
    %6246 = vmatprep.subr.bf16.mxu0 0
    %6247 = vmatpush1.bf16.msra.mxu0 0
    %6248 = vmatprep.subr.bf16.mxu0 0
    %6249 = vmatpush1.bf16.msra.mxu0 0
    %6250 = vmatprep.subr.bf16.mxu0 0
    %6251 = vmatpush1.bf16.msra.mxu0 0
    %6252 = vmatprep.subr.bf16.mxu0 0
    %6253 = vmatpush1.bf16.msra.mxu0 0
    %6254 = vmatprep.mubr.bf16.mxu0 0
    %6255 = vmatmul.mubr.bf16.gmra.mrb[0].mxu0 %v6217
    %v6256 = vpop.f32.mrb[0].mxu0
    %v6257 = vadd.f32 0.0, %v6256
    %v6258 = vpop.f32.mrb[0].mxu0
    %v6259 = vadd.f32 0.0, %v6258
    %v6260 = vpop.f32.mrb[0].mxu0
    %v6261 = vadd.f32 0.0, %v6260
    %v6262 = vpop.f32.mrb[0].mxu0
    %v6263 = vadd.f32 0.0, %v6262
    %6264 = vmatprep.mubr.bf16.mxu0 0
    %6265 = vmatmul.mubr.bf16.gmra.mrb[0].mxu0 %v6220
    %v6266 = vpop.f32.mrb[0].mxu0
    %v6267 = vadd.f32 0.0, %v6266
    %v6268 = vpop.f32.mrb[0].mxu0
    %v6269 = vadd.f32 0.0, %v6268
    %v6270 = vpop.f32.mrb[0].mxu0
    %v6271 = vadd.f32 0.0, %v6270
    %v6272 = vpop.f32.mrb[0].mxu0
    %v6273 = vadd.f32 0.0, %v6272
    %6274 = vdwg.mxu0
    %6275 = vmatprep.subr.bf16.mxu0 %v6189
    %6276 = vmatpush1.bf16.msra.mxu0 %v6188
    %6277 = vmatprep.subr.bf16.mxu0 %v6196
    %6278 = vmatpush1.bf16.msra.mxu0 %v6195
    %6279 = vmatprep.subr.bf16.mxu0 0
    %6280 = vmatpush1.bf16.msra.mxu0 0
    %6281 = vmatprep.subr.bf16.mxu0 0
    %6282 = vmatpush1.bf16.msra.mxu0 0
    %6283 = vmatprep.subr.bf16.mxu0 0
    %6284 = vmatpush1.bf16.msra.mxu0 0
    %6285 = vmatprep.subr.bf16.mxu0 0
    %6286 = vmatpush1.bf16.msra.mxu0 0
    %6287 = vmatprep.subr.bf16.mxu0 0
    %6288 = vmatpush1.bf16.msra.mxu0 0
    %6289 = vmatprep.subr.bf16.mxu0 0
    %6290 = vmatpush1.bf16.msra.mxu0 0
    %6291 = vmatprep.subr.bf16.mxu0 0
    %6292 = vmatpush1.bf16.msra.mxu0 0
    %6293 = vmatprep.subr.bf16.mxu0 0
    %6294 = vmatpush1.bf16.msra.mxu0 0
    %6295 = vmatprep.subr.bf16.mxu0 0
    %6296 = vmatpush1.bf16.msra.mxu0 0
    %6297 = vmatprep.subr.bf16.mxu0 0
    %6298 = vmatpush1.bf16.msra.mxu0 0
    %6299 = vmatprep.subr.bf16.mxu0 0
    %6300 = vmatpush1.bf16.msra.mxu0 0
    %6301 = vmatprep.subr.bf16.mxu0 0
    %6302 = vmatpush1.bf16.msra.mxu0 0
    %6303 = vmatprep.subr.bf16.mxu0 0
    %6304 = vmatpush1.bf16.msra.mxu0 0
    %6305 = vmatprep.subr.bf16.mxu0 0
    %6306 = vmatpush1.bf16.msra.mxu0 0
    %6307 = vmatprep.mubr.bf16.mxu0 0
    %6308 = vmatmul.mubr.bf16.gmra.mrb[0].mxu0 %v6217
    %v6309 = vpop.f32.mrb[0].mxu0
    %v6310 = vadd.f32 0.0, %v6309
    %v6311 = vpop.f32.mrb[0].mxu0
    %v6312 = vadd.f32 0.0, %v6311
    %v6313 = vpop.f32.mrb[0].mxu0
    %v6314 = vadd.f32 0.0, %v6313
    %v6315 = vpop.f32.mrb[0].mxu0
    %v6316 = vadd.f32 0.0, %v6315
    %6317 = vmatprep.mubr.bf16.mxu0 0
    %6318 = vmatmul.mubr.bf16.gmra.mrb[0].mxu0 %v6220
    %v6319 = vpop.f32.mrb[0].mxu0
    %v6320 = vadd.f32 0.0, %v6319
    %v6321 = vpop.f32.mrb[0].mxu0
    %v6322 = vadd.f32 0.0, %v6321
    %v6323 = vpop.f32.mrb[0].mxu0
    %v6324 = vadd.f32 0.0, %v6323
    %v6325 = vpop.f32.mrb[0].mxu0
    %v6326 = vadd.f32 0.0, %v6325
    %6327 = vdwg.mxu0
    %6328 = vmatprep.subr.bf16.mxu0 %v6191
    %6329 = vmatpush1.bf16.msra.mxu0 %v6190
    %6330 = vmatprep.subr.bf16.mxu0 %v6198
    %6331 = vmatpush1.bf16.msra.mxu0 %v6197
    %6332 = vmatprep.subr.bf16.mxu0 0
    %6333 = vmatpush1.bf16.msra.mxu0 0
    %6334 = vmatprep.subr.bf16.mxu0 0
    %6335 = vmatpush1.bf16.msra.mxu0 0
    %6336 = vmatprep.subr.bf16.mxu0 0
    %6337 = vmatpush1.bf16.msra.mxu0 0
    %6338 = vmatprep.subr.bf16.mxu0 0
    %6339 = vmatpush1.bf16.msra.mxu0 0
    %6340 = vmatprep.subr.bf16.mxu0 0
    %6341 = vmatpush1.bf16.msra.mxu0 0
    %6342 = vmatprep.subr.bf16.mxu0 0
    %6343 = vmatpush1.bf16.msra.mxu0 0
    %6344 = vmatprep.subr.bf16.mxu0 0
    %6345 = vmatpush1.bf16.msra.mxu0 0
    %6346 = vmatprep.subr.bf16.mxu0 0
    %6347 = vmatpush1.bf16.msra.mxu0 0
    %6348 = vmatprep.subr.bf16.mxu0 0
    %6349 = vmatpush1.bf16.msra.mxu0 0
    %6350 = vmatprep.subr.bf16.mxu0 0
    %6351 = vmatpush1.bf16.msra.mxu0 0
    %6352 = vmatprep.subr.bf16.mxu0 0
    %6353 = vmatpush1.bf16.msra.mxu0 0
    %6354 = vmatprep.subr.bf16.mxu0 0
    %6355 = vmatpush1.bf16.msra.mxu0 0
    %6356 = vmatprep.subr.bf16.mxu0 0
    %6357 = vmatpush1.bf16.msra.mxu0 0
    %6358 = vmatprep.subr.bf16.mxu0 0
    %6359 = vmatpush1.bf16.msra.mxu0 0
    %6360 = vmatprep.mubr.bf16.mxu0 0
    %6361 = vmatmul.mubr.bf16.gmra.mrb[0].mxu0 %v6217
    %v6362 = vpop.f32.mrb[0].mxu0
    %v6363 = vadd.f32 0.0, %v6362
    %v6364 = vpop.f32.mrb[0].mxu0
    %v6365 = vadd.f32 0.0, %v6364
    %v6366 = vpop.f32.mrb[0].mxu0
    %v6367 = vadd.f32 0.0, %v6366
    %v6368 = vpop.f32.mrb[0].mxu0
    %v6369 = vadd.f32 0.0, %v6368
    %6370 = vmatprep.mubr.bf16.mxu0 0
    %6371 = vmatmul.mubr.bf16.gmra.mrb[0].mxu0 %v6220
    %v6372 = vpop.f32.mrb[0].mxu0
    %v6373 = vadd.f32 0.0, %v6372
    %v6374 = vpop.f32.mrb[0].mxu0
    %v6375 = vadd.f32 0.0, %v6374
    %v6376 = vpop.f32.mrb[0].mxu0
    %v6377 = vadd.f32 0.0, %v6376
    %v6378 = vpop.f32.mrb[0].mxu0
    %v6379 = vadd.f32 0.0, %v6378
    %6380 = vdwg.mxu0
    %6381 = vmatprep.subr.bf16.mxu0 %v6169
    %6382 = vmatpush1.bf16.msra.mxu0 %v6192
    %6383 = vmatprep.subr.bf16.mxu0 %v6185
    %6384 = vmatpush1.bf16.msra.mxu0 %v6199
    %6385 = vmatprep.subr.bf16.mxu0 0
    %6386 = vmatpush1.bf16.msra.mxu0 0
    %6387 = vmatprep.subr.bf16.mxu0 0
    %6388 = vmatpush1.bf16.msra.mxu0 0
    %6389 = vmatprep.subr.bf16.mxu0 0
    %6390 = vmatpush1.bf16.msra.mxu0 0
    %6391 = vmatprep.subr.bf16.mxu0 0
    %6392 = vmatpush1.bf16.msra.mxu0 0
    %6393 = vmatprep.subr.bf16.mxu0 0
    %6394 = vmatpush1.bf16.msra.mxu0 0
    %6395 = vmatprep.subr.bf16.mxu0 0
    %6396 = vmatpush1.bf16.msra.mxu0 0
    %6397 = vmatprep.subr.bf16.mxu0 0
    %6398 = vmatpush1.bf16.msra.mxu0 0
    %6399 = vmatprep.subr.bf16.mxu0 0
    %6400 = vmatpush1.bf16.msra.mxu0 0
    %6401 = vmatprep.subr.bf16.mxu0 0
    %6402 = vmatpush1.bf16.msra.mxu0 0
    %6403 = vmatprep.subr.bf16.mxu0 0
    %6404 = vmatpush1.bf16.msra.mxu0 0
    %6405 = vmatprep.subr.bf16.mxu0 0
    %6406 = vmatpush1.bf16.msra.mxu0 0
    %6407 = vmatprep.subr.bf16.mxu0 0
    %6408 = vmatpush1.bf16.msra.mxu0 0
    %6409 = vmatprep.subr.bf16.mxu0 0
    %6410 = vmatpush1.bf16.msra.mxu0 0
    %6411 = vmatprep.subr.bf16.mxu0 0
    %6412 = vmatpush1.bf16.msra.mxu0 0
    %6413 = vmatprep.mubr.bf16.mxu0 0
    %6414 = vmatmul.mubr.bf16.gmra.mrb[0].mxu0 %v6217
    %v6415 = vpop.f32.mrb[0].mxu0
    %v6416 = vadd.f32 0.0, %v6415
    %v6417 = vpop.f32.mrb[0].mxu0
    %v6418 = vadd.f32 0.0, %v6417
    %v6419 = vpop.f32.mrb[0].mxu0
    %v6420 = vadd.f32 0.0, %v6419
    %v6421 = vpop.f32.mrb[0].mxu0
    %v6422 = vadd.f32 0.0, %v6421
    %6423 = vmatprep.mubr.bf16.mxu0 0
    %6424 = vmatmul.mubr.bf16.gmra.mrb[0].mxu0 %v6220
    %v6425 = vpop.f32.mrb[0].mxu0
    %v6426 = vadd.f32 0.0, %v6425
    %v6427 = vpop.f32.mrb[0].mxu0
    %v6428 = vadd.f32 0.0, %v6427
    %v6429 = vpop.f32.mrb[0].mxu0
    %v6430 = vadd.f32 0.0, %v6429
    %v6431 = vpop.f32.mrb[0].mxu0
    %v6432 = vadd.f32 0.0, %v6431
    %6433 = vdwg.mxu0
    %v6434 = vadd.f32 %v6108, %v6257
    %v6435 = vadd.f32 %v6109, %v6259
    %v6436 = vadd.f32 %v6110, %v6310
    %v6437 = vadd.f32 %v6111, %v6312
    %v6438 = vadd.f32 %v6112, %v6363
    %v6439 = vadd.f32 %v6113, %v6365
    %v6440 = vadd.f32 %v6114, %v6416
    %v6441 = vadd.f32 %v6115, %v6418
    %v6442 = vadd.f32 %v6116, %v6261
    %v6443 = vadd.f32 %v6117, %v6263
    %v6444 = vadd.f32 %v6118, %v6314
    %v6445 = vadd.f32 %v6119, %v6316
    %v6446 = vadd.f32 %v6120, %v6367
    %v6447 = vadd.f32 %v6121, %v6369
    %v6448 = vadd.f32 %v6122, %v6420
    %v6449 = vadd.f32 %v6123, %v6422
    %v6450 = vadd.f32 %v6124, %v6267
    %v6451 = vadd.f32 %v6125, %v6269
    %v6452 = vadd.f32 %v6126, %v6320
    %v6453 = vadd.f32 %v6127, %v6322
    %v6454 = vadd.f32 %v6128, %v6373
    %v6455 = vadd.f32 %v6129, %v6375
    %v6456 = vadd.f32 %v6130, %v6426
    %v6457 = vadd.f32 %v6131, %v6428
    %v6458 = vadd.f32 %v6132, %v6271
    %v6459 = vadd.f32 %v6133, %v6273
    %v6460 = vadd.f32 %v6134, %v6324
    %v6461 = vadd.f32 %v6135, %v6326
    %v6462 = vadd.f32 %v6136, %v6377
    %v6463 = vadd.f32 %v6137, %v6379
    %v6464 = vadd.f32 %v6138, %v6430
    %v6465 = vadd.f32 %v6139, %v6432
    %v6466 = vld [vmem:[%s2988] sm:$0xf]
    %v6467 = vld [vmem:[%s2988 + $0x4] sm:$0xf]
    %v6468 = vld [vmem:[%s2988 + $0x8] sm:$0xf]
    %v6469 = vld [vmem:[%s2988 + $0xc] sm:$0xf]
    %v6474 = vunpack.c.l.b16 %v6466
    %v6475 = vunpack.c.l.b16 %v6467
    %v6476 = vunpack.c.l.b16 %v6468
    %v6477 = vunpack.c.l.b16 %v6469
    %v6478 = vpack.c.b16 %v6475, %v6474
    %v6479 = vpack.c.b16 %v6477, %v6476
    %6480 = vrot.lane.b32.xlu0 %v3952, 62
    %v6481 = vpop.permute.xlu0 %6480
    %6482 = vrot.lane.b32.xlu0 %v3953, 62
    %v6483 = vpop.permute.xlu0 %6482
    %6484 = vrot.lane.b32.xlu0 %v3954, 62
    %v6485 = vpop.permute.xlu0 %6484
    %6486 = vrot.lane.b32.xlu0 %v3955, 62
    %v6487 = vpop.permute.xlu0 %6486
    %6488 = vrot.lane.b32.xlu0 %v3956, 62
    %v6489 = vpop.permute.xlu0 %6488
    %6490 = vrot.lane.b32.xlu0 %v3957, 62
    %v6491 = vpop.permute.xlu0 %6490
    %6492 = vrot.lane.b32.xlu0 %v3958, 62
    %v6493 = vpop.permute.xlu0 %6492
    %6494 = vrot.lane.b32.xlu0 %v3959, 62
    %v6495 = vpop.permute.xlu0 %6494
    %6496 = vrot.lane.b32.xlu0 %v3960, 62
    %v6497 = vpop.permute.xlu0 %6496
    %6498 = vrot.lane.b32.xlu0 %v3961, 62
    %v6499 = vpop.permute.xlu0 %6498
    %6500 = vrot.lane.b32.xlu0 %v3962, 62
    %v6501 = vpop.permute.xlu0 %6500
    %6502 = vrot.lane.b32.xlu0 %v3963, 62
    %v6503 = vpop.permute.xlu0 %6502
    %6504 = vrot.lane.b32.xlu0 %v3964, 62
    %v6505 = vpop.permute.xlu0 %6504
    %6506 = vrot.lane.b32.xlu0 %v3965, 62
    %v6507 = vpop.permute.xlu0 %6506
    %6508 = vrot.lane.b32.xlu0 %v3966, 62
    %v6509 = vpop.permute.xlu0 %6508
    %6510 = vrot.lane.b32.xlu0 %v3967, 62
    %v6511 = vpop.permute.xlu0 %6510
    %v6512 = vsel %vm3035, %v6481, %v6483
    %v6513 = vsel %vm3035, %v6483, %v6485
    %v6514 = vsel %vm3035, %v6485, %v6487
    %v6515 = vsel %vm3035, %v6487, %v6489
    %v6516 = vsel %vm3035, %v6489, %v6491
    %v6517 = vsel %vm3035, %v6491, %v6493
    %v6518 = vsel %vm3035, %v6493, %v6495
    %v6519 = vsel %vm3035, %v6497, %v6499
    %v6520 = vsel %vm3035, %v6499, %v6501
    %v6521 = vsel %vm3035, %v6501, %v6503
    %v6522 = vsel %vm3035, %v6503, %v6505
    %v6523 = vsel %vm3035, %v6505, %v6507
    %v6524 = vsel %vm3035, %v6507, %v6509
    %v6525 = vsel %vm3035, %v6509, %v6511
    %v6543 = vsel %vm573, %v6478, 0
    %v6546 = vsel %vm573, %v6479, 0
    %6548 = vmatprep.subr.bf16.mxu0 %v6513
    %6549 = vmatpush1.bf16.msra.mxu0 %v6512
    %6550 = vmatprep.subr.bf16.mxu0 %v6520
    %6551 = vmatpush1.bf16.msra.mxu0 %v6519
    %6552 = vmatprep.subr.bf16.mxu0 0
    %6553 = vmatpush1.bf16.msra.mxu0 0
    %6554 = vmatprep.subr.bf16.mxu0 0
    %6555 = vmatpush1.bf16.msra.mxu0 0
    %6556 = vmatprep.subr.bf16.mxu0 0
    %6557 = vmatpush1.bf16.msra.mxu0 0
    %6558 = vmatprep.subr.bf16.mxu0 0
    %6559 = vmatpush1.bf16.msra.mxu0 0
    %6560 = vmatprep.subr.bf16.mxu0 0
    %6561 = vmatpush1.bf16.msra.mxu0 0
    %6562 = vmatprep.subr.bf16.mxu0 0
    %6563 = vmatpush1.bf16.msra.mxu0 0
    %6564 = vmatprep.subr.bf16.mxu0 0
    %6565 = vmatpush1.bf16.msra.mxu0 0
    %6566 = vmatprep.subr.bf16.mxu0 0
    %6567 = vmatpush1.bf16.msra.mxu0 0
    %6568 = vmatprep.subr.bf16.mxu0 0
    %6569 = vmatpush1.bf16.msra.mxu0 0
    %6570 = vmatprep.subr.bf16.mxu0 0
    %6571 = vmatpush1.bf16.msra.mxu0 0
    %6572 = vmatprep.subr.bf16.mxu0 0
    %6573 = vmatpush1.bf16.msra.mxu0 0
    %6574 = vmatprep.subr.bf16.mxu0 0
    %6575 = vmatpush1.bf16.msra.mxu0 0
    %6576 = vmatprep.subr.bf16.mxu0 0
    %6577 = vmatpush1.bf16.msra.mxu0 0
    %6578 = vmatprep.subr.bf16.mxu0 0
    %6579 = vmatpush1.bf16.msra.mxu0 0
    %6580 = vmatprep.mubr.bf16.mxu0 0
    %6581 = vmatmul.mubr.bf16.gmra.mrb[0].mxu0 %v6543
    %v6582 = vpop.f32.mrb[0].mxu0
    %v6583 = vadd.f32 0.0, %v6582
    %v6584 = vpop.f32.mrb[0].mxu0
    %v6585 = vadd.f32 0.0, %v6584
    %v6586 = vpop.f32.mrb[0].mxu0
    %v6587 = vadd.f32 0.0, %v6586
    %v6588 = vpop.f32.mrb[0].mxu0
    %v6589 = vadd.f32 0.0, %v6588
    %6590 = vmatprep.mubr.bf16.mxu0 0
    %6591 = vmatmul.mubr.bf16.gmra.mrb[0].mxu0 %v6546
    %v6592 = vpop.f32.mrb[0].mxu0
    %v6593 = vadd.f32 0.0, %v6592
    %v6594 = vpop.f32.mrb[0].mxu0
    %v6595 = vadd.f32 0.0, %v6594
    %v6596 = vpop.f32.mrb[0].mxu0
    %v6597 = vadd.f32 0.0, %v6596
    %v6598 = vpop.f32.mrb[0].mxu0
    %v6599 = vadd.f32 0.0, %v6598
    %6600 = vdwg.mxu0
    %6601 = vmatprep.subr.bf16.mxu0 %v6515
    %6602 = vmatpush1.bf16.msra.mxu0 %v6514
    %6603 = vmatprep.subr.bf16.mxu0 %v6522
    %6604 = vmatpush1.bf16.msra.mxu0 %v6521
    %6605 = vmatprep.subr.bf16.mxu0 0
    %6606 = vmatpush1.bf16.msra.mxu0 0
    %6607 = vmatprep.subr.bf16.mxu0 0
    %6608 = vmatpush1.bf16.msra.mxu0 0
    %6609 = vmatprep.subr.bf16.mxu0 0
    %6610 = vmatpush1.bf16.msra.mxu0 0
    %6611 = vmatprep.subr.bf16.mxu0 0
    %6612 = vmatpush1.bf16.msra.mxu0 0
    %6613 = vmatprep.subr.bf16.mxu0 0
    %6614 = vmatpush1.bf16.msra.mxu0 0
    %6615 = vmatprep.subr.bf16.mxu0 0
    %6616 = vmatpush1.bf16.msra.mxu0 0
    %6617 = vmatprep.subr.bf16.mxu0 0
    %6618 = vmatpush1.bf16.msra.mxu0 0
    %6619 = vmatprep.subr.bf16.mxu0 0
    %6620 = vmatpush1.bf16.msra.mxu0 0
    %6621 = vmatprep.subr.bf16.mxu0 0
    %6622 = vmatpush1.bf16.msra.mxu0 0
    %6623 = vmatprep.subr.bf16.mxu0 0
    %6624 = vmatpush1.bf16.msra.mxu0 0
    %6625 = vmatprep.subr.bf16.mxu0 0
    %6626 = vmatpush1.bf16.msra.mxu0 0
    %6627 = vmatprep.subr.bf16.mxu0 0
    %6628 = vmatpush1.bf16.msra.mxu0 0
    %6629 = vmatprep.subr.bf16.mxu0 0
    %6630 = vmatpush1.bf16.msra.mxu0 0
    %6631 = vmatprep.subr.bf16.mxu0 0
    %6632 = vmatpush1.bf16.msra.mxu0 0
    %6633 = vmatprep.mubr.bf16.mxu0 0
    %6634 = vmatmul.mubr.bf16.gmra.mrb[0].mxu0 %v6543
    %v6635 = vpop.f32.mrb[0].mxu0
    %v6636 = vadd.f32 0.0, %v6635
    %v6637 = vpop.f32.mrb[0].mxu0
    %v6638 = vadd.f32 0.0, %v6637
    %v6639 = vpop.f32.mrb[0].mxu0
    %v6640 = vadd.f32 0.0, %v6639
    %v6641 = vpop.f32.mrb[0].mxu0
    %v6642 = vadd.f32 0.0, %v6641
    %6643 = vmatprep.mubr.bf16.mxu0 0
    %6644 = vmatmul.mubr.bf16.gmra.mrb[0].mxu0 %v6546
    %v6645 = vpop.f32.mrb[0].mxu0
    %v6646 = vadd.f32 0.0, %v6645
    %v6647 = vpop.f32.mrb[0].mxu0
    %v6648 = vadd.f32 0.0, %v6647
    %v6649 = vpop.f32.mrb[0].mxu0
    %v6650 = vadd.f32 0.0, %v6649
    %v6651 = vpop.f32.mrb[0].mxu0
    %v6652 = vadd.f32 0.0, %v6651
    %6653 = vdwg.mxu0
    %6654 = vmatprep.subr.bf16.mxu0 %v6517
    %6655 = vmatpush1.bf16.msra.mxu0 %v6516
    %6656 = vmatprep.subr.bf16.mxu0 %v6524
    %6657 = vmatpush1.bf16.msra.mxu0 %v6523
    %6658 = vmatprep.subr.bf16.mxu0 0
    %6659 = vmatpush1.bf16.msra.mxu0 0
    %6660 = vmatprep.subr.bf16.mxu0 0
    %6661 = vmatpush1.bf16.msra.mxu0 0
    %6662 = vmatprep.subr.bf16.mxu0 0
    %6663 = vmatpush1.bf16.msra.mxu0 0
    %6664 = vmatprep.subr.bf16.mxu0 0
    %6665 = vmatpush1.bf16.msra.mxu0 0
    %6666 = vmatprep.subr.bf16.mxu0 0
    %6667 = vmatpush1.bf16.msra.mxu0 0
    %6668 = vmatprep.subr.bf16.mxu0 0
    %6669 = vmatpush1.bf16.msra.mxu0 0
    %6670 = vmatprep.subr.bf16.mxu0 0
    %6671 = vmatpush1.bf16.msra.mxu0 0
    %6672 = vmatprep.subr.bf16.mxu0 0
    %6673 = vmatpush1.bf16.msra.mxu0 0
    %6674 = vmatprep.subr.bf16.mxu0 0
    %6675 = vmatpush1.bf16.msra.mxu0 0
    %6676 = vmatprep.subr.bf16.mxu0 0
    %6677 = vmatpush1.bf16.msra.mxu0 0
    %6678 = vmatprep.subr.bf16.mxu0 0
    %6679 = vmatpush1.bf16.msra.mxu0 0
    %6680 = vmatprep.subr.bf16.mxu0 0
    %6681 = vmatpush1.bf16.msra.mxu0 0
    %6682 = vmatprep.subr.bf16.mxu0 0
    %6683 = vmatpush1.bf16.msra.mxu0 0
    %6684 = vmatprep.subr.bf16.mxu0 0
    %6685 = vmatpush1.bf16.msra.mxu0 0
    %6686 = vmatprep.mubr.bf16.mxu0 0
    %6687 = vmatmul.mubr.bf16.gmra.mrb[0].mxu0 %v6543
    %v6688 = vpop.f32.mrb[0].mxu0
    %v6689 = vadd.f32 0.0, %v6688
    %v6690 = vpop.f32.mrb[0].mxu0
    %v6691 = vadd.f32 0.0, %v6690
    %v6692 = vpop.f32.mrb[0].mxu0
    %v6693 = vadd.f32 0.0, %v6692
    %v6694 = vpop.f32.mrb[0].mxu0
    %v6695 = vadd.f32 0.0, %v6694
    %6696 = vmatprep.mubr.bf16.mxu0 0
    %6697 = vmatmul.mubr.bf16.gmra.mrb[0].mxu0 %v6546
    %v6698 = vpop.f32.mrb[0].mxu0
    %v6699 = vadd.f32 0.0, %v6698
    %v6700 = vpop.f32.mrb[0].mxu0
    %v6701 = vadd.f32 0.0, %v6700
    %v6702 = vpop.f32.mrb[0].mxu0
    %v6703 = vadd.f32 0.0, %v6702
    %v6704 = vpop.f32.mrb[0].mxu0
    %v6705 = vadd.f32 0.0, %v6704
    %6706 = vdwg.mxu0
    %6707 = vmatprep.subr.bf16.mxu0 %v6495
    %6708 = vmatpush1.bf16.msra.mxu0 %v6518
    %6709 = vmatprep.subr.bf16.mxu0 %v6511
    %6710 = vmatpush1.bf16.msra.mxu0 %v6525
    %6711 = vmatprep.subr.bf16.mxu0 0
    %6712 = vmatpush1.bf16.msra.mxu0 0
    %6713 = vmatprep.subr.bf16.mxu0 0
    %6714 = vmatpush1.bf16.msra.mxu0 0
    %6715 = vmatprep.subr.bf16.mxu0 0
    %6716 = vmatpush1.bf16.msra.mxu0 0
    %6717 = vmatprep.subr.bf16.mxu0 0
    %6718 = vmatpush1.bf16.msra.mxu0 0
    %6719 = vmatprep.subr.bf16.mxu0 0
    %6720 = vmatpush1.bf16.msra.mxu0 0
    %6721 = vmatprep.subr.bf16.mxu0 0
    %6722 = vmatpush1.bf16.msra.mxu0 0
    %6723 = vmatprep.subr.bf16.mxu0 0
    %6724 = vmatpush1.bf16.msra.mxu0 0
    %6725 = vmatprep.subr.bf16.mxu0 0
    %6726 = vmatpush1.bf16.msra.mxu0 0
    %6727 = vmatprep.subr.bf16.mxu0 0
    %6728 = vmatpush1.bf16.msra.mxu0 0
    %6729 = vmatprep.subr.bf16.mxu0 0
    %6730 = vmatpush1.bf16.msra.mxu0 0
    %6731 = vmatprep.subr.bf16.mxu0 0
    %6732 = vmatpush1.bf16.msra.mxu0 0
    %6733 = vmatprep.subr.bf16.mxu0 0
    %6734 = vmatpush1.bf16.msra.mxu0 0
    %6735 = vmatprep.subr.bf16.mxu0 0
    %6736 = vmatpush1.bf16.msra.mxu0 0
    %6737 = vmatprep.subr.bf16.mxu0 0
    %6738 = vmatpush1.bf16.msra.mxu0 0
    %6739 = vmatprep.mubr.bf16.mxu0 0
    %6740 = vmatmul.mubr.bf16.gmra.mrb[0].mxu0 %v6543
    %v6741 = vpop.f32.mrb[0].mxu0
    %v6742 = vadd.f32 0.0, %v6741
    %v6743 = vpop.f32.mrb[0].mxu0
    %v6744 = vadd.f32 0.0, %v6743
    %v6745 = vpop.f32.mrb[0].mxu0
    %v6746 = vadd.f32 0.0, %v6745
    %v6747 = vpop.f32.mrb[0].mxu0
    %v6748 = vadd.f32 0.0, %v6747
    %6749 = vmatprep.mubr.bf16.mxu0 0
    %6750 = vmatmul.mubr.bf16.gmra.mrb[0].mxu0 %v6546
    %v6751 = vpop.f32.mrb[0].mxu0
    %v6752 = vadd.f32 0.0, %v6751
    %v6753 = vpop.f32.mrb[0].mxu0
    %v6754 = vadd.f32 0.0, %v6753
    %v6755 = vpop.f32.mrb[0].mxu0
    %v6756 = vadd.f32 0.0, %v6755
    %v6757 = vpop.f32.mrb[0].mxu0
    %v6758 = vadd.f32 0.0, %v6757
    %6759 = vdwg.mxu0
    %v6760 = vadd.f32 %v6434, %v6583
    %v6761 = vadd.f32 %v6435, %v6585
    %v6762 = vadd.f32 %v6436, %v6636
    %v6763 = vadd.f32 %v6437, %v6638
    %v6764 = vadd.f32 %v6438, %v6689
    %v6765 = vadd.f32 %v6439, %v6691
    %v6766 = vadd.f32 %v6440, %v6742
    %v6767 = vadd.f32 %v6441, %v6744
    %v6768 = vadd.f32 %v6442, %v6587
    %v6769 = vadd.f32 %v6443, %v6589
    %v6770 = vadd.f32 %v6444, %v6640
    %v6771 = vadd.f32 %v6445, %v6642
    %v6772 = vadd.f32 %v6446, %v6693
    %v6773 = vadd.f32 %v6447, %v6695
    %v6774 = vadd.f32 %v6448, %v6746
    %v6775 = vadd.f32 %v6449, %v6748
    %v6776 = vadd.f32 %v6450, %v6593
    %v6777 = vadd.f32 %v6451, %v6595
    %v6778 = vadd.f32 %v6452, %v6646
    %v6779 = vadd.f32 %v6453, %v6648
    %v6780 = vadd.f32 %v6454, %v6699
    %v6781 = vadd.f32 %v6455, %v6701
    %v6782 = vadd.f32 %v6456, %v6752
    %v6783 = vadd.f32 %v6457, %v6754
    %v6784 = vadd.f32 %v6458, %v6597
    %v6785 = vadd.f32 %v6459, %v6599
    %v6786 = vadd.f32 %v6460, %v6650
    %v6787 = vadd.f32 %v6461, %v6652
    %v6788 = vadd.f32 %v6462, %v6703
    %v6789 = vadd.f32 %v6463, %v6705
    %v6790 = vadd.f32 %v6464, %v6756
    %v6791 = vadd.f32 %v6465, %v6758
    %v6792 = vld [vmem:[%s4] sm:$0xff]
    %v6793 = vld [vmem:[%s4 + $0x8] sm:$0xff]
    %v6794 = vld [vmem:[%s4 + $0x10] sm:$0xff]
    %v6795 = vld [vmem:[%s4 + $0x18] sm:$0xff]
    %6797 = vset.pattern.permute.xlu0 0
    %6798 = vperm.xlu0 %6797, %v6792
    %v6799 = vpop.permute.xlu0 %6798
    %6802 = vset.pattern.permute.xlu0 0
    %6803 = vperm.xlu0 %6802, %v6793
    %v6804 = vpop.permute.xlu0 %6803
    %6807 = vset.pattern.permute.xlu0 0
    %6808 = vperm.xlu0 %6807, %v6794
    %v6809 = vpop.permute.xlu0 %6808
    %6812 = vset.pattern.permute.xlu0 0
    %6813 = vperm.xlu0 %6812, %v6795
    %v6814 = vpop.permute.xlu0 %6813
    %v6816 = vadd.f32 %v6760, %v6799
    %v6817 = vadd.f32 %v6761, %v6799
    %v6818 = vadd.f32 %v6762, %v6799
    %v6819 = vadd.f32 %v6763, %v6799
    %v6820 = vadd.f32 %v6764, %v6799
    %v6821 = vadd.f32 %v6765, %v6799
    %v6822 = vadd.f32 %v6766, %v6799
    %v6823 = vadd.f32 %v6767, %v6799
    %v6824 = vadd.f32 %v6768, %v6804
    %v6825 = vadd.f32 %v6769, %v6804
    %v6826 = vadd.f32 %v6770, %v6804
    %v6827 = vadd.f32 %v6771, %v6804
    %v6828 = vadd.f32 %v6772, %v6804
    %v6829 = vadd.f32 %v6773, %v6804
    %v6830 = vadd.f32 %v6774, %v6804
    %v6831 = vadd.f32 %v6775, %v6804
    %v6832 = vadd.f32 %v6776, %v6809
    %v6833 = vadd.f32 %v6777, %v6809
    %v6834 = vadd.f32 %v6778, %v6809
    %v6835 = vadd.f32 %v6779, %v6809
    %v6836 = vadd.f32 %v6780, %v6809
    %v6837 = vadd.f32 %v6781, %v6809
    %v6838 = vadd.f32 %v6782, %v6809
    %v6839 = vadd.f32 %v6783, %v6809
    %v6840 = vadd.f32 %v6784, %v6814
    %v6841 = vadd.f32 %v6785, %v6814
    %v6842 = vadd.f32 %v6786, %v6814
    %v6843 = vadd.f32 %v6787, %v6814
    %v6844 = vadd.f32 %v6788, %v6814
    %v6845 = vadd.f32 %v6789, %v6814
    %v6846 = vadd.f32 %v6790, %v6814
    %v6847 = vadd.f32 %v6791, %v6814
    %v6848 = vmax.f32 %v6816, 0.0
    %v6849 = vmax.f32 %v6817, 0.0
    %v6850 = vmax.f32 %v6818, 0.0
    %v6851 = vmax.f32 %v6819, 0.0
    %v6852 = vmax.f32 %v6820, 0.0
    %v6853 = vmax.f32 %v6821, 0.0
    %v6854 = vmax.f32 %v6822, 0.0
    %v6855 = vmax.f32 %v6823, 0.0
    %v6856 = vmax.f32 %v6824, 0.0
    %v6857 = vmax.f32 %v6825, 0.0
    %v6858 = vmax.f32 %v6826, 0.0
    %v6859 = vmax.f32 %v6827, 0.0
    %v6860 = vmax.f32 %v6828, 0.0
    %v6861 = vmax.f32 %v6829, 0.0
    %v6862 = vmax.f32 %v6830, 0.0
    %v6863 = vmax.f32 %v6831, 0.0
    %v6864 = vmax.f32 %v6832, 0.0
    %v6865 = vmax.f32 %v6833, 0.0
    %v6866 = vmax.f32 %v6834, 0.0
    %v6867 = vmax.f32 %v6835, 0.0
    %v6868 = vmax.f32 %v6836, 0.0
    %v6869 = vmax.f32 %v6837, 0.0
    %v6870 = vmax.f32 %v6838, 0.0
    %v6871 = vmax.f32 %v6839, 0.0
    %v6872 = vmax.f32 %v6840, 0.0
    %v6873 = vmax.f32 %v6841, 0.0
    %v6874 = vmax.f32 %v6842, 0.0
    %v6875 = vmax.f32 %v6843, 0.0
    %v6876 = vmax.f32 %v6844, 0.0
    %v6877 = vmax.f32 %v6845, 0.0
    %v6878 = vmax.f32 %v6846, 0.0
    %v6879 = vmax.f32 %v6847, 0.0
    %v6880 = vpack.c.bf16 %v6856, %v6848
    %v6881 = vpack.c.bf16 %v6857, %v6849
    %v6882 = vpack.c.bf16 %v6858, %v6850
    %v6883 = vpack.c.bf16 %v6859, %v6851
    %v6884 = vpack.c.bf16 %v6860, %v6852
    %v6885 = vpack.c.bf16 %v6861, %v6853
    %v6886 = vpack.c.bf16 %v6862, %v6854
    %v6887 = vpack.c.bf16 %v6863, %v6855
    %v6888 = vpack.c.bf16 %v6872, %v6864
    %v6889 = vpack.c.bf16 %v6873, %v6865
    %v6890 = vpack.c.bf16 %v6874, %v6866
    %v6891 = vpack.c.bf16 %v6875, %v6867
    %v6892 = vpack.c.bf16 %v6876, %v6868
    %v6893 = vpack.c.bf16 %v6877, %v6869
    %v6894 = vpack.c.bf16 %v6878, %v6870
    %v6895 = vpack.c.bf16 %v6879, %v6871
    %v6912 = vunpack.c.l.b16 %v6880
    %v6913 = vunpack.c.l.b16 %v6881
    %v6914 = vunpack.c.l.b16 %v6882
    %v6915 = vunpack.c.l.b16 %v6883
    %v6916 = vunpack.c.l.b16 %v6884
    %v6917 = vunpack.c.l.b16 %v6885
    %v6918 = vunpack.c.l.b16 %v6886
    %v6919 = vunpack.c.l.b16 %v6887
    %v6920 = vunpack.c.h.b16 %v6880
    %v6921 = vunpack.c.h.b16 %v6881
    %v6922 = vunpack.c.h.b16 %v6882
    %v6923 = vunpack.c.h.b16 %v6883
    %v6924 = vunpack.c.h.b16 %v6884
    %v6925 = vunpack.c.h.b16 %v6885
    %v6926 = vunpack.c.h.b16 %v6886
    %v6927 = vunpack.c.h.b16 %v6887
    %v6928 = vunpack.c.l.b16 %v6888
    %v6929 = vunpack.c.l.b16 %v6889
    %v6930 = vunpack.c.l.b16 %v6890
    %v6931 = vunpack.c.l.b16 %v6891
    %v6932 = vunpack.c.l.b16 %v6892
    %v6933 = vunpack.c.l.b16 %v6893
    %v6934 = vunpack.c.l.b16 %v6894
    %v6935 = vunpack.c.l.b16 %v6895
    %v6936 = vunpack.c.h.b16 %v6888
    %v6937 = vunpack.c.h.b16 %v6889
    %v6938 = vunpack.c.h.b16 %v6890
    %v6939 = vunpack.c.h.b16 %v6891
    %v6940 = vunpack.c.h.b16 %v6892
    %v6941 = vunpack.c.h.b16 %v6893
    %v6942 = vunpack.c.h.b16 %v6894
    %v6943 = vunpack.c.h.b16 %v6895
    %v6944 = vpack.c.b16 %v6913, %v6912
    %v6945 = vpack.c.b16 %v6915, %v6914
    %v6946 = vpack.c.b16 %v6917, %v6916
    %v6947 = vpack.c.b16 %v6919, %v6918
    %v6948 = vpack.c.b16 %v6921, %v6920
    %v6949 = vpack.c.b16 %v6923, %v6922
    %v6950 = vpack.c.b16 %v6925, %v6924
    %v6951 = vpack.c.b16 %v6927, %v6926
    %v6952 = vpack.c.b16 %v6929, %v6928
    %v6953 = vpack.c.b16 %v6931, %v6930
    %v6954 = vpack.c.b16 %v6933, %v6932
    %v6955 = vpack.c.b16 %v6935, %v6934
    %v6956 = vpack.c.b16 %v6937, %v6936
    %v6957 = vpack.c.b16 %v6939, %v6938
    %v6958 = vpack.c.b16 %v6941, %v6940
    %v6959 = vpack.c.b16 %v6943, %v6942
    %s6976 = scalar_lea.vmem [#allocation3], 128
    %6977 = vst [vmem:[%s6976] sm:$0xff] %v6944
    %6978 = vst [vmem:[%s6976 + $0x8] sm:$0xff] %v6945
    %6979 = vst [vmem:[%s6976 + $0x10] sm:$0xff] %v6946
    %6980 = vst.msk [vmem:[%s6976 + $0x18] sm:$0xff] %vm3505, %v6947
    %6981 = vst [vmem:[%s6976 + $0x20] sm:$0xff] %v6948
    %6982 = vst [vmem:[%s6976 + $0x28] sm:$0xff] %v6949
    %6983 = vst [vmem:[%s6976 + $0x30] sm:$0xff] %v6950
    %6984 = vst.msk [vmem:[%s6976 + $0x38] sm:$0xff] %vm3505, %v6951
    %6985 = vst [vmem:[%s6976 + $0x40] sm:$0xff] %v6952
    %6986 = vst [vmem:[%s6976 + $0x48] sm:$0xff] %v6953
    %6987 = vst [vmem:[%s6976 + $0x50] sm:$0xff] %v6954
    %6988 = vst.msk [vmem:[%s6976 + $0x58] sm:$0xff] %vm3505, %v6955
    %6989 = vst [vmem:[%s6976 + $0x60] sm:$0xff] %v6956
    %6990 = vst [vmem:[%s6976 + $0x68] sm:$0xff] %v6957
    %6991 = vst [vmem:[%s6976 + $0x70] sm:$0xff] %v6958
    %6992 = vst.msk [vmem:[%s6976 + $0x78] sm:$0xff] %vm3505, %v6959
    // Predicated region
    $region22: #{tpu_custom_call.1} parent=1 // pred_check
      _
    $region23: #{tpu_custom_call.1} parent=1 // pred_check_branch
      %6994 = sbr.rel (0) target = $region25
    $region24: #{tpu_custom_call.1} parent=1 // pred_region
      %s6996 = ssub.s32 4096, 4096
      %6997 = vsyncadd [#allocation4], %s6996
      %s6998 = sshll.u32 [#allocation3], 4
      %s6999 = int_to_ptr.vmem [resolvable:$true] %s6998
      %7004 = dma.vmem_to_hbm [thread:$0]  %s6999, 4096, %s5, [#allocation4], 512, 512, 32
    $region25: #{tpu_custom_call.1} parent=1 // pred_fallthru
      _
    // Predicated region
    $region26: #{tpu_custom_call.1} parent=1 // pred_check
      _
    $region27: #{tpu_custom_call.1} parent=1 // pred_check_branch
      %7006 = sbr.rel (0) target = $region29
    $region28: #{tpu_custom_call.1} parent=1 // pred_region
      %7007 = dma.done [#allocation4], 4096
    $region29: #{tpu_custom_call.1} parent=1 // pred_fallthru
      _
    %7008 = vsyncpa [#allocation4], 1

</llo_original>
